<compile_context>
chip_gen: v7x
topology: tpu7x:2x2x1
jax: 0.10.0
libtpu: 0.0.40
codegen_flags: <defaults>
</compile_context>

<pallas_src>
import functools

import jax
import jax.numpy as jnp
from jax.experimental import pallas as pl
from jax.experimental.pallas import tpu as pltpu


_COMPILER_PARAMS = pltpu.CompilerParams(
    dimension_semantics=("parallel",),
    vmem_limit_bytes=48 * 1024 * 1024,
)

_CHUNK = 128      # rows per inner accumulation chunk (one f32 acc tile)
_MAX_TM = 2048    # max rows per grid step


def _round_up(v, m):
    return ((v + m - 1) // m) * m


def _choose_tiling(n_rows):
    """Pick a row tile (multiple of _CHUNK) for a 1-D grid over n_rows rows."""
    n_t = max(2, -(-n_rows // _MAX_TM))
    tm = max(_CHUNK, _round_up(-(-n_rows // n_t), _CHUNK))
    n_tiles = -(-n_rows // tm)
    return tm, n_tiles, n_tiles * tm


# ----------------------------------------------------------------------------
# Pallas kernels
# ----------------------------------------------------------------------------
def _conv_bn_kernel(x_ref, w_ref, mask_ref, y_ref, s_ref, q_ref, *,
                    row_offsets, tm):
    """Implicit-GEMM conv tile + fused BatchNorm statistics.

    x_ref    : (R_total, K) bf16      flattened, lane-expanded input (resident)
    w_ref    : (T*K, C)     f32       per-row-tap weight blocks, T = #offsets
    mask_ref : (tm/128, 1, 128) f32   1.0 where the row is a real conv output
    y_ref    : (tm, C)      f32       conv output rows for this tile
    s_ref    : (1, C)       f32       per-tile masked column sum
    q_ref    : (1, C)       f32       per-tile masked column sum of squares
    """
    i = pl.program_id(0)
    k = x_ref.shape[1]
    cout = y_ref.shape[1]
    n_chunks = tm // _CHUNK
    n_taps = len(row_offsets)

    # Hoisted: load (and cast) each weight tap once per kernel invocation.
    w_taps = [w_ref[t * k:(t + 1) * k, :].astype(jnp.bfloat16)
              for t in range(n_taps)]

    def body(c, carry):
        s_acc, q_acc = carry
        base = pl.multiple_of(i * tm + c * _CHUNK, _CHUNK)
        acc = jnp.zeros((_CHUNK, cout), jnp.float32)
        for t in range(n_taps):
            # all offsets are multiples of 16 -> aligned bf16 sublane slices
            start = pl.multiple_of(base + row_offsets[t], 16)
            a = x_ref[pl.ds(start, _CHUNK), :]
            acc = acc + jnp.dot(a, w_taps[t],
                                preferred_element_type=jnp.float32)
        y_ref[pl.ds(pl.multiple_of(c * _CHUNK, _CHUNK), _CHUNK), :] = acc
        # Mask is only needed for the statistics (invalid rows are dropped by
        # the wrapper-side slice); fold it in with a (1,128)x(128,C) dot.
        m = mask_ref[c]                                   # (1, 128)
        s_acc = s_acc + jnp.dot(m, acc, preferred_element_type=jnp.float32)
        q_acc = q_acc + jnp.dot(m, acc * acc,
                                preferred_element_type=jnp.float32)
        return s_acc, q_acc

    zero = jnp.zeros((1, cout), jnp.float32)
    s_fin, q_fin = jax.lax.fori_loop(0, n_chunks, body, (zero, zero))
    s_ref[...] = s_fin
    q_ref[...] = q_fin


def _scale_shift_relu_kernel(x_ref, s_ref, b_ref, o_ref):
    o_ref[...] = jnp.maximum(x_ref[...] * s_ref[...] + b_ref[...], 0.0)


# ----------------------------------------------------------------------------
# pallas_call wrappers
# ----------------------------------------------------------------------------
def _conv_rows_pallas(xflat, wmat, mask, tm, row_offsets):
    """Run the implicit-GEMM conv kernel; returns (y_flat, col_sum, col_sumsq)."""
    r_pad = mask.shape[0] * _CHUNK
    n_tiles = r_pad // tm
    cout = wmat.shape[1]
    k = xflat.shape[1]
    assert wmat.shape[0] == len(row_offsets) * k
    assert all(int(o) % 16 == 0 for o in row_offsets)
    kernel = functools.partial(
        _conv_bn_kernel,
        row_offsets=tuple(int(o) for o in row_offsets),
        tm=tm)
    y, s, q = pl.pallas_call(
        kernel,
        out_shape=(jax.ShapeDtypeStruct((r_pad, cout), jnp.float32),
                   jax.ShapeDtypeStruct((n_tiles, 1, cout), jnp.float32),
                   jax.ShapeDtypeStruct((n_tiles, 1, cout), jnp.float32)),
        grid_spec=pltpu.PrefetchScalarGridSpec(
            num_scalar_prefetch=0,
            grid=(n_tiles,),
            in_specs=[
                pl.BlockSpec(xflat.shape, lambda i: (0, 0)),   # VMEM resident
                pl.BlockSpec(wmat.shape, lambda i: (0, 0)),    # VMEM resident
                pl.BlockSpec((tm // _CHUNK, 1, _CHUNK), lambda i: (i, 0, 0)),
            ],
            out_specs=(
                pl.BlockSpec((tm, cout), lambda i: (i, 0)),
                pl.BlockSpec((None, 1, cout), lambda i: (i, 0, 0)),
                pl.BlockSpec((None, 1, cout), lambda i: (i, 0, 0)),
            ),
        ),
        compiler_params=_COMPILER_PARAMS,
    )(xflat, wmat, mask)
    return y, jnp.sum(s, axis=(0, 1)), jnp.sum(q, axis=(0, 1))


def _pick_row_tile(rows):
    if rows % 8 != 0:
        return rows
    best = rows
    for t in range(8, min(rows // 2, 1024) + 1, 8):
        if rows % t == 0:
            best = t
    return best


def scale_shift_relu_pallas(x2, scale, shift):
    """relu(x * scale + shift) with per-channel scale/shift, lane-dense layout."""
    m, c = x2.shape
    if (m * c) % 1024 == 0 and 128 % c == 0:
        lanes = 128
        rows = (m * c) // 128
        xs = x2.reshape(rows, lanes)
        rep = lanes // c
        sc = jnp.tile(scale, rep).reshape(1, lanes)
        sh = jnp.tile(shift, rep).reshape(1, lanes)
    else:
        lanes, rows = c, m
        xs, sc, sh = x2, scale.reshape(1, c), shift.reshape(1, c)
    tr = _pick_row_tile(rows)
    out = pl.pallas_call(
        _scale_shift_relu_kernel,
        out_shape=jax.ShapeDtypeStruct((rows, lanes), jnp.float32),
        grid_spec=pltpu.PrefetchScalarGridSpec(
            num_scalar_prefetch=0,
            grid=(rows // tr,),
            in_specs=[
                pl.BlockSpec((tr, lanes), lambda i: (i, 0)),
                pl.BlockSpec((1, lanes), lambda i: (0, 0)),
                pl.BlockSpec((1, lanes), lambda i: (0, 0)),
            ],
            out_specs=pl.BlockSpec((tr, lanes), lambda i: (i, 0)),
        ),
        compiler_params=_COMPILER_PARAMS,
    )(xs, sc, sh)
    return out.reshape(m, c)


# ----------------------------------------------------------------------------
# Conv / ConvTranspose data preparation
# ----------------------------------------------------------------------------
def _flatten_rows(xw, r_pad, max_off):
    """(N, Dp, Hp, Wr, K) -> zero-padded (R_total, K) bf16 row matrix, plus R."""
    n, dp, hp, wr, k = xw.shape
    r = n * dp * hp * wr
    r_total = _round_up(r_pad + max_off, 16)
    flat = xw.reshape(r, k)
    return jnp.pad(flat, ((0, r_total - r), (0, 0))), r


def _valid_row_mask(dp, hp, wr, d_valid, h_valid, w_valid, r, r_pad):
    """Lane-dense (r_pad/128, 1, 128) f32 mask of rows that are real outputs."""
    idx = jnp.arange(r_pad, dtype=jnp.int32)
    rem = idx % (dp * hp * wr)
    d_ = rem // (hp * wr)
    h_ = (rem // wr) % hp
    w_ = rem % wr
    valid = (idx < r) & (d_ < d_valid) & (h_ < h_valid) & (w_ < w_valid)
    return valid.astype(jnp.float32).reshape(r_pad // _CHUNK, 1, _CHUNK)


def conv3d_rows(x, w):
    """3x3x3 Conv3d, stride 1, padding 1, no bias, channels-last implicit GEMM.

    x: (N, D, H, W, Cin) f32; w: PyTorch layout (Cout, Cin, 3, 3, 3).
    Returns (y_flat (r_pad, Cout), col_sum, col_sumsq, meta).
    """
    n, d, h, wdim, cin = x.shape
    cout = w.shape[0]
    xb = x.astype(jnp.bfloat16)
    xp = jnp.pad(xb, ((0, 0), (1, 1), (1, 1), (1, 1), (0, 0)))
    dp, hp = d + 2, h + 2
    # Expand the 3 W-axis taps onto the lane axis: (N, Dp, Hp, W, 3*Cin).
    xw = jnp.concatenate([xp[:, :, :, kw:kw + wdim, :] for kw in range(3)],
                         axis=-1)
    wr = _round_up(wdim, 16)              # keep bf16 sublane slices tile-aligned
    if wr != wdim:
        xw = jnp.pad(xw, ((0, 0), (0, 0), (0, 0), (0, wr - wdim), (0, 0)))
    rows = n * dp * hp * wr
    tm, _, r_pad = _choose_tiling(rows)
    row_offsets = [kd * hp * wr + kh * wr
                   for kd in range(3) for kh in range(3)]
    xflat, r = _flatten_rows(xw, r_pad, max(row_offsets))
    mask = _valid_row_mask(dp, hp, wr, d, h, wdim, r, r_pad)
    wmat = jnp.transpose(w, (2, 3, 4, 1, 0)).reshape(27 * cin, cout)
    wmat = wmat.astype(jnp.float32)
    y, s, q = _conv_rows_pallas(xflat, wmat, mask, tm, row_offsets)
    return y, s, q, (n, d, h, wdim, dp, hp, wr, r, cout)


def conv_transpose3d_rows(x, wt):
    """ConvTranspose3d, k=3, stride=2, padding=1, output_padding=1, no bias.

    All 8 output-parity sub-convolutions are fused into one kernel call: each
    flat input row emits 8*Cout output lanes (one Cout group per parity).
    x: (N, D, H, W, Cin) f32; wt: PyTorch layout (Cin, Cout, 3, 3, 3).
    Returns (y_flat (r_pad, 8*Cout), col_sum (8*Cout,), col_sumsq, meta).
    """
    n, d, h, w, cin = x.shape
    cout = wt.shape[1]
    xb = x.astype(jnp.bfloat16)
    # One trailing zero per spatial axis covers the i = I tap of odd parities.
    xp = jnp.pad(xb, ((0, 0), (0, 1), (0, 1), (0, 1), (0, 0)))
    dp, hp = d + 1, h + 1
    # Expand the 2 W-axis input offsets (dw = 0, 1) onto the lane axis.
    xw = jnp.concatenate([xp[:, :, :, dw:dw + w, :] for dw in range(2)],
                         axis=-1)                               # (N,Dp,Hp,W,2Cin)
    wr = _round_up(w, 16)
    if wr != w:
        xw = jnp.pad(xw, ((0, 0), (0, 0), (0, 0), (0, wr - w), (0, 0)))
    rows = n * dp * hp * wr
    tm, _, r_pad = _choose_tiling(rows)
    row_offsets = [dd * hp * wr + dh * wr for dd in range(2) for dh in range(2)]
    xflat, r = _flatten_rows(xw, r_pad, max(row_offsets))
    mask = _valid_row_mask(dp, hp, wr, d, h, w, r, r_pad)

    wk = jnp.transpose(wt, (2, 3, 4, 0, 1)).astype(jnp.float32)  # (kd,kh,kw,Ci,Co)
    z_half = jnp.zeros((cin, cout), jnp.float32)
    z_full = jnp.zeros((2 * cin, cout), jnp.float32)

    def axis_k(parity, delta):
        # kernel index used by (output parity, input offset delta); None = no tap
        #   even output o=2j  : x[j]   * w[1]
        #   odd  output o=2j+1: x[j+1] * w[0] + x[j] * w[2]
        if parity == 0:
            return 1 if delta == 0 else None
        return 0 if delta == 1 else 2

    def lane_block(pw, kd, kh):
        # lane layout of xw is [dw=0 | dw=1]; map each dw to its kernel index.
        if pw == 0:
            return jnp.concatenate([wk[kd, kh, 1], z_half], axis=0)
        return jnp.concatenate([wk[kd, kh, 2], wk[kd, kh, 0]], axis=0)

    tap_rows = []
    for dd in range(2):                      # must match row_offsets ordering
        for dh in range(2):
            blocks = []
            for pd in range(2):
                for ph in range(2):
                    for pw in range(2):
                        kd, kh = axis_k(pd, dd), axis_k(ph, dh)
                        blocks.append(z_full if kd is None or kh is None
                                      else lane_block(pw, kd, kh))
            tap_rows.append(jnp.concatenate(blocks, axis=1))    # (2Cin, 8*Cout)
    wmat = jnp.concatenate(tap_rows, axis=0)                    # (8Cin, 8*Cout)

    y, s, q = _conv_rows_pallas(xflat, wmat, mask, tm, row_offsets)
    return y, s, q, (n, d, h, w, dp, hp, wr, r, cout)


def _finish_conv(y_flat, meta):
    n, d, h, w, dp, hp, wr, r, cout = meta
    return y_flat[:r].reshape(n, dp, hp, wr, cout)[:, :d, :h, :w]


def _finish_upsample(y_flat, meta):
    n, d, h, w, dp, hp, wr, r, cout = meta
    yv = y_flat[:r].reshape(n, dp, hp, wr, 2, 2, 2, cout)[:, :d, :h, :w]
    # out[n, 2j+pd, 2k+ph, 2l+pw, c]
    return jnp.transpose(yv, (0, 1, 4, 2, 5, 3, 6, 7)).reshape(
        n, 2 * d, 2 * h, 2 * w, cout)


def _bn_scale_shift(s, q, count, gamma, beta, eps=1e-5):
    """Training-mode BatchNorm3d (batch stats, biased variance) as scale/shift."""
    mean = s / count
    # TODO(synk): single-pass E[x^2]-E[x]^2 can cancel for very large / offset
    # activations; use a shifted or Welford reduction for production sizes.
    var = jnp.maximum(q / count - mean * mean, 0.0)
    scale = gamma * jax.lax.rsqrt(var + eps)
    shift = beta - mean * scale
    return scale, shift


# ----------------------------------------------------------------------------
# UNetLikeDecoder forward
# ----------------------------------------------------------------------------
def init_params(key, c0=8, c1=16):
    ks = jax.random.split(key, 9)
    wn = lambda k, shp: 0.1 * jax.random.normal(k, shp, jnp.float32)
    gn = lambda k: 1.0 + 0.1 * jax.random.normal(k, (c0,), jnp.float32)
    bn = lambda k: 0.1 * jax.random.normal(k, (c0,), jnp.float32)
    # TODO(synk): output_layer (Conv3d k=7 + Tanh) is never invoked by
    # UNetLikeDecoder.forward, so its parameters are intentionally omitted.
    return {
        # Upsample3DUnit(c1 -> c0): ConvTranspose3d weight (Cin, Cout, 3, 3, 3)
        "up_w": wn(ks[0], (c1, c0, 3, 3, 3)),
        "up_gamma": gn(ks[1]), "up_beta": bn(ks[2]),
        # final_compress: Conv3d(2*c0 -> c0, k=3) weight (Cout, Cin, 3, 3, 3)
        "fc_w": wn(ks[3], (c0, 2 * c0, 3, 3, 3)),
        "fc_gamma": gn(ks[4]), "fc_beta": bn(ks[5]),
        # final_decoder block 0: Conv3d(c0 -> c0, k=3)
        "fd_w": wn(ks[6], (c0, c0, 3, 3, 3)),
        "fd_gamma": gn(ks[7]), "fd_beta": bn(ks[8]),
    }


@jax.jit
def unet_decoder_forward(params, base_volume, linker_deep, linker_fine):
    """Matches UNetLikeDecoder.forward with decoder_channel_list=[8, 16].

    Inputs are PyTorch NCDHW; output is NCDHW.
    """
    to_ndhwc = lambda t: jnp.transpose(t, (0, 2, 3, 4, 1))
    x = to_ndhwc(base_volume)
    skip_deep = to_ndhwc(linker_deep)    # linker_features[-1]
    skip_fine = to_ndhwc(linker_fine)    # linker_features[0]

    # i = 0: compress_layers[0] is empty; decoder_layers[0] = Upsample3DUnit(16->8)
    y, s, q, meta = conv_transpose3d_rows(
        jnp.concatenate([x, skip_deep], axis=-1), params["up_w"])
    n, d, h, w, cout = meta[0], meta[1], meta[2], meta[3], meta[-1]
    s8 = jnp.sum(s.reshape(8, cout), axis=0)         # combine the 8 parities
    q8 = jnp.sum(q.reshape(8, cout), axis=0)
    scale, shift = _bn_scale_shift(s8, q8, float(n * 8 * d * h * w),
                                   params["up_gamma"], params["up_beta"])
    y = scale_shift_relu_pallas(y, jnp.tile(scale, 8), jnp.tile(shift, 8))
    x = _finish_upsample(y, meta)

    # final_layer = final_compress (Conv 16->8) + one final_decoder block (8->8)
    y, s, q, meta = conv3d_rows(
        jnp.concatenate([x, skip_fine], axis=-1), params["fc_w"])
    n, d, h, w = meta[0], meta[1], meta[2], meta[3]
    scale, shift = _bn_scale_shift(s, q, float(n * d * h * w),
                                   params["fc_gamma"], params["fc_beta"])
    x = _finish_conv(scale_shift_relu_pallas(y, scale, shift), meta)

    y, s, q, meta = conv3d_rows(x, params["fd_w"])
    n, d, h, w = meta[0], meta[1], meta[2], meta[3]
    scale, shift = _bn_scale_shift(s, q, float(n * d * h * w),
                                   params["fd_gamma"], params["fd_beta"])
    x = _finish_conv(scale_shift_relu_pallas(y, scale, shift), meta)

    return jnp.transpose(x, (0, 4, 1, 2, 3))          # back to NCDHW


# ----------------------------------------------------------------------------
# Pure-JAX reference (f32) for validation
# ----------------------------------------------------------------------------
def _reference_forward(params, base_volume, linker_deep, linker_fine):
    def bn_relu(x, gamma, beta, eps=1e-5):
        mean = jnp.mean(x, axis=(0, 2, 3, 4), keepdims=True)
        var = jnp.mean(jnp.square(x - mean), axis=(0, 2, 3, 4), keepdims=True)
        g = gamma.reshape(1, -1, 1, 1, 1)
        b = beta.reshape(1, -1, 1, 1, 1)
        return jnp.maximum((x - mean) * jax.lax.rsqrt(var + eps) * g + b, 0.0)

    def conv3d(x, w):
        return jax.lax.conv_general_dilated(
            x, w, (1, 1, 1), ((1, 1), (1, 1), (1, 1)),
            dimension_numbers=("NCDHW", "OIDHW", "NCDHW"))

    def conv_transpose3d(x, wt):
        w = jnp.transpose(jnp.flip(wt, axis=(2, 3, 4)), (1, 0, 2, 3, 4))
        return jax.lax.conv_general_dilated(
            x, w, (1, 1, 1), ((1, 2), (1, 2), (1, 2)),
            lhs_dilation=(2, 2, 2),
            dimension_numbers=("NCDHW", "OIDHW", "NCDHW"))

    x = jnp.concatenate([base_volume, linker_deep], axis=1)
    x = bn_relu(conv_transpose3d(x, params["up_w"]),
                params["up_gamma"], params["up_beta"])
    x = jnp.concatenate([x, linker_fine], axis=1)
    x = bn_relu(conv3d(x, params["fc_w"]), params["fc_gamma"], params["fc_beta"])
    x = bn_relu(conv3d(x, params["fd_w"]), params["fd_gamma"], params["fd_beta"])
    return x


if __name__ == "__main__":
    key = jax.random.PRNGKey(0)
    k1, k2, k3, kp = jax.random.split(key, 4)

    nb, c0, c1, dsp = 2, 8, 16, 8
    # base_volume (c0 channels) concatenated with linker_features[-1] (c0) feeds
    # the ConvTranspose3d expecting c1 = 16 channels, as the forward requires.
    base_volume = jax.random.normal(k1, (nb, c0, dsp, dsp, dsp), jnp.float32)
    linker_deep = jax.random.normal(k2, (nb, c0, dsp, dsp, dsp), jnp.float32)
    linker_fine = jax.random.normal(
        k3, (nb, c0, 2 * dsp, 2 * dsp, 2 * dsp), jnp.float32)

    params = init_params(kp, c0, c1)

    out = unet_decoder_forward(params, base_volume, linker_deep, linker_fine)
    out = jax.block_until_ready(out)

    assert out.shape == (nb, c0, 2 * dsp, 2 * dsp, 2 * dsp), out.shape
    assert bool(jnp.all(jnp.isfinite(out)))

    ref = _reference_forward(params, base_volume, linker_deep, linker_fine)
    err = float(jnp.max(jnp.abs(out - ref)))
    assert err < 0.15, f"max abs error vs f32 reference: {err}"
    print("KERNEL_OK")
</pallas_src>

<mosaic_0001>
module attributes {stable_mosaic.version = 11 : i64} {
  func.func @_conv_bn_kernel(%arg0: i32, %arg1: memref<2976x32xbf16, #tpu.memory_space<vmem>>, %arg2: memref<128x64xf32, #tpu.memory_space<vmem>>, %arg3: memref<11x1x128xf32, #tpu.memory_space<vmem>>, %arg4: memref<1408x64xf32, #tpu.memory_space<vmem>>, %arg5: memref<1x1x64xf32, #tpu.memory_space<vmem>>, %arg6: memref<1x1x64xf32, #tpu.memory_space<vmem>>) attributes {dimension_semantics = [#tpu.dimension_semantics<parallel>], iteration_bounds = array<i64: 2>, scalar_prefetch = 0 : i64, scratch_operands = 0 : i64, tpu.core_type = #tpu.core_type<tc>, window_params = [{pipeline_mode = #tpu.pipeline_mode<synchronous>, transform_indices = @transform_0, window_bounds = array<i64: 2976, 32>}, {pipeline_mode = #tpu.pipeline_mode<synchronous>, transform_indices = @transform_1, window_bounds = array<i64: 128, 64>}, {transform_indices = @transform_2, window_bounds = array<i64: 11, 1, 128>}, {transform_indices = @transform_3, window_bounds = array<i64: 1408, 64>}, {transform_indices = @transform_4, window_bounds = array<i64: 1, 1, 64>}, {transform_indices = @transform_5, window_bounds = array<i64: 1, 1, 64>}]} {
    %c0 = arith.constant 0 : index
    %c0_0 = arith.constant 0 : index
    %0 = vector.load %arg2[%c0, %c0_0] : memref<128x64xf32, #tpu.memory_space<vmem>>, vector<32x64xf32>
    %1 = arith.truncf %0 : vector<32x64xf32> to vector<32x64xbf16>
    %c32 = arith.constant 32 : index
    %c0_1 = arith.constant 0 : index
    %2 = vector.load %arg2[%c32, %c0_1] : memref<128x64xf32, #tpu.memory_space<vmem>>, vector<32x64xf32>
    %3 = arith.truncf %2 : vector<32x64xf32> to vector<32x64xbf16>
    %c64 = arith.constant 64 : index
    %c0_2 = arith.constant 0 : index
    %4 = vector.load %arg2[%c64, %c0_2] : memref<128x64xf32, #tpu.memory_space<vmem>>, vector<32x64xf32>
    %5 = arith.truncf %4 : vector<32x64xf32> to vector<32x64xbf16>
    %c96 = arith.constant 96 : index
    %c0_3 = arith.constant 0 : index
    %6 = vector.load %arg2[%c96, %c0_3] : memref<128x64xf32, #tpu.memory_space<vmem>>, vector<32x64xf32>
    %7 = arith.truncf %6 : vector<32x64xf32> to vector<32x64xbf16>
    %cst = arith.constant 0.000000e+00 : f32
    %8 = vector.broadcast %cst : f32 to vector<1x64xf32>
    %c0_i32 = arith.constant 0 : i32
    %c11_i32 = arith.constant 11 : i32
    %9 = arith.addi %c0_i32, %c11_i32 : i32
    %c1_i32 = arith.constant 1 : i32
    %10:2 = scf.for %arg7 = %c0_i32 to %9 step %c1_i32 iter_args(%arg8 = %8, %arg9 = %8) -> (vector<1x64xf32>, vector<1x64xf32>)  : i32 {
      %c1408_i32 = arith.constant 1408 : i32
      %17 = arith.muli %arg0, %c1408_i32 : i32
      %c128_i32 = arith.constant 128 : i32
      %18 = arith.muli %arg7, %c128_i32 : i32
      %19 = arith.addi %17, %18 : i32
      %20 = tpu.assume_multiple %19, 128 : i32
      %cst_11 = arith.constant 0.000000e+00 : f32
      %21 = vector.broadcast %cst_11 : f32 to vector<128x64xf32>
      %c0_i32_12 = arith.constant 0 : i32
      %22 = arith.addi %20, %c0_i32_12 : i32
      %23 = tpu.assume_multiple %22, 16 : i32
      %24 = arith.index_cast %23 : i32 to index
      %c0_13 = arith.constant 0 : index
      %25 = vector.load %arg1[%24, %c0_13] : memref<2976x32xbf16, #tpu.memory_space<vmem>>, vector<128x32xbf16>
      %cst_14 = arith.constant dense<0.000000e+00> : vector<128x64xf32>
      %26 = tpu.matmul %25, %1, %cst_14 {dimension_numbers = #tpu.dot_dimension_numbers<[1], [0], [0], [1], [0, 0, 1, 1], [], []>} : vector<128x32xbf16>, vector<32x64xbf16>, vector<128x64xf32> -> vector<128x64xf32>
      %27 = arith.addf %21, %26 : vector<128x64xf32>
      %c16_i32 = arith.constant 16 : i32
      %28 = arith.addi %20, %c16_i32 : i32
      %29 = tpu.assume_multiple %28, 16 : i32
      %30 = arith.index_cast %29 : i32 to index
      %c0_15 = arith.constant 0 : index
      %31 = vector.load %arg1[%30, %c0_15] : memref<2976x32xbf16, #tpu.memory_space<vmem>>, vector<128x32xbf16>
      %cst_16 = arith.constant dense<0.000000e+00> : vector<128x64xf32>
      %32 = tpu.matmul %31, %3, %cst_16 {dimension_numbers = #tpu.dot_dimension_numbers<[1], [0], [0], [1], [0, 0, 1, 1], [], []>} : vector<128x32xbf16>, vector<32x64xbf16>, vector<128x64xf32> -> vector<128x64xf32>
      %33 = arith.addf %27, %32 : vector<128x64xf32>
      %c144_i32 = arith.constant 144 : i32
      %34 = arith.addi %20, %c144_i32 : i32
      %35 = tpu.assume_multiple %34, 16 : i32
      %36 = arith.index_cast %35 : i32 to index
      %c0_17 = arith.constant 0 : index
      %37 = vector.load %arg1[%36, %c0_17] : memref<2976x32xbf16, #tpu.memory_space<vmem>>, vector<128x32xbf16>
      %cst_18 = arith.constant dense<0.000000e+00> : vector<128x64xf32>
      %38 = tpu.matmul %37, %5, %cst_18 {dimension_numbers = #tpu.dot_dimension_numbers<[1], [0], [0], [1], [0, 0, 1, 1], [], []>} : vector<128x32xbf16>, vector<32x64xbf16>, vector<128x64xf32> -> vector<128x64xf32>
      %39 = arith.addf %33, %38 : vector<128x64xf32>
      %c160_i32 = arith.constant 160 : i32
      %40 = arith.addi %20, %c160_i32 : i32
      %41 = tpu.assume_multiple %40, 16 : i32
      %42 = arith.index_cast %41 : i32 to index
      %c0_19 = arith.constant 0 : index
      %43 = vector.load %arg1[%42, %c0_19] : memref<2976x32xbf16, #tpu.memory_space<vmem>>, vector<128x32xbf16>
      %cst_20 = arith.constant dense<0.000000e+00> : vector<128x64xf32>
      %44 = tpu.matmul %43, %7, %cst_20 {dimension_numbers = #tpu.dot_dimension_numbers<[1], [0], [0], [1], [0, 0, 1, 1], [], []>} : vector<128x32xbf16>, vector<32x64xbf16>, vector<128x64xf32> -> vector<128x64xf32>
      %45 = arith.addf %39, %44 : vector<128x64xf32>
      %c128_i32_21 = arith.constant 128 : i32
      %46 = arith.muli %arg7, %c128_i32_21 : i32
      %47 = tpu.assume_multiple %46, 128 : i32
      %48 = arith.index_cast %47 : i32 to index
      %c0_22 = arith.constant 0 : index
      %49 = vector.load %arg4[%48, %c0_22] : memref<1408x64xf32, #tpu.memory_space<vmem>>, vector<128x64xf32>
      tpu.vector_store %arg4[%48, %c0_22], %45 {strides = array<i32>} : memref<1408x64xf32, #tpu.memory_space<vmem>>, vector<128x64xf32>,
      %50 = arith.index_cast %arg7 : i32 to index
      %c0_23 = arith.constant 0 : index
      %c0_24 = arith.constant 0 : index
      %51 = vector.load %arg3[%50, %c0_23, %c0_24] : memref<11x1x128xf32, #tpu.memory_space<vmem>>, vector<1x1x128xf32>
      %52 = vector.shape_cast %51 : vector<1x1x128xf32> to vector<1x128xf32>
      %cst_25 = arith.constant dense<0.000000e+00> : vector<1x64xf32>
      %53 = tpu.matmul %52, %45, %cst_25 {dimension_numbers = #tpu.dot_dimension_numbers<[1], [0], [0], [1], [0, 0, 1, 1], [], []>} : vector<1x128xf32>, vector<128x64xf32>, vector<1x64xf32> -> vector<1x64xf32>
      %54 = arith.addf %arg8, %53 : vector<1x64xf32>
      %55 = arith.mulf %45, %45 : vector<128x64xf32>
      %cst_26 = arith.constant dense<0.000000e+00> : vector<1x64xf32>
      %56 = tpu.matmul %52, %55, %cst_26 {dimension_numbers = #tpu.dot_dimension_numbers<[1], [0], [0], [1], [0, 0, 1, 1], [], []>} : vector<1x128xf32>, vector<128x64xf32>, vector<1x64xf32> -> vector<1x64xf32>
      %57 = arith.addf %arg9, %56 : vector<1x64xf32>
      scf.yield %54, %57 : vector<1x64xf32>, vector<1x64xf32>
    }
    %c11_i32_4 = arith.constant 11 : i32
    %c0_5 = arith.constant 0 : index
    %c0_6 = arith.constant 0 : index
    %c0_7 = arith.constant 0 : index
    %11 = vector.load %arg5[%c0_5, %c0_6, %c0_7] : memref<1x1x64xf32, #tpu.memory_space<vmem>>, vector<1x1x64xf32>
    %12 = vector.shape_cast %11 : vector<1x1x64xf32> to vector<1x64xf32>
    %13 = vector.shape_cast %10#0 : vector<1x64xf32> to vector<1x1x64xf32>
    tpu.vector_store %arg5[%c0_5, %c0_6, %c0_7], %13 {strides = array<i32>} : memref<1x1x64xf32, #tpu.memory_space<vmem>>, vector<1x1x64xf32>,
    %c0_8 = arith.constant 0 : index
    %c0_9 = arith.constant 0 : index
    %c0_10 = arith.constant 0 : index
    %14 = vector.load %arg6[%c0_8, %c0_9, %c0_10] : memref<1x1x64xf32, #tpu.memory_space<vmem>>, vector<1x1x64xf32>
    %15 = vector.shape_cast %14 : vector<1x1x64xf32> to vector<1x64xf32>
    %16 = vector.shape_cast %10#1 : vector<1x64xf32> to vector<1x1x64xf32>
    tpu.vector_store %arg6[%c0_8, %c0_9, %c0_10], %16 {strides = array<i32>} : memref<1x1x64xf32, #tpu.memory_space<vmem>>, vector<1x1x64xf32>,
    return
  }
  func.func @transform_0(%arg0: i32) -> (i32, i32) {
    %c0_i32 = arith.constant 0 : i32
    %c0_i32_0 = arith.constant 0 : i32
    %c0_i32_1 = arith.constant 0 : i32
    return %c0_i32, %c0_i32_0 : i32, i32
  }
  func.func @transform_1(%arg0: i32) -> (i32, i32) {
    %c0_i32 = arith.constant 0 : i32
    %c0_i32_0 = arith.constant 0 : i32
    %c0_i32_1 = arith.constant 0 : i32
    return %c0_i32, %c0_i32_0 : i32, i32
  }
  func.func @transform_2(%arg0: i32) -> (i32, i32, i32) {
    %c0_i32 = arith.constant 0 : i32
    %c0_i32_0 = arith.constant 0 : i32
    %c0_i32_1 = arith.constant 0 : i32
    return %arg0, %c0_i32, %c0_i32_0 : i32, i32, i32
  }
  func.func @transform_3(%arg0: i32) -> (i32, i32) {
    %c0_i32 = arith.constant 0 : i32
    %c0_i32_0 = arith.constant 0 : i32
    return %arg0, %c0_i32 : i32, i32
  }
  func.func @transform_4(%arg0: i32) -> (i32, i32, i32) {
    %c0_i32 = arith.constant 0 : i32
    %c0_i32_0 = arith.constant 0 : i32
    %c0_i32_1 = arith.constant 0 : i32
    return %arg0, %c0_i32, %c0_i32_0 : i32, i32, i32
  }
  func.func @transform_5(%arg0: i32) -> (i32, i32, i32) {
    %c0_i32 = arith.constant 0 : i32
    %c0_i32_0 = arith.constant 0 : i32
    %c0_i32_1 = arith.constant 0 : i32
    return %arg0, %c0_i32, %c0_i32_0 : i32, i32, i32
  }
}

module attributes {stable_mosaic.version = 11 : i64} {
  func.func @_scale_shift_relu_kernel(%arg0: i32, %arg1: memref<704x128xf32, #tpu.memory_space<vmem>>, %arg2: memref<1x128xf32, #tpu.memory_space<vmem>>, %arg3: memref<1x128xf32, #tpu.memory_space<vmem>>, %arg4: memref<704x128xf32, #tpu.memory_space<vmem>>) attributes {dimension_semantics = [#tpu.dimension_semantics<parallel>], iteration_bounds = array<i64: 2>, scalar_prefetch = 0 : i64, scratch_operands = 0 : i64, tpu.core_type = #tpu.core_type<tc>, window_params = [{transform_indices = @transform_0, window_bounds = array<i64: 704, 128>}, {pipeline_mode = #tpu.pipeline_mode<synchronous>, transform_indices = @transform_1, window_bounds = array<i64: 1, 128>}, {pipeline_mode = #tpu.pipeline_mode<synchronous>, transform_indices = @transform_2, window_bounds = array<i64: 1, 128>}, {transform_indices = @transform_3, window_bounds = array<i64: 704, 128>}]} {
    %c0 = arith.constant 0 : index
    %c0_0 = arith.constant 0 : index
    %0 = vector.load %arg1[%c0, %c0_0] : memref<704x128xf32, #tpu.memory_space<vmem>>, vector<704x128xf32>
    %c0_1 = arith.constant 0 : index
    %c0_2 = arith.constant 0 : index
    %1 = vector.load %arg2[%c0_1, %c0_2] : memref<1x128xf32, #tpu.memory_space<vmem>>, vector<1x128xf32>
    %2 = vector.broadcast %1 : vector<1x128xf32> to vector<704x128xf32>
    %3 = arith.mulf %0, %2 : vector<704x128xf32>
    %c0_3 = arith.constant 0 : index
    %c0_4 = arith.constant 0 : index
    %4 = vector.load %arg3[%c0_3, %c0_4] : memref<1x128xf32, #tpu.memory_space<vmem>>, vector<1x128xf32>
    %5 = vector.broadcast %4 : vector<1x128xf32> to vector<704x128xf32>
    %6 = arith.addf %3, %5 : vector<704x128xf32>
    %cst = arith.constant 0.000000e+00 : f32
    %7 = vector.broadcast %cst : f32 to vector<704x128xf32>
    %8 = arith.maximumf %6, %7 : vector<704x128xf32>
    %c0_5 = arith.constant 0 : index
    %c0_6 = arith.constant 0 : index
    %9 = vector.load %arg4[%c0_5, %c0_6] : memref<704x128xf32, #tpu.memory_space<vmem>>, vector<704x128xf32>
    tpu.vector_store %arg4[%c0_5, %c0_6], %8 {strides = array<i32>} : memref<704x128xf32, #tpu.memory_space<vmem>>, vector<704x128xf32>,
    return
  }
  func.func @transform_0(%arg0: i32) -> (i32, i32) {
    %c0_i32 = arith.constant 0 : i32
    %c0_i32_0 = arith.constant 0 : i32
    return %arg0, %c0_i32 : i32, i32
  }
  func.func @transform_1(%arg0: i32) -> (i32, i32) {
    %c0_i32 = arith.constant 0 : i32
    %c0_i32_0 = arith.constant 0 : i32
    %c0_i32_1 = arith.constant 0 : i32
    return %c0_i32, %c0_i32_0 : i32, i32
  }
  func.func @transform_2(%arg0: i32) -> (i32, i32) {
    %c0_i32 = arith.constant 0 : i32
    %c0_i32_0 = arith.constant 0 : i32
    %c0_i32_1 = arith.constant 0 : i32
    return %c0_i32, %c0_i32_0 : i32, i32
  }
  func.func @transform_3(%arg0: i32) -> (i32, i32) {
    %c0_i32 = arith.constant 0 : i32
    %c0_i32_0 = arith.constant 0 : i32
    return %arg0, %c0_i32 : i32, i32
  }
}

module attributes {stable_mosaic.version = 11 : i64} {
  func.func @_conv_bn_kernel(%arg0: i32, %arg1: memref<11360x48xbf16, #tpu.memory_space<vmem>>, %arg2: memref<432x8xf32, #tpu.memory_space<vmem>>, %arg3: memref<14x1x128xf32, #tpu.memory_space<vmem>>, %arg4: memref<1792x8xf32, #tpu.memory_space<vmem>>, %arg5: memref<1x1x8xf32, #tpu.memory_space<vmem>>, %arg6: memref<1x1x8xf32, #tpu.memory_space<vmem>>) attributes {dimension_semantics = [#tpu.dimension_semantics<parallel>], iteration_bounds = array<i64: 6>, scalar_prefetch = 0 : i64, scratch_operands = 0 : i64, tpu.core_type = #tpu.core_type<tc>, window_params = [{pipeline_mode = #tpu.pipeline_mode<synchronous>, transform_indices = @transform_0, window_bounds = array<i64: 11360, 48>}, {pipeline_mode = #tpu.pipeline_mode<synchronous>, transform_indices = @transform_1, window_bounds = array<i64: 432, 8>}, {transform_indices = @transform_2, window_bounds = array<i64: 14, 1, 128>}, {transform_indices = @transform_3, window_bounds = array<i64: 1792, 8>}, {transform_indices = @transform_4, window_bounds = array<i64: 1, 1, 8>}, {transform_indices = @transform_5, window_bounds = array<i64: 1, 1, 8>}]} {
    %c0 = arith.constant 0 : index
    %c0_0 = arith.constant 0 : index
    %0 = vector.load %arg2[%c0, %c0_0] : memref<432x8xf32, #tpu.memory_space<vmem>>, vector<48x8xf32>
    %1 = arith.truncf %0 : vector<48x8xf32> to vector<48x8xbf16>
    %c48 = arith.constant 48 : index
    %c0_1 = arith.constant 0 : index
    %2 = vector.load %arg2[%c48, %c0_1] : memref<432x8xf32, #tpu.memory_space<vmem>>, vector<48x8xf32>
    %3 = arith.truncf %2 : vector<48x8xf32> to vector<48x8xbf16>
    %c96 = arith.constant 96 : index
    %c0_2 = arith.constant 0 : index
    %4 = vector.load %arg2[%c96, %c0_2] : memref<432x8xf32, #tpu.memory_space<vmem>>, vector<48x8xf32>
    %5 = arith.truncf %4 : vector<48x8xf32> to vector<48x8xbf16>
    %c144 = arith.constant 144 : index
    %c0_3 = arith.constant 0 : index
    %6 = vector.load %arg2[%c144, %c0_3] : memref<432x8xf32, #tpu.memory_space<vmem>>, vector<48x8xf32>
    %7 = arith.truncf %6 : vector<48x8xf32> to vector<48x8xbf16>
    %c192 = arith.constant 192 : index
    %c0_4 = arith.constant 0 : index
    %8 = vector.load %arg2[%c192, %c0_4] : memref<432x8xf32, #tpu.memory_space<vmem>>, vector<48x8xf32>
    %9 = arith.truncf %8 : vector<48x8xf32> to vector<48x8xbf16>
    %c240 = arith.constant 240 : index
    %c0_5 = arith.constant 0 : index
    %10 = vector.load %arg2[%c240, %c0_5] : memref<432x8xf32, #tpu.memory_space<vmem>>, vector<48x8xf32>
    %11 = arith.truncf %10 : vector<48x8xf32> to vector<48x8xbf16>
    %c288 = arith.constant 288 : index
    %c0_6 = arith.constant 0 : index
    %12 = vector.load %arg2[%c288, %c0_6] : memref<432x8xf32, #tpu.memory_space<vmem>>, vector<48x8xf32>
    %13 = arith.truncf %12 : vector<48x8xf32> to vector<48x8xbf16>
    %c336 = arith.constant 336 : index
    %c0_7 = arith.constant 0 : index
    %14 = vector.load %arg2[%c336, %c0_7] : memref<432x8xf32, #tpu.memory_space<vmem>>, vector<48x8xf32>
    %15 = arith.truncf %14 : vector<48x8xf32> to vector<48x8xbf16>
    %c384 = arith.constant 384 : index
    %c0_8 = arith.constant 0 : index
    %16 = vector.load %arg2[%c384, %c0_8] : memref<432x8xf32, #tpu.memory_space<vmem>>, vector<48x8xf32>
    %17 = arith.truncf %16 : vector<48x8xf32> to vector<48x8xbf16>
    %cst = arith.constant 0.000000e+00 : f32
    %18 = vector.broadcast %cst : f32 to vector<1x8xf32>
    %c0_i32 = arith.constant 0 : i32
    %c14_i32 = arith.constant 14 : i32
    %19 = arith.addi %c0_i32, %c14_i32 : i32
    %c1_i32 = arith.constant 1 : i32
    %20:2 = scf.for %arg7 = %c0_i32 to %19 step %c1_i32 iter_args(%arg8 = %18, %arg9 = %18) -> (vector<1x8xf32>, vector<1x8xf32>)  : i32 {
      %c1792_i32 = arith.constant 1792 : i32
      %27 = arith.muli %arg0, %c1792_i32 : i32
      %c128_i32 = arith.constant 128 : i32
      %28 = arith.muli %arg7, %c128_i32 : i32
      %29 = arith.addi %27, %28 : i32
      %30 = tpu.assume_multiple %29, 128 : i32
      %cst_16 = arith.constant 0.000000e+00 : f32
      %31 = vector.broadcast %cst_16 : f32 to vector<128x8xf32>
      %c0_i32_17 = arith.constant 0 : i32
      %32 = arith.addi %30, %c0_i32_17 : i32
      %33 = tpu.assume_multiple %32, 16 : i32
      %34 = arith.index_cast %33 : i32 to index
      %c0_18 = arith.constant 0 : index
      %35 = vector.load %arg1[%34, %c0_18] : memref<11360x48xbf16, #tpu.memory_space<vmem>>, vector<128x48xbf16>
      %cst_19 = arith.constant dense<0.000000e+00> : vector<128x8xf32>
      %36 = tpu.matmul %35, %1, %cst_19 {dimension_numbers = #tpu.dot_dimension_numbers<[1], [0], [0], [1], [0, 0, 1, 1], [], []>} : vector<128x48xbf16>, vector<48x8xbf16>, vector<128x8xf32> -> vector<128x8xf32>
      %37 = arith.addf %31, %36 : vector<128x8xf32>
      %c16_i32 = arith.constant 16 : i32
      %38 = arith.addi %30, %c16_i32 : i32
      %39 = tpu.assume_multiple %38, 16 : i32
      %40 = arith.index_cast %39 : i32 to index
      %c0_20 = arith.constant 0 : index
      %41 = vector.load %arg1[%40, %c0_20] : memref<11360x48xbf16, #tpu.memory_space<vmem>>, vector<128x48xbf16>
      %cst_21 = arith.constant dense<0.000000e+00> : vector<128x8xf32>
      %42 = tpu.matmul %41, %3, %cst_21 {dimension_numbers = #tpu.dot_dimension_numbers<[1], [0], [0], [1], [0, 0, 1, 1], [], []>} : vector<128x48xbf16>, vector<48x8xbf16>, vector<128x8xf32> -> vector<128x8xf32>
      %43 = arith.addf %37, %42 : vector<128x8xf32>
      %c32_i32 = arith.constant 32 : i32
      %44 = arith.addi %30, %c32_i32 : i32
      %45 = tpu.assume_multiple %44, 16 : i32
      %46 = arith.index_cast %45 : i32 to index
      %c0_22 = arith.constant 0 : index
      %47 = vector.load %arg1[%46, %c0_22] : memref<11360x48xbf16, #tpu.memory_space<vmem>>, vector<128x48xbf16>
      %cst_23 = arith.constant dense<0.000000e+00> : vector<128x8xf32>
      %48 = tpu.matmul %47, %5, %cst_23 {dimension_numbers = #tpu.dot_dimension_numbers<[1], [0], [0], [1], [0, 0, 1, 1], [], []>} : vector<128x48xbf16>, vector<48x8xbf16>, vector<128x8xf32> -> vector<128x8xf32>
      %49 = arith.addf %43, %48 : vector<128x8xf32>
      %c288_i32 = arith.constant 288 : i32
      %50 = arith.addi %30, %c288_i32 : i32
      %51 = tpu.assume_multiple %50, 16 : i32
      %52 = arith.index_cast %51 : i32 to index
      %c0_24 = arith.constant 0 : index
      %53 = vector.load %arg1[%52, %c0_24] : memref<11360x48xbf16, #tpu.memory_space<vmem>>, vector<128x48xbf16>
      %cst_25 = arith.constant dense<0.000000e+00> : vector<128x8xf32>
      %54 = tpu.matmul %53, %7, %cst_25 {dimension_numbers = #tpu.dot_dimension_numbers<[1], [0], [0], [1], [0, 0, 1, 1], [], []>} : vector<128x48xbf16>, vector<48x8xbf16>, vector<128x8xf32> -> vector<128x8xf32>
      %55 = arith.addf %49, %54 : vector<128x8xf32>
      %c304_i32 = arith.constant 304 : i32
      %56 = arith.addi %30, %c304_i32 : i32
      %57 = tpu.assume_multiple %56, 16 : i32
      %58 = arith.index_cast %57 : i32 to index
      %c0_26 = arith.constant 0 : index
      %59 = vector.load %arg1[%58, %c0_26] : memref<11360x48xbf16, #tpu.memory_space<vmem>>, vector<128x48xbf16>
      %cst_27 = arith.constant dense<0.000000e+00> : vector<128x8xf32>
      %60 = tpu.matmul %59, %9, %cst_27 {dimension_numbers = #tpu.dot_dimension_numbers<[1], [0], [0], [1], [0, 0, 1, 1], [], []>} : vector<128x48xbf16>, vector<48x8xbf16>, vector<128x8xf32> -> vector<128x8xf32>
      %61 = arith.addf %55, %60 : vector<128x8xf32>
      %c320_i32 = arith.constant 320 : i32
      %62 = arith.addi %30, %c320_i32 : i32
      %63 = tpu.assume_multiple %62, 16 : i32
      %64 = arith.index_cast %63 : i32 to index
      %c0_28 = arith.constant 0 : index
      %65 = vector.load %arg1[%64, %c0_28] : memref<11360x48xbf16, #tpu.memory_space<vmem>>, vector<128x48xbf16>
      %cst_29 = arith.constant dense<0.000000e+00> : vector<128x8xf32>
      %66 = tpu.matmul %65, %11, %cst_29 {dimension_numbers = #tpu.dot_dimension_numbers<[1], [0], [0], [1], [0, 0, 1, 1], [], []>} : vector<128x48xbf16>, vector<48x8xbf16>, vector<128x8xf32> -> vector<128x8xf32>
      %67 = arith.addf %61, %66 : vector<128x8xf32>
      %c576_i32 = arith.constant 576 : i32
      %68 = arith.addi %30, %c576_i32 : i32
      %69 = tpu.assume_multiple %68, 16 : i32
      %70 = arith.index_cast %69 : i32 to index
      %c0_30 = arith.constant 0 : index
      %71 = vector.load %arg1[%70, %c0_30] : memref<11360x48xbf16, #tpu.memory_space<vmem>>, vector<128x48xbf16>
      %cst_31 = arith.constant dense<0.000000e+00> : vector<128x8xf32>
      %72 = tpu.matmul %71, %13, %cst_31 {dimension_numbers = #tpu.dot_dimension_numbers<[1], [0], [0], [1], [0, 0, 1, 1], [], []>} : vector<128x48xbf16>, vector<48x8xbf16>, vector<128x8xf32> -> vector<128x8xf32>
      %73 = arith.addf %67, %72 : vector<128x8xf32>
      %c592_i32 = arith.constant 592 : i32
      %74 = arith.addi %30, %c592_i32 : i32
      %75 = tpu.assume_multiple %74, 16 : i32
      %76 = arith.index_cast %75 : i32 to index
      %c0_32 = arith.constant 0 : index
      %77 = vector.load %arg1[%76, %c0_32] : memref<11360x48xbf16, #tpu.memory_space<vmem>>, vector<128x48xbf16>
      %cst_33 = arith.constant dense<0.000000e+00> : vector<128x8xf32>
      %78 = tpu.matmul %77, %15, %cst_33 {dimension_numbers = #tpu.dot_dimension_numbers<[1], [0], [0], [1], [0, 0, 1, 1], [], []>} : vector<128x48xbf16>, vector<48x8xbf16>, vector<128x8xf32> -> vector<128x8xf32>
      %79 = arith.addf %73, %78 : vector<128x8xf32>
      %c608_i32 = arith.constant 608 : i32
      %80 = arith.addi %30, %c608_i32 : i32
      %81 = tpu.assume_multiple %80, 16 : i32
      %82 = arith.index_cast %81 : i32 to index
      %c0_34 = arith.constant 0 : index
      %83 = vector.load %arg1[%82, %c0_34] : memref<11360x48xbf16, #tpu.memory_space<vmem>>, vector<128x48xbf16>
      %cst_35 = arith.constant dense<0.000000e+00> : vector<128x8xf32>
      %84 = tpu.matmul %83, %17, %cst_35 {dimension_numbers = #tpu.dot_dimension_numbers<[1], [0], [0], [1], [0, 0, 1, 1], [], []>} : vector<128x48xbf16>, vector<48x8xbf16>, vector<128x8xf32> -> vector<128x8xf32>
      %85 = arith.addf %79, %84 : vector<128x8xf32>
      %c128_i32_36 = arith.constant 128 : i32
      %86 = arith.muli %arg7, %c128_i32_36 : i32
      %87 = tpu.assume_multiple %86, 128 : i32
      %88 = arith.index_cast %87 : i32 to index
      %c0_37 = arith.constant 0 : index
      %89 = vector.load %arg4[%88, %c0_37] : memref<1792x8xf32, #tpu.memory_space<vmem>>, vector<128x8xf32>
      tpu.vector_store %arg4[%88, %c0_37], %85 {strides = array<i32>} : memref<1792x8xf32, #tpu.memory_space<vmem>>, vector<128x8xf32>,
      %90 = arith.index_cast %arg7 : i32 to index
      %c0_38 = arith.constant 0 : index
      %c0_39 = arith.constant 0 : index
      %91 = vector.load %arg3[%90, %c0_38, %c0_39] : memref<14x1x128xf32, #tpu.memory_space<vmem>>, vector<1x1x128xf32>
      %92 = vector.shape_cast %91 : vector<1x1x128xf32> to vector<1x128xf32>
      %cst_40 = arith.constant dense<0.000000e+00> : vector<1x8xf32>
      %93 = tpu.matmul %92, %85, %cst_40 {dimension_numbers = #tpu.dot_dimension_numbers<[1], [0], [0], [1], [0, 0, 1, 1], [], []>} : vector<1x128xf32>, vector<128x8xf32>, vector<1x8xf32> -> vector<1x8xf32>
      %94 = arith.addf %arg8, %93 : vector<1x8xf32>
      %95 = arith.mulf %85, %85 : vector<128x8xf32>
      %cst_41 = arith.constant dense<0.000000e+00> : vector<1x8xf32>
      %96 = tpu.matmul %92, %95, %cst_41 {dimension_numbers = #tpu.dot_dimension_numbers<[1], [0], [0], [1], [0, 0, 1, 1], [], []>} : vector<1x128xf32>, vector<128x8xf32>, vector<1x8xf32> -> vector<1x8xf32>
      %97 = arith.addf %arg9, %96 : vector<1x8xf32>
      scf.yield %94, %97 : vector<1x8xf32>, vector<1x8xf32>
    }
    %c14_i32_9 = arith.constant 14 : i32
    %c0_10 = arith.constant 0 : index
    %c0_11 = arith.constant 0 : index
    %c0_12 = arith.constant 0 : index
    %21 = vector.load %arg5[%c0_10, %c0_11, %c0_12] : memref<1x1x8xf32, #tpu.memory_space<vmem>>, vector<1x1x8xf32>
    %22 = vector.shape_cast %21 : vector<1x1x8xf32> to vector<1x8xf32>
    %23 = vector.shape_cast %20#0 : vector<1x8xf32> to vector<1x1x8xf32>
    tpu.vector_store %arg5[%c0_10, %c0_11, %c0_12], %23 {strides = array<i32>} : memref<1x1x8xf32, #tpu.memory_space<vmem>>, vector<1x1x8xf32>,
    %c0_13 = arith.constant 0 : index
    %c0_14 = arith.constant 0 : index
    %c0_15 = arith.constant 0 : index
    %24 = vector.load %arg6[%c0_13, %c0_14, %c0_15] : memref<1x1x8xf32, #tpu.memory_space<vmem>>, vector<1x1x8xf32>
    %25 = vector.shape_cast %24 : vector<1x1x8xf32> to vector<1x8xf32>
    %26 = vector.shape_cast %20#1 : vector<1x8xf32> to vector<1x1x8xf32>
    tpu.vector_store %arg6[%c0_13, %c0_14, %c0_15], %26 {strides = array<i32>} : memref<1x1x8xf32, #tpu.memory_space<vmem>>, vector<1x1x8xf32>,
    return
  }
  func.func @transform_0(%arg0: i32) -> (i32, i32) {
    %c0_i32 = arith.constant 0 : i32
    %c0_i32_0 = arith.constant 0 : i32
    %c0_i32_1 = arith.constant 0 : i32
    return %c0_i32, %c0_i32_0 : i32, i32
  }
  func.func @transform_1(%arg0: i32) -> (i32, i32) {
    %c0_i32 = arith.constant 0 : i32
    %c0_i32_0 = arith.constant 0 : i32
    %c0_i32_1 = arith.constant 0 : i32
    return %c0_i32, %c0_i32_0 : i32, i32
  }
  func.func @transform_2(%arg0: i32) -> (i32, i32, i32) {
    %c0_i32 = arith.constant 0 : i32
    %c0_i32_0 = arith.constant 0 : i32
    %c0_i32_1 = arith.constant 0 : i32
    return %arg0, %c0_i32, %c0_i32_0 : i32, i32, i32
  }
  func.func @transform_3(%arg0: i32) -> (i32, i32) {
    %c0_i32 = arith.constant 0 : i32
    %c0_i32_0 = arith.constant 0 : i32
    return %arg0, %c0_i32 : i32, i32
  }
  func.func @transform_4(%arg0: i32) -> (i32, i32, i32) {
    %c0_i32 = arith.constant 0 : i32
    %c0_i32_0 = arith.constant 0 : i32
    %c0_i32_1 = arith.constant 0 : i32
    return %arg0, %c0_i32, %c0_i32_0 : i32, i32, i32
  }
  func.func @transform_5(%arg0: i32) -> (i32, i32, i32) {
    %c0_i32 = arith.constant 0 : i32
    %c0_i32_0 = arith.constant 0 : i32
    %c0_i32_1 = arith.constant 0 : i32
    return %arg0, %c0_i32, %c0_i32_0 : i32, i32, i32
  }
}

module attributes {stable_mosaic.version = 11 : i64} {
  func.func @_scale_shift_relu_kernel(%arg0: i32, %arg1: memref<336x128xf32, #tpu.memory_space<vmem>>, %arg2: memref<1x128xf32, #tpu.memory_space<vmem>>, %arg3: memref<1x128xf32, #tpu.memory_space<vmem>>, %arg4: memref<336x128xf32, #tpu.memory_space<vmem>>) attributes {dimension_semantics = [#tpu.dimension_semantics<parallel>], iteration_bounds = array<i64: 2>, scalar_prefetch = 0 : i64, scratch_operands = 0 : i64, tpu.core_type = #tpu.core_type<tc>, window_params = [{transform_indices = @transform_0, window_bounds = array<i64: 336, 128>}, {pipeline_mode = #tpu.pipeline_mode<synchronous>, transform_indices = @transform_1, window_bounds = array<i64: 1, 128>}, {pipeline_mode = #tpu.pipeline_mode<synchronous>, transform_indices = @transform_2, window_bounds = array<i64: 1, 128>}, {transform_indices = @transform_3, window_bounds = array<i64: 336, 128>}]} {
    %c0 = arith.constant 0 : index
    %c0_0 = arith.constant 0 : index
    %0 = vector.load %arg1[%c0, %c0_0] : memref<336x128xf32, #tpu.memory_space<vmem>>, vector<336x128xf32>
    %c0_1 = arith.constant 0 : index
    %c0_2 = arith.constant 0 : index
    %1 = vector.load %arg2[%c0_1, %c0_2] : memref<1x128xf32, #tpu.memory_space<vmem>>, vector<1x128xf32>
    %2 = vector.broadcast %1 : vector<1x128xf32> to vector<336x128xf32>
    %3 = arith.mulf %0, %2 : vector<336x128xf32>
    %c0_3 = arith.constant 0 : index
    %c0_4 = arith.constant 0 : index
    %4 = vector.load %arg3[%c0_3, %c0_4] : memref<1x128xf32, #tpu.memory_space<vmem>>, vector<1x128xf32>
    %5 = vector.broadcast %4 : vector<1x128xf32> to vector<336x128xf32>
    %6 = arith.addf %3, %5 : vector<336x128xf32>
    %cst = arith.constant 0.000000e+00 : f32
    %7 = vector.broadcast %cst : f32 to vector<336x128xf32>
    %8 = arith.maximumf %6, %7 : vector<336x128xf32>
    %c0_5 = arith.constant 0 : index
    %c0_6 = arith.constant 0 : index
    %9 = vector.load %arg4[%c0_5, %c0_6] : memref<336x128xf32, #tpu.memory_space<vmem>>, vector<336x128xf32>
    tpu.vector_store %arg4[%c0_5, %c0_6], %8 {strides = array<i32>} : memref<336x128xf32, #tpu.memory_space<vmem>>, vector<336x128xf32>,
    return
  }
  func.func @transform_0(%arg0: i32) -> (i32, i32) {
    %c0_i32 = arith.constant 0 : i32
    %c0_i32_0 = arith.constant 0 : i32
    return %arg0, %c0_i32 : i32, i32
  }
  func.func @transform_1(%arg0: i32) -> (i32, i32) {
    %c0_i32 = arith.constant 0 : i32
    %c0_i32_0 = arith.constant 0 : i32
    %c0_i32_1 = arith.constant 0 : i32
    return %c0_i32, %c0_i32_0 : i32, i32
  }
  func.func @transform_2(%arg0: i32) -> (i32, i32) {
    %c0_i32 = arith.constant 0 : i32
    %c0_i32_0 = arith.constant 0 : i32
    %c0_i32_1 = arith.constant 0 : i32
    return %c0_i32, %c0_i32_0 : i32, i32
  }
  func.func @transform_3(%arg0: i32) -> (i32, i32) {
    %c0_i32 = arith.constant 0 : i32
    %c0_i32_0 = arith.constant 0 : i32
    return %arg0, %c0_i32 : i32, i32
  }
}

module attributes {stable_mosaic.version = 11 : i64} {
  func.func @_conv_bn_kernel(%arg0: i32, %arg1: memref<11360x24xbf16, #tpu.memory_space<vmem>>, %arg2: memref<216x8xf32, #tpu.memory_space<vmem>>, %arg3: memref<14x1x128xf32, #tpu.memory_space<vmem>>, %arg4: memref<1792x8xf32, #tpu.memory_space<vmem>>, %arg5: memref<1x1x8xf32, #tpu.memory_space<vmem>>, %arg6: memref<1x1x8xf32, #tpu.memory_space<vmem>>) attributes {dimension_semantics = [#tpu.dimension_semantics<parallel>], iteration_bounds = array<i64: 6>, scalar_prefetch = 0 : i64, scratch_operands = 0 : i64, tpu.core_type = #tpu.core_type<tc>, window_params = [{pipeline_mode = #tpu.pipeline_mode<synchronous>, transform_indices = @transform_0, window_bounds = array<i64: 11360, 24>}, {pipeline_mode = #tpu.pipeline_mode<synchronous>, transform_indices = @transform_1, window_bounds = array<i64: 216, 8>}, {transform_indices = @transform_2, window_bounds = array<i64: 14, 1, 128>}, {transform_indices = @transform_3, window_bounds = array<i64: 1792, 8>}, {transform_indices = @transform_4, window_bounds = array<i64: 1, 1, 8>}, {transform_indices = @transform_5, window_bounds = array<i64: 1, 1, 8>}]} {
    %c0 = arith.constant 0 : index
    %c0_0 = arith.constant 0 : index
    %0 = vector.load %arg2[%c0, %c0_0] : memref<216x8xf32, #tpu.memory_space<vmem>>, vector<24x8xf32>
    %1 = arith.truncf %0 : vector<24x8xf32> to vector<24x8xbf16>
    %c24 = arith.constant 24 : index
    %c0_1 = arith.constant 0 : index
    %2 = vector.load %arg2[%c24, %c0_1] : memref<216x8xf32, #tpu.memory_space<vmem>>, vector<24x8xf32>
    %3 = arith.truncf %2 : vector<24x8xf32> to vector<24x8xbf16>
    %c48 = arith.constant 48 : index
    %c0_2 = arith.constant 0 : index
    %4 = vector.load %arg2[%c48, %c0_2] : memref<216x8xf32, #tpu.memory_space<vmem>>, vector<24x8xf32>
    %5 = arith.truncf %4 : vector<24x8xf32> to vector<24x8xbf16>
    %c72 = arith.constant 72 : index
    %c0_3 = arith.constant 0 : index
    %6 = vector.load %arg2[%c72, %c0_3] : memref<216x8xf32, #tpu.memory_space<vmem>>, vector<24x8xf32>
    %7 = arith.truncf %6 : vector<24x8xf32> to vector<24x8xbf16>
    %c96 = arith.constant 96 : index
    %c0_4 = arith.constant 0 : index
    %8 = vector.load %arg2[%c96, %c0_4] : memref<216x8xf32, #tpu.memory_space<vmem>>, vector<24x8xf32>
    %9 = arith.truncf %8 : vector<24x8xf32> to vector<24x8xbf16>
    %c120 = arith.constant 120 : index
    %c0_5 = arith.constant 0 : index
    %10 = vector.load %arg2[%c120, %c0_5] : memref<216x8xf32, #tpu.memory_space<vmem>>, vector<24x8xf32>
    %11 = arith.truncf %10 : vector<24x8xf32> to vector<24x8xbf16>
    %c144 = arith.constant 144 : index
    %c0_6 = arith.constant 0 : index
    %12 = vector.load %arg2[%c144, %c0_6] : memref<216x8xf32, #tpu.memory_space<vmem>>, vector<24x8xf32>
    %13 = arith.truncf %12 : vector<24x8xf32> to vector<24x8xbf16>
    %c168 = arith.constant 168 : index
    %c0_7 = arith.constant 0 : index
    %14 = vector.load %arg2[%c168, %c0_7] : memref<216x8xf32, #tpu.memory_space<vmem>>, vector<24x8xf32>
    %15 = arith.truncf %14 : vector<24x8xf32> to vector<24x8xbf16>
    %c192 = arith.constant 192 : index
    %c0_8 = arith.constant 0 : index
    %16 = vector.load %arg2[%c192, %c0_8] : memref<216x8xf32, #tpu.memory_space<vmem>>, vector<24x8xf32>
    %17 = arith.truncf %16 : vector<24x8xf32> to vector<24x8xbf16>
    %cst = arith.constant 0.000000e+00 : f32
    %18 = vector.broadcast %cst : f32 to vector<1x8xf32>
    %c0_i32 = arith.constant 0 : i32
    %c14_i32 = arith.constant 14 : i32
    %19 = arith.addi %c0_i32, %c14_i32 : i32
    %c1_i32 = arith.constant 1 : i32
    %20:2 = scf.for %arg7 = %c0_i32 to %19 step %c1_i32 iter_args(%arg8 = %18, %arg9 = %18) -> (vector<1x8xf32>, vector<1x8xf32>)  : i32 {
      %c1792_i32 = arith.constant 1792 : i32
      %27 = arith.muli %arg0, %c1792_i32 : i32
      %c128_i32 = arith.constant 128 : i32
      %28 = arith.muli %arg7, %c128_i32 : i32
      %29 = arith.addi %27, %28 : i32
      %30 = tpu.assume_multiple %29, 128 : i32
      %cst_16 = arith.constant 0.000000e+00 : f32
      %31 = vector.broadcast %cst_16 : f32 to vector<128x8xf32>
      %c0_i32_17 = arith.constant 0 : i32
      %32 = arith.addi %30, %c0_i32_17 : i32
      %33 = tpu.assume_multiple %32, 16 : i32
      %34 = arith.index_cast %33 : i32 to index
      %c0_18 = arith.constant 0 : index
      %35 = vector.load %arg1[%34, %c0_18] : memref<11360x24xbf16, #tpu.memory_space<vmem>>, vector<128x24xbf16>
      %cst_19 = arith.constant dense<0.000000e+00> : vector<128x8xf32>
      %36 = tpu.matmul %35, %1, %cst_19 {dimension_numbers = #tpu.dot_dimension_numbers<[1], [0], [0], [1], [0, 0, 1, 1], [], []>} : vector<128x24xbf16>, vector<24x8xbf16>, vector<128x8xf32> -> vector<128x8xf32>
      %37 = arith.addf %31, %36 : vector<128x8xf32>
      %c16_i32 = arith.constant 16 : i32
      %38 = arith.addi %30, %c16_i32 : i32
      %39 = tpu.assume_multiple %38, 16 : i32
      %40 = arith.index_cast %39 : i32 to index
      %c0_20 = arith.constant 0 : index
      %41 = vector.load %arg1[%40, %c0_20] : memref<11360x24xbf16, #tpu.memory_space<vmem>>, vector<128x24xbf16>
      %cst_21 = arith.constant dense<0.000000e+00> : vector<128x8xf32>
      %42 = tpu.matmul %41, %3, %cst_21 {dimension_numbers = #tpu.dot_dimension_numbers<[1], [0], [0], [1], [0, 0, 1, 1], [], []>} : vector<128x24xbf16>, vector<24x8xbf16>, vector<128x8xf32> -> vector<128x8xf32>
      %43 = arith.addf %37, %42 : vector<128x8xf32>
      %c32_i32 = arith.constant 32 : i32
      %44 = arith.addi %30, %c32_i32 : i32
      %45 = tpu.assume_multiple %44, 16 : i32
      %46 = arith.index_cast %45 : i32 to index
      %c0_22 = arith.constant 0 : index
      %47 = vector.load %arg1[%46, %c0_22] : memref<11360x24xbf16, #tpu.memory_space<vmem>>, vector<128x24xbf16>
      %cst_23 = arith.constant dense<0.000000e+00> : vector<128x8xf32>
      %48 = tpu.matmul %47, %5, %cst_23 {dimension_numbers = #tpu.dot_dimension_numbers<[1], [0], [0], [1], [0, 0, 1, 1], [], []>} : vector<128x24xbf16>, vector<24x8xbf16>, vector<128x8xf32> -> vector<128x8xf32>
      %49 = arith.addf %43, %48 : vector<128x8xf32>
      %c288_i32 = arith.constant 288 : i32
      %50 = arith.addi %30, %c288_i32 : i32
      %51 = tpu.assume_multiple %50, 16 : i32
      %52 = arith.index_cast %51 : i32 to index
      %c0_24 = arith.constant 0 : index
      %53 = vector.load %arg1[%52, %c0_24] : memref<11360x24xbf16, #tpu.memory_space<vmem>>, vector<128x24xbf16>
      %cst_25 = arith.constant dense<0.000000e+00> : vector<128x8xf32>
      %54 = tpu.matmul %53, %7, %cst_25 {dimension_numbers = #tpu.dot_dimension_numbers<[1], [0], [0], [1], [0, 0, 1, 1], [], []>} : vector<128x24xbf16>, vector<24x8xbf16>, vector<128x8xf32> -> vector<128x8xf32>
      %55 = arith.addf %49, %54 : vector<128x8xf32>
      %c304_i32 = arith.constant 304 : i32
      %56 = arith.addi %30, %c304_i32 : i32
      %57 = tpu.assume_multiple %56, 16 : i32
      %58 = arith.index_cast %57 : i32 to index
      %c0_26 = arith.constant 0 : index
      %59 = vector.load %arg1[%58, %c0_26] : memref<11360x24xbf16, #tpu.memory_space<vmem>>, vector<128x24xbf16>
      %cst_27 = arith.constant dense<0.000000e+00> : vector<128x8xf32>
      %60 = tpu.matmul %59, %9, %cst_27 {dimension_numbers = #tpu.dot_dimension_numbers<[1], [0], [0], [1], [0, 0, 1, 1], [], []>} : vector<128x24xbf16>, vector<24x8xbf16>, vector<128x8xf32> -> vector<128x8xf32>
      %61 = arith.addf %55, %60 : vector<128x8xf32>
      %c320_i32 = arith.constant 320 : i32
      %62 = arith.addi %30, %c320_i32 : i32
      %63 = tpu.assume_multiple %62, 16 : i32
      %64 = arith.index_cast %63 : i32 to index
      %c0_28 = arith.constant 0 : index
      %65 = vector.load %arg1[%64, %c0_28] : memref<11360x24xbf16, #tpu.memory_space<vmem>>, vector<128x24xbf16>
      %cst_29 = arith.constant dense<0.000000e+00> : vector<128x8xf32>
      %66 = tpu.matmul %65, %11, %cst_29 {dimension_numbers = #tpu.dot_dimension_numbers<[1], [0], [0], [1], [0, 0, 1, 1], [], []>} : vector<128x24xbf16>, vector<24x8xbf16>, vector<128x8xf32> -> vector<128x8xf32>
      %67 = arith.addf %61, %66 : vector<128x8xf32>
      %c576_i32 = arith.constant 576 : i32
      %68 = arith.addi %30, %c576_i32 : i32
      %69 = tpu.assume_multiple %68, 16 : i32
      %70 = arith.index_cast %69 : i32 to index
      %c0_30 = arith.constant 0 : index
      %71 = vector.load %arg1[%70, %c0_30] : memref<11360x24xbf16, #tpu.memory_space<vmem>>, vector<128x24xbf16>
      %cst_31 = arith.constant dense<0.000000e+00> : vector<128x8xf32>
      %72 = tpu.matmul %71, %13, %cst_31 {dimension_numbers = #tpu.dot_dimension_numbers<[1], [0], [0], [1], [0, 0, 1, 1], [], []>} : vector<128x24xbf16>, vector<24x8xbf16>, vector<128x8xf32> -> vector<128x8xf32>
      %73 = arith.addf %67, %72 : vector<128x8xf32>
      %c592_i32 = arith.constant 592 : i32
      %74 = arith.addi %30, %c592_i32 : i32
      %75 = tpu.assume_multiple %74, 16 : i32
      %76 = arith.index_cast %75 : i32 to index
      %c0_32 = arith.constant 0 : index
      %77 = vector.load %arg1[%76, %c0_32] : memref<11360x24xbf16, #tpu.memory_space<vmem>>, vector<128x24xbf16>
      %cst_33 = arith.constant dense<0.000000e+00> : vector<128x8xf32>
      %78 = tpu.matmul %77, %15, %cst_33 {dimension_numbers = #tpu.dot_dimension_numbers<[1], [0], [0], [1], [0, 0, 1, 1], [], []>} : vector<128x24xbf16>, vector<24x8xbf16>, vector<128x8xf32> -> vector<128x8xf32>
      %79 = arith.addf %73, %78 : vector<128x8xf32>
      %c608_i32 = arith.constant 608 : i32
      %80 = arith.addi %30, %c608_i32 : i32
      %81 = tpu.assume_multiple %80, 16 : i32
      %82 = arith.index_cast %81 : i32 to index
      %c0_34 = arith.constant 0 : index
      %83 = vector.load %arg1[%82, %c0_34] : memref<11360x24xbf16, #tpu.memory_space<vmem>>, vector<128x24xbf16>
      %cst_35 = arith.constant dense<0.000000e+00> : vector<128x8xf32>
      %84 = tpu.matmul %83, %17, %cst_35 {dimension_numbers = #tpu.dot_dimension_numbers<[1], [0], [0], [1], [0, 0, 1, 1], [], []>} : vector<128x24xbf16>, vector<24x8xbf16>, vector<128x8xf32> -> vector<128x8xf32>
      %85 = arith.addf %79, %84 : vector<128x8xf32>
      %c128_i32_36 = arith.constant 128 : i32
      %86 = arith.muli %arg7, %c128_i32_36 : i32
      %87 = tpu.assume_multiple %86, 128 : i32
      %88 = arith.index_cast %87 : i32 to index
      %c0_37 = arith.constant 0 : index
      %89 = vector.load %arg4[%88, %c0_37] : memref<1792x8xf32, #tpu.memory_space<vmem>>, vector<128x8xf32>
      tpu.vector_store %arg4[%88, %c0_37], %85 {strides = array<i32>} : memref<1792x8xf32, #tpu.memory_space<vmem>>, vector<128x8xf32>,
      %90 = arith.index_cast %arg7 : i32 to index
      %c0_38 = arith.constant 0 : index
      %c0_39 = arith.constant 0 : index
      %91 = vector.load %arg3[%90, %c0_38, %c0_39] : memref<14x1x128xf32, #tpu.memory_space<vmem>>, vector<1x1x128xf32>
      %92 = vector.shape_cast %91 : vector<1x1x128xf32> to vector<1x128xf32>
      %cst_40 = arith.constant dense<0.000000e+00> : vector<1x8xf32>
      %93 = tpu.matmul %92, %85, %cst_40 {dimension_numbers = #tpu.dot_dimension_numbers<[1], [0], [0], [1], [0, 0, 1, 1], [], []>} : vector<1x128xf32>, vector<128x8xf32>, vector<1x8xf32> -> vector<1x8xf32>
      %94 = arith.addf %arg8, %93 : vector<1x8xf32>
      %95 = arith.mulf %85, %85 : vector<128x8xf32>
      %cst_41 = arith.constant dense<0.000000e+00> : vector<1x8xf32>
      %96 = tpu.matmul %92, %95, %cst_41 {dimension_numbers = #tpu.dot_dimension_numbers<[1], [0], [0], [1], [0, 0, 1, 1], [], []>} : vector<1x128xf32>, vector<128x8xf32>, vector<1x8xf32> -> vector<1x8xf32>
      %97 = arith.addf %arg9, %96 : vector<1x8xf32>
      scf.yield %94, %97 : vector<1x8xf32>, vector<1x8xf32>
    }
    %c14_i32_9 = arith.constant 14 : i32
    %c0_10 = arith.constant 0 : index
    %c0_11 = arith.constant 0 : index
    %c0_12 = arith.constant 0 : index
    %21 = vector.load %arg5[%c0_10, %c0_11, %c0_12] : memref<1x1x8xf32, #tpu.memory_space<vmem>>, vector<1x1x8xf32>
    %22 = vector.shape_cast %21 : vector<1x1x8xf32> to vector<1x8xf32>
    %23 = vector.shape_cast %20#0 : vector<1x8xf32> to vector<1x1x8xf32>
    tpu.vector_store %arg5[%c0_10, %c0_11, %c0_12], %23 {strides = array<i32>} : memref<1x1x8xf32, #tpu.memory_space<vmem>>, vector<1x1x8xf32>,
    %c0_13 = arith.constant 0 : index
    %c0_14 = arith.constant 0 : index
    %c0_15 = arith.constant 0 : index
    %24 = vector.load %arg6[%c0_13, %c0_14, %c0_15] : memref<1x1x8xf32, #tpu.memory_space<vmem>>, vector<1x1x8xf32>
    %25 = vector.shape_cast %24 : vector<1x1x8xf32> to vector<1x8xf32>
    %26 = vector.shape_cast %20#1 : vector<1x8xf32> to vector<1x1x8xf32>
    tpu.vector_store %arg6[%c0_13, %c0_14, %c0_15], %26 {strides = array<i32>} : memref<1x1x8xf32, #tpu.memory_space<vmem>>, vector<1x1x8xf32>,
    return
  }
  func.func @transform_0(%arg0: i32) -> (i32, i32) {
    %c0_i32 = arith.constant 0 : i32
    %c0_i32_0 = arith.constant 0 : i32
    %c0_i32_1 = arith.constant 0 : i32
    return %c0_i32, %c0_i32_0 : i32, i32
  }
  func.func @transform_1(%arg0: i32) -> (i32, i32) {
    %c0_i32 = arith.constant 0 : i32
    %c0_i32_0 = arith.constant 0 : i32
    %c0_i32_1 = arith.constant 0 : i32
    return %c0_i32, %c0_i32_0 : i32, i32
  }
  func.func @transform_2(%arg0: i32) -> (i32, i32, i32) {
    %c0_i32 = arith.constant 0 : i32
    %c0_i32_0 = arith.constant 0 : i32
    %c0_i32_1 = arith.constant 0 : i32
    return %arg0, %c0_i32, %c0_i32_0 : i32, i32, i32
  }
  func.func @transform_3(%arg0: i32) -> (i32, i32) {
    %c0_i32 = arith.constant 0 : i32
    %c0_i32_0 = arith.constant 0 : i32
    return %arg0, %c0_i32 : i32, i32
  }
  func.func @transform_4(%arg0: i32) -> (i32, i32, i32) {
    %c0_i32 = arith.constant 0 : i32
    %c0_i32_0 = arith.constant 0 : i32
    %c0_i32_1 = arith.constant 0 : i32
    return %arg0, %c0_i32, %c0_i32_0 : i32, i32, i32
  }
  func.func @transform_5(%arg0: i32) -> (i32, i32, i32) {
    %c0_i32 = arith.constant 0 : i32
    %c0_i32_0 = arith.constant 0 : i32
    %c0_i32_1 = arith.constant 0 : i32
    return %arg0, %c0_i32, %c0_i32_0 : i32, i32, i32
  }
}

</mosaic_0001>

<llo_original>
// kernel: tile.41
$region0: #{tile.41}
  #allocation0 [shape = 's32[1]{0}', space=sflag, size = 0x4, scoped, tag = 'scoped memory for tile.41']
  %s0 = inlined_call_operand.vmem [shape: f32[8], index: 0, kind: input, shape index: {}]
  %s1 = inlined_call_operand.vmem [shape: f32[8,8], index: 1, kind: output, shape index: {}]
  // Predicated region
  $region2: #{tile.41} parent=0 // pred_check
    _
  $region3: #{tile.41} parent=0 // pred_check_branch
    %3 = sbr.rel (0) target = $region5
  $region4: #{tile.41} parent=0 // pred_region
    _
  $region5: #{tile.41} parent=0 // pred_fallthru
    _
  %v4 = vld [vmem:[%s0] ss:$0 sm:$0xff]
  %5 = vst [vmem:[%s1] sm:$0xff] %v4

// kernel: tile.48
$region0: #{tile.48}
  %s0 = inlined_call_operand.vmem [shape: f32[8,8], index: 0, kind: input, shape index: {}]
  %s1 = inlined_call_operand.vmem [shape: f32[64], index: 1, kind: output, shape index: {}]
  $region1: #{tile.48} parent=0
    #allocation0 [shape = 'u8[4096]{0}', space=vmem, size = 0x1000, scoped, tag = 'scoped mem for output reshape']
    %v2 = vld [vmem:[%s0] sm:$0x1]
    %vm3 = vcmask 64512
    %4 = vst.msk [vmem:[#allocation0] sm:$0x1] %vm3, %v2
    %s5 = scalar_lea.vmem %s0, 7
    %v6 = vld [vmem:[%s5] sm:$0x1]
    %7 = vrot.lane.b32.xlu0 %v6, 56
    %v8 = vpop.permute.xlu0 %7
    %vm9 = vcmask 523712
    %10 = vst.msk [vmem:[#allocation0] sm:$0x1] %vm9, %v8
    %s11 = scalar_lea.vmem %s0, 6
    %v12 = vld [vmem:[%s11] sm:$0x1]
    %13 = vrot.lane.b32.xlu0 %v12, 48
    %v14 = vpop.permute.xlu0 %13
    %vm15 = vcmask 458112
    %16 = vst.msk [vmem:[#allocation0] sm:$0x1] %vm15, %v14
    %s17 = scalar_lea.vmem %s0, 5
    %v18 = vld [vmem:[%s17] sm:$0x1]
    %19 = vrot.lane.b32.xlu0 %v18, 40
    %v20 = vpop.permute.xlu0 %19
    %vm21 = vcmask 392512
    %22 = vst.msk [vmem:[#allocation0] sm:$0x1] %vm21, %v20
    %s23 = scalar_lea.vmem %s0, 4
    %v24 = vld [vmem:[%s23] sm:$0x1]
    %25 = vrot.lane.b32.xlu0 %v24, 32
    %v26 = vpop.permute.xlu0 %25
    %vm27 = vcmask 326912
    %28 = vst.msk [vmem:[#allocation0] sm:$0x1] %vm27, %v26
    %s29 = scalar_lea.vmem %s0, 3
    %v30 = vld [vmem:[%s29] sm:$0x1]
    %31 = vrot.lane.b32.xlu0 %v30, 24
    %v32 = vpop.permute.xlu0 %31
    %vm33 = vcmask 261312
    %34 = vst.msk [vmem:[#allocation0] sm:$0x1] %vm33, %v32
    %s35 = scalar_lea.vmem %s0, 2
    %v36 = vld [vmem:[%s35] sm:$0x1]
    %37 = vrot.lane.b32.xlu0 %v36, 16
    %v38 = vpop.permute.xlu0 %37
    %vm39 = vcmask 195712
    %40 = vst.msk [vmem:[#allocation0] sm:$0x1] %vm39, %v38
    %s41 = scalar_lea.vmem %s0, 1
    %v42 = vld [vmem:[%s41] sm:$0x1]
    %43 = vrot.lane.b32.xlu0 %v42, 8
    %v44 = vpop.permute.xlu0 %43
    %vm45 = vcmask 130112
    %46 = vst.msk [vmem:[#allocation0] sm:$0x1] %vm45, %v44
    %s48 = sshllo.u32 0, 1
    %v50 = vld [vmem:[#allocation0] sm:%s48]
    %s51 = sshllo.u32 0, 1
    %52 = vst [vmem:[%s1] sm:%s51] %v50

// kernel: tile.49
$region0: #{tile.49}
  #allocation0 [shape = 's32[1]{0}', space=sflag, size = 0x4, scoped, tag = 'scoped memory for tile.49']
  %s0 = inlined_call_operand.vmem [shape: f32[64], index: 0, kind: input, shape index: {}]
  %s1 = inlined_call_operand.vmem [shape: f32[2,64], index: 1, kind: output, shape index: {}]
  // Predicated region
  $region2: #{tile.49} parent=0 // pred_check
    _
  $region3: #{tile.49} parent=0 // pred_check_branch
    %3 = sbr.rel (0) target = $region5
  $region4: #{tile.49} parent=0 // pred_region
    _
  $region5: #{tile.49} parent=0 // pred_fallthru
    _
  %v4 = vld [vmem:[%s0] ss:$0 sm:$0xff]
  %5 = vst [vmem:[%s1] sm:$0x3] %v4

// kernel: tile.50
$region0: #{tile.50}
  %s0 = inlined_call_operand.vmem [shape: f32[2,64], index: 0, kind: input, shape index: {}]
  %s1 = inlined_call_operand.vmem [shape: f32[1,128], index: 1, kind: output, shape index: {}]
  $region1: #{tile.50} parent=0
    #allocation0 [shape = 'u8[4096]{0}', space=vmem, size = 0x1000, scoped, tag = 'scoped mem for output reshape']
    #allocation1 [shape = 'u8[4096]{0}', space=vmem, size = 0x1000, scoped, tag = 'scoped mem for input reshape']
    %s3 = sshllo.u32 0, 2
    %v4 = vld [vmem:[%s0] sm:%s3]
    %5 = vst [vmem:[#allocation1] sm:%s3] %v4
    %v6 = vld [vmem:[#allocation1] sm:$0x1]
    %vm7 = vcmask 523264
    %8 = vst.msk [vmem:[#allocation0] sm:$0x1] %vm7, %v6
    %s9 = scalar_lea.vmem [#allocation1], 1
    %v10 = vld [vmem:[%s9] sm:$0x1]
    %11 = vrot.lane.b32.xlu0 %v10, 64
    %v12 = vpop.permute.xlu0 %11
    %vm13 = vcmask 1048064
    %14 = vst.msk [vmem:[#allocation0] sm:$0x1] %vm13, %v12
    %s16 = sshllo.u32 0, 1
    %v18 = vld [vmem:[#allocation0] sm:%s16]
    %s19 = sshllo.u32 0, 1
    %20 = vst [vmem:[%s1] sm:%s19] %v18

// kernel: unet_decoder_forward.6
$region0: #{unet_decoder_forward.6}
  #allocation0 [shape = 'u32[]', space=smem, size = 0x4, offset = 0x4, fixed_abs, tag = 'smem constant byte address 0x4 - core index']
  #allocation1 [shape = 'u32[144,128]{1,0:T(1,128)}', space=vmem, size = 0x12000, scoped, tag = 'internal scratch']
  %s0 = inlined_call_operand.vmem [shape: bf16[2976,32], index: 0, kind: input, shape index: {}]
  %s1 = inlined_call_operand.vmem [shape: f32[128,64], index: 1, kind: input, shape index: {}]
  %s2 = inlined_call_operand.vmem [shape: f32[22,1,128], index: 2, kind: input, shape index: {}]
  %s3 = inlined_call_operand.vmem [shape: f32[2816,64], index: 3, kind: output, shape index: {0}]
  %s4 = inlined_call_operand.vmem [shape: f32[2,1,64], index: 4, kind: output, shape index: {1}]
  %s5 = inlined_call_operand.vmem [shape: f32[2,1,64], index: 5, kind: output, shape index: {2}]
  %6 = xla_tuple %s3, %s4, %s5
  %s7 = sld [smem:[#allocation0]]
  $region68: #{unet_decoder_forward.6} parent=0
    _
  %s9 = ssub.s32 1, %s7
  %s10 = scalar_select 0, %s9, %s7
  loop: start=0, step=1, limit=4
  $region2: #{unet_decoder_forward.6} parent=0 // loop_pre_header
    _
  $region3: #{unet_decoder_forward.6} parent=0 // loop_header
    %s12 = sphi 0, %s16
    %p13 = scmp.ge.s32.totalorder %s12, 4
    %s20 = sphi 0, %s20
    %s22 = sphi 0, %s20
    %s23 = sphi 0, %s22
    %s37 = sphi 0, %s23
    %s41 = sphi 0, %s41
    %s43 = sphi 0, %s41
    %s44 = sphi 0, %s43
    %s58 = sphi 0, %s44
    %s64 = sphi 0, %s66
    %s67 = sphi 0, %s64
    %s68 = sphi 0, %s67
    %s84 = sphi 0, %s68
    %s90 = sphi 0, %s92
    %s93 = sphi 0, %s90
    %s94 = sphi 0, %s93
    %s110 = sphi 0, %s94
    %s116 = sphi 0, %s118
    %s119 = sphi 0, %s116
    %s120 = sphi 0, %s119
    %s136 = sphi 0, %s120
    %s142 = sphi 0, %s144
    %s145 = sphi 0, %s142
    %s146 = sphi 0, %s145
    %s162 = sphi 0, %s146
  $region4: #{unet_decoder_forward.6} parent=0 // loop_header_branch
    %15 = sbr.rel (%p13) target = $region8
  $region5: #{unet_decoder_forward.6} parent=0 // loop_body
    %s17 = ssub.s32 %s12, 1
    %s18 = ssub.s32 %s12, 2
    %s19 = sadd.s32 %s12, 1
    %s21 = sadd.s32 %s20, 1
    %p24 = scmp.eq.s32.totalorder %s12, 1
    %p25 = scmp.ne.s32.totalorder %s20, %s22
    %p26 = scmp.eq.s32.totalorder %s12, 0
    %p27 = por %p25, %p26
    %p28 = scmp.ne.s32.totalorder %s20, %s22
    %p29 = scmp.eq.s32.totalorder %s17, 1
    %p30 = por %p28, %p29
    %p31 = scmp.ne.s32.totalorder %s22, %s23
    %p32 = scmp.eq.s32.totalorder %s17, 0
    %p33 = por %p31, %p32
    %p34 = scmp.ne.s32.totalorder %s22, %s23
    %p35 = scmp.eq.s32.totalorder %s18, 1
    %p36 = por %p34, %p35
    %p38 = scmp.ne.s32.totalorder %s23, %s37
    %p39 = scmp.eq.s32.totalorder %s18, 0
    %p40 = por %p38, %p39
    %s42 = sadd.s32 %s41, 1
    %p45 = scmp.eq.s32.totalorder %s12, 1
    %p46 = scmp.ne.s32.totalorder %s41, %s43
    %p47 = scmp.eq.s32.totalorder %s12, 0
    %p48 = por %p46, %p47
    %p49 = scmp.ne.s32.totalorder %s41, %s43
    %p50 = scmp.eq.s32.totalorder %s17, 1
    %p51 = por %p49, %p50
    %p52 = scmp.ne.s32.totalorder %s43, %s44
    %p53 = scmp.eq.s32.totalorder %s17, 0
    %p54 = por %p52, %p53
    %p55 = scmp.ne.s32.totalorder %s43, %s44
    %p56 = scmp.eq.s32.totalorder %s18, 1
    %p57 = por %p55, %p56
    %p59 = scmp.ne.s32.totalorder %s44, %s58
    %p60 = scmp.eq.s32.totalorder %s18, 0
    %p61 = por %p59, %p60
    %s62 = ssub.s32 %s12, %s19
    %p63 = scmp.eq.s32.totalorder %s62, 0
    %s65 = sadd.s32 %s64, 1
    %s66 = scalar_select %p63, %s64, %s65
    %p69 = pneg %p63
    %p70 = scmp.eq.s32.totalorder %s12, 1
    %p71 = por %p69, %p70
    %p72 = scmp.ne.s32.totalorder %s64, %s67
    %p73 = scmp.eq.s32.totalorder %s12, 0
    %p74 = por %p72, %p73
    %p75 = scmp.ne.s32.totalorder %s64, %s67
    %p76 = scmp.eq.s32.totalorder %s17, 1
    %p77 = por %p75, %p76
    %p78 = scmp.ne.s32.totalorder %s67, %s68
    %p79 = scmp.eq.s32.totalorder %s17, 0
    %p80 = por %p78, %p79
    %p81 = scmp.ne.s32.totalorder %s67, %s68
    %p82 = scmp.eq.s32.totalorder %s18, 1
    %p83 = por %p81, %p82
    %p85 = scmp.ne.s32.totalorder %s68, %s84
    %p86 = scmp.eq.s32.totalorder %s18, 0
    %p87 = por %p85, %p86
    %s88 = ssub.s32 %s12, %s19
    %p89 = scmp.eq.s32.totalorder %s88, 0
    %s91 = sadd.s32 %s90, 1
    %s92 = scalar_select %p89, %s90, %s91
    %p95 = pneg %p89
    %p96 = scmp.eq.s32.totalorder %s12, 1
    %p97 = por %p95, %p96
    %p98 = scmp.ne.s32.totalorder %s90, %s93
    %p99 = scmp.eq.s32.totalorder %s12, 0
    %p100 = por %p98, %p99
    %p101 = scmp.ne.s32.totalorder %s90, %s93
    %p102 = scmp.eq.s32.totalorder %s17, 1
    %p103 = por %p101, %p102
    %p104 = scmp.ne.s32.totalorder %s93, %s94
    %p105 = scmp.eq.s32.totalorder %s17, 0
    %p106 = por %p104, %p105
    %p107 = scmp.ne.s32.totalorder %s93, %s94
    %p108 = scmp.eq.s32.totalorder %s18, 1
    %p109 = por %p107, %p108
    %p111 = scmp.ne.s32.totalorder %s94, %s110
    %p112 = scmp.eq.s32.totalorder %s18, 0
    %p113 = por %p111, %p112
    %s114 = ssub.s32 %s12, %s19
    %p115 = scmp.eq.s32.totalorder %s114, 0
    %s117 = sadd.s32 %s116, 1
    %s118 = scalar_select %p115, %s116, %s117
    %p121 = pneg %p115
    %p122 = scmp.eq.s32.totalorder %s12, 1
    %p123 = por %p121, %p122
    %p124 = scmp.ne.s32.totalorder %s116, %s119
    %p125 = scmp.eq.s32.totalorder %s12, 0
    %p126 = por %p124, %p125
    %p127 = scmp.ne.s32.totalorder %s116, %s119
    %p128 = scmp.eq.s32.totalorder %s17, 1
    %p129 = por %p127, %p128
    %p130 = scmp.ne.s32.totalorder %s119, %s120
    %p131 = scmp.eq.s32.totalorder %s17, 0
    %p132 = por %p130, %p131
    %p133 = scmp.ne.s32.totalorder %s119, %s120
    %p134 = scmp.eq.s32.totalorder %s18, 1
    %p135 = por %p133, %p134
    %p137 = scmp.ne.s32.totalorder %s120, %s136
    %p138 = scmp.eq.s32.totalorder %s18, 0
    %p139 = por %p137, %p138
    %s140 = ssub.s32 %s12, %s19
    %p141 = scmp.eq.s32.totalorder %s140, 0
    %s143 = sadd.s32 %s142, 1
    %s144 = scalar_select %p141, %s142, %s143
    %p147 = pneg %p141
    %p148 = scmp.eq.s32.totalorder %s12, 1
    %p149 = por %p147, %p148
    %p150 = scmp.ne.s32.totalorder %s142, %s145
    %p151 = scmp.eq.s32.totalorder %s12, 0
    %p152 = por %p150, %p151
    %p153 = scmp.ne.s32.totalorder %s142, %s145
    %p154 = scmp.eq.s32.totalorder %s17, 1
    %p155 = por %p153, %p154
    %p156 = scmp.ne.s32.totalorder %s145, %s146
    %p157 = scmp.eq.s32.totalorder %s17, 0
    %p158 = por %p156, %p157
    %p159 = scmp.ne.s32.totalorder %s145, %s146
    %p160 = scmp.eq.s32.totalorder %s18, 1
    %p161 = por %p159, %p160
    %p163 = scmp.ne.s32.totalorder %s146, %s162
    %p164 = scmp.eq.s32.totalorder %s18, 0
    %p165 = por %p163, %p164
    %p166 = scmp.le.s32.totalorder 1, %s12
    %p167 = scmp.lt.s32.totalorder %s12, 3
    %p168 = pnand %p166, %p167
    %p169 = pneg %p168
    // Predicated region
    $region9: #{unet_decoder_forward.6} parent=5 // pred_check
      _
    $region10: #{unet_decoder_forward.6} parent=5 // pred_check_branch
      %171 = sbr.rel (%p168) target = $region12
    $region11: #{unet_decoder_forward.6} parent=5 // pred_region
      %s172 = ssub.s32 %s12, 1
      // Predicated region
      $region13: #{unet_decoder_forward.6} parent=11 // pred_check
        %p173 = pneg %p33
      $region14: #{unet_decoder_forward.6} parent=11 // pred_check_branch
        %175 = sbr.rel (%p173) target = $region16
      $region15: #{unet_decoder_forward.6} parent=11 // pred_region
        _
      $region16: #{unet_decoder_forward.6} parent=11 // pred_fallthru
        _
      // Predicated region
      $region17: #{unet_decoder_forward.6} parent=11 // pred_check
        %p176 = pneg %p54
      $region18: #{unet_decoder_forward.6} parent=11 // pred_check_branch
        %178 = sbr.rel (%p176) target = $region20
      $region19: #{unet_decoder_forward.6} parent=11 // pred_region
        _
      $region20: #{unet_decoder_forward.6} parent=11 // pred_fallthru
        _
    $region12: #{unet_decoder_forward.6} parent=5 // pred_fallthru
      _
    %p179 = scmp.lt.s32.totalorder %s12, 2
    // Predicated region
    $region21: #{unet_decoder_forward.6} parent=5 // pred_check
      %p180 = pneg %p179
    $region22: #{unet_decoder_forward.6} parent=5 // pred_check_branch
      %182 = sbr.rel (%p180) target = $region24
    $region23: #{unet_decoder_forward.6} parent=5 // pred_region
      // Predicated region
      $region25: #{unet_decoder_forward.6} parent=23 // pred_check
        %p183 = pneg %p74
      $region26: #{unet_decoder_forward.6} parent=23 // pred_check_branch
        %185 = sbr.rel (%p183) target = $region28
      $region27: #{unet_decoder_forward.6} parent=23 // pred_region
        %s186 = smul.u32 11, %s12
        %p187 = scmp.lt.s32.totalorder %s186, 21
        %s188 = scalar_select %p187, %s186, 21
        %s189 = scalar_lea.vmem %s2, %s188
        %s190 = smul.u32 11, %s12
      $region28: #{unet_decoder_forward.6} parent=23 // pred_fallthru
        _
    $region24: #{unet_decoder_forward.6} parent=5 // pred_fallthru
      _
    %p191 = scmp.le.s32.totalorder 1, %s12
    %p192 = scmp.lt.s32.totalorder %s12, 3
    %p193 = pnand %p191, %p192
    %p194 = pneg %p193
    // Predicated region
    $region29: #{unet_decoder_forward.6} parent=5 // pred_check
      _
    $region30: #{unet_decoder_forward.6} parent=5 // pred_check_branch
      %196 = sbr.rel (%p193) target = $region32
    $region31: #{unet_decoder_forward.6} parent=5 // pred_region
      %s197 = ssub.s32 %s12, 1
      %p198 = pneg %p33
      %p199 = pneg %p30
      %p200 = pneg %p54
      %p201 = pneg %p51
      %s202 = smul.u32 11, %s17
      %p203 = scmp.lt.s32.totalorder %s202, 21
      %s204 = scalar_select %p203, %s202, 21
      %s205 = scalar_lea.vmem %s2, %s204
      %p206 = pneg %p80
      %p207 = pneg %p77
      %p208 = pneg %p106
      %p209 = pneg %p103
      %s210 = smul.u32 176, %s17
      %p211 = scmp.lt.s32.totalorder %s210, 351
      %s212 = scalar_select %p211, %s210, 351
      %s213 = smul.addr %s212, 8
      %s214 = scalar_lea.vmem %s3, %s213
      %p215 = pneg %p132
      %p216 = pneg %p129
      %p217 = scmp.lt.s32.totalorder %s17, 1
      %s218 = scalar_select %p217, %s17, 1
      %s219 = scalar_lea.vmem %s4, %s218
      %p220 = pneg %p158
      %p221 = pneg %p155
      %p222 = scmp.lt.s32.totalorder %s17, 1
      %s223 = scalar_select %p222, %s17, 1
      %s224 = scalar_lea.vmem %s5, %s223
      %s225 = smul.u32 11, %s17
      %p226 = scmp.lt.s32.totalorder %s225, 21
      %s227 = scalar_select %p226, %s225, 21
      %s228 = scalar_lea.vmem %s2, %s227
      %s229 = smul.u32 11, %s17
      %s230 = smul.u32 176, %s17
      %p231 = scmp.lt.s32.totalorder %s230, 351
      %s232 = scalar_select %p231, %s230, 351
      %s233 = smul.addr %s232, 8
      %s234 = scalar_lea.vmem %s3, %s233
      %s235 = smul.u32 176, %s17
      %p236 = scmp.lt.s32.totalorder %s17, 1
      %s237 = scalar_select %p236, %s17, 1
      %s238 = scalar_lea.vmem %s4, %s237
      %p239 = scmp.lt.s32.totalorder %s17, 1
      %s240 = scalar_select %p239, %s17, 1
      %s241 = scalar_lea.vmem %s5, %s240
      %v243 = vld [vmem:[%s1] sm:$0xff]
      %v244 = vld [vmem:[%s1 + $0x8] sm:$0xff]
      %v245 = vld [vmem:[%s1 + $0x10] sm:$0xff]
      %v246 = vld [vmem:[%s1 + $0x18] sm:$0xff]
      %v247 = vpack.c.bf16 %v244, %v243
      %v248 = vpack.c.bf16 %v246, %v245
      %v249 = vld [vmem:[%s1 + $0x20] sm:$0xff]
      %v250 = vld [vmem:[%s1 + $0x28] sm:$0xff]
      %v251 = vld [vmem:[%s1 + $0x30] sm:$0xff]
      %v252 = vld [vmem:[%s1 + $0x38] sm:$0xff]
      %v253 = vpack.c.bf16 %v250, %v249
      %v254 = vpack.c.bf16 %v252, %v251
      %v255 = vld [vmem:[%s1 + $0x40] sm:$0xff]
      %v256 = vld [vmem:[%s1 + $0x48] sm:$0xff]
      %v257 = vld [vmem:[%s1 + $0x50] sm:$0xff]
      %v258 = vld [vmem:[%s1 + $0x58] sm:$0xff]
      %v259 = vpack.c.bf16 %v256, %v255
      %v260 = vpack.c.bf16 %v258, %v257
      %v261 = vld [vmem:[%s1 + $0x60] sm:$0xff]
      %v262 = vld [vmem:[%s1 + $0x68] sm:$0xff]
      %v263 = vld [vmem:[%s1 + $0x70] sm:$0xff]
      %v264 = vld [vmem:[%s1 + $0x78] sm:$0xff]
      %v265 = vpack.c.bf16 %v262, %v261
      %v266 = vpack.c.bf16 %v264, %v263
      loop: start=0, step=1, limit=11
      $region33: #{unet_decoder_forward.6} parent=31 // loop_pre_header
        _
      $region34: #{unet_decoder_forward.6} parent=31 // loop_header
        %s268 = sphi 0, %s272
        %p269 = scmp.ge.s32.totalorder %s268, 11
        %v273 = vphi 0.0, %v1128
        %v274 = vphi 0.0, %v1215
      $region35: #{unet_decoder_forward.6} parent=31 // loop_header_branch
        %271 = sbr.rel (%p269) target = $region39
      $region36: #{unet_decoder_forward.6} parent=31 // loop_body
        %s275 = smul.u32 %s17, 1408
        %s276 = smul.u32 %s268, 128
        %s277 = sadd.s32 %s275, %s276
        %s278 = sshra.s32 %s277, 3
        %s279 = sand.u32 %s277, 7
        %s280 = smul.addr %s278, 4
        %s281 = scalar_lea.vmem %s0, %s280
        %v282 = vld [vmem:[%s281] sm:$0xf]
        %v283 = vld [vmem:[%s281 + $0x4] sm:$0xf]
        %v284 = vld [vmem:[%s281 + $0x8] sm:$0xf]
        %v285 = vld [vmem:[%s281 + $0xc] sm:$0xf]
        %v286 = vld [vmem:[%s281 + $0x10] sm:$0xf]
        %v287 = vld [vmem:[%s281 + $0x14] sm:$0xf]
        %v288 = vld [vmem:[%s281 + $0x18] sm:$0xf]
        %v289 = vld [vmem:[%s281 + $0x1c] sm:$0xf]
        %v290 = vld [vmem:[%s281 + $0x20] sm:$0xf]
        %v291 = vld [vmem:[%s281 + $0x24] sm:$0xf]
        %v292 = vld [vmem:[%s281 + $0x28] sm:$0xf]
        %v293 = vld [vmem:[%s281 + $0x2c] sm:$0xf]
        %v294 = vld [vmem:[%s281 + $0x30] sm:$0xf]
        %v295 = vld [vmem:[%s281 + $0x34] sm:$0xf]
        %v296 = vld [vmem:[%s281 + $0x38] sm:$0xf]
        %v297 = vld [vmem:[%s281 + $0x3c] sm:$0xf]
        %s298 = sadd.s32 %s277, 16
        %s299 = sshra.s32 %s298, 3
        %s300 = sand.u32 %s298, 7
        %s301 = smul.addr %s299, 4
        %s302 = scalar_lea.vmem %s0, %s301
        %v303 = vld [vmem:[%s302] sm:$0xf]
        %v304 = vld [vmem:[%s302 + $0x4] sm:$0xf]
        %v305 = vld [vmem:[%s302 + $0x8] sm:$0xf]
        %v306 = vld [vmem:[%s302 + $0xc] sm:$0xf]
        %v307 = vld [vmem:[%s302 + $0x10] sm:$0xf]
        %v308 = vld [vmem:[%s302 + $0x14] sm:$0xf]
        %v309 = vld [vmem:[%s302 + $0x18] sm:$0xf]
        %v310 = vld [vmem:[%s302 + $0x1c] sm:$0xf]
        %v311 = vld [vmem:[%s302 + $0x20] sm:$0xf]
        %v312 = vld [vmem:[%s302 + $0x24] sm:$0xf]
        %v313 = vld [vmem:[%s302 + $0x28] sm:$0xf]
        %v314 = vld [vmem:[%s302 + $0x2c] sm:$0xf]
        %v315 = vld [vmem:[%s302 + $0x30] sm:$0xf]
        %v316 = vld [vmem:[%s302 + $0x34] sm:$0xf]
        %v317 = vld [vmem:[%s302 + $0x38] sm:$0xf]
        %v318 = vld [vmem:[%s302 + $0x3c] sm:$0xf]
        %v335 = vunpack.c.l.b16 %v303
        %v336 = vunpack.c.l.b16 %v304
        %v337 = vunpack.c.l.b16 %v305
        %v338 = vunpack.c.l.b16 %v306
        %v339 = vunpack.c.l.b16 %v307
        %v340 = vunpack.c.l.b16 %v308
        %v341 = vunpack.c.l.b16 %v309
        %v342 = vunpack.c.l.b16 %v310
        %v343 = vunpack.c.l.b16 %v311
        %v344 = vunpack.c.l.b16 %v312
        %v345 = vunpack.c.l.b16 %v313
        %v346 = vunpack.c.l.b16 %v314
        %v347 = vunpack.c.l.b16 %v315
        %v348 = vunpack.c.l.b16 %v316
        %v349 = vunpack.c.l.b16 %v317
        %v350 = vunpack.c.l.b16 %v318
        %v351 = vpack.c.b16 %v336, %v335
        %v352 = vpack.c.b16 %v338, %v337
        %v353 = vpack.c.b16 %v340, %v339
        %v354 = vpack.c.b16 %v342, %v341
        %v355 = vpack.c.b16 %v344, %v343
        %v356 = vpack.c.b16 %v346, %v345
        %v357 = vpack.c.b16 %v348, %v347
        %v358 = vpack.c.b16 %v350, %v349
        %vm359 = vcmask 261120
        %v361 = vsel %vm359, %v351, 0
        %v364 = vsel %vm359, %v352, 0
        %v367 = vsel %vm359, %v353, 0
        %v370 = vsel %vm359, %v354, 0
        %v373 = vsel %vm359, %v355, 0
        %v376 = vsel %vm359, %v356, 0
        %v379 = vsel %vm359, %v357, 0
        %v382 = vsel %vm359, %v358, 0
        %384 = vmatprep.subr.bf16.mxu0 0
        %385 = vmatpush1.bf16.msra.mxu0 %v253
        %386 = vmatprep.subr.bf16.mxu0 0
        %387 = vmatpush1.bf16.msra.mxu0 %v254
        %388 = vmatprep.subr.bf16.mxu0 0
        %389 = vmatpush1.bf16.msra.mxu0 0
        %390 = vmatprep.subr.bf16.mxu0 0
        %391 = vmatpush1.bf16.msra.mxu0 0
        %392 = vmatprep.subr.bf16.mxu0 0
        %393 = vmatpush1.bf16.msra.mxu0 0
        %394 = vmatprep.subr.bf16.mxu0 0
        %395 = vmatpush1.bf16.msra.mxu0 0
        %396 = vmatprep.subr.bf16.mxu0 0
        %397 = vmatpush1.bf16.msra.mxu0 0
        %398 = vmatprep.subr.bf16.mxu0 0
        %399 = vmatpush1.bf16.msra.mxu0 0
        %400 = vmatprep.subr.bf16.mxu0 0
        %401 = vmatpush1.bf16.msra.mxu0 0
        %402 = vmatprep.subr.bf16.mxu0 0
        %403 = vmatpush1.bf16.msra.mxu0 0
        %404 = vmatprep.subr.bf16.mxu0 0
        %405 = vmatpush1.bf16.msra.mxu0 0
        %406 = vmatprep.subr.bf16.mxu0 0
        %407 = vmatpush1.bf16.msra.mxu0 0
        %408 = vmatprep.subr.bf16.mxu0 0
        %409 = vmatpush1.bf16.msra.mxu0 0
        %410 = vmatprep.subr.bf16.mxu0 0
        %411 = vmatpush1.bf16.msra.mxu0 0
        %412 = vmatprep.subr.bf16.mxu0 0
        %413 = vmatpush1.bf16.msra.mxu0 0
        %414 = vmatprep.subr.bf16.mxu0 0
        %415 = vmatpush1.bf16.msra.mxu0 0
        %416 = vmatprep.mubr.bf16.mxu0 0
        %417 = vmatmul.mubr.bf16.gmra.mrb[0].mxu0 %v361
        %v418 = vpop.f32.mrb[0].mxu0
        %v419 = vadd.f32 0.0, %v418
        %v420 = vpop.f32.mrb[0].mxu0
        %v421 = vpop.f32.mrb[0].mxu0
        %v422 = vadd.f32 0.0, %v421
        %v423 = vpop.f32.mrb[0].mxu0
        %424 = vmatprep.mubr.bf16.mxu0 0
        %425 = vmatmul.mubr.bf16.gmra.mrb[0].mxu0 %v364
        %v426 = vpop.f32.mrb[0].mxu0
        %v427 = vadd.f32 0.0, %v426
        %v428 = vpop.f32.mrb[0].mxu0
        %v429 = vpop.f32.mrb[0].mxu0
        %v430 = vadd.f32 0.0, %v429
        %v431 = vpop.f32.mrb[0].mxu0
        %432 = vmatprep.mubr.bf16.mxu0 0
        %433 = vmatmul.mubr.bf16.gmra.mrb[0].mxu0 %v367
        %v434 = vpop.f32.mrb[0].mxu0
        %v435 = vadd.f32 0.0, %v434
        %v436 = vpop.f32.mrb[0].mxu0
        %v437 = vpop.f32.mrb[0].mxu0
        %v438 = vadd.f32 0.0, %v437
        %v439 = vpop.f32.mrb[0].mxu0
        %440 = vmatprep.mubr.bf16.mxu0 0
        %441 = vmatmul.mubr.bf16.gmra.mrb[0].mxu0 %v370
        %v442 = vpop.f32.mrb[0].mxu0
        %v443 = vadd.f32 0.0, %v442
        %v444 = vpop.f32.mrb[0].mxu0
        %v445 = vpop.f32.mrb[0].mxu0
        %v446 = vadd.f32 0.0, %v445
        %v447 = vpop.f32.mrb[0].mxu0
        %448 = vmatprep.mubr.bf16.mxu0 0
        %449 = vmatmul.mubr.bf16.gmra.mrb[0].mxu0 %v373
        %v450 = vpop.f32.mrb[0].mxu0
        %v451 = vadd.f32 0.0, %v450
        %v452 = vpop.f32.mrb[0].mxu0
        %v453 = vpop.f32.mrb[0].mxu0
        %v454 = vadd.f32 0.0, %v453
        %v455 = vpop.f32.mrb[0].mxu0
        %456 = vmatprep.mubr.bf16.mxu0 0
        %457 = vmatmul.mubr.bf16.gmra.mrb[0].mxu0 %v376
        %v458 = vpop.f32.mrb[0].mxu0
        %v459 = vadd.f32 0.0, %v458
        %v460 = vpop.f32.mrb[0].mxu0
        %v461 = vpop.f32.mrb[0].mxu0
        %v462 = vadd.f32 0.0, %v461
        %v463 = vpop.f32.mrb[0].mxu0
        %464 = vmatprep.mubr.bf16.mxu0 0
        %465 = vmatmul.mubr.bf16.gmra.mrb[0].mxu0 %v379
        %v466 = vpop.f32.mrb[0].mxu0
        %v467 = vadd.f32 0.0, %v466
        %v468 = vpop.f32.mrb[0].mxu0
        %v469 = vpop.f32.mrb[0].mxu0
        %v470 = vadd.f32 0.0, %v469
        %v471 = vpop.f32.mrb[0].mxu0
        %472 = vmatprep.mubr.bf16.mxu0 0
        %473 = vmatmul.mubr.bf16.gmra.mrb[0].mxu0 %v382
        %v474 = vpop.f32.mrb[0].mxu0
        %v475 = vadd.f32 0.0, %v474
        %v476 = vpop.f32.mrb[0].mxu0
        %v477 = vpop.f32.mrb[0].mxu0
        %v478 = vadd.f32 0.0, %v477
        %v479 = vpop.f32.mrb[0].mxu0
        %480 = vdwg.mxu0
        %v497 = vunpack.c.l.b16 %v282
        %v498 = vunpack.c.l.b16 %v283
        %v499 = vunpack.c.l.b16 %v284
        %v500 = vunpack.c.l.b16 %v285
        %v501 = vunpack.c.l.b16 %v286
        %v502 = vunpack.c.l.b16 %v287
        %v503 = vunpack.c.l.b16 %v288
        %v504 = vunpack.c.l.b16 %v289
        %v505 = vunpack.c.l.b16 %v290
        %v506 = vunpack.c.l.b16 %v291
        %v507 = vunpack.c.l.b16 %v292
        %v508 = vunpack.c.l.b16 %v293
        %v509 = vunpack.c.l.b16 %v294
        %v510 = vunpack.c.l.b16 %v295
        %v511 = vunpack.c.l.b16 %v296
        %v512 = vunpack.c.l.b16 %v297
        %v513 = vpack.c.b16 %v498, %v497
        %v514 = vpack.c.b16 %v500, %v499
        %v515 = vpack.c.b16 %v502, %v501
        %v516 = vpack.c.b16 %v504, %v503
        %v517 = vpack.c.b16 %v506, %v505
        %v518 = vpack.c.b16 %v508, %v507
        %v519 = vpack.c.b16 %v510, %v509
        %v520 = vpack.c.b16 %v512, %v511
        %v522 = vsel %vm359, %v513, 0
        %v525 = vsel %vm359, %v514, 0
        %v528 = vsel %vm359, %v515, 0
        %v531 = vsel %vm359, %v516, 0
        %v534 = vsel %vm359, %v517, 0
        %v537 = vsel %vm359, %v518, 0
        %v540 = vsel %vm359, %v519, 0
        %v543 = vsel %vm359, %v520, 0
        %545 = vmatprep.subr.bf16.mxu0 0
        %546 = vmatpush1.bf16.msra.mxu0 %v247
        %547 = vmatprep.subr.bf16.mxu0 0
        %548 = vmatpush1.bf16.msra.mxu0 %v248
        %549 = vmatprep.subr.bf16.mxu0 0
        %550 = vmatpush1.bf16.msra.mxu0 0
        %551 = vmatprep.subr.bf16.mxu0 0
        %552 = vmatpush1.bf16.msra.mxu0 0
        %553 = vmatprep.subr.bf16.mxu0 0
        %554 = vmatpush1.bf16.msra.mxu0 0
        %555 = vmatprep.subr.bf16.mxu0 0
        %556 = vmatpush1.bf16.msra.mxu0 0
        %557 = vmatprep.subr.bf16.mxu0 0
        %558 = vmatpush1.bf16.msra.mxu0 0
        %559 = vmatprep.subr.bf16.mxu0 0
        %560 = vmatpush1.bf16.msra.mxu0 0
        %561 = vmatprep.subr.bf16.mxu0 0
        %562 = vmatpush1.bf16.msra.mxu0 0
        %563 = vmatprep.subr.bf16.mxu0 0
        %564 = vmatpush1.bf16.msra.mxu0 0
        %565 = vmatprep.subr.bf16.mxu0 0
        %566 = vmatpush1.bf16.msra.mxu0 0
        %567 = vmatprep.subr.bf16.mxu0 0
        %568 = vmatpush1.bf16.msra.mxu0 0
        %569 = vmatprep.subr.bf16.mxu0 0
        %570 = vmatpush1.bf16.msra.mxu0 0
        %571 = vmatprep.subr.bf16.mxu0 0
        %572 = vmatpush1.bf16.msra.mxu0 0
        %573 = vmatprep.subr.bf16.mxu0 0
        %574 = vmatpush1.bf16.msra.mxu0 0
        %575 = vmatprep.subr.bf16.mxu0 0
        %576 = vmatpush1.bf16.msra.mxu0 0
        %577 = vmatprep.mubr.bf16.mxu0 0
        %578 = vmatmul.mubr.bf16.gmra.mrb[0].mxu0 %v522
        %v579 = vpop.f32.mrb[0].mxu0
        %v580 = vadd.f32 %v419, %v579
        %v581 = vpop.f32.mrb[0].mxu0
        %v582 = vpop.f32.mrb[0].mxu0
        %v583 = vadd.f32 %v422, %v582
        %v584 = vpop.f32.mrb[0].mxu0
        %585 = vmatprep.mubr.bf16.mxu0 0
        %586 = vmatmul.mubr.bf16.gmra.mrb[0].mxu0 %v525
        %v587 = vpop.f32.mrb[0].mxu0
        %v588 = vadd.f32 %v427, %v587
        %v589 = vpop.f32.mrb[0].mxu0
        %v590 = vpop.f32.mrb[0].mxu0
        %v591 = vadd.f32 %v430, %v590
        %v592 = vpop.f32.mrb[0].mxu0
        %593 = vmatprep.mubr.bf16.mxu0 0
        %594 = vmatmul.mubr.bf16.gmra.mrb[0].mxu0 %v528
        %v595 = vpop.f32.mrb[0].mxu0
        %v596 = vadd.f32 %v435, %v595
        %v597 = vpop.f32.mrb[0].mxu0
        %v598 = vpop.f32.mrb[0].mxu0
        %v599 = vadd.f32 %v438, %v598
        %v600 = vpop.f32.mrb[0].mxu0
        %601 = vmatprep.mubr.bf16.mxu0 0
        %602 = vmatmul.mubr.bf16.gmra.mrb[0].mxu0 %v531
        %v603 = vpop.f32.mrb[0].mxu0
        %v604 = vadd.f32 %v443, %v603
        %v605 = vpop.f32.mrb[0].mxu0
        %v606 = vpop.f32.mrb[0].mxu0
        %v607 = vadd.f32 %v446, %v606
        %v608 = vpop.f32.mrb[0].mxu0
        %609 = vmatprep.mubr.bf16.mxu0 0
        %610 = vmatmul.mubr.bf16.gmra.mrb[0].mxu0 %v534
        %v611 = vpop.f32.mrb[0].mxu0
        %v612 = vadd.f32 %v451, %v611
        %v613 = vpop.f32.mrb[0].mxu0
        %v614 = vpop.f32.mrb[0].mxu0
        %v615 = vadd.f32 %v454, %v614
        %v616 = vpop.f32.mrb[0].mxu0
        %617 = vmatprep.mubr.bf16.mxu0 0
        %618 = vmatmul.mubr.bf16.gmra.mrb[0].mxu0 %v537
        %v619 = vpop.f32.mrb[0].mxu0
        %v620 = vadd.f32 %v459, %v619
        %v621 = vpop.f32.mrb[0].mxu0
        %v622 = vpop.f32.mrb[0].mxu0
        %v623 = vadd.f32 %v462, %v622
        %v624 = vpop.f32.mrb[0].mxu0
        %625 = vmatprep.mubr.bf16.mxu0 0
        %626 = vmatmul.mubr.bf16.gmra.mrb[0].mxu0 %v540
        %v627 = vpop.f32.mrb[0].mxu0
        %v628 = vadd.f32 %v467, %v627
        %v629 = vpop.f32.mrb[0].mxu0
        %v630 = vpop.f32.mrb[0].mxu0
        %v631 = vadd.f32 %v470, %v630
        %v632 = vpop.f32.mrb[0].mxu0
        %633 = vmatprep.mubr.bf16.mxu0 0
        %634 = vmatmul.mubr.bf16.gmra.mrb[0].mxu0 %v543
        %v635 = vpop.f32.mrb[0].mxu0
        %v636 = vadd.f32 %v475, %v635
        %v637 = vpop.f32.mrb[0].mxu0
        %v638 = vpop.f32.mrb[0].mxu0
        %v639 = vadd.f32 %v478, %v638
        %v640 = vpop.f32.mrb[0].mxu0
        %641 = vdwg.mxu0
        %s642 = sadd.s32 %s277, 144
        %s643 = sshra.s32 %s642, 3
        %s644 = sand.u32 %s642, 7
        %s645 = smul.addr %s643, 4
        %s646 = scalar_lea.vmem %s0, %s645
        %v647 = vld [vmem:[%s646] sm:$0xf]
        %v648 = vld [vmem:[%s646 + $0x4] sm:$0xf]
        %v649 = vld [vmem:[%s646 + $0x8] sm:$0xf]
        %v650 = vld [vmem:[%s646 + $0xc] sm:$0xf]
        %v651 = vld [vmem:[%s646 + $0x10] sm:$0xf]
        %v652 = vld [vmem:[%s646 + $0x14] sm:$0xf]
        %v653 = vld [vmem:[%s646 + $0x18] sm:$0xf]
        %v654 = vld [vmem:[%s646 + $0x1c] sm:$0xf]
        %v655 = vld [vmem:[%s646 + $0x20] sm:$0xf]
        %v656 = vld [vmem:[%s646 + $0x24] sm:$0xf]
        %v657 = vld [vmem:[%s646 + $0x28] sm:$0xf]
        %v658 = vld [vmem:[%s646 + $0x2c] sm:$0xf]
        %v659 = vld [vmem:[%s646 + $0x30] sm:$0xf]
        %v660 = vld [vmem:[%s646 + $0x34] sm:$0xf]
        %v661 = vld [vmem:[%s646 + $0x38] sm:$0xf]
        %v662 = vld [vmem:[%s646 + $0x3c] sm:$0xf]
        %v679 = vunpack.c.l.b16 %v647
        %v680 = vunpack.c.l.b16 %v648
        %v681 = vunpack.c.l.b16 %v649
        %v682 = vunpack.c.l.b16 %v650
        %v683 = vunpack.c.l.b16 %v651
        %v684 = vunpack.c.l.b16 %v652
        %v685 = vunpack.c.l.b16 %v653
        %v686 = vunpack.c.l.b16 %v654
        %v687 = vunpack.c.l.b16 %v655
        %v688 = vunpack.c.l.b16 %v656
        %v689 = vunpack.c.l.b16 %v657
        %v690 = vunpack.c.l.b16 %v658
        %v691 = vunpack.c.l.b16 %v659
        %v692 = vunpack.c.l.b16 %v660
        %v693 = vunpack.c.l.b16 %v661
        %v694 = vunpack.c.l.b16 %v662
        %v695 = vpack.c.b16 %v680, %v679
        %v696 = vpack.c.b16 %v682, %v681
        %v697 = vpack.c.b16 %v684, %v683
        %v698 = vpack.c.b16 %v686, %v685
        %v699 = vpack.c.b16 %v688, %v687
        %v700 = vpack.c.b16 %v690, %v689
        %v701 = vpack.c.b16 %v692, %v691
        %v702 = vpack.c.b16 %v694, %v693
        %v704 = vsel %vm359, %v695, 0
        %v707 = vsel %vm359, %v696, 0
        %v710 = vsel %vm359, %v697, 0
        %v713 = vsel %vm359, %v698, 0
        %v716 = vsel %vm359, %v699, 0
        %v719 = vsel %vm359, %v700, 0
        %v722 = vsel %vm359, %v701, 0
        %v725 = vsel %vm359, %v702, 0
        %727 = vmatprep.subr.bf16.mxu0 0
        %728 = vmatpush1.bf16.msra.mxu0 %v259
        %729 = vmatprep.subr.bf16.mxu0 0
        %730 = vmatpush1.bf16.msra.mxu0 %v260
        %731 = vmatprep.subr.bf16.mxu0 0
        %732 = vmatpush1.bf16.msra.mxu0 0
        %733 = vmatprep.subr.bf16.mxu0 0
        %734 = vmatpush1.bf16.msra.mxu0 0
        %735 = vmatprep.subr.bf16.mxu0 0
        %736 = vmatpush1.bf16.msra.mxu0 0
        %737 = vmatprep.subr.bf16.mxu0 0
        %738 = vmatpush1.bf16.msra.mxu0 0
        %739 = vmatprep.subr.bf16.mxu0 0
        %740 = vmatpush1.bf16.msra.mxu0 0
        %741 = vmatprep.subr.bf16.mxu0 0
        %742 = vmatpush1.bf16.msra.mxu0 0
        %743 = vmatprep.subr.bf16.mxu0 0
        %744 = vmatpush1.bf16.msra.mxu0 0
        %745 = vmatprep.subr.bf16.mxu0 0
        %746 = vmatpush1.bf16.msra.mxu0 0
        %747 = vmatprep.subr.bf16.mxu0 0
        %748 = vmatpush1.bf16.msra.mxu0 0
        %749 = vmatprep.subr.bf16.mxu0 0
        %750 = vmatpush1.bf16.msra.mxu0 0
        %751 = vmatprep.subr.bf16.mxu0 0
        %752 = vmatpush1.bf16.msra.mxu0 0
        %753 = vmatprep.subr.bf16.mxu0 0
        %754 = vmatpush1.bf16.msra.mxu0 0
        %755 = vmatprep.subr.bf16.mxu0 0
        %756 = vmatpush1.bf16.msra.mxu0 0
        %757 = vmatprep.subr.bf16.mxu0 0
        %758 = vmatpush1.bf16.msra.mxu0 0
        %759 = vmatprep.mubr.bf16.mxu0 0
        %760 = vmatmul.mubr.bf16.gmra.mrb[0].mxu0 %v704
        %v761 = vpop.f32.mrb[0].mxu0
        %v762 = vadd.f32 0.0, %v761
        %v763 = vpop.f32.mrb[0].mxu0
        %v764 = vpop.f32.mrb[0].mxu0
        %v765 = vadd.f32 0.0, %v764
        %v766 = vpop.f32.mrb[0].mxu0
        %767 = vmatprep.mubr.bf16.mxu0 0
        %768 = vmatmul.mubr.bf16.gmra.mrb[0].mxu0 %v707
        %v769 = vpop.f32.mrb[0].mxu0
        %v770 = vadd.f32 0.0, %v769
        %v771 = vpop.f32.mrb[0].mxu0
        %v772 = vpop.f32.mrb[0].mxu0
        %v773 = vadd.f32 0.0, %v772
        %v774 = vpop.f32.mrb[0].mxu0
        %775 = vmatprep.mubr.bf16.mxu0 0
        %776 = vmatmul.mubr.bf16.gmra.mrb[0].mxu0 %v710
        %v777 = vpop.f32.mrb[0].mxu0
        %v778 = vadd.f32 0.0, %v777
        %v779 = vpop.f32.mrb[0].mxu0
        %v780 = vpop.f32.mrb[0].mxu0
        %v781 = vadd.f32 0.0, %v780
        %v782 = vpop.f32.mrb[0].mxu0
        %783 = vmatprep.mubr.bf16.mxu0 0
        %784 = vmatmul.mubr.bf16.gmra.mrb[0].mxu0 %v713
        %v785 = vpop.f32.mrb[0].mxu0
        %v786 = vadd.f32 0.0, %v785
        %v787 = vpop.f32.mrb[0].mxu0
        %v788 = vpop.f32.mrb[0].mxu0
        %v789 = vadd.f32 0.0, %v788
        %v790 = vpop.f32.mrb[0].mxu0
        %791 = vmatprep.mubr.bf16.mxu0 0
        %792 = vmatmul.mubr.bf16.gmra.mrb[0].mxu0 %v716
        %v793 = vpop.f32.mrb[0].mxu0
        %v794 = vadd.f32 0.0, %v793
        %v795 = vpop.f32.mrb[0].mxu0
        %v796 = vpop.f32.mrb[0].mxu0
        %v797 = vadd.f32 0.0, %v796
        %v798 = vpop.f32.mrb[0].mxu0
        %799 = vmatprep.mubr.bf16.mxu0 0
        %800 = vmatmul.mubr.bf16.gmra.mrb[0].mxu0 %v719
        %v801 = vpop.f32.mrb[0].mxu0
        %v802 = vadd.f32 0.0, %v801
        %v803 = vpop.f32.mrb[0].mxu0
        %v804 = vpop.f32.mrb[0].mxu0
        %v805 = vadd.f32 0.0, %v804
        %v806 = vpop.f32.mrb[0].mxu0
        %807 = vmatprep.mubr.bf16.mxu0 0
        %808 = vmatmul.mubr.bf16.gmra.mrb[0].mxu0 %v722
        %v809 = vpop.f32.mrb[0].mxu0
        %v810 = vadd.f32 0.0, %v809
        %v811 = vpop.f32.mrb[0].mxu0
        %v812 = vpop.f32.mrb[0].mxu0
        %v813 = vadd.f32 0.0, %v812
        %v814 = vpop.f32.mrb[0].mxu0
        %815 = vmatprep.mubr.bf16.mxu0 0
        %816 = vmatmul.mubr.bf16.gmra.mrb[0].mxu0 %v725
        %v817 = vpop.f32.mrb[0].mxu0
        %v818 = vadd.f32 0.0, %v817
        %v819 = vpop.f32.mrb[0].mxu0
        %v820 = vpop.f32.mrb[0].mxu0
        %v821 = vadd.f32 0.0, %v820
        %v822 = vpop.f32.mrb[0].mxu0
        %823 = vdwg.mxu0
        %v824 = vadd.f32 %v580, %v762
        %v825 = vadd.f32 %v583, %v765
        %v826 = vadd.f32 %v588, %v770
        %v827 = vadd.f32 %v591, %v773
        %v828 = vadd.f32 %v596, %v778
        %v829 = vadd.f32 %v599, %v781
        %v830 = vadd.f32 %v604, %v786
        %v831 = vadd.f32 %v607, %v789
        %v832 = vadd.f32 %v612, %v794
        %v833 = vadd.f32 %v615, %v797
        %v834 = vadd.f32 %v620, %v802
        %v835 = vadd.f32 %v623, %v805
        %v836 = vadd.f32 %v628, %v810
        %v837 = vadd.f32 %v631, %v813
        %v838 = vadd.f32 %v636, %v818
        %v839 = vadd.f32 %v639, %v821
        %s840 = sadd.s32 %s277, 160
        %s841 = sshra.s32 %s840, 3
        %s842 = sand.u32 %s840, 7
        %s843 = smul.addr %s841, 4
        %s844 = scalar_lea.vmem %s0, %s843
        %v845 = vld [vmem:[%s844] sm:$0xf]
        %v846 = vld [vmem:[%s844 + $0x4] sm:$0xf]
        %v847 = vld [vmem:[%s844 + $0x8] sm:$0xf]
        %v848 = vld [vmem:[%s844 + $0xc] sm:$0xf]
        %v849 = vld [vmem:[%s844 + $0x10] sm:$0xf]
        %v850 = vld [vmem:[%s844 + $0x14] sm:$0xf]
        %v851 = vld [vmem:[%s844 + $0x18] sm:$0xf]
        %v852 = vld [vmem:[%s844 + $0x1c] sm:$0xf]
        %v853 = vld [vmem:[%s844 + $0x20] sm:$0xf]
        %v854 = vld [vmem:[%s844 + $0x24] sm:$0xf]
        %v855 = vld [vmem:[%s844 + $0x28] sm:$0xf]
        %v856 = vld [vmem:[%s844 + $0x2c] sm:$0xf]
        %v857 = vld [vmem:[%s844 + $0x30] sm:$0xf]
        %v858 = vld [vmem:[%s844 + $0x34] sm:$0xf]
        %v859 = vld [vmem:[%s844 + $0x38] sm:$0xf]
        %v860 = vld [vmem:[%s844 + $0x3c] sm:$0xf]
        %v877 = vunpack.c.l.b16 %v845
        %v878 = vunpack.c.l.b16 %v846
        %v879 = vunpack.c.l.b16 %v847
        %v880 = vunpack.c.l.b16 %v848
        %v881 = vunpack.c.l.b16 %v849
        %v882 = vunpack.c.l.b16 %v850
        %v883 = vunpack.c.l.b16 %v851
        %v884 = vunpack.c.l.b16 %v852
        %v885 = vunpack.c.l.b16 %v853
        %v886 = vunpack.c.l.b16 %v854
        %v887 = vunpack.c.l.b16 %v855
        %v888 = vunpack.c.l.b16 %v856
        %v889 = vunpack.c.l.b16 %v857
        %v890 = vunpack.c.l.b16 %v858
        %v891 = vunpack.c.l.b16 %v859
        %v892 = vunpack.c.l.b16 %v860
        %v893 = vpack.c.b16 %v878, %v877
        %v894 = vpack.c.b16 %v880, %v879
        %v895 = vpack.c.b16 %v882, %v881
        %v896 = vpack.c.b16 %v884, %v883
        %v897 = vpack.c.b16 %v886, %v885
        %v898 = vpack.c.b16 %v888, %v887
        %v899 = vpack.c.b16 %v890, %v889
        %v900 = vpack.c.b16 %v892, %v891
        %v902 = vsel %vm359, %v893, 0
        %v905 = vsel %vm359, %v894, 0
        %v908 = vsel %vm359, %v895, 0
        %v911 = vsel %vm359, %v896, 0
        %v914 = vsel %vm359, %v897, 0
        %v917 = vsel %vm359, %v898, 0
        %v920 = vsel %vm359, %v899, 0
        %v923 = vsel %vm359, %v900, 0
        %925 = vmatprep.subr.bf16.mxu0 0
        %926 = vmatpush1.bf16.msra.mxu0 %v265
        %927 = vmatprep.subr.bf16.mxu0 0
        %928 = vmatpush1.bf16.msra.mxu0 %v266
        %929 = vmatprep.subr.bf16.mxu0 0
        %930 = vmatpush1.bf16.msra.mxu0 0
        %931 = vmatprep.subr.bf16.mxu0 0
        %932 = vmatpush1.bf16.msra.mxu0 0
        %933 = vmatprep.subr.bf16.mxu0 0
        %934 = vmatpush1.bf16.msra.mxu0 0
        %935 = vmatprep.subr.bf16.mxu0 0
        %936 = vmatpush1.bf16.msra.mxu0 0
        %937 = vmatprep.subr.bf16.mxu0 0
        %938 = vmatpush1.bf16.msra.mxu0 0
        %939 = vmatprep.subr.bf16.mxu0 0
        %940 = vmatpush1.bf16.msra.mxu0 0
        %941 = vmatprep.subr.bf16.mxu0 0
        %942 = vmatpush1.bf16.msra.mxu0 0
        %943 = vmatprep.subr.bf16.mxu0 0
        %944 = vmatpush1.bf16.msra.mxu0 0
        %945 = vmatprep.subr.bf16.mxu0 0
        %946 = vmatpush1.bf16.msra.mxu0 0
        %947 = vmatprep.subr.bf16.mxu0 0
        %948 = vmatpush1.bf16.msra.mxu0 0
        %949 = vmatprep.subr.bf16.mxu0 0
        %950 = vmatpush1.bf16.msra.mxu0 0
        %951 = vmatprep.subr.bf16.mxu0 0
        %952 = vmatpush1.bf16.msra.mxu0 0
        %953 = vmatprep.subr.bf16.mxu0 0
        %954 = vmatpush1.bf16.msra.mxu0 0
        %955 = vmatprep.subr.bf16.mxu0 0
        %956 = vmatpush1.bf16.msra.mxu0 0
        %957 = vmatprep.mubr.bf16.mxu0 0
        %958 = vmatmul.mubr.bf16.gmra.mrb[0].mxu0 %v902
        %v959 = vpop.f32.mrb[0].mxu0
        %v960 = vadd.f32 0.0, %v959
        %v961 = vpop.f32.mrb[0].mxu0
        %v962 = vpop.f32.mrb[0].mxu0
        %v963 = vadd.f32 0.0, %v962
        %v964 = vpop.f32.mrb[0].mxu0
        %965 = vmatprep.mubr.bf16.mxu0 0
        %966 = vmatmul.mubr.bf16.gmra.mrb[0].mxu0 %v905
        %v967 = vpop.f32.mrb[0].mxu0
        %v968 = vadd.f32 0.0, %v967
        %v969 = vpop.f32.mrb[0].mxu0
        %v970 = vpop.f32.mrb[0].mxu0
        %v971 = vadd.f32 0.0, %v970
        %v972 = vpop.f32.mrb[0].mxu0
        %973 = vmatprep.mubr.bf16.mxu0 0
        %974 = vmatmul.mubr.bf16.gmra.mrb[0].mxu0 %v908
        %v975 = vpop.f32.mrb[0].mxu0
        %v976 = vadd.f32 0.0, %v975
        %v977 = vpop.f32.mrb[0].mxu0
        %v978 = vpop.f32.mrb[0].mxu0
        %v979 = vadd.f32 0.0, %v978
        %v980 = vpop.f32.mrb[0].mxu0
        %981 = vmatprep.mubr.bf16.mxu0 0
        %982 = vmatmul.mubr.bf16.gmra.mrb[0].mxu0 %v911
        %v983 = vpop.f32.mrb[0].mxu0
        %v984 = vadd.f32 0.0, %v983
        %v985 = vpop.f32.mrb[0].mxu0
        %v986 = vpop.f32.mrb[0].mxu0
        %v987 = vadd.f32 0.0, %v986
        %v988 = vpop.f32.mrb[0].mxu0
        %989 = vmatprep.mubr.bf16.mxu0 0
        %990 = vmatmul.mubr.bf16.gmra.mrb[0].mxu0 %v914
        %v991 = vpop.f32.mrb[0].mxu0
        %v992 = vadd.f32 0.0, %v991
        %v993 = vpop.f32.mrb[0].mxu0
        %v994 = vpop.f32.mrb[0].mxu0
        %v995 = vadd.f32 0.0, %v994
        %v996 = vpop.f32.mrb[0].mxu0
        %997 = vmatprep.mubr.bf16.mxu0 0
        %998 = vmatmul.mubr.bf16.gmra.mrb[0].mxu0 %v917
        %v999 = vpop.f32.mrb[0].mxu0
        %v1000 = vadd.f32 0.0, %v999
        %v1001 = vpop.f32.mrb[0].mxu0
        %v1002 = vpop.f32.mrb[0].mxu0
        %v1003 = vadd.f32 0.0, %v1002
        %v1004 = vpop.f32.mrb[0].mxu0
        %1005 = vmatprep.mubr.bf16.mxu0 0
        %1006 = vmatmul.mubr.bf16.gmra.mrb[0].mxu0 %v920
        %v1007 = vpop.f32.mrb[0].mxu0
        %v1008 = vadd.f32 0.0, %v1007
        %v1009 = vpop.f32.mrb[0].mxu0
        %v1010 = vpop.f32.mrb[0].mxu0
        %v1011 = vadd.f32 0.0, %v1010
        %v1012 = vpop.f32.mrb[0].mxu0
        %1013 = vmatprep.mubr.bf16.mxu0 0
        %1014 = vmatmul.mubr.bf16.gmra.mrb[0].mxu0 %v923
        %v1015 = vpop.f32.mrb[0].mxu0
        %v1016 = vadd.f32 0.0, %v1015
        %v1017 = vpop.f32.mrb[0].mxu0
        %v1018 = vpop.f32.mrb[0].mxu0
        %v1019 = vadd.f32 0.0, %v1018
        %v1020 = vpop.f32.mrb[0].mxu0
        %1021 = vdwg.mxu0
        %v1022 = vadd.f32 %v824, %v960
        %v1023 = vadd.f32 %v825, %v963
        %v1024 = vadd.f32 %v826, %v968
        %v1025 = vadd.f32 %v827, %v971
        %v1026 = vadd.f32 %v828, %v976
        %v1027 = vadd.f32 %v829, %v979
        %v1028 = vadd.f32 %v830, %v984
        %v1029 = vadd.f32 %v831, %v987
        %v1030 = vadd.f32 %v832, %v992
        %v1031 = vadd.f32 %v833, %v995
        %v1032 = vadd.f32 %v834, %v1000
        %v1033 = vadd.f32 %v835, %v1003
        %v1034 = vadd.f32 %v836, %v1008
        %v1035 = vadd.f32 %v837, %v1011
        %v1036 = vadd.f32 %v838, %v1016
        %v1037 = vadd.f32 %v839, %v1019
        %s1038 = scalar_lea.vmem %s234, %s276
        %vm1039 = vcmask 523264
        %1040 = vst.msk [vmem:[%s1038] sm:$0xff] %vm1039, %v1022
        %1041 = vst.msk [vmem:[%s1038 + $0x8] sm:$0xff] %vm1039, %v1023
        %1042 = vst.msk [vmem:[%s1038 + $0x10] sm:$0xff] %vm1039, %v1024
        %1043 = vst.msk [vmem:[%s1038 + $0x18] sm:$0xff] %vm1039, %v1025
        %1044 = vst.msk [vmem:[%s1038 + $0x20] sm:$0xff] %vm1039, %v1026
        %1045 = vst.msk [vmem:[%s1038 + $0x28] sm:$0xff] %vm1039, %v1027
        %1046 = vst.msk [vmem:[%s1038 + $0x30] sm:$0xff] %vm1039, %v1028
        %1047 = vst.msk [vmem:[%s1038 + $0x38] sm:$0xff] %vm1039, %v1029
        %1048 = vst.msk [vmem:[%s1038 + $0x40] sm:$0xff] %vm1039, %v1030
        %1049 = vst.msk [vmem:[%s1038 + $0x48] sm:$0xff] %vm1039, %v1031
        %1050 = vst.msk [vmem:[%s1038 + $0x50] sm:$0xff] %vm1039, %v1032
        %1051 = vst.msk [vmem:[%s1038 + $0x58] sm:$0xff] %vm1039, %v1033
        %1052 = vst.msk [vmem:[%s1038 + $0x60] sm:$0xff] %vm1039, %v1034
        %1053 = vst.msk [vmem:[%s1038 + $0x68] sm:$0xff] %vm1039, %v1035
        %1054 = vst.msk [vmem:[%s1038 + $0x70] sm:$0xff] %vm1039, %v1036
        %1055 = vst.msk [vmem:[%s1038 + $0x78] sm:$0xff] %vm1039, %v1037
        %s1056 = scalar_lea.vmem %s228, %s268
        %v1057 = vld [vmem:[%s1056] sm:$0x1]
        %1058 = vmatprep.subr.mxu0 0.0
        %1059 = vmatpush1.msra.mxu0 %v1022
        %1060 = vmatprep.subr.mxu0 0.0
        %1061 = vmatpush1.msra.mxu0 %v1023
        %1062 = vmatprep.subr.mxu0 0.0
        %1063 = vmatpush1.msra.mxu0 %v1024
        %1064 = vmatprep.subr.mxu0 0.0
        %1065 = vmatpush1.msra.mxu0 %v1025
        %1066 = vmatprep.subr.mxu0 0.0
        %1067 = vmatpush1.msra.mxu0 %v1026
        %1068 = vmatprep.subr.mxu0 0.0
        %1069 = vmatpush1.msra.mxu0 %v1027
        %1070 = vmatprep.subr.mxu0 0.0
        %1071 = vmatpush1.msra.mxu0 %v1028
        %1072 = vmatprep.subr.mxu0 0.0
        %1073 = vmatpush1.msra.mxu0 %v1029
        %1074 = vmatprep.subr.mxu0 0.0
        %1075 = vmatpush1.msra.mxu0 %v1030
        %1076 = vmatprep.subr.mxu0 0.0
        %1077 = vmatpush1.msra.mxu0 %v1031
        %1078 = vmatprep.subr.mxu0 0.0
        %1079 = vmatpush1.msra.mxu0 %v1032
        %1080 = vmatprep.subr.mxu0 0.0
        %1081 = vmatpush1.msra.mxu0 %v1033
        %1082 = vmatprep.subr.mxu0 0.0
        %1083 = vmatpush1.msra.mxu0 %v1034
        %1084 = vmatprep.subr.mxu0 0.0
        %1085 = vmatpush1.msra.mxu0 %v1035
        %1086 = vmatprep.subr.mxu0 0.0
        %1087 = vmatpush1.msra.mxu0 %v1036
        %1088 = vmatprep.subr.mxu0 0.0
        %1089 = vmatpush1.msra.mxu0 %v1037
        %1090 = vmatprep.subr.mxu0 0.0
        %1091 = vmatpush1.msra.mxu0 0.0
        %1092 = vmatprep.subr.mxu0 0.0
        %1093 = vmatpush1.msra.mxu0 0.0
        %1094 = vmatprep.subr.mxu0 0.0
        %1095 = vmatpush1.msra.mxu0 0.0
        %1096 = vmatprep.subr.mxu0 0.0
        %1097 = vmatpush1.msra.mxu0 0.0
        %1098 = vmatprep.subr.mxu0 0.0
        %1099 = vmatpush1.msra.mxu0 0.0
        %1100 = vmatprep.subr.mxu0 0.0
        %1101 = vmatpush1.msra.mxu0 0.0
        %1102 = vmatprep.subr.mxu0 0.0
        %1103 = vmatpush1.msra.mxu0 0.0
        %1104 = vmatprep.subr.mxu0 0.0
        %1105 = vmatpush1.msra.mxu0 0.0
        %1106 = vmatprep.subr.mxu0 0.0
        %1107 = vmatpush1.msra.mxu0 0.0
        %1108 = vmatprep.subr.mxu0 0.0
        %1109 = vmatpush1.msra.mxu0 0.0
        %1110 = vmatprep.subr.mxu0 0.0
        %1111 = vmatpush1.msra.mxu0 0.0
        %1112 = vmatprep.subr.mxu0 0.0
        %1113 = vmatpush1.msra.mxu0 0.0
        %1114 = vmatprep.subr.mxu0 0.0
        %1115 = vmatpush1.msra.mxu0 0.0
        %1116 = vmatprep.subr.mxu0 0.0
        %1117 = vmatpush1.msra.mxu0 0.0
        %1118 = vmatprep.subr.mxu0 0.0
        %1119 = vmatpush1.msra.mxu0 0.0
        %1120 = vmatprep.subr.mxu0 0.0
        %1121 = vmatpush1.msra.mxu0 0.0
        %1122 = vmatprep.mubr.f32.mxu0 0.0
        %1123 = vmatmul.mubr.f32.gmra.mrb[0].mxu0 %v1057
        %v1124 = vpop.f32.mrb[0].mxu0
        %v1125 = vadd.f32 0.0, %v1124
        %v1126 = vpop.f32.mrb[0].mxu0
        %1127 = vdwg.mxu0
        %v1128 = vadd.f32 %v273, %v1125
        %v1129 = vmul.f32 %v1022, %v1022
        %v1130 = vmul.f32 %v1023, %v1023
        %v1131 = vmul.f32 %v1024, %v1024
        %v1132 = vmul.f32 %v1025, %v1025
        %v1133 = vmul.f32 %v1026, %v1026
        %v1134 = vmul.f32 %v1027, %v1027
        %v1135 = vmul.f32 %v1028, %v1028
        %v1136 = vmul.f32 %v1029, %v1029
        %v1137 = vmul.f32 %v1030, %v1030
        %v1138 = vmul.f32 %v1031, %v1031
        %v1139 = vmul.f32 %v1032, %v1032
        %v1140 = vmul.f32 %v1033, %v1033
        %v1141 = vmul.f32 %v1034, %v1034
        %v1142 = vmul.f32 %v1035, %v1035
        %v1143 = vmul.f32 %v1036, %v1036
        %v1144 = vmul.f32 %v1037, %v1037
        %1145 = vmatprep.subr.mxu0 0.0
        %1146 = vmatpush1.msra.mxu0 %v1129
        %1147 = vmatprep.subr.mxu0 0.0
        %1148 = vmatpush1.msra.mxu0 %v1130
        %1149 = vmatprep.subr.mxu0 0.0
        %1150 = vmatpush1.msra.mxu0 %v1131
        %1151 = vmatprep.subr.mxu0 0.0
        %1152 = vmatpush1.msra.mxu0 %v1132
        %1153 = vmatprep.subr.mxu0 0.0
        %1154 = vmatpush1.msra.mxu0 %v1133
        %1155 = vmatprep.subr.mxu0 0.0
        %1156 = vmatpush1.msra.mxu0 %v1134
        %1157 = vmatprep.subr.mxu0 0.0
        %1158 = vmatpush1.msra.mxu0 %v1135
        %1159 = vmatprep.subr.mxu0 0.0
        %1160 = vmatpush1.msra.mxu0 %v1136
        %1161 = vmatprep.subr.mxu0 0.0
        %1162 = vmatpush1.msra.mxu0 %v1137
        %1163 = vmatprep.subr.mxu0 0.0
        %1164 = vmatpush1.msra.mxu0 %v1138
        %1165 = vmatprep.subr.mxu0 0.0
        %1166 = vmatpush1.msra.mxu0 %v1139
        %1167 = vmatprep.subr.mxu0 0.0
        %1168 = vmatpush1.msra.mxu0 %v1140
        %1169 = vmatprep.subr.mxu0 0.0
        %1170 = vmatpush1.msra.mxu0 %v1141
        %1171 = vmatprep.subr.mxu0 0.0
        %1172 = vmatpush1.msra.mxu0 %v1142
        %1173 = vmatprep.subr.mxu0 0.0
        %1174 = vmatpush1.msra.mxu0 %v1143
        %1175 = vmatprep.subr.mxu0 0.0
        %1176 = vmatpush1.msra.mxu0 %v1144
        %1177 = vmatprep.subr.mxu0 0.0
        %1178 = vmatpush1.msra.mxu0 0.0
        %1179 = vmatprep.subr.mxu0 0.0
        %1180 = vmatpush1.msra.mxu0 0.0
        %1181 = vmatprep.subr.mxu0 0.0
        %1182 = vmatpush1.msra.mxu0 0.0
        %1183 = vmatprep.subr.mxu0 0.0
        %1184 = vmatpush1.msra.mxu0 0.0
        %1185 = vmatprep.subr.mxu0 0.0
        %1186 = vmatpush1.msra.mxu0 0.0
        %1187 = vmatprep.subr.mxu0 0.0
        %1188 = vmatpush1.msra.mxu0 0.0
        %1189 = vmatprep.subr.mxu0 0.0
        %1190 = vmatpush1.msra.mxu0 0.0
        %1191 = vmatprep.subr.mxu0 0.0
        %1192 = vmatpush1.msra.mxu0 0.0
        %1193 = vmatprep.subr.mxu0 0.0
        %1194 = vmatpush1.msra.mxu0 0.0
        %1195 = vmatprep.subr.mxu0 0.0
        %1196 = vmatpush1.msra.mxu0 0.0
        %1197 = vmatprep.subr.mxu0 0.0
        %1198 = vmatpush1.msra.mxu0 0.0
        %1199 = vmatprep.subr.mxu0 0.0
        %1200 = vmatpush1.msra.mxu0 0.0
        %1201 = vmatprep.subr.mxu0 0.0
        %1202 = vmatpush1.msra.mxu0 0.0
        %1203 = vmatprep.subr.mxu0 0.0
        %1204 = vmatpush1.msra.mxu0 0.0
        %1205 = vmatprep.subr.mxu0 0.0
        %1206 = vmatpush1.msra.mxu0 0.0
        %1207 = vmatprep.subr.mxu0 0.0
        %1208 = vmatpush1.msra.mxu0 0.0
        %1209 = vmatprep.mubr.f32.mxu0 0.0
        %1210 = vmatmul.mubr.f32.gmra.mrb[0].mxu0 %v1057
        %v1211 = vpop.f32.mrb[0].mxu0
        %v1212 = vadd.f32 0.0, %v1211
        %v1213 = vpop.f32.mrb[0].mxu0
        %1214 = vdwg.mxu0
        %v1215 = vadd.f32 %v274, %v1212
      $region37: #{unet_decoder_forward.6} parent=31 // loop_footer
        %s272 = sadd.s32 1, %s268
      $region38: #{unet_decoder_forward.6} parent=31 // loop_footer_branch
        %267 = sbr.rel target = $region34
      $region39: #{unet_decoder_forward.6} parent=31 // loop_exit
        _
      %vm1216 = vcmask 516096
      %1217 = vst.msk [vmem:[%s238] sm:$0x1] %vm1216, %v273
      %1218 = vst.msk [vmem:[%s241] sm:$0x1] %vm1216, %v274
      %s1219 = smul.u32 176, %s17
      %p1220 = scmp.lt.s32.totalorder %s1219, 351
      %s1221 = scalar_select %p1220, %s1219, 351
      %s1222 = smul.addr %s1221, 8
      %s1223 = scalar_lea.vmem %s3, %s1222
      %p1224 = scmp.lt.s32.totalorder %s17, 1
      %s1225 = scalar_select %p1224, %s17, 1
      %s1226 = scalar_lea.vmem %s4, %s1225
      %p1227 = scmp.lt.s32.totalorder %s17, 1
      %s1228 = scalar_select %p1227, %s17, 1
      %s1229 = scalar_lea.vmem %s5, %s1228
      // Predicated region
      $region40: #{unet_decoder_forward.6} parent=31 // pred_check
        %p1230 = pneg %p103
      $region41: #{unet_decoder_forward.6} parent=31 // pred_check_branch
        %1232 = sbr.rel (%p1230) target = $region43
      $region42: #{unet_decoder_forward.6} parent=31 // pred_region
        %s1233 = smul.u32 176, %s17
      $region43: #{unet_decoder_forward.6} parent=31 // pred_fallthru
        _
      // Predicated region
      $region44: #{unet_decoder_forward.6} parent=31 // pred_check
        %p1234 = pneg %p129
      $region45: #{unet_decoder_forward.6} parent=31 // pred_check_branch
        %1236 = sbr.rel (%p1234) target = $region47
      $region46: #{unet_decoder_forward.6} parent=31 // pred_region
        _
      $region47: #{unet_decoder_forward.6} parent=31 // pred_fallthru
        _
      // Predicated region
      $region48: #{unet_decoder_forward.6} parent=31 // pred_check
        %p1237 = pneg %p155
      $region49: #{unet_decoder_forward.6} parent=31 // pred_check_branch
        %1239 = sbr.rel (%p1237) target = $region51
      $region50: #{unet_decoder_forward.6} parent=31 // pred_region
        _
      $region51: #{unet_decoder_forward.6} parent=31 // pred_fallthru
        _
    $region32: #{unet_decoder_forward.6} parent=5 // pred_fallthru
      _
    %p1240 = scmp.le.s32.totalorder 2, %s12
    // Predicated region
    $region52: #{unet_decoder_forward.6} parent=5 // pred_check
      %p1241 = pneg %p1240
    $region53: #{unet_decoder_forward.6} parent=5 // pred_check_branch
      %1243 = sbr.rel (%p1241) target = $region55
    $region54: #{unet_decoder_forward.6} parent=5 // pred_region
      %s1244 = ssub.s32 %s12, 2
      // Predicated region
      $region56: #{unet_decoder_forward.6} parent=54 // pred_check
        %p1245 = pneg %p109
      $region57: #{unet_decoder_forward.6} parent=54 // pred_check_branch
        %1247 = sbr.rel (%p1245) target = $region59
      $region58: #{unet_decoder_forward.6} parent=54 // pred_region
        %s1248 = smul.u32 176, %s18
        %p1249 = scmp.lt.s32.totalorder %s1248, 351
        %s1250 = scalar_select %p1249, %s1248, 351
        %s1251 = smul.addr %s1250, 8
        %s1252 = scalar_lea.vmem %s3, %s1251
      $region59: #{unet_decoder_forward.6} parent=54 // pred_fallthru
        _
      // Predicated region
      $region60: #{unet_decoder_forward.6} parent=54 // pred_check
        %p1253 = pneg %p135
      $region61: #{unet_decoder_forward.6} parent=54 // pred_check_branch
        %1255 = sbr.rel (%p1253) target = $region63
      $region62: #{unet_decoder_forward.6} parent=54 // pred_region
        %p1256 = scmp.lt.s32.totalorder %s18, 1
        %s1257 = scalar_select %p1256, %s18, 1
        %s1258 = scalar_lea.vmem %s4, %s1257
      $region63: #{unet_decoder_forward.6} parent=54 // pred_fallthru
        _
      // Predicated region
      $region64: #{unet_decoder_forward.6} parent=54 // pred_check
        %p1259 = pneg %p161
      $region65: #{unet_decoder_forward.6} parent=54 // pred_check_branch
        %1261 = sbr.rel (%p1259) target = $region67
      $region66: #{unet_decoder_forward.6} parent=54 // pred_region
        %p1262 = scmp.lt.s32.totalorder %s18, 1
        %s1263 = scalar_select %p1262, %s18, 1
        %s1264 = scalar_lea.vmem %s5, %s1263
      $region67: #{unet_decoder_forward.6} parent=54 // pred_fallthru
        _
    $region55: #{unet_decoder_forward.6} parent=5 // pred_fallthru
      _
  $region6: #{unet_decoder_forward.6} parent=0 // loop_footer
    %s16 = sadd.s32 1, %s12
  $region7: #{unet_decoder_forward.6} parent=0 // loop_footer_branch
    %11 = sbr.rel target = $region3
  $region8: #{unet_decoder_forward.6} parent=0 // loop_exit
    _

// kernel: unet_decoder_forward.7
$region0: #{unet_decoder_forward.7}
  #allocation0 [shape = 'u32[]', space=smem, size = 0x4, offset = 0x4, fixed_abs, tag = 'smem constant byte address 0x4 - core index']
  #allocation1 [shape = 'u32[144,128]{1,0:T(1,128)}', space=vmem, size = 0x12000, scoped, tag = 'internal scratch']
  %s0 = inlined_call_operand.vmem [shape: f32[1408,128], index: 0, kind: input, shape index: {}]
  %s1 = inlined_call_operand.vmem [shape: f32[1,128], index: 1, kind: input, shape index: {}]
  %s2 = inlined_call_operand.vmem [shape: f32[1,128], index: 2, kind: input, shape index: {}]
  %s3 = inlined_call_operand.vmem [shape: f32[1408,128], index: 3, kind: output, shape index: {}]
  %s4 = sld [smem:[#allocation0]]
  $region45: #{unet_decoder_forward.7} parent=0
    _
  %s6 = ssub.s32 1, %s4
  %s7 = scalar_select 0, %s6, %s4
  loop: start=0, step=1, limit=4
  $region2: #{unet_decoder_forward.7} parent=0 // loop_pre_header
    _
  $region3: #{unet_decoder_forward.7} parent=0 // loop_header
    %s9 = sphi 0, %s13
    %p10 = scmp.ge.s32.totalorder %s9, 4
    %s19 = sphi 0, %s21
    %s22 = sphi 0, %s19
    %s23 = sphi 0, %s22
    %s39 = sphi 0, %s23
    %s43 = sphi 0, %s43
    %s45 = sphi 0, %s43
    %s46 = sphi 0, %s45
    %s60 = sphi 0, %s46
    %s64 = sphi 0, %s64
    %s66 = sphi 0, %s64
    %s67 = sphi 0, %s66
    %s81 = sphi 0, %s67
    %s87 = sphi 0, %s89
    %s90 = sphi 0, %s87
    %s91 = sphi 0, %s90
    %s107 = sphi 0, %s91
  $region4: #{unet_decoder_forward.7} parent=0 // loop_header_branch
    %12 = sbr.rel (%p10) target = $region8
  $region5: #{unet_decoder_forward.7} parent=0 // loop_body
    %s14 = ssub.s32 %s9, 1
    %s15 = ssub.s32 %s9, 2
    %s16 = sadd.s32 %s9, 1
    %s17 = ssub.s32 %s9, %s16
    %p18 = scmp.eq.s32.totalorder %s17, 0
    %s20 = sadd.s32 %s19, 1
    %s21 = scalar_select %p18, %s19, %s20
    %p24 = pneg %p18
    %p25 = scmp.eq.s32.totalorder %s9, 1
    %p26 = por %p24, %p25
    %p27 = scmp.ne.s32.totalorder %s19, %s22
    %p28 = scmp.eq.s32.totalorder %s9, 0
    %p29 = por %p27, %p28
    %p30 = scmp.ne.s32.totalorder %s19, %s22
    %p31 = scmp.eq.s32.totalorder %s14, 1
    %p32 = por %p30, %p31
    %p33 = scmp.ne.s32.totalorder %s22, %s23
    %p34 = scmp.eq.s32.totalorder %s14, 0
    %p35 = por %p33, %p34
    %p36 = scmp.ne.s32.totalorder %s22, %s23
    %p37 = scmp.eq.s32.totalorder %s15, 1
    %p38 = por %p36, %p37
    %p40 = scmp.ne.s32.totalorder %s23, %s39
    %p41 = scmp.eq.s32.totalorder %s15, 0
    %p42 = por %p40, %p41
    %s44 = sadd.s32 %s43, 1
    %p47 = scmp.eq.s32.totalorder %s9, 1
    %p48 = scmp.ne.s32.totalorder %s43, %s45
    %p49 = scmp.eq.s32.totalorder %s9, 0
    %p50 = por %p48, %p49
    %p51 = scmp.ne.s32.totalorder %s43, %s45
    %p52 = scmp.eq.s32.totalorder %s14, 1
    %p53 = por %p51, %p52
    %p54 = scmp.ne.s32.totalorder %s45, %s46
    %p55 = scmp.eq.s32.totalorder %s14, 0
    %p56 = por %p54, %p55
    %p57 = scmp.ne.s32.totalorder %s45, %s46
    %p58 = scmp.eq.s32.totalorder %s15, 1
    %p59 = por %p57, %p58
    %p61 = scmp.ne.s32.totalorder %s46, %s60
    %p62 = scmp.eq.s32.totalorder %s15, 0
    %p63 = por %p61, %p62
    %s65 = sadd.s32 %s64, 1
    %p68 = scmp.eq.s32.totalorder %s9, 1
    %p69 = scmp.ne.s32.totalorder %s64, %s66
    %p70 = scmp.eq.s32.totalorder %s9, 0
    %p71 = por %p69, %p70
    %p72 = scmp.ne.s32.totalorder %s64, %s66
    %p73 = scmp.eq.s32.totalorder %s14, 1
    %p74 = por %p72, %p73
    %p75 = scmp.ne.s32.totalorder %s66, %s67
    %p76 = scmp.eq.s32.totalorder %s14, 0
    %p77 = por %p75, %p76
    %p78 = scmp.ne.s32.totalorder %s66, %s67
    %p79 = scmp.eq.s32.totalorder %s15, 1
    %p80 = por %p78, %p79
    %p82 = scmp.ne.s32.totalorder %s67, %s81
    %p83 = scmp.eq.s32.totalorder %s15, 0
    %p84 = por %p82, %p83
    %s85 = ssub.s32 %s9, %s16
    %p86 = scmp.eq.s32.totalorder %s85, 0
    %s88 = sadd.s32 %s87, 1
    %s89 = scalar_select %p86, %s87, %s88
    %p92 = pneg %p86
    %p93 = scmp.eq.s32.totalorder %s9, 1
    %p94 = por %p92, %p93
    %p95 = scmp.ne.s32.totalorder %s87, %s90
    %p96 = scmp.eq.s32.totalorder %s9, 0
    %p97 = por %p95, %p96
    %p98 = scmp.ne.s32.totalorder %s87, %s90
    %p99 = scmp.eq.s32.totalorder %s14, 1
    %p100 = por %p98, %p99
    %p101 = scmp.ne.s32.totalorder %s90, %s91
    %p102 = scmp.eq.s32.totalorder %s14, 0
    %p103 = por %p101, %p102
    %p104 = scmp.ne.s32.totalorder %s90, %s91
    %p105 = scmp.eq.s32.totalorder %s15, 1
    %p106 = por %p104, %p105
    %p108 = scmp.ne.s32.totalorder %s91, %s107
    %p109 = scmp.eq.s32.totalorder %s15, 0
    %p110 = por %p108, %p109
    %p111 = scmp.le.s32.totalorder 1, %s9
    %p112 = scmp.lt.s32.totalorder %s9, 3
    %p113 = pnand %p111, %p112
    %p114 = pneg %p113
    // Predicated region
    $region9: #{unet_decoder_forward.7} parent=5 // pred_check
      _
    $region10: #{unet_decoder_forward.7} parent=5 // pred_check_branch
      %116 = sbr.rel (%p113) target = $region12
    $region11: #{unet_decoder_forward.7} parent=5 // pred_region
      %s117 = ssub.s32 %s9, 1
      // Predicated region
      $region13: #{unet_decoder_forward.7} parent=11 // pred_check
        %p118 = pneg %p56
      $region14: #{unet_decoder_forward.7} parent=11 // pred_check_branch
        %120 = sbr.rel (%p118) target = $region16
      $region15: #{unet_decoder_forward.7} parent=11 // pred_region
        _
      $region16: #{unet_decoder_forward.7} parent=11 // pred_fallthru
        _
      // Predicated region
      $region17: #{unet_decoder_forward.7} parent=11 // pred_check
        %p121 = pneg %p77
      $region18: #{unet_decoder_forward.7} parent=11 // pred_check_branch
        %123 = sbr.rel (%p121) target = $region20
      $region19: #{unet_decoder_forward.7} parent=11 // pred_region
        _
      $region20: #{unet_decoder_forward.7} parent=11 // pred_fallthru
        _
    $region12: #{unet_decoder_forward.7} parent=5 // pred_fallthru
      _
    %p124 = scmp.lt.s32.totalorder %s9, 2
    // Predicated region
    $region21: #{unet_decoder_forward.7} parent=5 // pred_check
      %p125 = pneg %p124
    $region22: #{unet_decoder_forward.7} parent=5 // pred_check_branch
      %127 = sbr.rel (%p125) target = $region24
    $region23: #{unet_decoder_forward.7} parent=5 // pred_region
      // Predicated region
      $region25: #{unet_decoder_forward.7} parent=23 // pred_check
        %p128 = pneg %p29
      $region26: #{unet_decoder_forward.7} parent=23 // pred_check_branch
        %130 = sbr.rel (%p128) target = $region28
      $region27: #{unet_decoder_forward.7} parent=23 // pred_region
        %s131 = smul.u32 88, %s9
        %p132 = scmp.lt.s32.totalorder %s131, 175
        %s133 = scalar_select %p132, %s131, 175
        %s134 = smul.addr %s133, 8
        %s135 = scalar_lea.vmem %s0, %s134
        %s136 = smul.u32 88, %s9
      $region28: #{unet_decoder_forward.7} parent=23 // pred_fallthru
        _
    $region24: #{unet_decoder_forward.7} parent=5 // pred_fallthru
      _
    %p137 = scmp.le.s32.totalorder 1, %s9
    %p138 = scmp.lt.s32.totalorder %s9, 3
    %p139 = pnand %p137, %p138
    %p140 = pneg %p139
    // Predicated region
    $region29: #{unet_decoder_forward.7} parent=5 // pred_check
      _
    $region30: #{unet_decoder_forward.7} parent=5 // pred_check_branch
      %142 = sbr.rel (%p139) target = $region32
    $region31: #{unet_decoder_forward.7} parent=5 // pred_region
      %s143 = ssub.s32 %s9, 1
      %s144 = smul.u32 88, %s14
      %p145 = scmp.lt.s32.totalorder %s144, 175
      %s146 = scalar_select %p145, %s144, 175
      %s147 = smul.addr %s146, 8
      %s148 = scalar_lea.vmem %s0, %s147
      %p149 = pneg %p35
      %p150 = pneg %p32
      %p151 = pneg %p56
      %p152 = pneg %p53
      %p153 = pneg %p77
      %p154 = pneg %p74
      %p155 = pneg %p103
      %p156 = pneg %p100
      %s157 = smul.u32 88, %s14
      %p158 = scmp.lt.s32.totalorder %s157, 175
      %s159 = scalar_select %p158, %s157, 175
      %s160 = smul.addr %s159, 8
      %s161 = scalar_lea.vmem %s3, %s160
      %s162 = smul.u32 88, %s14
      %p163 = scmp.lt.s32.totalorder %s162, 175
      %s164 = scalar_select %p163, %s162, 175
      %s165 = smul.addr %s164, 8
      %s166 = scalar_lea.vmem %s0, %s165
      %s167 = smul.u32 88, %s14
      %s168 = smul.u32 88, %s14
      %p169 = scmp.lt.s32.totalorder %s168, 175
      %s170 = scalar_select %p169, %s168, 175
      %s171 = smul.addr %s170, 8
      %s172 = scalar_lea.vmem %s3, %s171
      %s173 = smul.u32 88, %s14
      %v174 = vld [vmem:[%s166] sm:$0xff]
      %v175 = vld [vmem:[%s166 + $0x8] sm:$0xff]
      %v176 = vld [vmem:[%s166 + $0x10] sm:$0xff]
      %v177 = vld [vmem:[%s166 + $0x18] sm:$0xff]
      %v178 = vld [vmem:[%s166 + $0x20] sm:$0xff]
      %v179 = vld [vmem:[%s166 + $0x28] sm:$0xff]
      %v180 = vld [vmem:[%s166 + $0x30] sm:$0xff]
      %v181 = vld [vmem:[%s166 + $0x38] sm:$0xff]
      %v182 = vld [vmem:[%s166 + $0x40] sm:$0xff]
      %v183 = vld [vmem:[%s166 + $0x48] sm:$0xff]
      %v184 = vld [vmem:[%s166 + $0x50] sm:$0xff]
      %v185 = vld [vmem:[%s166 + $0x58] sm:$0xff]
      %v186 = vld [vmem:[%s166 + $0x60] sm:$0xff]
      %v187 = vld [vmem:[%s166 + $0x68] sm:$0xff]
      %v188 = vld [vmem:[%s166 + $0x70] sm:$0xff]
      %v189 = vld [vmem:[%s166 + $0x78] sm:$0xff]
      %v190 = vld [vmem:[%s166 + $0x80] sm:$0xff]
      %v191 = vld [vmem:[%s166 + $0x88] sm:$0xff]
      %v192 = vld [vmem:[%s166 + $0x90] sm:$0xff]
      %v193 = vld [vmem:[%s166 + $0x98] sm:$0xff]
      %v194 = vld [vmem:[%s166 + $0xa0] sm:$0xff]
      %v195 = vld [vmem:[%s166 + $0xa8] sm:$0xff]
      %v196 = vld [vmem:[%s166 + $0xb0] sm:$0xff]
      %v197 = vld [vmem:[%s166 + $0xb8] sm:$0xff]
      %v198 = vld [vmem:[%s166 + $0xc0] sm:$0xff]
      %v199 = vld [vmem:[%s166 + $0xc8] sm:$0xff]
      %v200 = vld [vmem:[%s166 + $0xd0] sm:$0xff]
      %v201 = vld [vmem:[%s166 + $0xd8] sm:$0xff]
      %v202 = vld [vmem:[%s166 + $0xe0] sm:$0xff]
      %v203 = vld [vmem:[%s166 + $0xe8] sm:$0xff]
      %v204 = vld [vmem:[%s166 + $0xf0] sm:$0xff]
      %v205 = vld [vmem:[%s166 + $0xf8] sm:$0xff]
      %v206 = vld [vmem:[%s166 + $0x100] sm:$0xff]
      %v207 = vld [vmem:[%s166 + $0x108] sm:$0xff]
      %v208 = vld [vmem:[%s166 + $0x110] sm:$0xff]
      %v209 = vld [vmem:[%s166 + $0x118] sm:$0xff]
      %v210 = vld [vmem:[%s166 + $0x120] sm:$0xff]
      %v211 = vld [vmem:[%s166 + $0x128] sm:$0xff]
      %v212 = vld [vmem:[%s166 + $0x130] sm:$0xff]
      %v213 = vld [vmem:[%s166 + $0x138] sm:$0xff]
      %v214 = vld [vmem:[%s166 + $0x140] sm:$0xff]
      %v215 = vld [vmem:[%s166 + $0x148] sm:$0xff]
      %v216 = vld [vmem:[%s166 + $0x150] sm:$0xff]
      %v217 = vld [vmem:[%s166 + $0x158] sm:$0xff]
      %v218 = vld [vmem:[%s166 + $0x160] sm:$0xff]
      %v219 = vld [vmem:[%s166 + $0x168] sm:$0xff]
      %v220 = vld [vmem:[%s166 + $0x170] sm:$0xff]
      %v221 = vld [vmem:[%s166 + $0x178] sm:$0xff]
      %v222 = vld [vmem:[%s166 + $0x180] sm:$0xff]
      %v223 = vld [vmem:[%s166 + $0x188] sm:$0xff]
      %v224 = vld [vmem:[%s166 + $0x190] sm:$0xff]
      %v225 = vld [vmem:[%s166 + $0x198] sm:$0xff]
      %v226 = vld [vmem:[%s166 + $0x1a0] sm:$0xff]
      %v227 = vld [vmem:[%s166 + $0x1a8] sm:$0xff]
      %v228 = vld [vmem:[%s166 + $0x1b0] sm:$0xff]
      %v229 = vld [vmem:[%s166 + $0x1b8] sm:$0xff]
      %v230 = vld [vmem:[%s166 + $0x1c0] sm:$0xff]
      %v231 = vld [vmem:[%s166 + $0x1c8] sm:$0xff]
      %v232 = vld [vmem:[%s166 + $0x1d0] sm:$0xff]
      %v233 = vld [vmem:[%s166 + $0x1d8] sm:$0xff]
      %v234 = vld [vmem:[%s166 + $0x1e0] sm:$0xff]
      %v235 = vld [vmem:[%s166 + $0x1e8] sm:$0xff]
      %v236 = vld [vmem:[%s166 + $0x1f0] sm:$0xff]
      %v237 = vld [vmem:[%s166 + $0x1f8] sm:$0xff]
      %v238 = vld [vmem:[%s166 + $0x200] sm:$0xff]
      %v239 = vld [vmem:[%s166 + $0x208] sm:$0xff]
      %v240 = vld [vmem:[%s166 + $0x210] sm:$0xff]
      %v241 = vld [vmem:[%s166 + $0x218] sm:$0xff]
      %v242 = vld [vmem:[%s166 + $0x220] sm:$0xff]
      %v243 = vld [vmem:[%s166 + $0x228] sm:$0xff]
      %v244 = vld [vmem:[%s166 + $0x230] sm:$0xff]
      %v245 = vld [vmem:[%s166 + $0x238] sm:$0xff]
      %v246 = vld [vmem:[%s166 + $0x240] sm:$0xff]
      %v247 = vld [vmem:[%s166 + $0x248] sm:$0xff]
      %v248 = vld [vmem:[%s166 + $0x250] sm:$0xff]
      %v249 = vld [vmem:[%s166 + $0x258] sm:$0xff]
      %v250 = vld [vmem:[%s166 + $0x260] sm:$0xff]
      %v251 = vld [vmem:[%s166 + $0x268] sm:$0xff]
      %v252 = vld [vmem:[%s166 + $0x270] sm:$0xff]
      %v253 = vld [vmem:[%s166 + $0x278] sm:$0xff]
      %v254 = vld [vmem:[%s166 + $0x280] sm:$0xff]
      %v255 = vld [vmem:[%s166 + $0x288] sm:$0xff]
      %v256 = vld [vmem:[%s166 + $0x290] sm:$0xff]
      %v257 = vld [vmem:[%s166 + $0x298] sm:$0xff]
      %v258 = vld [vmem:[%s166 + $0x2a0] sm:$0xff]
      %v259 = vld [vmem:[%s166 + $0x2a8] sm:$0xff]
      %v260 = vld [vmem:[%s166 + $0x2b0] sm:$0xff]
      %v261 = vld [vmem:[%s166 + $0x2b8] sm:$0xff]
      %v262 = vld [vmem:[%s1] sm:$0x1]
      %v264 = vlaneseq
      %v265 = vshrl.u32 %v264, 7
      %v266 = vsub.s32 0, %v265
      %v267 = vrot.slane %v262, %v266
      %v269 = vmul.f32 %v174, %v267
      %v270 = vmul.f32 %v175, %v267
      %v271 = vmul.f32 %v176, %v267
      %v272 = vmul.f32 %v177, %v267
      %v273 = vmul.f32 %v178, %v267
      %v274 = vmul.f32 %v179, %v267
      %v275 = vmul.f32 %v180, %v267
      %v276 = vmul.f32 %v181, %v267
      %v277 = vmul.f32 %v182, %v267
      %v278 = vmul.f32 %v183, %v267
      %v279 = vmul.f32 %v184, %v267
      %v280 = vmul.f32 %v185, %v267
      %v281 = vmul.f32 %v186, %v267
      %v282 = vmul.f32 %v187, %v267
      %v283 = vmul.f32 %v188, %v267
      %v284 = vmul.f32 %v189, %v267
      %v285 = vmul.f32 %v190, %v267
      %v286 = vmul.f32 %v191, %v267
      %v287 = vmul.f32 %v192, %v267
      %v288 = vmul.f32 %v193, %v267
      %v289 = vmul.f32 %v194, %v267
      %v290 = vmul.f32 %v195, %v267
      %v291 = vmul.f32 %v196, %v267
      %v292 = vmul.f32 %v197, %v267
      %v293 = vmul.f32 %v198, %v267
      %v294 = vmul.f32 %v199, %v267
      %v295 = vmul.f32 %v200, %v267
      %v296 = vmul.f32 %v201, %v267
      %v297 = vmul.f32 %v202, %v267
      %v298 = vmul.f32 %v203, %v267
      %v299 = vmul.f32 %v204, %v267
      %v300 = vmul.f32 %v205, %v267
      %v301 = vmul.f32 %v206, %v267
      %v302 = vmul.f32 %v207, %v267
      %v303 = vmul.f32 %v208, %v267
      %v304 = vmul.f32 %v209, %v267
      %v305 = vmul.f32 %v210, %v267
      %v306 = vmul.f32 %v211, %v267
      %v307 = vmul.f32 %v212, %v267
      %v308 = vmul.f32 %v213, %v267
      %v309 = vmul.f32 %v214, %v267
      %v310 = vmul.f32 %v215, %v267
      %v311 = vmul.f32 %v216, %v267
      %v312 = vmul.f32 %v217, %v267
      %v313 = vmul.f32 %v218, %v267
      %v314 = vmul.f32 %v219, %v267
      %v315 = vmul.f32 %v220, %v267
      %v316 = vmul.f32 %v221, %v267
      %v317 = vmul.f32 %v222, %v267
      %v318 = vmul.f32 %v223, %v267
      %v319 = vmul.f32 %v224, %v267
      %v320 = vmul.f32 %v225, %v267
      %v321 = vmul.f32 %v226, %v267
      %v322 = vmul.f32 %v227, %v267
      %v323 = vmul.f32 %v228, %v267
      %v324 = vmul.f32 %v229, %v267
      %v325 = vmul.f32 %v230, %v267
      %v326 = vmul.f32 %v231, %v267
      %v327 = vmul.f32 %v232, %v267
      %v328 = vmul.f32 %v233, %v267
      %v329 = vmul.f32 %v234, %v267
      %v330 = vmul.f32 %v235, %v267
      %v331 = vmul.f32 %v236, %v267
      %v332 = vmul.f32 %v237, %v267
      %v333 = vmul.f32 %v238, %v267
      %v334 = vmul.f32 %v239, %v267
      %v335 = vmul.f32 %v240, %v267
      %v336 = vmul.f32 %v241, %v267
      %v337 = vmul.f32 %v242, %v267
      %v338 = vmul.f32 %v243, %v267
      %v339 = vmul.f32 %v244, %v267
      %v340 = vmul.f32 %v245, %v267
      %v341 = vmul.f32 %v246, %v267
      %v342 = vmul.f32 %v247, %v267
      %v343 = vmul.f32 %v248, %v267
      %v344 = vmul.f32 %v249, %v267
      %v345 = vmul.f32 %v250, %v267
      %v346 = vmul.f32 %v251, %v267
      %v347 = vmul.f32 %v252, %v267
      %v348 = vmul.f32 %v253, %v267
      %v349 = vmul.f32 %v254, %v267
      %v350 = vmul.f32 %v255, %v267
      %v351 = vmul.f32 %v256, %v267
      %v352 = vmul.f32 %v257, %v267
      %v353 = vmul.f32 %v258, %v267
      %v354 = vmul.f32 %v259, %v267
      %v355 = vmul.f32 %v260, %v267
      %v356 = vmul.f32 %v261, %v267
      %v357 = vld [vmem:[%s2] sm:$0x1]
      %v359 = vlaneseq
      %v360 = vshrl.u32 %v359, 7
      %v361 = vsub.s32 0, %v360
      %v362 = vrot.slane %v357, %v361
      %v364 = vadd.f32 %v269, %v362
      %v365 = vadd.f32 %v270, %v362
      %v366 = vadd.f32 %v271, %v362
      %v367 = vadd.f32 %v272, %v362
      %v368 = vadd.f32 %v273, %v362
      %v369 = vadd.f32 %v274, %v362
      %v370 = vadd.f32 %v275, %v362
      %v371 = vadd.f32 %v276, %v362
      %v372 = vadd.f32 %v277, %v362
      %v373 = vadd.f32 %v278, %v362
      %v374 = vadd.f32 %v279, %v362
      %v375 = vadd.f32 %v280, %v362
      %v376 = vadd.f32 %v281, %v362
      %v377 = vadd.f32 %v282, %v362
      %v378 = vadd.f32 %v283, %v362
      %v379 = vadd.f32 %v284, %v362
      %v380 = vadd.f32 %v285, %v362
      %v381 = vadd.f32 %v286, %v362
      %v382 = vadd.f32 %v287, %v362
      %v383 = vadd.f32 %v288, %v362
      %v384 = vadd.f32 %v289, %v362
      %v385 = vadd.f32 %v290, %v362
      %v386 = vadd.f32 %v291, %v362
      %v387 = vadd.f32 %v292, %v362
      %v388 = vadd.f32 %v293, %v362
      %v389 = vadd.f32 %v294, %v362
      %v390 = vadd.f32 %v295, %v362
      %v391 = vadd.f32 %v296, %v362
      %v392 = vadd.f32 %v297, %v362
      %v393 = vadd.f32 %v298, %v362
      %v394 = vadd.f32 %v299, %v362
      %v395 = vadd.f32 %v300, %v362
      %v396 = vadd.f32 %v301, %v362
      %v397 = vadd.f32 %v302, %v362
      %v398 = vadd.f32 %v303, %v362
      %v399 = vadd.f32 %v304, %v362
      %v400 = vadd.f32 %v305, %v362
      %v401 = vadd.f32 %v306, %v362
      %v402 = vadd.f32 %v307, %v362
      %v403 = vadd.f32 %v308, %v362
      %v404 = vadd.f32 %v309, %v362
      %v405 = vadd.f32 %v310, %v362
      %v406 = vadd.f32 %v311, %v362
      %v407 = vadd.f32 %v312, %v362
      %v408 = vadd.f32 %v313, %v362
      %v409 = vadd.f32 %v314, %v362
      %v410 = vadd.f32 %v315, %v362
      %v411 = vadd.f32 %v316, %v362
      %v412 = vadd.f32 %v317, %v362
      %v413 = vadd.f32 %v318, %v362
      %v414 = vadd.f32 %v319, %v362
      %v415 = vadd.f32 %v320, %v362
      %v416 = vadd.f32 %v321, %v362
      %v417 = vadd.f32 %v322, %v362
      %v418 = vadd.f32 %v323, %v362
      %v419 = vadd.f32 %v324, %v362
      %v420 = vadd.f32 %v325, %v362
      %v421 = vadd.f32 %v326, %v362
      %v422 = vadd.f32 %v327, %v362
      %v423 = vadd.f32 %v328, %v362
      %v424 = vadd.f32 %v329, %v362
      %v425 = vadd.f32 %v330, %v362
      %v426 = vadd.f32 %v331, %v362
      %v427 = vadd.f32 %v332, %v362
      %v428 = vadd.f32 %v333, %v362
      %v429 = vadd.f32 %v334, %v362
      %v430 = vadd.f32 %v335, %v362
      %v431 = vadd.f32 %v336, %v362
      %v432 = vadd.f32 %v337, %v362
      %v433 = vadd.f32 %v338, %v362
      %v434 = vadd.f32 %v339, %v362
      %v435 = vadd.f32 %v340, %v362
      %v436 = vadd.f32 %v341, %v362
      %v437 = vadd.f32 %v342, %v362
      %v438 = vadd.f32 %v343, %v362
      %v439 = vadd.f32 %v344, %v362
      %v440 = vadd.f32 %v345, %v362
      %v441 = vadd.f32 %v346, %v362
      %v442 = vadd.f32 %v347, %v362
      %v443 = vadd.f32 %v348, %v362
      %v444 = vadd.f32 %v349, %v362
      %v445 = vadd.f32 %v350, %v362
      %v446 = vadd.f32 %v351, %v362
      %v447 = vadd.f32 %v352, %v362
      %v448 = vadd.f32 %v353, %v362
      %v449 = vadd.f32 %v354, %v362
      %v450 = vadd.f32 %v355, %v362
      %v451 = vadd.f32 %v356, %v362
      %v452 = vmax.f32 %v364, 0.0
      %v453 = vmax.f32 %v365, 0.0
      %v454 = vmax.f32 %v366, 0.0
      %v455 = vmax.f32 %v367, 0.0
      %v456 = vmax.f32 %v368, 0.0
      %v457 = vmax.f32 %v369, 0.0
      %v458 = vmax.f32 %v370, 0.0
      %v459 = vmax.f32 %v371, 0.0
      %v460 = vmax.f32 %v372, 0.0
      %v461 = vmax.f32 %v373, 0.0
      %v462 = vmax.f32 %v374, 0.0
      %v463 = vmax.f32 %v375, 0.0
      %v464 = vmax.f32 %v376, 0.0
      %v465 = vmax.f32 %v377, 0.0
      %v466 = vmax.f32 %v378, 0.0
      %v467 = vmax.f32 %v379, 0.0
      %v468 = vmax.f32 %v380, 0.0
      %v469 = vmax.f32 %v381, 0.0
      %v470 = vmax.f32 %v382, 0.0
      %v471 = vmax.f32 %v383, 0.0
      %v472 = vmax.f32 %v384, 0.0
      %v473 = vmax.f32 %v385, 0.0
      %v474 = vmax.f32 %v386, 0.0
      %v475 = vmax.f32 %v387, 0.0
      %v476 = vmax.f32 %v388, 0.0
      %v477 = vmax.f32 %v389, 0.0
      %v478 = vmax.f32 %v390, 0.0
      %v479 = vmax.f32 %v391, 0.0
      %v480 = vmax.f32 %v392, 0.0
      %v481 = vmax.f32 %v393, 0.0
      %v482 = vmax.f32 %v394, 0.0
      %v483 = vmax.f32 %v395, 0.0
      %v484 = vmax.f32 %v396, 0.0
      %v485 = vmax.f32 %v397, 0.0
      %v486 = vmax.f32 %v398, 0.0
      %v487 = vmax.f32 %v399, 0.0
      %v488 = vmax.f32 %v400, 0.0
      %v489 = vmax.f32 %v401, 0.0
      %v490 = vmax.f32 %v402, 0.0
      %v491 = vmax.f32 %v403, 0.0
      %v492 = vmax.f32 %v404, 0.0
      %v493 = vmax.f32 %v405, 0.0
      %v494 = vmax.f32 %v406, 0.0
      %v495 = vmax.f32 %v407, 0.0
      %v496 = vmax.f32 %v408, 0.0
      %v497 = vmax.f32 %v409, 0.0
      %v498 = vmax.f32 %v410, 0.0
      %v499 = vmax.f32 %v411, 0.0
      %v500 = vmax.f32 %v412, 0.0
      %v501 = vmax.f32 %v413, 0.0
      %v502 = vmax.f32 %v414, 0.0
      %v503 = vmax.f32 %v415, 0.0
      %v504 = vmax.f32 %v416, 0.0
      %v505 = vmax.f32 %v417, 0.0
      %v506 = vmax.f32 %v418, 0.0
      %v507 = vmax.f32 %v419, 0.0
      %v508 = vmax.f32 %v420, 0.0
      %v509 = vmax.f32 %v421, 0.0
      %v510 = vmax.f32 %v422, 0.0
      %v511 = vmax.f32 %v423, 0.0
      %v512 = vmax.f32 %v424, 0.0
      %v513 = vmax.f32 %v425, 0.0
      %v514 = vmax.f32 %v426, 0.0
      %v515 = vmax.f32 %v427, 0.0
      %v516 = vmax.f32 %v428, 0.0
      %v517 = vmax.f32 %v429, 0.0
      %v518 = vmax.f32 %v430, 0.0
      %v519 = vmax.f32 %v431, 0.0
      %v520 = vmax.f32 %v432, 0.0
      %v521 = vmax.f32 %v433, 0.0
      %v522 = vmax.f32 %v434, 0.0
      %v523 = vmax.f32 %v435, 0.0
      %v524 = vmax.f32 %v436, 0.0
      %v525 = vmax.f32 %v437, 0.0
      %v526 = vmax.f32 %v438, 0.0
      %v527 = vmax.f32 %v439, 0.0
      %v528 = vmax.f32 %v440, 0.0
      %v529 = vmax.f32 %v441, 0.0
      %v530 = vmax.f32 %v442, 0.0
      %v531 = vmax.f32 %v443, 0.0
      %v532 = vmax.f32 %v444, 0.0
      %v533 = vmax.f32 %v445, 0.0
      %v534 = vmax.f32 %v446, 0.0
      %v535 = vmax.f32 %v447, 0.0
      %v536 = vmax.f32 %v448, 0.0
      %v537 = vmax.f32 %v449, 0.0
      %v538 = vmax.f32 %v450, 0.0
      %v539 = vmax.f32 %v451, 0.0
      %540 = vst [vmem:[%s172] sm:$0xff] %v452
      %541 = vst [vmem:[%s172 + $0x8] sm:$0xff] %v453
      %542 = vst [vmem:[%s172 + $0x10] sm:$0xff] %v454
      %543 = vst [vmem:[%s172 + $0x18] sm:$0xff] %v455
      %544 = vst [vmem:[%s172 + $0x20] sm:$0xff] %v456
      %545 = vst [vmem:[%s172 + $0x28] sm:$0xff] %v457
      %546 = vst [vmem:[%s172 + $0x30] sm:$0xff] %v458
      %547 = vst [vmem:[%s172 + $0x38] sm:$0xff] %v459
      %548 = vst [vmem:[%s172 + $0x40] sm:$0xff] %v460
      %549 = vst [vmem:[%s172 + $0x48] sm:$0xff] %v461
      %550 = vst [vmem:[%s172 + $0x50] sm:$0xff] %v462
      %551 = vst [vmem:[%s172 + $0x58] sm:$0xff] %v463
      %552 = vst [vmem:[%s172 + $0x60] sm:$0xff] %v464
      %553 = vst [vmem:[%s172 + $0x68] sm:$0xff] %v465
      %554 = vst [vmem:[%s172 + $0x70] sm:$0xff] %v466
      %555 = vst [vmem:[%s172 + $0x78] sm:$0xff] %v467
      %556 = vst [vmem:[%s172 + $0x80] sm:$0xff] %v468
      %557 = vst [vmem:[%s172 + $0x88] sm:$0xff] %v469
      %558 = vst [vmem:[%s172 + $0x90] sm:$0xff] %v470
      %559 = vst [vmem:[%s172 + $0x98] sm:$0xff] %v471
      %560 = vst [vmem:[%s172 + $0xa0] sm:$0xff] %v472
      %561 = vst [vmem:[%s172 + $0xa8] sm:$0xff] %v473
      %562 = vst [vmem:[%s172 + $0xb0] sm:$0xff] %v474
      %563 = vst [vmem:[%s172 + $0xb8] sm:$0xff] %v475
      %564 = vst [vmem:[%s172 + $0xc0] sm:$0xff] %v476
      %565 = vst [vmem:[%s172 + $0xc8] sm:$0xff] %v477
      %566 = vst [vmem:[%s172 + $0xd0] sm:$0xff] %v478
      %567 = vst [vmem:[%s172 + $0xd8] sm:$0xff] %v479
      %568 = vst [vmem:[%s172 + $0xe0] sm:$0xff] %v480
      %569 = vst [vmem:[%s172 + $0xe8] sm:$0xff] %v481
      %570 = vst [vmem:[%s172 + $0xf0] sm:$0xff] %v482
      %571 = vst [vmem:[%s172 + $0xf8] sm:$0xff] %v483
      %572 = vst [vmem:[%s172 + $0x100] sm:$0xff] %v484
      %573 = vst [vmem:[%s172 + $0x108] sm:$0xff] %v485
      %574 = vst [vmem:[%s172 + $0x110] sm:$0xff] %v486
      %575 = vst [vmem:[%s172 + $0x118] sm:$0xff] %v487
      %576 = vst [vmem:[%s172 + $0x120] sm:$0xff] %v488
      %577 = vst [vmem:[%s172 + $0x128] sm:$0xff] %v489
      %578 = vst [vmem:[%s172 + $0x130] sm:$0xff] %v490
      %579 = vst [vmem:[%s172 + $0x138] sm:$0xff] %v491
      %580 = vst [vmem:[%s172 + $0x140] sm:$0xff] %v492
      %581 = vst [vmem:[%s172 + $0x148] sm:$0xff] %v493
      %582 = vst [vmem:[%s172 + $0x150] sm:$0xff] %v494
      %583 = vst [vmem:[%s172 + $0x158] sm:$0xff] %v495
      %584 = vst [vmem:[%s172 + $0x160] sm:$0xff] %v496
      %585 = vst [vmem:[%s172 + $0x168] sm:$0xff] %v497
      %586 = vst [vmem:[%s172 + $0x170] sm:$0xff] %v498
      %587 = vst [vmem:[%s172 + $0x178] sm:$0xff] %v499
      %588 = vst [vmem:[%s172 + $0x180] sm:$0xff] %v500
      %589 = vst [vmem:[%s172 + $0x188] sm:$0xff] %v501
      %590 = vst [vmem:[%s172 + $0x190] sm:$0xff] %v502
      %591 = vst [vmem:[%s172 + $0x198] sm:$0xff] %v503
      %592 = vst [vmem:[%s172 + $0x1a0] sm:$0xff] %v504
      %593 = vst [vmem:[%s172 + $0x1a8] sm:$0xff] %v505
      %594 = vst [vmem:[%s172 + $0x1b0] sm:$0xff] %v506
      %595 = vst [vmem:[%s172 + $0x1b8] sm:$0xff] %v507
      %596 = vst [vmem:[%s172 + $0x1c0] sm:$0xff] %v508
      %597 = vst [vmem:[%s172 + $0x1c8] sm:$0xff] %v509
      %598 = vst [vmem:[%s172 + $0x1d0] sm:$0xff] %v510
      %599 = vst [vmem:[%s172 + $0x1d8] sm:$0xff] %v511
      %600 = vst [vmem:[%s172 + $0x1e0] sm:$0xff] %v512
      %601 = vst [vmem:[%s172 + $0x1e8] sm:$0xff] %v513
      %602 = vst [vmem:[%s172 + $0x1f0] sm:$0xff] %v514
      %603 = vst [vmem:[%s172 + $0x1f8] sm:$0xff] %v515
      %604 = vst [vmem:[%s172 + $0x200] sm:$0xff] %v516
      %605 = vst [vmem:[%s172 + $0x208] sm:$0xff] %v517
      %606 = vst [vmem:[%s172 + $0x210] sm:$0xff] %v518
      %607 = vst [vmem:[%s172 + $0x218] sm:$0xff] %v519
      %608 = vst [vmem:[%s172 + $0x220] sm:$0xff] %v520
      %609 = vst [vmem:[%s172 + $0x228] sm:$0xff] %v521
      %610 = vst [vmem:[%s172 + $0x230] sm:$0xff] %v522
      %611 = vst [vmem:[%s172 + $0x238] sm:$0xff] %v523
      %612 = vst [vmem:[%s172 + $0x240] sm:$0xff] %v524
      %613 = vst [vmem:[%s172 + $0x248] sm:$0xff] %v525
      %614 = vst [vmem:[%s172 + $0x250] sm:$0xff] %v526
      %615 = vst [vmem:[%s172 + $0x258] sm:$0xff] %v527
      %616 = vst [vmem:[%s172 + $0x260] sm:$0xff] %v528
      %617 = vst [vmem:[%s172 + $0x268] sm:$0xff] %v529
      %618 = vst [vmem:[%s172 + $0x270] sm:$0xff] %v530
      %619 = vst [vmem:[%s172 + $0x278] sm:$0xff] %v531
      %620 = vst [vmem:[%s172 + $0x280] sm:$0xff] %v532
      %621 = vst [vmem:[%s172 + $0x288] sm:$0xff] %v533
      %622 = vst [vmem:[%s172 + $0x290] sm:$0xff] %v534
      %623 = vst [vmem:[%s172 + $0x298] sm:$0xff] %v535
      %624 = vst [vmem:[%s172 + $0x2a0] sm:$0xff] %v536
      %625 = vst [vmem:[%s172 + $0x2a8] sm:$0xff] %v537
      %626 = vst [vmem:[%s172 + $0x2b0] sm:$0xff] %v538
      %627 = vst [vmem:[%s172 + $0x2b8] sm:$0xff] %v539
      %s628 = smul.u32 88, %s14
      %p629 = scmp.lt.s32.totalorder %s628, 175
      %s630 = scalar_select %p629, %s628, 175
      %s631 = smul.addr %s630, 8
      %s632 = scalar_lea.vmem %s3, %s631
      // Predicated region
      $region33: #{unet_decoder_forward.7} parent=31 // pred_check
        %p633 = pneg %p100
      $region34: #{unet_decoder_forward.7} parent=31 // pred_check_branch
        %635 = sbr.rel (%p633) target = $region36
      $region35: #{unet_decoder_forward.7} parent=31 // pred_region
        %s636 = smul.u32 88, %s14
      $region36: #{unet_decoder_forward.7} parent=31 // pred_fallthru
        _
    $region32: #{unet_decoder_forward.7} parent=5 // pred_fallthru
      _
    %p637 = scmp.le.s32.totalorder 2, %s9
    // Predicated region
    $region37: #{unet_decoder_forward.7} parent=5 // pred_check
      %p638 = pneg %p637
    $region38: #{unet_decoder_forward.7} parent=5 // pred_check_branch
      %640 = sbr.rel (%p638) target = $region40
    $region39: #{unet_decoder_forward.7} parent=5 // pred_region
      %s641 = ssub.s32 %s9, 2
      // Predicated region
      $region41: #{unet_decoder_forward.7} parent=39 // pred_check
        %p642 = pneg %p106
      $region42: #{unet_decoder_forward.7} parent=39 // pred_check_branch
        %644 = sbr.rel (%p642) target = $region44
      $region43: #{unet_decoder_forward.7} parent=39 // pred_region
        %s645 = smul.u32 88, %s15
        %p646 = scmp.lt.s32.totalorder %s645, 175
        %s647 = scalar_select %p646, %s645, 175
        %s648 = smul.addr %s647, 8
        %s649 = scalar_lea.vmem %s3, %s648
      $region44: #{unet_decoder_forward.7} parent=39 // pred_fallthru
        _
    $region40: #{unet_decoder_forward.7} parent=5 // pred_fallthru
      _
  $region6: #{unet_decoder_forward.7} parent=0 // loop_footer
    %s13 = sadd.s32 1, %s9
  $region7: #{unet_decoder_forward.7} parent=0 // loop_footer_branch
    %8 = sbr.rel target = $region3
  $region8: #{unet_decoder_forward.7} parent=0 // loop_exit
    _

// kernel: unet_decoder_forward.8
$region0: #{unet_decoder_forward.8}
  #allocation0 [shape = 'u32[]', space=smem, size = 0x4, offset = 0x4, fixed_abs, tag = 'smem constant byte address 0x4 - core index']
  #allocation1 [shape = 'u32[144,128]{1,0:T(1,128)}', space=vmem, size = 0x12000, scoped, tag = 'internal scratch']
  %s0 = inlined_call_operand.vmem [shape: bf16[11360,48], index: 0, kind: input, shape index: {}]
  %s1 = inlined_call_operand.vmem [shape: f32[432,8], index: 1, kind: input, shape index: {}]
  %s2 = inlined_call_operand.vmem [shape: f32[84,1,128], index: 2, kind: input, shape index: {}]
  %s3 = inlined_call_operand.vmem [shape: f32[10752,8], index: 3, kind: output, shape index: {0}]
  %s4 = inlined_call_operand.vmem [shape: f32[6,1,8], index: 4, kind: output, shape index: {1}]
  %s5 = inlined_call_operand.vmem [shape: f32[6,1,8], index: 5, kind: output, shape index: {2}]
  %6 = xla_tuple %s3, %s4, %s5
  %s7 = sld [smem:[#allocation0]]
  $region68: #{unet_decoder_forward.8} parent=0
    _
  %s9 = ssub.s32 1, %s7
  %s10 = scalar_select 0, %s9, %s7
  loop: start=0, step=1, limit=8
  $region2: #{unet_decoder_forward.8} parent=0 // loop_pre_header
    _
  $region3: #{unet_decoder_forward.8} parent=0 // loop_header
    %s12 = sphi 0, %s16
    %p13 = scmp.ge.s32.totalorder %s12, 8
    %s20 = sphi 0, %s20
    %s22 = sphi 0, %s20
    %s23 = sphi 0, %s22
    %s37 = sphi 0, %s23
    %s41 = sphi 0, %s41
    %s43 = sphi 0, %s41
    %s44 = sphi 0, %s43
    %s58 = sphi 0, %s44
    %s64 = sphi 0, %s66
    %s67 = sphi 0, %s64
    %s68 = sphi 0, %s67
    %s84 = sphi 0, %s68
    %s90 = sphi 0, %s92
    %s93 = sphi 0, %s90
    %s94 = sphi 0, %s93
    %s110 = sphi 0, %s94
    %s116 = sphi 0, %s118
    %s119 = sphi 0, %s116
    %s120 = sphi 0, %s119
    %s136 = sphi 0, %s120
    %s142 = sphi 0, %s144
    %s145 = sphi 0, %s142
    %s146 = sphi 0, %s145
    %s162 = sphi 0, %s146
  $region4: #{unet_decoder_forward.8} parent=0 // loop_header_branch
    %15 = sbr.rel (%p13) target = $region8
  $region5: #{unet_decoder_forward.8} parent=0 // loop_body
    %s17 = ssub.s32 %s12, 1
    %s18 = ssub.s32 %s12, 2
    %s19 = sadd.s32 %s12, 1
    %s21 = sadd.s32 %s20, 1
    %p24 = scmp.eq.s32.totalorder %s12, 5
    %p25 = scmp.ne.s32.totalorder %s20, %s22
    %p26 = scmp.eq.s32.totalorder %s12, 0
    %p27 = por %p25, %p26
    %p28 = scmp.ne.s32.totalorder %s20, %s22
    %p29 = scmp.eq.s32.totalorder %s17, 5
    %p30 = por %p28, %p29
    %p31 = scmp.ne.s32.totalorder %s22, %s23
    %p32 = scmp.eq.s32.totalorder %s17, 0
    %p33 = por %p31, %p32
    %p34 = scmp.ne.s32.totalorder %s22, %s23
    %p35 = scmp.eq.s32.totalorder %s18, 5
    %p36 = por %p34, %p35
    %p38 = scmp.ne.s32.totalorder %s23, %s37
    %p39 = scmp.eq.s32.totalorder %s18, 0
    %p40 = por %p38, %p39
    %s42 = sadd.s32 %s41, 1
    %p45 = scmp.eq.s32.totalorder %s12, 5
    %p46 = scmp.ne.s32.totalorder %s41, %s43
    %p47 = scmp.eq.s32.totalorder %s12, 0
    %p48 = por %p46, %p47
    %p49 = scmp.ne.s32.totalorder %s41, %s43
    %p50 = scmp.eq.s32.totalorder %s17, 5
    %p51 = por %p49, %p50
    %p52 = scmp.ne.s32.totalorder %s43, %s44
    %p53 = scmp.eq.s32.totalorder %s17, 0
    %p54 = por %p52, %p53
    %p55 = scmp.ne.s32.totalorder %s43, %s44
    %p56 = scmp.eq.s32.totalorder %s18, 5
    %p57 = por %p55, %p56
    %p59 = scmp.ne.s32.totalorder %s44, %s58
    %p60 = scmp.eq.s32.totalorder %s18, 0
    %p61 = por %p59, %p60
    %s62 = ssub.s32 %s12, %s19
    %p63 = scmp.eq.s32.totalorder %s62, 0
    %s65 = sadd.s32 %s64, 1
    %s66 = scalar_select %p63, %s64, %s65
    %p69 = pneg %p63
    %p70 = scmp.eq.s32.totalorder %s12, 5
    %p71 = por %p69, %p70
    %p72 = scmp.ne.s32.totalorder %s64, %s67
    %p73 = scmp.eq.s32.totalorder %s12, 0
    %p74 = por %p72, %p73
    %p75 = scmp.ne.s32.totalorder %s64, %s67
    %p76 = scmp.eq.s32.totalorder %s17, 5
    %p77 = por %p75, %p76
    %p78 = scmp.ne.s32.totalorder %s67, %s68
    %p79 = scmp.eq.s32.totalorder %s17, 0
    %p80 = por %p78, %p79
    %p81 = scmp.ne.s32.totalorder %s67, %s68
    %p82 = scmp.eq.s32.totalorder %s18, 5
    %p83 = por %p81, %p82
    %p85 = scmp.ne.s32.totalorder %s68, %s84
    %p86 = scmp.eq.s32.totalorder %s18, 0
    %p87 = por %p85, %p86
    %s88 = ssub.s32 %s12, %s19
    %p89 = scmp.eq.s32.totalorder %s88, 0
    %s91 = sadd.s32 %s90, 1
    %s92 = scalar_select %p89, %s90, %s91
    %p95 = pneg %p89
    %p96 = scmp.eq.s32.totalorder %s12, 5
    %p97 = por %p95, %p96
    %p98 = scmp.ne.s32.totalorder %s90, %s93
    %p99 = scmp.eq.s32.totalorder %s12, 0
    %p100 = por %p98, %p99
    %p101 = scmp.ne.s32.totalorder %s90, %s93
    %p102 = scmp.eq.s32.totalorder %s17, 5
    %p103 = por %p101, %p102
    %p104 = scmp.ne.s32.totalorder %s93, %s94
    %p105 = scmp.eq.s32.totalorder %s17, 0
    %p106 = por %p104, %p105
    %p107 = scmp.ne.s32.totalorder %s93, %s94
    %p108 = scmp.eq.s32.totalorder %s18, 5
    %p109 = por %p107, %p108
    %p111 = scmp.ne.s32.totalorder %s94, %s110
    %p112 = scmp.eq.s32.totalorder %s18, 0
    %p113 = por %p111, %p112
    %s114 = ssub.s32 %s12, %s19
    %p115 = scmp.eq.s32.totalorder %s114, 0
    %s117 = sadd.s32 %s116, 1
    %s118 = scalar_select %p115, %s116, %s117
    %p121 = pneg %p115
    %p122 = scmp.eq.s32.totalorder %s12, 5
    %p123 = por %p121, %p122
    %p124 = scmp.ne.s32.totalorder %s116, %s119
    %p125 = scmp.eq.s32.totalorder %s12, 0
    %p126 = por %p124, %p125
    %p127 = scmp.ne.s32.totalorder %s116, %s119
    %p128 = scmp.eq.s32.totalorder %s17, 5
    %p129 = por %p127, %p128
    %p130 = scmp.ne.s32.totalorder %s119, %s120
    %p131 = scmp.eq.s32.totalorder %s17, 0
    %p132 = por %p130, %p131
    %p133 = scmp.ne.s32.totalorder %s119, %s120
    %p134 = scmp.eq.s32.totalorder %s18, 5
    %p135 = por %p133, %p134
    %p137 = scmp.ne.s32.totalorder %s120, %s136
    %p138 = scmp.eq.s32.totalorder %s18, 0
    %p139 = por %p137, %p138
    %s140 = ssub.s32 %s12, %s19
    %p141 = scmp.eq.s32.totalorder %s140, 0
    %s143 = sadd.s32 %s142, 1
    %s144 = scalar_select %p141, %s142, %s143
    %p147 = pneg %p141
    %p148 = scmp.eq.s32.totalorder %s12, 5
    %p149 = por %p147, %p148
    %p150 = scmp.ne.s32.totalorder %s142, %s145
    %p151 = scmp.eq.s32.totalorder %s12, 0
    %p152 = por %p150, %p151
    %p153 = scmp.ne.s32.totalorder %s142, %s145
    %p154 = scmp.eq.s32.totalorder %s17, 5
    %p155 = por %p153, %p154
    %p156 = scmp.ne.s32.totalorder %s145, %s146
    %p157 = scmp.eq.s32.totalorder %s17, 0
    %p158 = por %p156, %p157
    %p159 = scmp.ne.s32.totalorder %s145, %s146
    %p160 = scmp.eq.s32.totalorder %s18, 5
    %p161 = por %p159, %p160
    %p163 = scmp.ne.s32.totalorder %s146, %s162
    %p164 = scmp.eq.s32.totalorder %s18, 0
    %p165 = por %p163, %p164
    %p166 = scmp.le.s32.totalorder 1, %s12
    %p167 = scmp.lt.s32.totalorder %s12, 7
    %p168 = pnand %p166, %p167
    %p169 = pneg %p168
    // Predicated region
    $region9: #{unet_decoder_forward.8} parent=5 // pred_check
      _
    $region10: #{unet_decoder_forward.8} parent=5 // pred_check_branch
      %171 = sbr.rel (%p168) target = $region12
    $region11: #{unet_decoder_forward.8} parent=5 // pred_region
      %s172 = ssub.s32 %s12, 1
      // Predicated region
      $region13: #{unet_decoder_forward.8} parent=11 // pred_check
        %p173 = pneg %p33
      $region14: #{unet_decoder_forward.8} parent=11 // pred_check_branch
        %175 = sbr.rel (%p173) target = $region16
      $region15: #{unet_decoder_forward.8} parent=11 // pred_region
        _
      $region16: #{unet_decoder_forward.8} parent=11 // pred_fallthru
        _
      // Predicated region
      $region17: #{unet_decoder_forward.8} parent=11 // pred_check
        %p176 = pneg %p54
      $region18: #{unet_decoder_forward.8} parent=11 // pred_check_branch
        %178 = sbr.rel (%p176) target = $region20
      $region19: #{unet_decoder_forward.8} parent=11 // pred_region
        _
      $region20: #{unet_decoder_forward.8} parent=11 // pred_fallthru
        _
    $region12: #{unet_decoder_forward.8} parent=5 // pred_fallthru
      _
    %p179 = scmp.lt.s32.totalorder %s12, 6
    // Predicated region
    $region21: #{unet_decoder_forward.8} parent=5 // pred_check
      %p180 = pneg %p179
    $region22: #{unet_decoder_forward.8} parent=5 // pred_check_branch
      %182 = sbr.rel (%p180) target = $region24
    $region23: #{unet_decoder_forward.8} parent=5 // pred_region
      // Predicated region
      $region25: #{unet_decoder_forward.8} parent=23 // pred_check
        %p183 = pneg %p74
      $region26: #{unet_decoder_forward.8} parent=23 // pred_check_branch
        %185 = sbr.rel (%p183) target = $region28
      $region27: #{unet_decoder_forward.8} parent=23 // pred_region
        %s186 = smul.u32 14, %s12
        %p187 = scmp.lt.s32.totalorder %s186, 83
        %s188 = scalar_select %p187, %s186, 83
        %s189 = scalar_lea.vmem %s2, %s188
        %s190 = smul.u32 14, %s12
      $region28: #{unet_decoder_forward.8} parent=23 // pred_fallthru
        _
    $region24: #{unet_decoder_forward.8} parent=5 // pred_fallthru
      _
    %p191 = scmp.le.s32.totalorder 1, %s12
    %p192 = scmp.lt.s32.totalorder %s12, 7
    %p193 = pnand %p191, %p192
    %p194 = pneg %p193
    // Predicated region
    $region29: #{unet_decoder_forward.8} parent=5 // pred_check
      _
    $region30: #{unet_decoder_forward.8} parent=5 // pred_check_branch
      %196 = sbr.rel (%p193) target = $region32
    $region31: #{unet_decoder_forward.8} parent=5 // pred_region
      %s197 = ssub.s32 %s12, 1
      %p198 = pneg %p33
      %p199 = pneg %p30
      %p200 = pneg %p54
      %p201 = pneg %p51
      %s202 = smul.u32 14, %s17
      %p203 = scmp.lt.s32.totalorder %s202, 83
      %s204 = scalar_select %p203, %s202, 83
      %s205 = scalar_lea.vmem %s2, %s204
      %p206 = pneg %p80
      %p207 = pneg %p77
      %p208 = pneg %p106
      %p209 = pneg %p103
      %s210 = smul.u32 224, %s17
      %p211 = scmp.lt.s32.totalorder %s210, 1343
      %s212 = scalar_select %p211, %s210, 1343
      %s213 = smul.addr %s212, 8
      %s214 = scalar_lea.vmem %s3, %s213
      %p215 = pneg %p132
      %p216 = pneg %p129
      %p217 = scmp.lt.s32.totalorder %s17, 5
      %s218 = scalar_select %p217, %s17, 5
      %s219 = scalar_lea.vmem %s4, %s218
      %p220 = pneg %p158
      %p221 = pneg %p155
      %p222 = scmp.lt.s32.totalorder %s17, 5
      %s223 = scalar_select %p222, %s17, 5
      %s224 = scalar_lea.vmem %s5, %s223
      %s225 = smul.u32 14, %s17
      %p226 = scmp.lt.s32.totalorder %s225, 83
      %s227 = scalar_select %p226, %s225, 83
      %s228 = scalar_lea.vmem %s2, %s227
      %s229 = smul.u32 14, %s17
      %s230 = smul.u32 224, %s17
      %p231 = scmp.lt.s32.totalorder %s230, 1343
      %s232 = scalar_select %p231, %s230, 1343
      %s233 = smul.addr %s232, 8
      %s234 = scalar_lea.vmem %s3, %s233
      %s235 = smul.u32 224, %s17
      %p236 = scmp.lt.s32.totalorder %s17, 5
      %s237 = scalar_select %p236, %s17, 5
      %s238 = scalar_lea.vmem %s4, %s237
      %p239 = scmp.lt.s32.totalorder %s17, 5
      %s240 = scalar_select %p239, %s17, 5
      %s241 = scalar_lea.vmem %s5, %s240
      %v243 = vld [vmem:[%s1] sm:$0xff]
      %v244 = vld [vmem:[%s1 + $0x8] sm:$0xff]
      %v245 = vld [vmem:[%s1 + $0x10] sm:$0xff]
      %v246 = vld [vmem:[%s1 + $0x18] sm:$0xff]
      %v247 = vld [vmem:[%s1 + $0x20] sm:$0xff]
      %v248 = vld [vmem:[%s1 + $0x28] sm:$0xff]
      %v249 = vpack.c.bf16 %v244, %v243
      %v250 = vpack.c.bf16 %v246, %v245
      %v251 = vpack.c.bf16 %v248, %v247
      %v252 = vld [vmem:[%s1 + $0x30] sm:$0xff]
      %v253 = vld [vmem:[%s1 + $0x38] sm:$0xff]
      %v254 = vld [vmem:[%s1 + $0x40] sm:$0xff]
      %v255 = vld [vmem:[%s1 + $0x48] sm:$0xff]
      %v256 = vld [vmem:[%s1 + $0x50] sm:$0xff]
      %v257 = vld [vmem:[%s1 + $0x58] sm:$0xff]
      %v258 = vpack.c.bf16 %v253, %v252
      %v259 = vpack.c.bf16 %v255, %v254
      %v260 = vpack.c.bf16 %v257, %v256
      %v261 = vld [vmem:[%s1 + $0x60] sm:$0xff]
      %v262 = vld [vmem:[%s1 + $0x68] sm:$0xff]
      %v263 = vld [vmem:[%s1 + $0x70] sm:$0xff]
      %v264 = vld [vmem:[%s1 + $0x78] sm:$0xff]
      %v265 = vld [vmem:[%s1 + $0x80] sm:$0xff]
      %v266 = vld [vmem:[%s1 + $0x88] sm:$0xff]
      %v267 = vpack.c.bf16 %v262, %v261
      %v268 = vpack.c.bf16 %v264, %v263
      %v269 = vpack.c.bf16 %v266, %v265
      %v270 = vld [vmem:[%s1 + $0x90] sm:$0xff]
      %v271 = vld [vmem:[%s1 + $0x98] sm:$0xff]
      %v272 = vld [vmem:[%s1 + $0xa0] sm:$0xff]
      %v273 = vld [vmem:[%s1 + $0xa8] sm:$0xff]
      %v274 = vld [vmem:[%s1 + $0xb0] sm:$0xff]
      %v275 = vld [vmem:[%s1 + $0xb8] sm:$0xff]
      %v276 = vpack.c.bf16 %v271, %v270
      %v277 = vpack.c.bf16 %v273, %v272
      %v278 = vpack.c.bf16 %v275, %v274
      %v279 = vld [vmem:[%s1 + $0xc0] sm:$0xff]
      %v280 = vld [vmem:[%s1 + $0xc8] sm:$0xff]
      %v281 = vld [vmem:[%s1 + $0xd0] sm:$0xff]
      %v282 = vld [vmem:[%s1 + $0xd8] sm:$0xff]
      %v283 = vld [vmem:[%s1 + $0xe0] sm:$0xff]
      %v284 = vld [vmem:[%s1 + $0xe8] sm:$0xff]
      %v285 = vpack.c.bf16 %v280, %v279
      %v286 = vpack.c.bf16 %v282, %v281
      %v287 = vpack.c.bf16 %v284, %v283
      %v288 = vld [vmem:[%s1 + $0xf0] sm:$0xff]
      %v289 = vld [vmem:[%s1 + $0xf8] sm:$0xff]
      %v290 = vld [vmem:[%s1 + $0x100] sm:$0xff]
      %v291 = vld [vmem:[%s1 + $0x108] sm:$0xff]
      %v292 = vld [vmem:[%s1 + $0x110] sm:$0xff]
      %v293 = vld [vmem:[%s1 + $0x118] sm:$0xff]
      %v294 = vpack.c.bf16 %v289, %v288
      %v295 = vpack.c.bf16 %v291, %v290
      %v296 = vpack.c.bf16 %v293, %v292
      %v297 = vld [vmem:[%s1 + $0x120] sm:$0xff]
      %v298 = vld [vmem:[%s1 + $0x128] sm:$0xff]
      %v299 = vld [vmem:[%s1 + $0x130] sm:$0xff]
      %v300 = vld [vmem:[%s1 + $0x138] sm:$0xff]
      %v301 = vld [vmem:[%s1 + $0x140] sm:$0xff]
      %v302 = vld [vmem:[%s1 + $0x148] sm:$0xff]
      %v303 = vpack.c.bf16 %v298, %v297
      %v304 = vpack.c.bf16 %v300, %v299
      %v305 = vpack.c.bf16 %v302, %v301
      %v306 = vld [vmem:[%s1 + $0x150] sm:$0xff]
      %v307 = vld [vmem:[%s1 + $0x158] sm:$0xff]
      %v308 = vld [vmem:[%s1 + $0x160] sm:$0xff]
      %v309 = vld [vmem:[%s1 + $0x168] sm:$0xff]
      %v310 = vld [vmem:[%s1 + $0x170] sm:$0xff]
      %v311 = vld [vmem:[%s1 + $0x178] sm:$0xff]
      %v312 = vpack.c.bf16 %v307, %v306
      %v313 = vpack.c.bf16 %v309, %v308
      %v314 = vpack.c.bf16 %v311, %v310
      %v315 = vld [vmem:[%s1 + $0x180] sm:$0xff]
      %v316 = vld [vmem:[%s1 + $0x188] sm:$0xff]
      %v317 = vld [vmem:[%s1 + $0x190] sm:$0xff]
      %v318 = vld [vmem:[%s1 + $0x198] sm:$0xff]
      %v319 = vld [vmem:[%s1 + $0x1a0] sm:$0xff]
      %v320 = vld [vmem:[%s1 + $0x1a8] sm:$0xff]
      %v321 = vpack.c.bf16 %v316, %v315
      %v322 = vpack.c.bf16 %v318, %v317
      %v323 = vpack.c.bf16 %v320, %v319
      loop: start=0, step=1, limit=14
      $region33: #{unet_decoder_forward.8} parent=31 // loop_pre_header
        _
      $region34: #{unet_decoder_forward.8} parent=31 // loop_header
        %s325 = sphi 0, %s329
        %p326 = scmp.ge.s32.totalorder %s325, 14
        %v330 = vphi 0.0, %v2175
        %v331 = vphi 0.0, %v2262
      $region35: #{unet_decoder_forward.8} parent=31 // loop_header_branch
        %328 = sbr.rel (%p326) target = $region39
      $region36: #{unet_decoder_forward.8} parent=31 // loop_body
        %s332 = smul.u32 %s17, 1792
        %s333 = smul.u32 %s325, 128
        %s334 = sadd.s32 %s332, %s333
        %s335 = sshra.s32 %s334, 3
        %s336 = sand.u32 %s334, 7
        %s337 = smul.addr %s335, 4
        %s338 = scalar_lea.vmem %s0, %s337
        %v339 = vld [vmem:[%s338] sm:$0xf]
        %v340 = vld [vmem:[%s338 + $0x4] sm:$0xf]
        %v341 = vld [vmem:[%s338 + $0x8] sm:$0xf]
        %v342 = vld [vmem:[%s338 + $0xc] sm:$0xf]
        %v343 = vld [vmem:[%s338 + $0x10] sm:$0xf]
        %v344 = vld [vmem:[%s338 + $0x14] sm:$0xf]
        %v345 = vld [vmem:[%s338 + $0x18] sm:$0xf]
        %v346 = vld [vmem:[%s338 + $0x1c] sm:$0xf]
        %v347 = vld [vmem:[%s338 + $0x20] sm:$0xf]
        %v348 = vld [vmem:[%s338 + $0x24] sm:$0xf]
        %v349 = vld [vmem:[%s338 + $0x28] sm:$0xf]
        %v350 = vld [vmem:[%s338 + $0x2c] sm:$0xf]
        %v351 = vld [vmem:[%s338 + $0x30] sm:$0xf]
        %v352 = vld [vmem:[%s338 + $0x34] sm:$0xf]
        %v353 = vld [vmem:[%s338 + $0x38] sm:$0xf]
        %v354 = vld [vmem:[%s338 + $0x3c] sm:$0xf]
        %s355 = sadd.s32 %s334, 16
        %s356 = sshra.s32 %s355, 3
        %s357 = sand.u32 %s355, 7
        %s358 = smul.addr %s356, 4
        %s359 = scalar_lea.vmem %s0, %s358
        %v360 = vld [vmem:[%s359] sm:$0xf]
        %v361 = vld [vmem:[%s359 + $0x4] sm:$0xf]
        %v362 = vld [vmem:[%s359 + $0x8] sm:$0xf]
        %v363 = vld [vmem:[%s359 + $0xc] sm:$0xf]
        %v364 = vld [vmem:[%s359 + $0x10] sm:$0xf]
        %v365 = vld [vmem:[%s359 + $0x14] sm:$0xf]
        %v366 = vld [vmem:[%s359 + $0x18] sm:$0xf]
        %v367 = vld [vmem:[%s359 + $0x1c] sm:$0xf]
        %v368 = vld [vmem:[%s359 + $0x20] sm:$0xf]
        %v369 = vld [vmem:[%s359 + $0x24] sm:$0xf]
        %v370 = vld [vmem:[%s359 + $0x28] sm:$0xf]
        %v371 = vld [vmem:[%s359 + $0x2c] sm:$0xf]
        %v372 = vld [vmem:[%s359 + $0x30] sm:$0xf]
        %v373 = vld [vmem:[%s359 + $0x34] sm:$0xf]
        %v374 = vld [vmem:[%s359 + $0x38] sm:$0xf]
        %v375 = vld [vmem:[%s359 + $0x3c] sm:$0xf]
        %v392 = vunpack.c.l.b16 %v360
        %v393 = vunpack.c.l.b16 %v361
        %v394 = vunpack.c.l.b16 %v362
        %v395 = vunpack.c.l.b16 %v363
        %v396 = vunpack.c.l.b16 %v364
        %v397 = vunpack.c.l.b16 %v365
        %v398 = vunpack.c.l.b16 %v366
        %v399 = vunpack.c.l.b16 %v367
        %v400 = vunpack.c.l.b16 %v368
        %v401 = vunpack.c.l.b16 %v369
        %v402 = vunpack.c.l.b16 %v370
        %v403 = vunpack.c.l.b16 %v371
        %v404 = vunpack.c.l.b16 %v372
        %v405 = vunpack.c.l.b16 %v373
        %v406 = vunpack.c.l.b16 %v374
        %v407 = vunpack.c.l.b16 %v375
        %v408 = vpack.c.b16 %v393, %v392
        %v409 = vpack.c.b16 %v395, %v394
        %v410 = vpack.c.b16 %v397, %v396
        %v411 = vpack.c.b16 %v399, %v398
        %v412 = vpack.c.b16 %v401, %v400
        %v413 = vpack.c.b16 %v403, %v402
        %v414 = vpack.c.b16 %v405, %v404
        %v415 = vpack.c.b16 %v407, %v406
        %vm416 = vcmask 392192
        %v418 = vsel %vm416, %v408, 0
        %v421 = vsel %vm416, %v409, 0
        %v424 = vsel %vm416, %v410, 0
        %v427 = vsel %vm416, %v411, 0
        %v430 = vsel %vm416, %v412, 0
        %v433 = vsel %vm416, %v413, 0
        %v436 = vsel %vm416, %v414, 0
        %v439 = vsel %vm416, %v415, 0
        %441 = vmatprep.subr.bf16.mxu0 0
        %442 = vmatpush1.bf16.msra.mxu0 %v258
        %443 = vmatprep.subr.bf16.mxu0 0
        %444 = vmatpush1.bf16.msra.mxu0 %v259
        %445 = vmatprep.subr.bf16.mxu0 0
        %446 = vmatpush1.bf16.msra.mxu0 %v260
        %447 = vmatprep.subr.bf16.mxu0 0
        %448 = vmatpush1.bf16.msra.mxu0 0
        %449 = vmatprep.subr.bf16.mxu0 0
        %450 = vmatpush1.bf16.msra.mxu0 0
        %451 = vmatprep.subr.bf16.mxu0 0
        %452 = vmatpush1.bf16.msra.mxu0 0
        %453 = vmatprep.subr.bf16.mxu0 0
        %454 = vmatpush1.bf16.msra.mxu0 0
        %455 = vmatprep.subr.bf16.mxu0 0
        %456 = vmatpush1.bf16.msra.mxu0 0
        %457 = vmatprep.subr.bf16.mxu0 0
        %458 = vmatpush1.bf16.msra.mxu0 0
        %459 = vmatprep.subr.bf16.mxu0 0
        %460 = vmatpush1.bf16.msra.mxu0 0
        %461 = vmatprep.subr.bf16.mxu0 0
        %462 = vmatpush1.bf16.msra.mxu0 0
        %463 = vmatprep.subr.bf16.mxu0 0
        %464 = vmatpush1.bf16.msra.mxu0 0
        %465 = vmatprep.subr.bf16.mxu0 0
        %466 = vmatpush1.bf16.msra.mxu0 0
        %467 = vmatprep.subr.bf16.mxu0 0
        %468 = vmatpush1.bf16.msra.mxu0 0
        %469 = vmatprep.subr.bf16.mxu0 0
        %470 = vmatpush1.bf16.msra.mxu0 0
        %471 = vmatprep.subr.bf16.mxu0 0
        %472 = vmatpush1.bf16.msra.mxu0 0
        %473 = vmatprep.mubr.bf16.mxu0 0
        %474 = vmatmul.mubr.bf16.gmra.mrb[0].mxu0 %v418
        %v475 = vpop.f32.mrb[0].mxu0
        %v476 = vadd.f32 0.0, %v475
        %v477 = vpop.f32.mrb[0].mxu0
        %v478 = vpop.f32.mrb[0].mxu0
        %v479 = vadd.f32 0.0, %v478
        %v480 = vpop.f32.mrb[0].mxu0
        %481 = vmatprep.mubr.bf16.mxu0 0
        %482 = vmatmul.mubr.bf16.gmra.mrb[0].mxu0 %v421
        %v483 = vpop.f32.mrb[0].mxu0
        %v484 = vadd.f32 0.0, %v483
        %v485 = vpop.f32.mrb[0].mxu0
        %v486 = vpop.f32.mrb[0].mxu0
        %v487 = vadd.f32 0.0, %v486
        %v488 = vpop.f32.mrb[0].mxu0
        %489 = vmatprep.mubr.bf16.mxu0 0
        %490 = vmatmul.mubr.bf16.gmra.mrb[0].mxu0 %v424
        %v491 = vpop.f32.mrb[0].mxu0
        %v492 = vadd.f32 0.0, %v491
        %v493 = vpop.f32.mrb[0].mxu0
        %v494 = vpop.f32.mrb[0].mxu0
        %v495 = vadd.f32 0.0, %v494
        %v496 = vpop.f32.mrb[0].mxu0
        %497 = vmatprep.mubr.bf16.mxu0 0
        %498 = vmatmul.mubr.bf16.gmra.mrb[0].mxu0 %v427
        %v499 = vpop.f32.mrb[0].mxu0
        %v500 = vadd.f32 0.0, %v499
        %v501 = vpop.f32.mrb[0].mxu0
        %v502 = vpop.f32.mrb[0].mxu0
        %v503 = vadd.f32 0.0, %v502
        %v504 = vpop.f32.mrb[0].mxu0
        %505 = vmatprep.mubr.bf16.mxu0 0
        %506 = vmatmul.mubr.bf16.gmra.mrb[0].mxu0 %v430
        %v507 = vpop.f32.mrb[0].mxu0
        %v508 = vadd.f32 0.0, %v507
        %v509 = vpop.f32.mrb[0].mxu0
        %v510 = vpop.f32.mrb[0].mxu0
        %v511 = vadd.f32 0.0, %v510
        %v512 = vpop.f32.mrb[0].mxu0
        %513 = vmatprep.mubr.bf16.mxu0 0
        %514 = vmatmul.mubr.bf16.gmra.mrb[0].mxu0 %v433
        %v515 = vpop.f32.mrb[0].mxu0
        %v516 = vadd.f32 0.0, %v515
        %v517 = vpop.f32.mrb[0].mxu0
        %v518 = vpop.f32.mrb[0].mxu0
        %v519 = vadd.f32 0.0, %v518
        %v520 = vpop.f32.mrb[0].mxu0
        %521 = vmatprep.mubr.bf16.mxu0 0
        %522 = vmatmul.mubr.bf16.gmra.mrb[0].mxu0 %v436
        %v523 = vpop.f32.mrb[0].mxu0
        %v524 = vadd.f32 0.0, %v523
        %v525 = vpop.f32.mrb[0].mxu0
        %v526 = vpop.f32.mrb[0].mxu0
        %v527 = vadd.f32 0.0, %v526
        %v528 = vpop.f32.mrb[0].mxu0
        %529 = vmatprep.mubr.bf16.mxu0 0
        %530 = vmatmul.mubr.bf16.gmra.mrb[0].mxu0 %v439
        %v531 = vpop.f32.mrb[0].mxu0
        %v532 = vadd.f32 0.0, %v531
        %v533 = vpop.f32.mrb[0].mxu0
        %v534 = vpop.f32.mrb[0].mxu0
        %v535 = vadd.f32 0.0, %v534
        %v536 = vpop.f32.mrb[0].mxu0
        %537 = vdwg.mxu0
        %v554 = vunpack.c.l.b16 %v339
        %v555 = vunpack.c.l.b16 %v340
        %v556 = vunpack.c.l.b16 %v341
        %v557 = vunpack.c.l.b16 %v342
        %v558 = vunpack.c.l.b16 %v343
        %v559 = vunpack.c.l.b16 %v344
        %v560 = vunpack.c.l.b16 %v345
        %v561 = vunpack.c.l.b16 %v346
        %v562 = vunpack.c.l.b16 %v347
        %v563 = vunpack.c.l.b16 %v348
        %v564 = vunpack.c.l.b16 %v349
        %v565 = vunpack.c.l.b16 %v350
        %v566 = vunpack.c.l.b16 %v351
        %v567 = vunpack.c.l.b16 %v352
        %v568 = vunpack.c.l.b16 %v353
        %v569 = vunpack.c.l.b16 %v354
        %v570 = vpack.c.b16 %v555, %v554
        %v571 = vpack.c.b16 %v557, %v556
        %v572 = vpack.c.b16 %v559, %v558
        %v573 = vpack.c.b16 %v561, %v560
        %v574 = vpack.c.b16 %v563, %v562
        %v575 = vpack.c.b16 %v565, %v564
        %v576 = vpack.c.b16 %v567, %v566
        %v577 = vpack.c.b16 %v569, %v568
        %v579 = vsel %vm416, %v570, 0
        %v582 = vsel %vm416, %v571, 0
        %v585 = vsel %vm416, %v572, 0
        %v588 = vsel %vm416, %v573, 0
        %v591 = vsel %vm416, %v574, 0
        %v594 = vsel %vm416, %v575, 0
        %v597 = vsel %vm416, %v576, 0
        %v600 = vsel %vm416, %v577, 0
        %602 = vmatprep.subr.bf16.mxu0 0
        %603 = vmatpush1.bf16.msra.mxu0 %v249
        %604 = vmatprep.subr.bf16.mxu0 0
        %605 = vmatpush1.bf16.msra.mxu0 %v250
        %606 = vmatprep.subr.bf16.mxu0 0
        %607 = vmatpush1.bf16.msra.mxu0 %v251
        %608 = vmatprep.subr.bf16.mxu0 0
        %609 = vmatpush1.bf16.msra.mxu0 0
        %610 = vmatprep.subr.bf16.mxu0 0
        %611 = vmatpush1.bf16.msra.mxu0 0
        %612 = vmatprep.subr.bf16.mxu0 0
        %613 = vmatpush1.bf16.msra.mxu0 0
        %614 = vmatprep.subr.bf16.mxu0 0
        %615 = vmatpush1.bf16.msra.mxu0 0
        %616 = vmatprep.subr.bf16.mxu0 0
        %617 = vmatpush1.bf16.msra.mxu0 0
        %618 = vmatprep.subr.bf16.mxu0 0
        %619 = vmatpush1.bf16.msra.mxu0 0
        %620 = vmatprep.subr.bf16.mxu0 0
        %621 = vmatpush1.bf16.msra.mxu0 0
        %622 = vmatprep.subr.bf16.mxu0 0
        %623 = vmatpush1.bf16.msra.mxu0 0
        %624 = vmatprep.subr.bf16.mxu0 0
        %625 = vmatpush1.bf16.msra.mxu0 0
        %626 = vmatprep.subr.bf16.mxu0 0
        %627 = vmatpush1.bf16.msra.mxu0 0
        %628 = vmatprep.subr.bf16.mxu0 0
        %629 = vmatpush1.bf16.msra.mxu0 0
        %630 = vmatprep.subr.bf16.mxu0 0
        %631 = vmatpush1.bf16.msra.mxu0 0
        %632 = vmatprep.subr.bf16.mxu0 0
        %633 = vmatpush1.bf16.msra.mxu0 0
        %634 = vmatprep.mubr.bf16.mxu0 0
        %635 = vmatmul.mubr.bf16.gmra.mrb[0].mxu0 %v579
        %v636 = vpop.f32.mrb[0].mxu0
        %v637 = vadd.f32 %v476, %v636
        %v638 = vpop.f32.mrb[0].mxu0
        %v639 = vpop.f32.mrb[0].mxu0
        %v640 = vadd.f32 %v479, %v639
        %v641 = vpop.f32.mrb[0].mxu0
        %642 = vmatprep.mubr.bf16.mxu0 0
        %643 = vmatmul.mubr.bf16.gmra.mrb[0].mxu0 %v582
        %v644 = vpop.f32.mrb[0].mxu0
        %v645 = vadd.f32 %v484, %v644
        %v646 = vpop.f32.mrb[0].mxu0
        %v647 = vpop.f32.mrb[0].mxu0
        %v648 = vadd.f32 %v487, %v647
        %v649 = vpop.f32.mrb[0].mxu0
        %650 = vmatprep.mubr.bf16.mxu0 0
        %651 = vmatmul.mubr.bf16.gmra.mrb[0].mxu0 %v585
        %v652 = vpop.f32.mrb[0].mxu0
        %v653 = vadd.f32 %v492, %v652
        %v654 = vpop.f32.mrb[0].mxu0
        %v655 = vpop.f32.mrb[0].mxu0
        %v656 = vadd.f32 %v495, %v655
        %v657 = vpop.f32.mrb[0].mxu0
        %658 = vmatprep.mubr.bf16.mxu0 0
        %659 = vmatmul.mubr.bf16.gmra.mrb[0].mxu0 %v588
        %v660 = vpop.f32.mrb[0].mxu0
        %v661 = vadd.f32 %v500, %v660
        %v662 = vpop.f32.mrb[0].mxu0
        %v663 = vpop.f32.mrb[0].mxu0
        %v664 = vadd.f32 %v503, %v663
        %v665 = vpop.f32.mrb[0].mxu0
        %666 = vmatprep.mubr.bf16.mxu0 0
        %667 = vmatmul.mubr.bf16.gmra.mrb[0].mxu0 %v591
        %v668 = vpop.f32.mrb[0].mxu0
        %v669 = vadd.f32 %v508, %v668
        %v670 = vpop.f32.mrb[0].mxu0
        %v671 = vpop.f32.mrb[0].mxu0
        %v672 = vadd.f32 %v511, %v671
        %v673 = vpop.f32.mrb[0].mxu0
        %674 = vmatprep.mubr.bf16.mxu0 0
        %675 = vmatmul.mubr.bf16.gmra.mrb[0].mxu0 %v594
        %v676 = vpop.f32.mrb[0].mxu0
        %v677 = vadd.f32 %v516, %v676
        %v678 = vpop.f32.mrb[0].mxu0
        %v679 = vpop.f32.mrb[0].mxu0
        %v680 = vadd.f32 %v519, %v679
        %v681 = vpop.f32.mrb[0].mxu0
        %682 = vmatprep.mubr.bf16.mxu0 0
        %683 = vmatmul.mubr.bf16.gmra.mrb[0].mxu0 %v597
        %v684 = vpop.f32.mrb[0].mxu0
        %v685 = vadd.f32 %v524, %v684
        %v686 = vpop.f32.mrb[0].mxu0
        %v687 = vpop.f32.mrb[0].mxu0
        %v688 = vadd.f32 %v527, %v687
        %v689 = vpop.f32.mrb[0].mxu0
        %690 = vmatprep.mubr.bf16.mxu0 0
        %691 = vmatmul.mubr.bf16.gmra.mrb[0].mxu0 %v600
        %v692 = vpop.f32.mrb[0].mxu0
        %v693 = vadd.f32 %v532, %v692
        %v694 = vpop.f32.mrb[0].mxu0
        %v695 = vpop.f32.mrb[0].mxu0
        %v696 = vadd.f32 %v535, %v695
        %v697 = vpop.f32.mrb[0].mxu0
        %698 = vdwg.mxu0
        %s699 = sadd.s32 %s334, 32
        %s700 = sshra.s32 %s699, 3
        %s701 = sand.u32 %s699, 7
        %s702 = smul.addr %s700, 4
        %s703 = scalar_lea.vmem %s0, %s702
        %v704 = vld [vmem:[%s703] sm:$0xf]
        %v705 = vld [vmem:[%s703 + $0x4] sm:$0xf]
        %v706 = vld [vmem:[%s703 + $0x8] sm:$0xf]
        %v707 = vld [vmem:[%s703 + $0xc] sm:$0xf]
        %v708 = vld [vmem:[%s703 + $0x10] sm:$0xf]
        %v709 = vld [vmem:[%s703 + $0x14] sm:$0xf]
        %v710 = vld [vmem:[%s703 + $0x18] sm:$0xf]
        %v711 = vld [vmem:[%s703 + $0x1c] sm:$0xf]
        %v712 = vld [vmem:[%s703 + $0x20] sm:$0xf]
        %v713 = vld [vmem:[%s703 + $0x24] sm:$0xf]
        %v714 = vld [vmem:[%s703 + $0x28] sm:$0xf]
        %v715 = vld [vmem:[%s703 + $0x2c] sm:$0xf]
        %v716 = vld [vmem:[%s703 + $0x30] sm:$0xf]
        %v717 = vld [vmem:[%s703 + $0x34] sm:$0xf]
        %v718 = vld [vmem:[%s703 + $0x38] sm:$0xf]
        %v719 = vld [vmem:[%s703 + $0x3c] sm:$0xf]
        %v736 = vunpack.c.l.b16 %v704
        %v737 = vunpack.c.l.b16 %v705
        %v738 = vunpack.c.l.b16 %v706
        %v739 = vunpack.c.l.b16 %v707
        %v740 = vunpack.c.l.b16 %v708
        %v741 = vunpack.c.l.b16 %v709
        %v742 = vunpack.c.l.b16 %v710
        %v743 = vunpack.c.l.b16 %v711
        %v744 = vunpack.c.l.b16 %v712
        %v745 = vunpack.c.l.b16 %v713
        %v746 = vunpack.c.l.b16 %v714
        %v747 = vunpack.c.l.b16 %v715
        %v748 = vunpack.c.l.b16 %v716
        %v749 = vunpack.c.l.b16 %v717
        %v750 = vunpack.c.l.b16 %v718
        %v751 = vunpack.c.l.b16 %v719
        %v752 = vpack.c.b16 %v737, %v736
        %v753 = vpack.c.b16 %v739, %v738
        %v754 = vpack.c.b16 %v741, %v740
        %v755 = vpack.c.b16 %v743, %v742
        %v756 = vpack.c.b16 %v745, %v744
        %v757 = vpack.c.b16 %v747, %v746
        %v758 = vpack.c.b16 %v749, %v748
        %v759 = vpack.c.b16 %v751, %v750
        %v761 = vsel %vm416, %v752, 0
        %v764 = vsel %vm416, %v753, 0
        %v767 = vsel %vm416, %v754, 0
        %v770 = vsel %vm416, %v755, 0
        %v773 = vsel %vm416, %v756, 0
        %v776 = vsel %vm416, %v757, 0
        %v779 = vsel %vm416, %v758, 0
        %v782 = vsel %vm416, %v759, 0
        %784 = vmatprep.subr.bf16.mxu0 0
        %785 = vmatpush1.bf16.msra.mxu0 %v267
        %786 = vmatprep.subr.bf16.mxu0 0
        %787 = vmatpush1.bf16.msra.mxu0 %v268
        %788 = vmatprep.subr.bf16.mxu0 0
        %789 = vmatpush1.bf16.msra.mxu0 %v269
        %790 = vmatprep.subr.bf16.mxu0 0
        %791 = vmatpush1.bf16.msra.mxu0 0
        %792 = vmatprep.subr.bf16.mxu0 0
        %793 = vmatpush1.bf16.msra.mxu0 0
        %794 = vmatprep.subr.bf16.mxu0 0
        %795 = vmatpush1.bf16.msra.mxu0 0
        %796 = vmatprep.subr.bf16.mxu0 0
        %797 = vmatpush1.bf16.msra.mxu0 0
        %798 = vmatprep.subr.bf16.mxu0 0
        %799 = vmatpush1.bf16.msra.mxu0 0
        %800 = vmatprep.subr.bf16.mxu0 0
        %801 = vmatpush1.bf16.msra.mxu0 0
        %802 = vmatprep.subr.bf16.mxu0 0
        %803 = vmatpush1.bf16.msra.mxu0 0
        %804 = vmatprep.subr.bf16.mxu0 0
        %805 = vmatpush1.bf16.msra.mxu0 0
        %806 = vmatprep.subr.bf16.mxu0 0
        %807 = vmatpush1.bf16.msra.mxu0 0
        %808 = vmatprep.subr.bf16.mxu0 0
        %809 = vmatpush1.bf16.msra.mxu0 0
        %810 = vmatprep.subr.bf16.mxu0 0
        %811 = vmatpush1.bf16.msra.mxu0 0
        %812 = vmatprep.subr.bf16.mxu0 0
        %813 = vmatpush1.bf16.msra.mxu0 0
        %814 = vmatprep.subr.bf16.mxu0 0
        %815 = vmatpush1.bf16.msra.mxu0 0
        %816 = vmatprep.mubr.bf16.mxu0 0
        %817 = vmatmul.mubr.bf16.gmra.mrb[0].mxu0 %v761
        %v818 = vpop.f32.mrb[0].mxu0
        %v819 = vadd.f32 0.0, %v818
        %v820 = vpop.f32.mrb[0].mxu0
        %v821 = vpop.f32.mrb[0].mxu0
        %v822 = vadd.f32 0.0, %v821
        %v823 = vpop.f32.mrb[0].mxu0
        %824 = vmatprep.mubr.bf16.mxu0 0
        %825 = vmatmul.mubr.bf16.gmra.mrb[0].mxu0 %v764
        %v826 = vpop.f32.mrb[0].mxu0
        %v827 = vadd.f32 0.0, %v826
        %v828 = vpop.f32.mrb[0].mxu0
        %v829 = vpop.f32.mrb[0].mxu0
        %v830 = vadd.f32 0.0, %v829
        %v831 = vpop.f32.mrb[0].mxu0
        %832 = vmatprep.mubr.bf16.mxu0 0
        %833 = vmatmul.mubr.bf16.gmra.mrb[0].mxu0 %v767
        %v834 = vpop.f32.mrb[0].mxu0
        %v835 = vadd.f32 0.0, %v834
        %v836 = vpop.f32.mrb[0].mxu0
        %v837 = vpop.f32.mrb[0].mxu0
        %v838 = vadd.f32 0.0, %v837
        %v839 = vpop.f32.mrb[0].mxu0
        %840 = vmatprep.mubr.bf16.mxu0 0
        %841 = vmatmul.mubr.bf16.gmra.mrb[0].mxu0 %v770
        %v842 = vpop.f32.mrb[0].mxu0
        %v843 = vadd.f32 0.0, %v842
        %v844 = vpop.f32.mrb[0].mxu0
        %v845 = vpop.f32.mrb[0].mxu0
        %v846 = vadd.f32 0.0, %v845
        %v847 = vpop.f32.mrb[0].mxu0
        %848 = vmatprep.mubr.bf16.mxu0 0
        %849 = vmatmul.mubr.bf16.gmra.mrb[0].mxu0 %v773
        %v850 = vpop.f32.mrb[0].mxu0
        %v851 = vadd.f32 0.0, %v850
        %v852 = vpop.f32.mrb[0].mxu0
        %v853 = vpop.f32.mrb[0].mxu0
        %v854 = vadd.f32 0.0, %v853
        %v855 = vpop.f32.mrb[0].mxu0
        %856 = vmatprep.mubr.bf16.mxu0 0
        %857 = vmatmul.mubr.bf16.gmra.mrb[0].mxu0 %v776
        %v858 = vpop.f32.mrb[0].mxu0
        %v859 = vadd.f32 0.0, %v858
        %v860 = vpop.f32.mrb[0].mxu0
        %v861 = vpop.f32.mrb[0].mxu0
        %v862 = vadd.f32 0.0, %v861
        %v863 = vpop.f32.mrb[0].mxu0
        %864 = vmatprep.mubr.bf16.mxu0 0
        %865 = vmatmul.mubr.bf16.gmra.mrb[0].mxu0 %v779
        %v866 = vpop.f32.mrb[0].mxu0
        %v867 = vadd.f32 0.0, %v866
        %v868 = vpop.f32.mrb[0].mxu0
        %v869 = vpop.f32.mrb[0].mxu0
        %v870 = vadd.f32 0.0, %v869
        %v871 = vpop.f32.mrb[0].mxu0
        %872 = vmatprep.mubr.bf16.mxu0 0
        %873 = vmatmul.mubr.bf16.gmra.mrb[0].mxu0 %v782
        %v874 = vpop.f32.mrb[0].mxu0
        %v875 = vadd.f32 0.0, %v874
        %v876 = vpop.f32.mrb[0].mxu0
        %v877 = vpop.f32.mrb[0].mxu0
        %v878 = vadd.f32 0.0, %v877
        %v879 = vpop.f32.mrb[0].mxu0
        %880 = vdwg.mxu0
        %v881 = vadd.f32 %v637, %v819
        %v882 = vadd.f32 %v640, %v822
        %v883 = vadd.f32 %v645, %v827
        %v884 = vadd.f32 %v648, %v830
        %v885 = vadd.f32 %v653, %v835
        %v886 = vadd.f32 %v656, %v838
        %v887 = vadd.f32 %v661, %v843
        %v888 = vadd.f32 %v664, %v846
        %v889 = vadd.f32 %v669, %v851
        %v890 = vadd.f32 %v672, %v854
        %v891 = vadd.f32 %v677, %v859
        %v892 = vadd.f32 %v680, %v862
        %v893 = vadd.f32 %v685, %v867
        %v894 = vadd.f32 %v688, %v870
        %v895 = vadd.f32 %v693, %v875
        %v896 = vadd.f32 %v696, %v878
        %s897 = sadd.s32 %s334, 288
        %s898 = sshra.s32 %s897, 3
        %s899 = sand.u32 %s897, 7
        %s900 = smul.addr %s898, 4
        %s901 = scalar_lea.vmem %s0, %s900
        %v902 = vld [vmem:[%s901] sm:$0xf]
        %v903 = vld [vmem:[%s901 + $0x4] sm:$0xf]
        %v904 = vld [vmem:[%s901 + $0x8] sm:$0xf]
        %v905 = vld [vmem:[%s901 + $0xc] sm:$0xf]
        %v906 = vld [vmem:[%s901 + $0x10] sm:$0xf]
        %v907 = vld [vmem:[%s901 + $0x14] sm:$0xf]
        %v908 = vld [vmem:[%s901 + $0x18] sm:$0xf]
        %v909 = vld [vmem:[%s901 + $0x1c] sm:$0xf]
        %v910 = vld [vmem:[%s901 + $0x20] sm:$0xf]
        %v911 = vld [vmem:[%s901 + $0x24] sm:$0xf]
        %v912 = vld [vmem:[%s901 + $0x28] sm:$0xf]
        %v913 = vld [vmem:[%s901 + $0x2c] sm:$0xf]
        %v914 = vld [vmem:[%s901 + $0x30] sm:$0xf]
        %v915 = vld [vmem:[%s901 + $0x34] sm:$0xf]
        %v916 = vld [vmem:[%s901 + $0x38] sm:$0xf]
        %v917 = vld [vmem:[%s901 + $0x3c] sm:$0xf]
        %v934 = vunpack.c.l.b16 %v902
        %v935 = vunpack.c.l.b16 %v903
        %v936 = vunpack.c.l.b16 %v904
        %v937 = vunpack.c.l.b16 %v905
        %v938 = vunpack.c.l.b16 %v906
        %v939 = vunpack.c.l.b16 %v907
        %v940 = vunpack.c.l.b16 %v908
        %v941 = vunpack.c.l.b16 %v909
        %v942 = vunpack.c.l.b16 %v910
        %v943 = vunpack.c.l.b16 %v911
        %v944 = vunpack.c.l.b16 %v912
        %v945 = vunpack.c.l.b16 %v913
        %v946 = vunpack.c.l.b16 %v914
        %v947 = vunpack.c.l.b16 %v915
        %v948 = vunpack.c.l.b16 %v916
        %v949 = vunpack.c.l.b16 %v917
        %v950 = vpack.c.b16 %v935, %v934
        %v951 = vpack.c.b16 %v937, %v936
        %v952 = vpack.c.b16 %v939, %v938
        %v953 = vpack.c.b16 %v941, %v940
        %v954 = vpack.c.b16 %v943, %v942
        %v955 = vpack.c.b16 %v945, %v944
        %v956 = vpack.c.b16 %v947, %v946
        %v957 = vpack.c.b16 %v949, %v948
        %v959 = vsel %vm416, %v950, 0
        %v962 = vsel %vm416, %v951, 0
        %v965 = vsel %vm416, %v952, 0
        %v968 = vsel %vm416, %v953, 0
        %v971 = vsel %vm416, %v954, 0
        %v974 = vsel %vm416, %v955, 0
        %v977 = vsel %vm416, %v956, 0
        %v980 = vsel %vm416, %v957, 0
        %982 = vmatprep.subr.bf16.mxu0 0
        %983 = vmatpush1.bf16.msra.mxu0 %v276
        %984 = vmatprep.subr.bf16.mxu0 0
        %985 = vmatpush1.bf16.msra.mxu0 %v277
        %986 = vmatprep.subr.bf16.mxu0 0
        %987 = vmatpush1.bf16.msra.mxu0 %v278
        %988 = vmatprep.subr.bf16.mxu0 0
        %989 = vmatpush1.bf16.msra.mxu0 0
        %990 = vmatprep.subr.bf16.mxu0 0
        %991 = vmatpush1.bf16.msra.mxu0 0
        %992 = vmatprep.subr.bf16.mxu0 0
        %993 = vmatpush1.bf16.msra.mxu0 0
        %994 = vmatprep.subr.bf16.mxu0 0
        %995 = vmatpush1.bf16.msra.mxu0 0
        %996 = vmatprep.subr.bf16.mxu0 0
        %997 = vmatpush1.bf16.msra.mxu0 0
        %998 = vmatprep.subr.bf16.mxu0 0
        %999 = vmatpush1.bf16.msra.mxu0 0
        %1000 = vmatprep.subr.bf16.mxu0 0
        %1001 = vmatpush1.bf16.msra.mxu0 0
        %1002 = vmatprep.subr.bf16.mxu0 0
        %1003 = vmatpush1.bf16.msra.mxu0 0
        %1004 = vmatprep.subr.bf16.mxu0 0
        %1005 = vmatpush1.bf16.msra.mxu0 0
        %1006 = vmatprep.subr.bf16.mxu0 0
        %1007 = vmatpush1.bf16.msra.mxu0 0
        %1008 = vmatprep.subr.bf16.mxu0 0
        %1009 = vmatpush1.bf16.msra.mxu0 0
        %1010 = vmatprep.subr.bf16.mxu0 0
        %1011 = vmatpush1.bf16.msra.mxu0 0
        %1012 = vmatprep.subr.bf16.mxu0 0
        %1013 = vmatpush1.bf16.msra.mxu0 0
        %1014 = vmatprep.mubr.bf16.mxu0 0
        %1015 = vmatmul.mubr.bf16.gmra.mrb[0].mxu0 %v959
        %v1016 = vpop.f32.mrb[0].mxu0
        %v1017 = vadd.f32 0.0, %v1016
        %v1018 = vpop.f32.mrb[0].mxu0
        %v1019 = vpop.f32.mrb[0].mxu0
        %v1020 = vadd.f32 0.0, %v1019
        %v1021 = vpop.f32.mrb[0].mxu0
        %1022 = vmatprep.mubr.bf16.mxu0 0
        %1023 = vmatmul.mubr.bf16.gmra.mrb[0].mxu0 %v962
        %v1024 = vpop.f32.mrb[0].mxu0
        %v1025 = vadd.f32 0.0, %v1024
        %v1026 = vpop.f32.mrb[0].mxu0
        %v1027 = vpop.f32.mrb[0].mxu0
        %v1028 = vadd.f32 0.0, %v1027
        %v1029 = vpop.f32.mrb[0].mxu0
        %1030 = vmatprep.mubr.bf16.mxu0 0
        %1031 = vmatmul.mubr.bf16.gmra.mrb[0].mxu0 %v965
        %v1032 = vpop.f32.mrb[0].mxu0
        %v1033 = vadd.f32 0.0, %v1032
        %v1034 = vpop.f32.mrb[0].mxu0
        %v1035 = vpop.f32.mrb[0].mxu0
        %v1036 = vadd.f32 0.0, %v1035
        %v1037 = vpop.f32.mrb[0].mxu0
        %1038 = vmatprep.mubr.bf16.mxu0 0
        %1039 = vmatmul.mubr.bf16.gmra.mrb[0].mxu0 %v968
        %v1040 = vpop.f32.mrb[0].mxu0
        %v1041 = vadd.f32 0.0, %v1040
        %v1042 = vpop.f32.mrb[0].mxu0
        %v1043 = vpop.f32.mrb[0].mxu0
        %v1044 = vadd.f32 0.0, %v1043
        %v1045 = vpop.f32.mrb[0].mxu0
        %1046 = vmatprep.mubr.bf16.mxu0 0
        %1047 = vmatmul.mubr.bf16.gmra.mrb[0].mxu0 %v971
        %v1048 = vpop.f32.mrb[0].mxu0
        %v1049 = vadd.f32 0.0, %v1048
        %v1050 = vpop.f32.mrb[0].mxu0
        %v1051 = vpop.f32.mrb[0].mxu0
        %v1052 = vadd.f32 0.0, %v1051
        %v1053 = vpop.f32.mrb[0].mxu0
        %1054 = vmatprep.mubr.bf16.mxu0 0
        %1055 = vmatmul.mubr.bf16.gmra.mrb[0].mxu0 %v974
        %v1056 = vpop.f32.mrb[0].mxu0
        %v1057 = vadd.f32 0.0, %v1056
        %v1058 = vpop.f32.mrb[0].mxu0
        %v1059 = vpop.f32.mrb[0].mxu0
        %v1060 = vadd.f32 0.0, %v1059
        %v1061 = vpop.f32.mrb[0].mxu0
        %1062 = vmatprep.mubr.bf16.mxu0 0
        %1063 = vmatmul.mubr.bf16.gmra.mrb[0].mxu0 %v977
        %v1064 = vpop.f32.mrb[0].mxu0
        %v1065 = vadd.f32 0.0, %v1064
        %v1066 = vpop.f32.mrb[0].mxu0
        %v1067 = vpop.f32.mrb[0].mxu0
        %v1068 = vadd.f32 0.0, %v1067
        %v1069 = vpop.f32.mrb[0].mxu0
        %1070 = vmatprep.mubr.bf16.mxu0 0
        %1071 = vmatmul.mubr.bf16.gmra.mrb[0].mxu0 %v980
        %v1072 = vpop.f32.mrb[0].mxu0
        %v1073 = vadd.f32 0.0, %v1072
        %v1074 = vpop.f32.mrb[0].mxu0
        %v1075 = vpop.f32.mrb[0].mxu0
        %v1076 = vadd.f32 0.0, %v1075
        %v1077 = vpop.f32.mrb[0].mxu0
        %1078 = vdwg.mxu0
        %v1079 = vadd.f32 %v881, %v1017
        %v1080 = vadd.f32 %v882, %v1020
        %v1081 = vadd.f32 %v883, %v1025
        %v1082 = vadd.f32 %v884, %v1028
        %v1083 = vadd.f32 %v885, %v1033
        %v1084 = vadd.f32 %v886, %v1036
        %v1085 = vadd.f32 %v887, %v1041
        %v1086 = vadd.f32 %v888, %v1044
        %v1087 = vadd.f32 %v889, %v1049
        %v1088 = vadd.f32 %v890, %v1052
        %v1089 = vadd.f32 %v891, %v1057
        %v1090 = vadd.f32 %v892, %v1060
        %v1091 = vadd.f32 %v893, %v1065
        %v1092 = vadd.f32 %v894, %v1068
        %v1093 = vadd.f32 %v895, %v1073
        %v1094 = vadd.f32 %v896, %v1076
        %s1095 = sadd.s32 %s334, 304
        %s1096 = sshra.s32 %s1095, 3
        %s1097 = sand.u32 %s1095, 7
        %s1098 = smul.addr %s1096, 4
        %s1099 = scalar_lea.vmem %s0, %s1098
        %v1100 = vld [vmem:[%s1099] sm:$0xf]
        %v1101 = vld [vmem:[%s1099 + $0x4] sm:$0xf]
        %v1102 = vld [vmem:[%s1099 + $0x8] sm:$0xf]
        %v1103 = vld [vmem:[%s1099 + $0xc] sm:$0xf]
        %v1104 = vld [vmem:[%s1099 + $0x10] sm:$0xf]
        %v1105 = vld [vmem:[%s1099 + $0x14] sm:$0xf]
        %v1106 = vld [vmem:[%s1099 + $0x18] sm:$0xf]
        %v1107 = vld [vmem:[%s1099 + $0x1c] sm:$0xf]
        %v1108 = vld [vmem:[%s1099 + $0x20] sm:$0xf]
        %v1109 = vld [vmem:[%s1099 + $0x24] sm:$0xf]
        %v1110 = vld [vmem:[%s1099 + $0x28] sm:$0xf]
        %v1111 = vld [vmem:[%s1099 + $0x2c] sm:$0xf]
        %v1112 = vld [vmem:[%s1099 + $0x30] sm:$0xf]
        %v1113 = vld [vmem:[%s1099 + $0x34] sm:$0xf]
        %v1114 = vld [vmem:[%s1099 + $0x38] sm:$0xf]
        %v1115 = vld [vmem:[%s1099 + $0x3c] sm:$0xf]
        %v1132 = vunpack.c.l.b16 %v1100
        %v1133 = vunpack.c.l.b16 %v1101
        %v1134 = vunpack.c.l.b16 %v1102
        %v1135 = vunpack.c.l.b16 %v1103
        %v1136 = vunpack.c.l.b16 %v1104
        %v1137 = vunpack.c.l.b16 %v1105
        %v1138 = vunpack.c.l.b16 %v1106
        %v1139 = vunpack.c.l.b16 %v1107
        %v1140 = vunpack.c.l.b16 %v1108
        %v1141 = vunpack.c.l.b16 %v1109
        %v1142 = vunpack.c.l.b16 %v1110
        %v1143 = vunpack.c.l.b16 %v1111
        %v1144 = vunpack.c.l.b16 %v1112
        %v1145 = vunpack.c.l.b16 %v1113
        %v1146 = vunpack.c.l.b16 %v1114
        %v1147 = vunpack.c.l.b16 %v1115
        %v1148 = vpack.c.b16 %v1133, %v1132
        %v1149 = vpack.c.b16 %v1135, %v1134
        %v1150 = vpack.c.b16 %v1137, %v1136
        %v1151 = vpack.c.b16 %v1139, %v1138
        %v1152 = vpack.c.b16 %v1141, %v1140
        %v1153 = vpack.c.b16 %v1143, %v1142
        %v1154 = vpack.c.b16 %v1145, %v1144
        %v1155 = vpack.c.b16 %v1147, %v1146
        %v1157 = vsel %vm416, %v1148, 0
        %v1160 = vsel %vm416, %v1149, 0
        %v1163 = vsel %vm416, %v1150, 0
        %v1166 = vsel %vm416, %v1151, 0
        %v1169 = vsel %vm416, %v1152, 0
        %v1172 = vsel %vm416, %v1153, 0
        %v1175 = vsel %vm416, %v1154, 0
        %v1178 = vsel %vm416, %v1155, 0
        %1180 = vmatprep.subr.bf16.mxu0 0
        %1181 = vmatpush1.bf16.msra.mxu0 %v285
        %1182 = vmatprep.subr.bf16.mxu0 0
        %1183 = vmatpush1.bf16.msra.mxu0 %v286
        %1184 = vmatprep.subr.bf16.mxu0 0
        %1185 = vmatpush1.bf16.msra.mxu0 %v287
        %1186 = vmatprep.subr.bf16.mxu0 0
        %1187 = vmatpush1.bf16.msra.mxu0 0
        %1188 = vmatprep.subr.bf16.mxu0 0
        %1189 = vmatpush1.bf16.msra.mxu0 0
        %1190 = vmatprep.subr.bf16.mxu0 0
        %1191 = vmatpush1.bf16.msra.mxu0 0
        %1192 = vmatprep.subr.bf16.mxu0 0
        %1193 = vmatpush1.bf16.msra.mxu0 0
        %1194 = vmatprep.subr.bf16.mxu0 0
        %1195 = vmatpush1.bf16.msra.mxu0 0
        %1196 = vmatprep.subr.bf16.mxu0 0
        %1197 = vmatpush1.bf16.msra.mxu0 0
        %1198 = vmatprep.subr.bf16.mxu0 0
        %1199 = vmatpush1.bf16.msra.mxu0 0
        %1200 = vmatprep.subr.bf16.mxu0 0
        %1201 = vmatpush1.bf16.msra.mxu0 0
        %1202 = vmatprep.subr.bf16.mxu0 0
        %1203 = vmatpush1.bf16.msra.mxu0 0
        %1204 = vmatprep.subr.bf16.mxu0 0
        %1205 = vmatpush1.bf16.msra.mxu0 0
        %1206 = vmatprep.subr.bf16.mxu0 0
        %1207 = vmatpush1.bf16.msra.mxu0 0
        %1208 = vmatprep.subr.bf16.mxu0 0
        %1209 = vmatpush1.bf16.msra.mxu0 0
        %1210 = vmatprep.subr.bf16.mxu0 0
        %1211 = vmatpush1.bf16.msra.mxu0 0
        %1212 = vmatprep.mubr.bf16.mxu0 0
        %1213 = vmatmul.mubr.bf16.gmra.mrb[0].mxu0 %v1157
        %v1214 = vpop.f32.mrb[0].mxu0
        %v1215 = vadd.f32 0.0, %v1214
        %v1216 = vpop.f32.mrb[0].mxu0
        %v1217 = vpop.f32.mrb[0].mxu0
        %v1218 = vadd.f32 0.0, %v1217
        %v1219 = vpop.f32.mrb[0].mxu0
        %1220 = vmatprep.mubr.bf16.mxu0 0
        %1221 = vmatmul.mubr.bf16.gmra.mrb[0].mxu0 %v1160
        %v1222 = vpop.f32.mrb[0].mxu0
        %v1223 = vadd.f32 0.0, %v1222
        %v1224 = vpop.f32.mrb[0].mxu0
        %v1225 = vpop.f32.mrb[0].mxu0
        %v1226 = vadd.f32 0.0, %v1225
        %v1227 = vpop.f32.mrb[0].mxu0
        %1228 = vmatprep.mubr.bf16.mxu0 0
        %1229 = vmatmul.mubr.bf16.gmra.mrb[0].mxu0 %v1163
        %v1230 = vpop.f32.mrb[0].mxu0
        %v1231 = vadd.f32 0.0, %v1230
        %v1232 = vpop.f32.mrb[0].mxu0
        %v1233 = vpop.f32.mrb[0].mxu0
        %v1234 = vadd.f32 0.0, %v1233
        %v1235 = vpop.f32.mrb[0].mxu0
        %1236 = vmatprep.mubr.bf16.mxu0 0
        %1237 = vmatmul.mubr.bf16.gmra.mrb[0].mxu0 %v1166
        %v1238 = vpop.f32.mrb[0].mxu0
        %v1239 = vadd.f32 0.0, %v1238
        %v1240 = vpop.f32.mrb[0].mxu0
        %v1241 = vpop.f32.mrb[0].mxu0
        %v1242 = vadd.f32 0.0, %v1241
        %v1243 = vpop.f32.mrb[0].mxu0
        %1244 = vmatprep.mubr.bf16.mxu0 0
        %1245 = vmatmul.mubr.bf16.gmra.mrb[0].mxu0 %v1169
        %v1246 = vpop.f32.mrb[0].mxu0
        %v1247 = vadd.f32 0.0, %v1246
        %v1248 = vpop.f32.mrb[0].mxu0
        %v1249 = vpop.f32.mrb[0].mxu0
        %v1250 = vadd.f32 0.0, %v1249
        %v1251 = vpop.f32.mrb[0].mxu0
        %1252 = vmatprep.mubr.bf16.mxu0 0
        %1253 = vmatmul.mubr.bf16.gmra.mrb[0].mxu0 %v1172
        %v1254 = vpop.f32.mrb[0].mxu0
        %v1255 = vadd.f32 0.0, %v1254
        %v1256 = vpop.f32.mrb[0].mxu0
        %v1257 = vpop.f32.mrb[0].mxu0
        %v1258 = vadd.f32 0.0, %v1257
        %v1259 = vpop.f32.mrb[0].mxu0
        %1260 = vmatprep.mubr.bf16.mxu0 0
        %1261 = vmatmul.mubr.bf16.gmra.mrb[0].mxu0 %v1175
        %v1262 = vpop.f32.mrb[0].mxu0
        %v1263 = vadd.f32 0.0, %v1262
        %v1264 = vpop.f32.mrb[0].mxu0
        %v1265 = vpop.f32.mrb[0].mxu0
        %v1266 = vadd.f32 0.0, %v1265
        %v1267 = vpop.f32.mrb[0].mxu0
        %1268 = vmatprep.mubr.bf16.mxu0 0
        %1269 = vmatmul.mubr.bf16.gmra.mrb[0].mxu0 %v1178
        %v1270 = vpop.f32.mrb[0].mxu0
        %v1271 = vadd.f32 0.0, %v1270
        %v1272 = vpop.f32.mrb[0].mxu0
        %v1273 = vpop.f32.mrb[0].mxu0
        %v1274 = vadd.f32 0.0, %v1273
        %v1275 = vpop.f32.mrb[0].mxu0
        %1276 = vdwg.mxu0
        %v1277 = vadd.f32 %v1079, %v1215
        %v1278 = vadd.f32 %v1080, %v1218
        %v1279 = vadd.f32 %v1081, %v1223
        %v1280 = vadd.f32 %v1082, %v1226
        %v1281 = vadd.f32 %v1083, %v1231
        %v1282 = vadd.f32 %v1084, %v1234
        %v1283 = vadd.f32 %v1085, %v1239
        %v1284 = vadd.f32 %v1086, %v1242
        %v1285 = vadd.f32 %v1087, %v1247
        %v1286 = vadd.f32 %v1088, %v1250
        %v1287 = vadd.f32 %v1089, %v1255
        %v1288 = vadd.f32 %v1090, %v1258
        %v1289 = vadd.f32 %v1091, %v1263
        %v1290 = vadd.f32 %v1092, %v1266
        %v1291 = vadd.f32 %v1093, %v1271
        %v1292 = vadd.f32 %v1094, %v1274
        %s1293 = sadd.s32 %s334, 320
        %s1294 = sshra.s32 %s1293, 3
        %s1295 = sand.u32 %s1293, 7
        %s1296 = smul.addr %s1294, 4
        %s1297 = scalar_lea.vmem %s0, %s1296
        %v1298 = vld [vmem:[%s1297] sm:$0xf]
        %v1299 = vld [vmem:[%s1297 + $0x4] sm:$0xf]
        %v1300 = vld [vmem:[%s1297 + $0x8] sm:$0xf]
        %v1301 = vld [vmem:[%s1297 + $0xc] sm:$0xf]
        %v1302 = vld [vmem:[%s1297 + $0x10] sm:$0xf]
        %v1303 = vld [vmem:[%s1297 + $0x14] sm:$0xf]
        %v1304 = vld [vmem:[%s1297 + $0x18] sm:$0xf]
        %v1305 = vld [vmem:[%s1297 + $0x1c] sm:$0xf]
        %v1306 = vld [vmem:[%s1297 + $0x20] sm:$0xf]
        %v1307 = vld [vmem:[%s1297 + $0x24] sm:$0xf]
        %v1308 = vld [vmem:[%s1297 + $0x28] sm:$0xf]
        %v1309 = vld [vmem:[%s1297 + $0x2c] sm:$0xf]
        %v1310 = vld [vmem:[%s1297 + $0x30] sm:$0xf]
        %v1311 = vld [vmem:[%s1297 + $0x34] sm:$0xf]
        %v1312 = vld [vmem:[%s1297 + $0x38] sm:$0xf]
        %v1313 = vld [vmem:[%s1297 + $0x3c] sm:$0xf]
        %v1330 = vunpack.c.l.b16 %v1298
        %v1331 = vunpack.c.l.b16 %v1299
        %v1332 = vunpack.c.l.b16 %v1300
        %v1333 = vunpack.c.l.b16 %v1301
        %v1334 = vunpack.c.l.b16 %v1302
        %v1335 = vunpack.c.l.b16 %v1303
        %v1336 = vunpack.c.l.b16 %v1304
        %v1337 = vunpack.c.l.b16 %v1305
        %v1338 = vunpack.c.l.b16 %v1306
        %v1339 = vunpack.c.l.b16 %v1307
        %v1340 = vunpack.c.l.b16 %v1308
        %v1341 = vunpack.c.l.b16 %v1309
        %v1342 = vunpack.c.l.b16 %v1310
        %v1343 = vunpack.c.l.b16 %v1311
        %v1344 = vunpack.c.l.b16 %v1312
        %v1345 = vunpack.c.l.b16 %v1313
        %v1346 = vpack.c.b16 %v1331, %v1330
        %v1347 = vpack.c.b16 %v1333, %v1332
        %v1348 = vpack.c.b16 %v1335, %v1334
        %v1349 = vpack.c.b16 %v1337, %v1336
        %v1350 = vpack.c.b16 %v1339, %v1338
        %v1351 = vpack.c.b16 %v1341, %v1340
        %v1352 = vpack.c.b16 %v1343, %v1342
        %v1353 = vpack.c.b16 %v1345, %v1344
        %v1355 = vsel %vm416, %v1346, 0
        %v1358 = vsel %vm416, %v1347, 0
        %v1361 = vsel %vm416, %v1348, 0
        %v1364 = vsel %vm416, %v1349, 0
        %v1367 = vsel %vm416, %v1350, 0
        %v1370 = vsel %vm416, %v1351, 0
        %v1373 = vsel %vm416, %v1352, 0
        %v1376 = vsel %vm416, %v1353, 0
        %1378 = vmatprep.subr.bf16.mxu0 0
        %1379 = vmatpush1.bf16.msra.mxu0 %v294
        %1380 = vmatprep.subr.bf16.mxu0 0
        %1381 = vmatpush1.bf16.msra.mxu0 %v295
        %1382 = vmatprep.subr.bf16.mxu0 0
        %1383 = vmatpush1.bf16.msra.mxu0 %v296
        %1384 = vmatprep.subr.bf16.mxu0 0
        %1385 = vmatpush1.bf16.msra.mxu0 0
        %1386 = vmatprep.subr.bf16.mxu0 0
        %1387 = vmatpush1.bf16.msra.mxu0 0
        %1388 = vmatprep.subr.bf16.mxu0 0
        %1389 = vmatpush1.bf16.msra.mxu0 0
        %1390 = vmatprep.subr.bf16.mxu0 0
        %1391 = vmatpush1.bf16.msra.mxu0 0
        %1392 = vmatprep.subr.bf16.mxu0 0
        %1393 = vmatpush1.bf16.msra.mxu0 0
        %1394 = vmatprep.subr.bf16.mxu0 0
        %1395 = vmatpush1.bf16.msra.mxu0 0
        %1396 = vmatprep.subr.bf16.mxu0 0
        %1397 = vmatpush1.bf16.msra.mxu0 0
        %1398 = vmatprep.subr.bf16.mxu0 0
        %1399 = vmatpush1.bf16.msra.mxu0 0
        %1400 = vmatprep.subr.bf16.mxu0 0
        %1401 = vmatpush1.bf16.msra.mxu0 0
        %1402 = vmatprep.subr.bf16.mxu0 0
        %1403 = vmatpush1.bf16.msra.mxu0 0
        %1404 = vmatprep.subr.bf16.mxu0 0
        %1405 = vmatpush1.bf16.msra.mxu0 0
        %1406 = vmatprep.subr.bf16.mxu0 0
        %1407 = vmatpush1.bf16.msra.mxu0 0
        %1408 = vmatprep.subr.bf16.mxu0 0
        %1409 = vmatpush1.bf16.msra.mxu0 0
        %1410 = vmatprep.mubr.bf16.mxu0 0
        %1411 = vmatmul.mubr.bf16.gmra.mrb[0].mxu0 %v1355
        %v1412 = vpop.f32.mrb[0].mxu0
        %v1413 = vadd.f32 0.0, %v1412
        %v1414 = vpop.f32.mrb[0].mxu0
        %v1415 = vpop.f32.mrb[0].mxu0
        %v1416 = vadd.f32 0.0, %v1415
        %v1417 = vpop.f32.mrb[0].mxu0
        %1418 = vmatprep.mubr.bf16.mxu0 0
        %1419 = vmatmul.mubr.bf16.gmra.mrb[0].mxu0 %v1358
        %v1420 = vpop.f32.mrb[0].mxu0
        %v1421 = vadd.f32 0.0, %v1420
        %v1422 = vpop.f32.mrb[0].mxu0
        %v1423 = vpop.f32.mrb[0].mxu0
        %v1424 = vadd.f32 0.0, %v1423
        %v1425 = vpop.f32.mrb[0].mxu0
        %1426 = vmatprep.mubr.bf16.mxu0 0
        %1427 = vmatmul.mubr.bf16.gmra.mrb[0].mxu0 %v1361
        %v1428 = vpop.f32.mrb[0].mxu0
        %v1429 = vadd.f32 0.0, %v1428
        %v1430 = vpop.f32.mrb[0].mxu0
        %v1431 = vpop.f32.mrb[0].mxu0
        %v1432 = vadd.f32 0.0, %v1431
        %v1433 = vpop.f32.mrb[0].mxu0
        %1434 = vmatprep.mubr.bf16.mxu0 0
        %1435 = vmatmul.mubr.bf16.gmra.mrb[0].mxu0 %v1364
        %v1436 = vpop.f32.mrb[0].mxu0
        %v1437 = vadd.f32 0.0, %v1436
        %v1438 = vpop.f32.mrb[0].mxu0
        %v1439 = vpop.f32.mrb[0].mxu0
        %v1440 = vadd.f32 0.0, %v1439
        %v1441 = vpop.f32.mrb[0].mxu0
        %1442 = vmatprep.mubr.bf16.mxu0 0
        %1443 = vmatmul.mubr.bf16.gmra.mrb[0].mxu0 %v1367
        %v1444 = vpop.f32.mrb[0].mxu0
        %v1445 = vadd.f32 0.0, %v1444
        %v1446 = vpop.f32.mrb[0].mxu0
        %v1447 = vpop.f32.mrb[0].mxu0
        %v1448 = vadd.f32 0.0, %v1447
        %v1449 = vpop.f32.mrb[0].mxu0
        %1450 = vmatprep.mubr.bf16.mxu0 0
        %1451 = vmatmul.mubr.bf16.gmra.mrb[0].mxu0 %v1370
        %v1452 = vpop.f32.mrb[0].mxu0
        %v1453 = vadd.f32 0.0, %v1452
        %v1454 = vpop.f32.mrb[0].mxu0
        %v1455 = vpop.f32.mrb[0].mxu0
        %v1456 = vadd.f32 0.0, %v1455
        %v1457 = vpop.f32.mrb[0].mxu0
        %1458 = vmatprep.mubr.bf16.mxu0 0
        %1459 = vmatmul.mubr.bf16.gmra.mrb[0].mxu0 %v1373
        %v1460 = vpop.f32.mrb[0].mxu0
        %v1461 = vadd.f32 0.0, %v1460
        %v1462 = vpop.f32.mrb[0].mxu0
        %v1463 = vpop.f32.mrb[0].mxu0
        %v1464 = vadd.f32 0.0, %v1463
        %v1465 = vpop.f32.mrb[0].mxu0
        %1466 = vmatprep.mubr.bf16.mxu0 0
        %1467 = vmatmul.mubr.bf16.gmra.mrb[0].mxu0 %v1376
        %v1468 = vpop.f32.mrb[0].mxu0
        %v1469 = vadd.f32 0.0, %v1468
        %v1470 = vpop.f32.mrb[0].mxu0
        %v1471 = vpop.f32.mrb[0].mxu0
        %v1472 = vadd.f32 0.0, %v1471
        %v1473 = vpop.f32.mrb[0].mxu0
        %1474 = vdwg.mxu0
        %v1475 = vadd.f32 %v1277, %v1413
        %v1476 = vadd.f32 %v1278, %v1416
        %v1477 = vadd.f32 %v1279, %v1421
        %v1478 = vadd.f32 %v1280, %v1424
        %v1479 = vadd.f32 %v1281, %v1429
        %v1480 = vadd.f32 %v1282, %v1432
        %v1481 = vadd.f32 %v1283, %v1437
        %v1482 = vadd.f32 %v1284, %v1440
        %v1483 = vadd.f32 %v1285, %v1445
        %v1484 = vadd.f32 %v1286, %v1448
        %v1485 = vadd.f32 %v1287, %v1453
        %v1486 = vadd.f32 %v1288, %v1456
        %v1487 = vadd.f32 %v1289, %v1461
        %v1488 = vadd.f32 %v1290, %v1464
        %v1489 = vadd.f32 %v1291, %v1469
        %v1490 = vadd.f32 %v1292, %v1472
        %s1491 = sadd.s32 %s334, 576
        %s1492 = sshra.s32 %s1491, 3
        %s1493 = sand.u32 %s1491, 7
        %s1494 = smul.addr %s1492, 4
        %s1495 = scalar_lea.vmem %s0, %s1494
        %v1496 = vld [vmem:[%s1495] sm:$0xf]
        %v1497 = vld [vmem:[%s1495 + $0x4] sm:$0xf]
        %v1498 = vld [vmem:[%s1495 + $0x8] sm:$0xf]
        %v1499 = vld [vmem:[%s1495 + $0xc] sm:$0xf]
        %v1500 = vld [vmem:[%s1495 + $0x10] sm:$0xf]
        %v1501 = vld [vmem:[%s1495 + $0x14] sm:$0xf]
        %v1502 = vld [vmem:[%s1495 + $0x18] sm:$0xf]
        %v1503 = vld [vmem:[%s1495 + $0x1c] sm:$0xf]
        %v1504 = vld [vmem:[%s1495 + $0x20] sm:$0xf]
        %v1505 = vld [vmem:[%s1495 + $0x24] sm:$0xf]
        %v1506 = vld [vmem:[%s1495 + $0x28] sm:$0xf]
        %v1507 = vld [vmem:[%s1495 + $0x2c] sm:$0xf]
        %v1508 = vld [vmem:[%s1495 + $0x30] sm:$0xf]
        %v1509 = vld [vmem:[%s1495 + $0x34] sm:$0xf]
        %v1510 = vld [vmem:[%s1495 + $0x38] sm:$0xf]
        %v1511 = vld [vmem:[%s1495 + $0x3c] sm:$0xf]
        %v1528 = vunpack.c.l.b16 %v1496
        %v1529 = vunpack.c.l.b16 %v1497
        %v1530 = vunpack.c.l.b16 %v1498
        %v1531 = vunpack.c.l.b16 %v1499
        %v1532 = vunpack.c.l.b16 %v1500
        %v1533 = vunpack.c.l.b16 %v1501
        %v1534 = vunpack.c.l.b16 %v1502
        %v1535 = vunpack.c.l.b16 %v1503
        %v1536 = vunpack.c.l.b16 %v1504
        %v1537 = vunpack.c.l.b16 %v1505
        %v1538 = vunpack.c.l.b16 %v1506
        %v1539 = vunpack.c.l.b16 %v1507
        %v1540 = vunpack.c.l.b16 %v1508
        %v1541 = vunpack.c.l.b16 %v1509
        %v1542 = vunpack.c.l.b16 %v1510
        %v1543 = vunpack.c.l.b16 %v1511
        %v1544 = vpack.c.b16 %v1529, %v1528
        %v1545 = vpack.c.b16 %v1531, %v1530
        %v1546 = vpack.c.b16 %v1533, %v1532
        %v1547 = vpack.c.b16 %v1535, %v1534
        %v1548 = vpack.c.b16 %v1537, %v1536
        %v1549 = vpack.c.b16 %v1539, %v1538
        %v1550 = vpack.c.b16 %v1541, %v1540
        %v1551 = vpack.c.b16 %v1543, %v1542
        %v1553 = vsel %vm416, %v1544, 0
        %v1556 = vsel %vm416, %v1545, 0
        %v1559 = vsel %vm416, %v1546, 0
        %v1562 = vsel %vm416, %v1547, 0
        %v1565 = vsel %vm416, %v1548, 0
        %v1568 = vsel %vm416, %v1549, 0
        %v1571 = vsel %vm416, %v1550, 0
        %v1574 = vsel %vm416, %v1551, 0
        %1576 = vmatprep.subr.bf16.mxu0 0
        %1577 = vmatpush1.bf16.msra.mxu0 %v303
        %1578 = vmatprep.subr.bf16.mxu0 0
        %1579 = vmatpush1.bf16.msra.mxu0 %v304
        %1580 = vmatprep.subr.bf16.mxu0 0
        %1581 = vmatpush1.bf16.msra.mxu0 %v305
        %1582 = vmatprep.subr.bf16.mxu0 0
        %1583 = vmatpush1.bf16.msra.mxu0 0
        %1584 = vmatprep.subr.bf16.mxu0 0
        %1585 = vmatpush1.bf16.msra.mxu0 0
        %1586 = vmatprep.subr.bf16.mxu0 0
        %1587 = vmatpush1.bf16.msra.mxu0 0
        %1588 = vmatprep.subr.bf16.mxu0 0
        %1589 = vmatpush1.bf16.msra.mxu0 0
        %1590 = vmatprep.subr.bf16.mxu0 0
        %1591 = vmatpush1.bf16.msra.mxu0 0
        %1592 = vmatprep.subr.bf16.mxu0 0
        %1593 = vmatpush1.bf16.msra.mxu0 0
        %1594 = vmatprep.subr.bf16.mxu0 0
        %1595 = vmatpush1.bf16.msra.mxu0 0
        %1596 = vmatprep.subr.bf16.mxu0 0
        %1597 = vmatpush1.bf16.msra.mxu0 0
        %1598 = vmatprep.subr.bf16.mxu0 0
        %1599 = vmatpush1.bf16.msra.mxu0 0
        %1600 = vmatprep.subr.bf16.mxu0 0
        %1601 = vmatpush1.bf16.msra.mxu0 0
        %1602 = vmatprep.subr.bf16.mxu0 0
        %1603 = vmatpush1.bf16.msra.mxu0 0
        %1604 = vmatprep.subr.bf16.mxu0 0
        %1605 = vmatpush1.bf16.msra.mxu0 0
        %1606 = vmatprep.subr.bf16.mxu0 0
        %1607 = vmatpush1.bf16.msra.mxu0 0
        %1608 = vmatprep.mubr.bf16.mxu0 0
        %1609 = vmatmul.mubr.bf16.gmra.mrb[0].mxu0 %v1553
        %v1610 = vpop.f32.mrb[0].mxu0
        %v1611 = vadd.f32 0.0, %v1610
        %v1612 = vpop.f32.mrb[0].mxu0
        %v1613 = vpop.f32.mrb[0].mxu0
        %v1614 = vadd.f32 0.0, %v1613
        %v1615 = vpop.f32.mrb[0].mxu0
        %1616 = vmatprep.mubr.bf16.mxu0 0
        %1617 = vmatmul.mubr.bf16.gmra.mrb[0].mxu0 %v1556
        %v1618 = vpop.f32.mrb[0].mxu0
        %v1619 = vadd.f32 0.0, %v1618
        %v1620 = vpop.f32.mrb[0].mxu0
        %v1621 = vpop.f32.mrb[0].mxu0
        %v1622 = vadd.f32 0.0, %v1621
        %v1623 = vpop.f32.mrb[0].mxu0
        %1624 = vmatprep.mubr.bf16.mxu0 0
        %1625 = vmatmul.mubr.bf16.gmra.mrb[0].mxu0 %v1559
        %v1626 = vpop.f32.mrb[0].mxu0
        %v1627 = vadd.f32 0.0, %v1626
        %v1628 = vpop.f32.mrb[0].mxu0
        %v1629 = vpop.f32.mrb[0].mxu0
        %v1630 = vadd.f32 0.0, %v1629
        %v1631 = vpop.f32.mrb[0].mxu0
        %1632 = vmatprep.mubr.bf16.mxu0 0
        %1633 = vmatmul.mubr.bf16.gmra.mrb[0].mxu0 %v1562
        %v1634 = vpop.f32.mrb[0].mxu0
        %v1635 = vadd.f32 0.0, %v1634
        %v1636 = vpop.f32.mrb[0].mxu0
        %v1637 = vpop.f32.mrb[0].mxu0
        %v1638 = vadd.f32 0.0, %v1637
        %v1639 = vpop.f32.mrb[0].mxu0
        %1640 = vmatprep.mubr.bf16.mxu0 0
        %1641 = vmatmul.mubr.bf16.gmra.mrb[0].mxu0 %v1565
        %v1642 = vpop.f32.mrb[0].mxu0
        %v1643 = vadd.f32 0.0, %v1642
        %v1644 = vpop.f32.mrb[0].mxu0
        %v1645 = vpop.f32.mrb[0].mxu0
        %v1646 = vadd.f32 0.0, %v1645
        %v1647 = vpop.f32.mrb[0].mxu0
        %1648 = vmatprep.mubr.bf16.mxu0 0
        %1649 = vmatmul.mubr.bf16.gmra.mrb[0].mxu0 %v1568
        %v1650 = vpop.f32.mrb[0].mxu0
        %v1651 = vadd.f32 0.0, %v1650
        %v1652 = vpop.f32.mrb[0].mxu0
        %v1653 = vpop.f32.mrb[0].mxu0
        %v1654 = vadd.f32 0.0, %v1653
        %v1655 = vpop.f32.mrb[0].mxu0
        %1656 = vmatprep.mubr.bf16.mxu0 0
        %1657 = vmatmul.mubr.bf16.gmra.mrb[0].mxu0 %v1571
        %v1658 = vpop.f32.mrb[0].mxu0
        %v1659 = vadd.f32 0.0, %v1658
        %v1660 = vpop.f32.mrb[0].mxu0
        %v1661 = vpop.f32.mrb[0].mxu0
        %v1662 = vadd.f32 0.0, %v1661
        %v1663 = vpop.f32.mrb[0].mxu0
        %1664 = vmatprep.mubr.bf16.mxu0 0
        %1665 = vmatmul.mubr.bf16.gmra.mrb[0].mxu0 %v1574
        %v1666 = vpop.f32.mrb[0].mxu0
        %v1667 = vadd.f32 0.0, %v1666
        %v1668 = vpop.f32.mrb[0].mxu0
        %v1669 = vpop.f32.mrb[0].mxu0
        %v1670 = vadd.f32 0.0, %v1669
        %v1671 = vpop.f32.mrb[0].mxu0
        %1672 = vdwg.mxu0
        %v1673 = vadd.f32 %v1475, %v1611
        %v1674 = vadd.f32 %v1476, %v1614
        %v1675 = vadd.f32 %v1477, %v1619
        %v1676 = vadd.f32 %v1478, %v1622
        %v1677 = vadd.f32 %v1479, %v1627
        %v1678 = vadd.f32 %v1480, %v1630
        %v1679 = vadd.f32 %v1481, %v1635
        %v1680 = vadd.f32 %v1482, %v1638
        %v1681 = vadd.f32 %v1483, %v1643
        %v1682 = vadd.f32 %v1484, %v1646
        %v1683 = vadd.f32 %v1485, %v1651
        %v1684 = vadd.f32 %v1486, %v1654
        %v1685 = vadd.f32 %v1487, %v1659
        %v1686 = vadd.f32 %v1488, %v1662
        %v1687 = vadd.f32 %v1489, %v1667
        %v1688 = vadd.f32 %v1490, %v1670
        %s1689 = sadd.s32 %s334, 592
        %s1690 = sshra.s32 %s1689, 3
        %s1691 = sand.u32 %s1689, 7
        %s1692 = smul.addr %s1690, 4
        %s1693 = scalar_lea.vmem %s0, %s1692
        %v1694 = vld [vmem:[%s1693] sm:$0xf]
        %v1695 = vld [vmem:[%s1693 + $0x4] sm:$0xf]
        %v1696 = vld [vmem:[%s1693 + $0x8] sm:$0xf]
        %v1697 = vld [vmem:[%s1693 + $0xc] sm:$0xf]
        %v1698 = vld [vmem:[%s1693 + $0x10] sm:$0xf]
        %v1699 = vld [vmem:[%s1693 + $0x14] sm:$0xf]
        %v1700 = vld [vmem:[%s1693 + $0x18] sm:$0xf]
        %v1701 = vld [vmem:[%s1693 + $0x1c] sm:$0xf]
        %v1702 = vld [vmem:[%s1693 + $0x20] sm:$0xf]
        %v1703 = vld [vmem:[%s1693 + $0x24] sm:$0xf]
        %v1704 = vld [vmem:[%s1693 + $0x28] sm:$0xf]
        %v1705 = vld [vmem:[%s1693 + $0x2c] sm:$0xf]
        %v1706 = vld [vmem:[%s1693 + $0x30] sm:$0xf]
        %v1707 = vld [vmem:[%s1693 + $0x34] sm:$0xf]
        %v1708 = vld [vmem:[%s1693 + $0x38] sm:$0xf]
        %v1709 = vld [vmem:[%s1693 + $0x3c] sm:$0xf]
        %v1726 = vunpack.c.l.b16 %v1694
        %v1727 = vunpack.c.l.b16 %v1695
        %v1728 = vunpack.c.l.b16 %v1696
        %v1729 = vunpack.c.l.b16 %v1697
        %v1730 = vunpack.c.l.b16 %v1698
        %v1731 = vunpack.c.l.b16 %v1699
        %v1732 = vunpack.c.l.b16 %v1700
        %v1733 = vunpack.c.l.b16 %v1701
        %v1734 = vunpack.c.l.b16 %v1702
        %v1735 = vunpack.c.l.b16 %v1703
        %v1736 = vunpack.c.l.b16 %v1704
        %v1737 = vunpack.c.l.b16 %v1705
        %v1738 = vunpack.c.l.b16 %v1706
        %v1739 = vunpack.c.l.b16 %v1707
        %v1740 = vunpack.c.l.b16 %v1708
        %v1741 = vunpack.c.l.b16 %v1709
        %v1742 = vpack.c.b16 %v1727, %v1726
        %v1743 = vpack.c.b16 %v1729, %v1728
        %v1744 = vpack.c.b16 %v1731, %v1730
        %v1745 = vpack.c.b16 %v1733, %v1732
        %v1746 = vpack.c.b16 %v1735, %v1734
        %v1747 = vpack.c.b16 %v1737, %v1736
        %v1748 = vpack.c.b16 %v1739, %v1738
        %v1749 = vpack.c.b16 %v1741, %v1740
        %v1751 = vsel %vm416, %v1742, 0
        %v1754 = vsel %vm416, %v1743, 0
        %v1757 = vsel %vm416, %v1744, 0
        %v1760 = vsel %vm416, %v1745, 0
        %v1763 = vsel %vm416, %v1746, 0
        %v1766 = vsel %vm416, %v1747, 0
        %v1769 = vsel %vm416, %v1748, 0
        %v1772 = vsel %vm416, %v1749, 0
        %1774 = vmatprep.subr.bf16.mxu0 0
        %1775 = vmatpush1.bf16.msra.mxu0 %v312
        %1776 = vmatprep.subr.bf16.mxu0 0
        %1777 = vmatpush1.bf16.msra.mxu0 %v313
        %1778 = vmatprep.subr.bf16.mxu0 0
        %1779 = vmatpush1.bf16.msra.mxu0 %v314
        %1780 = vmatprep.subr.bf16.mxu0 0
        %1781 = vmatpush1.bf16.msra.mxu0 0
        %1782 = vmatprep.subr.bf16.mxu0 0
        %1783 = vmatpush1.bf16.msra.mxu0 0
        %1784 = vmatprep.subr.bf16.mxu0 0
        %1785 = vmatpush1.bf16.msra.mxu0 0
        %1786 = vmatprep.subr.bf16.mxu0 0
        %1787 = vmatpush1.bf16.msra.mxu0 0
        %1788 = vmatprep.subr.bf16.mxu0 0
        %1789 = vmatpush1.bf16.msra.mxu0 0
        %1790 = vmatprep.subr.bf16.mxu0 0
        %1791 = vmatpush1.bf16.msra.mxu0 0
        %1792 = vmatprep.subr.bf16.mxu0 0
        %1793 = vmatpush1.bf16.msra.mxu0 0
        %1794 = vmatprep.subr.bf16.mxu0 0
        %1795 = vmatpush1.bf16.msra.mxu0 0
        %1796 = vmatprep.subr.bf16.mxu0 0
        %1797 = vmatpush1.bf16.msra.mxu0 0
        %1798 = vmatprep.subr.bf16.mxu0 0
        %1799 = vmatpush1.bf16.msra.mxu0 0
        %1800 = vmatprep.subr.bf16.mxu0 0
        %1801 = vmatpush1.bf16.msra.mxu0 0
        %1802 = vmatprep.subr.bf16.mxu0 0
        %1803 = vmatpush1.bf16.msra.mxu0 0
        %1804 = vmatprep.subr.bf16.mxu0 0
        %1805 = vmatpush1.bf16.msra.mxu0 0
        %1806 = vmatprep.mubr.bf16.mxu0 0
        %1807 = vmatmul.mubr.bf16.gmra.mrb[0].mxu0 %v1751
        %v1808 = vpop.f32.mrb[0].mxu0
        %v1809 = vadd.f32 0.0, %v1808
        %v1810 = vpop.f32.mrb[0].mxu0
        %v1811 = vpop.f32.mrb[0].mxu0
        %v1812 = vadd.f32 0.0, %v1811
        %v1813 = vpop.f32.mrb[0].mxu0
        %1814 = vmatprep.mubr.bf16.mxu0 0
        %1815 = vmatmul.mubr.bf16.gmra.mrb[0].mxu0 %v1754
        %v1816 = vpop.f32.mrb[0].mxu0
        %v1817 = vadd.f32 0.0, %v1816
        %v1818 = vpop.f32.mrb[0].mxu0
        %v1819 = vpop.f32.mrb[0].mxu0
        %v1820 = vadd.f32 0.0, %v1819
        %v1821 = vpop.f32.mrb[0].mxu0
        %1822 = vmatprep.mubr.bf16.mxu0 0
        %1823 = vmatmul.mubr.bf16.gmra.mrb[0].mxu0 %v1757
        %v1824 = vpop.f32.mrb[0].mxu0
        %v1825 = vadd.f32 0.0, %v1824
        %v1826 = vpop.f32.mrb[0].mxu0
        %v1827 = vpop.f32.mrb[0].mxu0
        %v1828 = vadd.f32 0.0, %v1827
        %v1829 = vpop.f32.mrb[0].mxu0
        %1830 = vmatprep.mubr.bf16.mxu0 0
        %1831 = vmatmul.mubr.bf16.gmra.mrb[0].mxu0 %v1760
        %v1832 = vpop.f32.mrb[0].mxu0
        %v1833 = vadd.f32 0.0, %v1832
        %v1834 = vpop.f32.mrb[0].mxu0
        %v1835 = vpop.f32.mrb[0].mxu0
        %v1836 = vadd.f32 0.0, %v1835
        %v1837 = vpop.f32.mrb[0].mxu0
        %1838 = vmatprep.mubr.bf16.mxu0 0
        %1839 = vmatmul.mubr.bf16.gmra.mrb[0].mxu0 %v1763
        %v1840 = vpop.f32.mrb[0].mxu0
        %v1841 = vadd.f32 0.0, %v1840
        %v1842 = vpop.f32.mrb[0].mxu0
        %v1843 = vpop.f32.mrb[0].mxu0
        %v1844 = vadd.f32 0.0, %v1843
        %v1845 = vpop.f32.mrb[0].mxu0
        %1846 = vmatprep.mubr.bf16.mxu0 0
        %1847 = vmatmul.mubr.bf16.gmra.mrb[0].mxu0 %v1766
        %v1848 = vpop.f32.mrb[0].mxu0
        %v1849 = vadd.f32 0.0, %v1848
        %v1850 = vpop.f32.mrb[0].mxu0
        %v1851 = vpop.f32.mrb[0].mxu0
        %v1852 = vadd.f32 0.0, %v1851
        %v1853 = vpop.f32.mrb[0].mxu0
        %1854 = vmatprep.mubr.bf16.mxu0 0
        %1855 = vmatmul.mubr.bf16.gmra.mrb[0].mxu0 %v1769
        %v1856 = vpop.f32.mrb[0].mxu0
        %v1857 = vadd.f32 0.0, %v1856
        %v1858 = vpop.f32.mrb[0].mxu0
        %v1859 = vpop.f32.mrb[0].mxu0
        %v1860 = vadd.f32 0.0, %v1859
        %v1861 = vpop.f32.mrb[0].mxu0
        %1862 = vmatprep.mubr.bf16.mxu0 0
        %1863 = vmatmul.mubr.bf16.gmra.mrb[0].mxu0 %v1772
        %v1864 = vpop.f32.mrb[0].mxu0
        %v1865 = vadd.f32 0.0, %v1864
        %v1866 = vpop.f32.mrb[0].mxu0
        %v1867 = vpop.f32.mrb[0].mxu0
        %v1868 = vadd.f32 0.0, %v1867
        %v1869 = vpop.f32.mrb[0].mxu0
        %1870 = vdwg.mxu0
        %v1871 = vadd.f32 %v1673, %v1809
        %v1872 = vadd.f32 %v1674, %v1812
        %v1873 = vadd.f32 %v1675, %v1817
        %v1874 = vadd.f32 %v1676, %v1820
        %v1875 = vadd.f32 %v1677, %v1825
        %v1876 = vadd.f32 %v1678, %v1828
        %v1877 = vadd.f32 %v1679, %v1833
        %v1878 = vadd.f32 %v1680, %v1836
        %v1879 = vadd.f32 %v1681, %v1841
        %v1880 = vadd.f32 %v1682, %v1844
        %v1881 = vadd.f32 %v1683, %v1849
        %v1882 = vadd.f32 %v1684, %v1852
        %v1883 = vadd.f32 %v1685, %v1857
        %v1884 = vadd.f32 %v1686, %v1860
        %v1885 = vadd.f32 %v1687, %v1865
        %v1886 = vadd.f32 %v1688, %v1868
        %s1887 = sadd.s32 %s334, 608
        %s1888 = sshra.s32 %s1887, 3
        %s1889 = sand.u32 %s1887, 7
        %s1890 = smul.addr %s1888, 4
        %s1891 = scalar_lea.vmem %s0, %s1890
        %v1892 = vld [vmem:[%s1891] sm:$0xf]
        %v1893 = vld [vmem:[%s1891 + $0x4] sm:$0xf]
        %v1894 = vld [vmem:[%s1891 + $0x8] sm:$0xf]
        %v1895 = vld [vmem:[%s1891 + $0xc] sm:$0xf]
        %v1896 = vld [vmem:[%s1891 + $0x10] sm:$0xf]
        %v1897 = vld [vmem:[%s1891 + $0x14] sm:$0xf]
        %v1898 = vld [vmem:[%s1891 + $0x18] sm:$0xf]
        %v1899 = vld [vmem:[%s1891 + $0x1c] sm:$0xf]
        %v1900 = vld [vmem:[%s1891 + $0x20] sm:$0xf]
        %v1901 = vld [vmem:[%s1891 + $0x24] sm:$0xf]
        %v1902 = vld [vmem:[%s1891 + $0x28] sm:$0xf]
        %v1903 = vld [vmem:[%s1891 + $0x2c] sm:$0xf]
        %v1904 = vld [vmem:[%s1891 + $0x30] sm:$0xf]
        %v1905 = vld [vmem:[%s1891 + $0x34] sm:$0xf]
        %v1906 = vld [vmem:[%s1891 + $0x38] sm:$0xf]
        %v1907 = vld [vmem:[%s1891 + $0x3c] sm:$0xf]
        %v1924 = vunpack.c.l.b16 %v1892
        %v1925 = vunpack.c.l.b16 %v1893
        %v1926 = vunpack.c.l.b16 %v1894
        %v1927 = vunpack.c.l.b16 %v1895
        %v1928 = vunpack.c.l.b16 %v1896
        %v1929 = vunpack.c.l.b16 %v1897
        %v1930 = vunpack.c.l.b16 %v1898
        %v1931 = vunpack.c.l.b16 %v1899
        %v1932 = vunpack.c.l.b16 %v1900
        %v1933 = vunpack.c.l.b16 %v1901
        %v1934 = vunpack.c.l.b16 %v1902
        %v1935 = vunpack.c.l.b16 %v1903
        %v1936 = vunpack.c.l.b16 %v1904
        %v1937 = vunpack.c.l.b16 %v1905
        %v1938 = vunpack.c.l.b16 %v1906
        %v1939 = vunpack.c.l.b16 %v1907
        %v1940 = vpack.c.b16 %v1925, %v1924
        %v1941 = vpack.c.b16 %v1927, %v1926
        %v1942 = vpack.c.b16 %v1929, %v1928
        %v1943 = vpack.c.b16 %v1931, %v1930
        %v1944 = vpack.c.b16 %v1933, %v1932
        %v1945 = vpack.c.b16 %v1935, %v1934
        %v1946 = vpack.c.b16 %v1937, %v1936
        %v1947 = vpack.c.b16 %v1939, %v1938
        %v1949 = vsel %vm416, %v1940, 0
        %v1952 = vsel %vm416, %v1941, 0
        %v1955 = vsel %vm416, %v1942, 0
        %v1958 = vsel %vm416, %v1943, 0
        %v1961 = vsel %vm416, %v1944, 0
        %v1964 = vsel %vm416, %v1945, 0
        %v1967 = vsel %vm416, %v1946, 0
        %v1970 = vsel %vm416, %v1947, 0
        %1972 = vmatprep.subr.bf16.mxu0 0
        %1973 = vmatpush1.bf16.msra.mxu0 %v321
        %1974 = vmatprep.subr.bf16.mxu0 0
        %1975 = vmatpush1.bf16.msra.mxu0 %v322
        %1976 = vmatprep.subr.bf16.mxu0 0
        %1977 = vmatpush1.bf16.msra.mxu0 %v323
        %1978 = vmatprep.subr.bf16.mxu0 0
        %1979 = vmatpush1.bf16.msra.mxu0 0
        %1980 = vmatprep.subr.bf16.mxu0 0
        %1981 = vmatpush1.bf16.msra.mxu0 0
        %1982 = vmatprep.subr.bf16.mxu0 0
        %1983 = vmatpush1.bf16.msra.mxu0 0
        %1984 = vmatprep.subr.bf16.mxu0 0
        %1985 = vmatpush1.bf16.msra.mxu0 0
        %1986 = vmatprep.subr.bf16.mxu0 0
        %1987 = vmatpush1.bf16.msra.mxu0 0
        %1988 = vmatprep.subr.bf16.mxu0 0
        %1989 = vmatpush1.bf16.msra.mxu0 0
        %1990 = vmatprep.subr.bf16.mxu0 0
        %1991 = vmatpush1.bf16.msra.mxu0 0
        %1992 = vmatprep.subr.bf16.mxu0 0
        %1993 = vmatpush1.bf16.msra.mxu0 0
        %1994 = vmatprep.subr.bf16.mxu0 0
        %1995 = vmatpush1.bf16.msra.mxu0 0
        %1996 = vmatprep.subr.bf16.mxu0 0
        %1997 = vmatpush1.bf16.msra.mxu0 0
        %1998 = vmatprep.subr.bf16.mxu0 0
        %1999 = vmatpush1.bf16.msra.mxu0 0
        %2000 = vmatprep.subr.bf16.mxu0 0
        %2001 = vmatpush1.bf16.msra.mxu0 0
        %2002 = vmatprep.subr.bf16.mxu0 0
        %2003 = vmatpush1.bf16.msra.mxu0 0
        %2004 = vmatprep.mubr.bf16.mxu0 0
        %2005 = vmatmul.mubr.bf16.gmra.mrb[0].mxu0 %v1949
        %v2006 = vpop.f32.mrb[0].mxu0
        %v2007 = vadd.f32 0.0, %v2006
        %v2008 = vpop.f32.mrb[0].mxu0
        %v2009 = vpop.f32.mrb[0].mxu0
        %v2010 = vadd.f32 0.0, %v2009
        %v2011 = vpop.f32.mrb[0].mxu0
        %2012 = vmatprep.mubr.bf16.mxu0 0
        %2013 = vmatmul.mubr.bf16.gmra.mrb[0].mxu0 %v1952
        %v2014 = vpop.f32.mrb[0].mxu0
        %v2015 = vadd.f32 0.0, %v2014
        %v2016 = vpop.f32.mrb[0].mxu0
        %v2017 = vpop.f32.mrb[0].mxu0
        %v2018 = vadd.f32 0.0, %v2017
        %v2019 = vpop.f32.mrb[0].mxu0
        %2020 = vmatprep.mubr.bf16.mxu0 0
        %2021 = vmatmul.mubr.bf16.gmra.mrb[0].mxu0 %v1955
        %v2022 = vpop.f32.mrb[0].mxu0
        %v2023 = vadd.f32 0.0, %v2022
        %v2024 = vpop.f32.mrb[0].mxu0
        %v2025 = vpop.f32.mrb[0].mxu0
        %v2026 = vadd.f32 0.0, %v2025
        %v2027 = vpop.f32.mrb[0].mxu0
        %2028 = vmatprep.mubr.bf16.mxu0 0
        %2029 = vmatmul.mubr.bf16.gmra.mrb[0].mxu0 %v1958
        %v2030 = vpop.f32.mrb[0].mxu0
        %v2031 = vadd.f32 0.0, %v2030
        %v2032 = vpop.f32.mrb[0].mxu0
        %v2033 = vpop.f32.mrb[0].mxu0
        %v2034 = vadd.f32 0.0, %v2033
        %v2035 = vpop.f32.mrb[0].mxu0
        %2036 = vmatprep.mubr.bf16.mxu0 0
        %2037 = vmatmul.mubr.bf16.gmra.mrb[0].mxu0 %v1961
        %v2038 = vpop.f32.mrb[0].mxu0
        %v2039 = vadd.f32 0.0, %v2038
        %v2040 = vpop.f32.mrb[0].mxu0
        %v2041 = vpop.f32.mrb[0].mxu0
        %v2042 = vadd.f32 0.0, %v2041
        %v2043 = vpop.f32.mrb[0].mxu0
        %2044 = vmatprep.mubr.bf16.mxu0 0
        %2045 = vmatmul.mubr.bf16.gmra.mrb[0].mxu0 %v1964
        %v2046 = vpop.f32.mrb[0].mxu0
        %v2047 = vadd.f32 0.0, %v2046
        %v2048 = vpop.f32.mrb[0].mxu0
        %v2049 = vpop.f32.mrb[0].mxu0
        %v2050 = vadd.f32 0.0, %v2049
        %v2051 = vpop.f32.mrb[0].mxu0
        %2052 = vmatprep.mubr.bf16.mxu0 0
        %2053 = vmatmul.mubr.bf16.gmra.mrb[0].mxu0 %v1967
        %v2054 = vpop.f32.mrb[0].mxu0
        %v2055 = vadd.f32 0.0, %v2054
        %v2056 = vpop.f32.mrb[0].mxu0
        %v2057 = vpop.f32.mrb[0].mxu0
        %v2058 = vadd.f32 0.0, %v2057
        %v2059 = vpop.f32.mrb[0].mxu0
        %2060 = vmatprep.mubr.bf16.mxu0 0
        %2061 = vmatmul.mubr.bf16.gmra.mrb[0].mxu0 %v1970
        %v2062 = vpop.f32.mrb[0].mxu0
        %v2063 = vadd.f32 0.0, %v2062
        %v2064 = vpop.f32.mrb[0].mxu0
        %v2065 = vpop.f32.mrb[0].mxu0
        %v2066 = vadd.f32 0.0, %v2065
        %v2067 = vpop.f32.mrb[0].mxu0
        %2068 = vdwg.mxu0
        %v2069 = vadd.f32 %v1871, %v2007
        %v2070 = vadd.f32 %v1872, %v2010
        %v2071 = vadd.f32 %v1873, %v2015
        %v2072 = vadd.f32 %v1874, %v2018
        %v2073 = vadd.f32 %v1875, %v2023
        %v2074 = vadd.f32 %v1876, %v2026
        %v2075 = vadd.f32 %v1877, %v2031
        %v2076 = vadd.f32 %v1878, %v2034
        %v2077 = vadd.f32 %v1879, %v2039
        %v2078 = vadd.f32 %v1880, %v2042
        %v2079 = vadd.f32 %v1881, %v2047
        %v2080 = vadd.f32 %v1882, %v2050
        %v2081 = vadd.f32 %v1883, %v2055
        %v2082 = vadd.f32 %v1884, %v2058
        %v2083 = vadd.f32 %v1885, %v2063
        %v2084 = vadd.f32 %v1886, %v2066
        %s2085 = scalar_lea.vmem %s234, %s333
        %vm2086 = vcmask 64512
        %2087 = vst.msk [vmem:[%s2085] sm:$0xff] %vm2086, %v2069
        %2088 = vst.msk [vmem:[%s2085 + $0x8] sm:$0xff] %vm2086, %v2070
        %2089 = vst.msk [vmem:[%s2085 + $0x10] sm:$0xff] %vm2086, %v2071
        %2090 = vst.msk [vmem:[%s2085 + $0x18] sm:$0xff] %vm2086, %v2072
        %2091 = vst.msk [vmem:[%s2085 + $0x20] sm:$0xff] %vm2086, %v2073
        %2092 = vst.msk [vmem:[%s2085 + $0x28] sm:$0xff] %vm2086, %v2074
        %2093 = vst.msk [vmem:[%s2085 + $0x30] sm:$0xff] %vm2086, %v2075
        %2094 = vst.msk [vmem:[%s2085 + $0x38] sm:$0xff] %vm2086, %v2076
        %2095 = vst.msk [vmem:[%s2085 + $0x40] sm:$0xff] %vm2086, %v2077
        %2096 = vst.msk [vmem:[%s2085 + $0x48] sm:$0xff] %vm2086, %v2078
        %2097 = vst.msk [vmem:[%s2085 + $0x50] sm:$0xff] %vm2086, %v2079
        %2098 = vst.msk [vmem:[%s2085 + $0x58] sm:$0xff] %vm2086, %v2080
        %2099 = vst.msk [vmem:[%s2085 + $0x60] sm:$0xff] %vm2086, %v2081
        %2100 = vst.msk [vmem:[%s2085 + $0x68] sm:$0xff] %vm2086, %v2082
        %2101 = vst.msk [vmem:[%s2085 + $0x70] sm:$0xff] %vm2086, %v2083
        %2102 = vst.msk [vmem:[%s2085 + $0x78] sm:$0xff] %vm2086, %v2084
        %s2103 = scalar_lea.vmem %s228, %s325
        %v2104 = vld [vmem:[%s2103] sm:$0x1]
        %2105 = vmatprep.subr.mxu0 0.0
        %2106 = vmatpush1.msra.mxu0 %v2069
        %2107 = vmatprep.subr.mxu0 0.0
        %2108 = vmatpush1.msra.mxu0 %v2070
        %2109 = vmatprep.subr.mxu0 0.0
        %2110 = vmatpush1.msra.mxu0 %v2071
        %2111 = vmatprep.subr.mxu0 0.0
        %2112 = vmatpush1.msra.mxu0 %v2072
        %2113 = vmatprep.subr.mxu0 0.0
        %2114 = vmatpush1.msra.mxu0 %v2073
        %2115 = vmatprep.subr.mxu0 0.0
        %2116 = vmatpush1.msra.mxu0 %v2074
        %2117 = vmatprep.subr.mxu0 0.0
        %2118 = vmatpush1.msra.mxu0 %v2075
        %2119 = vmatprep.subr.mxu0 0.0
        %2120 = vmatpush1.msra.mxu0 %v2076
        %2121 = vmatprep.subr.mxu0 0.0
        %2122 = vmatpush1.msra.mxu0 %v2077
        %2123 = vmatprep.subr.mxu0 0.0
        %2124 = vmatpush1.msra.mxu0 %v2078
        %2125 = vmatprep.subr.mxu0 0.0
        %2126 = vmatpush1.msra.mxu0 %v2079
        %2127 = vmatprep.subr.mxu0 0.0
        %2128 = vmatpush1.msra.mxu0 %v2080
        %2129 = vmatprep.subr.mxu0 0.0
        %2130 = vmatpush1.msra.mxu0 %v2081
        %2131 = vmatprep.subr.mxu0 0.0
        %2132 = vmatpush1.msra.mxu0 %v2082
        %2133 = vmatprep.subr.mxu0 0.0
        %2134 = vmatpush1.msra.mxu0 %v2083
        %2135 = vmatprep.subr.mxu0 0.0
        %2136 = vmatpush1.msra.mxu0 %v2084
        %2137 = vmatprep.subr.mxu0 0.0
        %2138 = vmatpush1.msra.mxu0 0.0
        %2139 = vmatprep.subr.mxu0 0.0
        %2140 = vmatpush1.msra.mxu0 0.0
        %2141 = vmatprep.subr.mxu0 0.0
        %2142 = vmatpush1.msra.mxu0 0.0
        %2143 = vmatprep.subr.mxu0 0.0
        %2144 = vmatpush1.msra.mxu0 0.0
        %2145 = vmatprep.subr.mxu0 0.0
        %2146 = vmatpush1.msra.mxu0 0.0
        %2147 = vmatprep.subr.mxu0 0.0
        %2148 = vmatpush1.msra.mxu0 0.0
        %2149 = vmatprep.subr.mxu0 0.0
        %2150 = vmatpush1.msra.mxu0 0.0
        %2151 = vmatprep.subr.mxu0 0.0
        %2152 = vmatpush1.msra.mxu0 0.0
        %2153 = vmatprep.subr.mxu0 0.0
        %2154 = vmatpush1.msra.mxu0 0.0
        %2155 = vmatprep.subr.mxu0 0.0
        %2156 = vmatpush1.msra.mxu0 0.0
        %2157 = vmatprep.subr.mxu0 0.0
        %2158 = vmatpush1.msra.mxu0 0.0
        %2159 = vmatprep.subr.mxu0 0.0
        %2160 = vmatpush1.msra.mxu0 0.0
        %2161 = vmatprep.subr.mxu0 0.0
        %2162 = vmatpush1.msra.mxu0 0.0
        %2163 = vmatprep.subr.mxu0 0.0
        %2164 = vmatpush1.msra.mxu0 0.0
        %2165 = vmatprep.subr.mxu0 0.0
        %2166 = vmatpush1.msra.mxu0 0.0
        %2167 = vmatprep.subr.mxu0 0.0
        %2168 = vmatpush1.msra.mxu0 0.0
        %2169 = vmatprep.mubr.f32.mxu0 0.0
        %2170 = vmatmul.mubr.f32.gmra.mrb[0].mxu0 %v2104
        %v2171 = vpop.f32.mrb[0].mxu0
        %v2172 = vadd.f32 0.0, %v2171
        %v2173 = vpop.f32.mrb[0].mxu0
        %2174 = vdwg.mxu0
        %v2175 = vadd.f32 %v330, %v2172
        %v2176 = vmul.f32 %v2069, %v2069
        %v2177 = vmul.f32 %v2070, %v2070
        %v2178 = vmul.f32 %v2071, %v2071
        %v2179 = vmul.f32 %v2072, %v2072
        %v2180 = vmul.f32 %v2073, %v2073
        %v2181 = vmul.f32 %v2074, %v2074
        %v2182 = vmul.f32 %v2075, %v2075
        %v2183 = vmul.f32 %v2076, %v2076
        %v2184 = vmul.f32 %v2077, %v2077
        %v2185 = vmul.f32 %v2078, %v2078
        %v2186 = vmul.f32 %v2079, %v2079
        %v2187 = vmul.f32 %v2080, %v2080
        %v2188 = vmul.f32 %v2081, %v2081
        %v2189 = vmul.f32 %v2082, %v2082
        %v2190 = vmul.f32 %v2083, %v2083
        %v2191 = vmul.f32 %v2084, %v2084
        %2192 = vmatprep.subr.mxu0 0.0
        %2193 = vmatpush1.msra.mxu0 %v2176
        %2194 = vmatprep.subr.mxu0 0.0
        %2195 = vmatpush1.msra.mxu0 %v2177
        %2196 = vmatprep.subr.mxu0 0.0
        %2197 = vmatpush1.msra.mxu0 %v2178
        %2198 = vmatprep.subr.mxu0 0.0
        %2199 = vmatpush1.msra.mxu0 %v2179
        %2200 = vmatprep.subr.mxu0 0.0
        %2201 = vmatpush1.msra.mxu0 %v2180
        %2202 = vmatprep.subr.mxu0 0.0
        %2203 = vmatpush1.msra.mxu0 %v2181
        %2204 = vmatprep.subr.mxu0 0.0
        %2205 = vmatpush1.msra.mxu0 %v2182
        %2206 = vmatprep.subr.mxu0 0.0
        %2207 = vmatpush1.msra.mxu0 %v2183
        %2208 = vmatprep.subr.mxu0 0.0
        %2209 = vmatpush1.msra.mxu0 %v2184
        %2210 = vmatprep.subr.mxu0 0.0
        %2211 = vmatpush1.msra.mxu0 %v2185
        %2212 = vmatprep.subr.mxu0 0.0
        %2213 = vmatpush1.msra.mxu0 %v2186
        %2214 = vmatprep.subr.mxu0 0.0
        %2215 = vmatpush1.msra.mxu0 %v2187
        %2216 = vmatprep.subr.mxu0 0.0
        %2217 = vmatpush1.msra.mxu0 %v2188
        %2218 = vmatprep.subr.mxu0 0.0
        %2219 = vmatpush1.msra.mxu0 %v2189
        %2220 = vmatprep.subr.mxu0 0.0
        %2221 = vmatpush1.msra.mxu0 %v2190
        %2222 = vmatprep.subr.mxu0 0.0
        %2223 = vmatpush1.msra.mxu0 %v2191
        %2224 = vmatprep.subr.mxu0 0.0
        %2225 = vmatpush1.msra.mxu0 0.0
        %2226 = vmatprep.subr.mxu0 0.0
        %2227 = vmatpush1.msra.mxu0 0.0
        %2228 = vmatprep.subr.mxu0 0.0
        %2229 = vmatpush1.msra.mxu0 0.0
        %2230 = vmatprep.subr.mxu0 0.0
        %2231 = vmatpush1.msra.mxu0 0.0
        %2232 = vmatprep.subr.mxu0 0.0
        %2233 = vmatpush1.msra.mxu0 0.0
        %2234 = vmatprep.subr.mxu0 0.0
        %2235 = vmatpush1.msra.mxu0 0.0
        %2236 = vmatprep.subr.mxu0 0.0
        %2237 = vmatpush1.msra.mxu0 0.0
        %2238 = vmatprep.subr.mxu0 0.0
        %2239 = vmatpush1.msra.mxu0 0.0
        %2240 = vmatprep.subr.mxu0 0.0
        %2241 = vmatpush1.msra.mxu0 0.0
        %2242 = vmatprep.subr.mxu0 0.0
        %2243 = vmatpush1.msra.mxu0 0.0
        %2244 = vmatprep.subr.mxu0 0.0
        %2245 = vmatpush1.msra.mxu0 0.0
        %2246 = vmatprep.subr.mxu0 0.0
        %2247 = vmatpush1.msra.mxu0 0.0
        %2248 = vmatprep.subr.mxu0 0.0
        %2249 = vmatpush1.msra.mxu0 0.0
        %2250 = vmatprep.subr.mxu0 0.0
        %2251 = vmatpush1.msra.mxu0 0.0
        %2252 = vmatprep.subr.mxu0 0.0
        %2253 = vmatpush1.msra.mxu0 0.0
        %2254 = vmatprep.subr.mxu0 0.0
        %2255 = vmatpush1.msra.mxu0 0.0
        %2256 = vmatprep.mubr.f32.mxu0 0.0
        %2257 = vmatmul.mubr.f32.gmra.mrb[0].mxu0 %v2104
        %v2258 = vpop.f32.mrb[0].mxu0
        %v2259 = vadd.f32 0.0, %v2258
        %v2260 = vpop.f32.mrb[0].mxu0
        %2261 = vdwg.mxu0
        %v2262 = vadd.f32 %v331, %v2259
      $region37: #{unet_decoder_forward.8} parent=31 // loop_footer
        %s329 = sadd.s32 1, %s325
      $region38: #{unet_decoder_forward.8} parent=31 // loop_footer_branch
        %324 = sbr.rel target = $region34
      $region39: #{unet_decoder_forward.8} parent=31 // loop_exit
        _
      %vm2263 = vcmask 57344
      %2264 = vst.msk [vmem:[%s238] sm:$0x1] %vm2263, %v330
      %2265 = vst.msk [vmem:[%s241] sm:$0x1] %vm2263, %v331
      %s2266 = smul.u32 224, %s17
      %p2267 = scmp.lt.s32.totalorder %s2266, 1343
      %s2268 = scalar_select %p2267, %s2266, 1343
      %s2269 = smul.addr %s2268, 8
      %s2270 = scalar_lea.vmem %s3, %s2269
      %p2271 = scmp.lt.s32.totalorder %s17, 5
      %s2272 = scalar_select %p2271, %s17, 5
      %s2273 = scalar_lea.vmem %s4, %s2272
      %p2274 = scmp.lt.s32.totalorder %s17, 5
      %s2275 = scalar_select %p2274, %s17, 5
      %s2276 = scalar_lea.vmem %s5, %s2275
      // Predicated region
      $region40: #{unet_decoder_forward.8} parent=31 // pred_check
        %p2277 = pneg %p103
      $region41: #{unet_decoder_forward.8} parent=31 // pred_check_branch
        %2279 = sbr.rel (%p2277) target = $region43
      $region42: #{unet_decoder_forward.8} parent=31 // pred_region
        %s2280 = smul.u32 224, %s17
      $region43: #{unet_decoder_forward.8} parent=31 // pred_fallthru
        _
      // Predicated region
      $region44: #{unet_decoder_forward.8} parent=31 // pred_check
        %p2281 = pneg %p129
      $region45: #{unet_decoder_forward.8} parent=31 // pred_check_branch
        %2283 = sbr.rel (%p2281) target = $region47
      $region46: #{unet_decoder_forward.8} parent=31 // pred_region
        _
      $region47: #{unet_decoder_forward.8} parent=31 // pred_fallthru
        _
      // Predicated region
      $region48: #{unet_decoder_forward.8} parent=31 // pred_check
        %p2284 = pneg %p155
      $region49: #{unet_decoder_forward.8} parent=31 // pred_check_branch
        %2286 = sbr.rel (%p2284) target = $region51
      $region50: #{unet_decoder_forward.8} parent=31 // pred_region
        _
      $region51: #{unet_decoder_forward.8} parent=31 // pred_fallthru
        _
    $region32: #{unet_decoder_forward.8} parent=5 // pred_fallthru
      _
    %p2287 = scmp.le.s32.totalorder 2, %s12
    // Predicated region
    $region52: #{unet_decoder_forward.8} parent=5 // pred_check
      %p2288 = pneg %p2287
    $region53: #{unet_decoder_forward.8} parent=5 // pred_check_branch
      %2290 = sbr.rel (%p2288) target = $region55
    $region54: #{unet_decoder_forward.8} parent=5 // pred_region
      %s2291 = ssub.s32 %s12, 2
      // Predicated region
      $region56: #{unet_decoder_forward.8} parent=54 // pred_check
        %p2292 = pneg %p109
      $region57: #{unet_decoder_forward.8} parent=54 // pred_check_branch
        %2294 = sbr.rel (%p2292) target = $region59
      $region58: #{unet_decoder_forward.8} parent=54 // pred_region
        %s2295 = smul.u32 224, %s18
        %p2296 = scmp.lt.s32.totalorder %s2295, 1343
        %s2297 = scalar_select %p2296, %s2295, 1343
        %s2298 = smul.addr %s2297, 8
        %s2299 = scalar_lea.vmem %s3, %s2298
      $region59: #{unet_decoder_forward.8} parent=54 // pred_fallthru
        _
      // Predicated region
      $region60: #{unet_decoder_forward.8} parent=54 // pred_check
        %p2300 = pneg %p135
      $region61: #{unet_decoder_forward.8} parent=54 // pred_check_branch
        %2302 = sbr.rel (%p2300) target = $region63
      $region62: #{unet_decoder_forward.8} parent=54 // pred_region
        %p2303 = scmp.lt.s32.totalorder %s18, 5
        %s2304 = scalar_select %p2303, %s18, 5
        %s2305 = scalar_lea.vmem %s4, %s2304
      $region63: #{unet_decoder_forward.8} parent=54 // pred_fallthru
        _
      // Predicated region
      $region64: #{unet_decoder_forward.8} parent=54 // pred_check
        %p2306 = pneg %p161
      $region65: #{unet_decoder_forward.8} parent=54 // pred_check_branch
        %2308 = sbr.rel (%p2306) target = $region67
      $region66: #{unet_decoder_forward.8} parent=54 // pred_region
        %p2309 = scmp.lt.s32.totalorder %s18, 5
        %s2310 = scalar_select %p2309, %s18, 5
        %s2311 = scalar_lea.vmem %s5, %s2310
      $region67: #{unet_decoder_forward.8} parent=54 // pred_fallthru
        _
    $region55: #{unet_decoder_forward.8} parent=5 // pred_fallthru
      _
  $region6: #{unet_decoder_forward.8} parent=0 // loop_footer
    %s16 = sadd.s32 1, %s12
  $region7: #{unet_decoder_forward.8} parent=0 // loop_footer_branch
    %11 = sbr.rel target = $region3
  $region8: #{unet_decoder_forward.8} parent=0 // loop_exit
    _

// kernel: tile.59
$region0: #{tile.59}
  #allocation0 [shape = 's32[1]{0}', space=sflag, size = 0x4, scoped, tag = 'scoped memory for tile.59']
  %s0 = inlined_call_operand.vmem [shape: f32[8], index: 0, kind: input, shape index: {}]
  %s1 = inlined_call_operand.vmem [shape: f32[16,8], index: 1, kind: output, shape index: {}]
  // Predicated region
  $region2: #{tile.59} parent=0 // pred_check
    _
  $region3: #{tile.59} parent=0 // pred_check_branch
    %3 = sbr.rel (0) target = $region5
  $region4: #{tile.59} parent=0 // pred_region
    _
  $region5: #{tile.59} parent=0 // pred_fallthru
    _
  %v4 = vld [vmem:[%s0] ss:$0 sm:$0xff]
  %5 = vst [vmem:[%s1] sm:$0xff] %v4
  %s6 = scalar_lea.vmem %s1, 8
  %7 = vst [vmem:[%s6] sm:$0xff] %v4

// kernel: tile.60
$region0: #{tile.60}
  %s0 = inlined_call_operand.vmem [shape: f32[16,8], index: 0, kind: input, shape index: {}]
  %s1 = inlined_call_operand.vmem [shape: f32[1,128], index: 1, kind: output, shape index: {}]
  $region1: #{tile.60} parent=0
    #allocation0 [shape = 'u8[4096]{0}', space=vmem, size = 0x1000, scoped, tag = 'scoped mem for output reshape']
    %v2 = vld [vmem:[%s0] sm:$0x1]
    %vm3 = vcmask 64512
    %4 = vst.msk [vmem:[#allocation0] sm:$0x1] %vm3, %v2
    %s5 = scalar_lea.vmem %s0, 15
    %v6 = vld [vmem:[%s5] sm:$0x1]
    %7 = vrot.lane.b32.xlu0 %v6, 120
    %v8 = vpop.permute.xlu0 %7
    %vm9 = vcmask 1048512
    %10 = vst.msk [vmem:[#allocation0] sm:$0x1] %vm9, %v8
    %s11 = scalar_lea.vmem %s0, 14
    %v12 = vld [vmem:[%s11] sm:$0x1]
    %13 = vrot.lane.b32.xlu0 %v12, 112
    %v14 = vpop.permute.xlu0 %13
    %vm15 = vcmask 982912
    %16 = vst.msk [vmem:[#allocation0] sm:$0x1] %vm15, %v14
    %s17 = scalar_lea.vmem %s0, 13
    %v18 = vld [vmem:[%s17] sm:$0x1]
    %19 = vrot.lane.b32.xlu0 %v18, 104
    %v20 = vpop.permute.xlu0 %19
    %vm21 = vcmask 917312
    %22 = vst.msk [vmem:[#allocation0] sm:$0x1] %vm21, %v20
    %s23 = scalar_lea.vmem %s0, 12
    %v24 = vld [vmem:[%s23] sm:$0x1]
    %25 = vrot.lane.b32.xlu0 %v24, 96
    %v26 = vpop.permute.xlu0 %25
    %vm27 = vcmask 851712
    %28 = vst.msk [vmem:[#allocation0] sm:$0x1] %vm27, %v26
    %s29 = scalar_lea.vmem %s0, 11
    %v30 = vld [vmem:[%s29] sm:$0x1]
    %31 = vrot.lane.b32.xlu0 %v30, 88
    %v32 = vpop.permute.xlu0 %31
    %vm33 = vcmask 786112
    %34 = vst.msk [vmem:[#allocation0] sm:$0x1] %vm33, %v32
    %s35 = scalar_lea.vmem %s0, 10
    %v36 = vld [vmem:[%s35] sm:$0x1]
    %37 = vrot.lane.b32.xlu0 %v36, 80
    %v38 = vpop.permute.xlu0 %37
    %vm39 = vcmask 720512
    %40 = vst.msk [vmem:[#allocation0] sm:$0x1] %vm39, %v38
    %s41 = scalar_lea.vmem %s0, 9
    %v42 = vld [vmem:[%s41] sm:$0x1]
    %43 = vrot.lane.b32.xlu0 %v42, 72
    %v44 = vpop.permute.xlu0 %43
    %vm45 = vcmask 654912
    %46 = vst.msk [vmem:[#allocation0] sm:$0x1] %vm45, %v44
    %s47 = scalar_lea.vmem %s0, 8
    %v48 = vld [vmem:[%s47] sm:$0x1]
    %49 = vrot.lane.b32.xlu0 %v48, 64
    %v50 = vpop.permute.xlu0 %49
    %vm51 = vcmask 589312
    %52 = vst.msk [vmem:[#allocation0] sm:$0x1] %vm51, %v50
    %s53 = scalar_lea.vmem %s0, 7
    %v54 = vld [vmem:[%s53] sm:$0x1]
    %55 = vrot.lane.b32.xlu0 %v54, 56
    %v56 = vpop.permute.xlu0 %55
    %vm57 = vcmask 523712
    %58 = vst.msk [vmem:[#allocation0] sm:$0x1] %vm57, %v56
    %s59 = scalar_lea.vmem %s0, 6
    %v60 = vld [vmem:[%s59] sm:$0x1]
    %61 = vrot.lane.b32.xlu0 %v60, 48
    %v62 = vpop.permute.xlu0 %61
    %vm63 = vcmask 458112
    %64 = vst.msk [vmem:[#allocation0] sm:$0x1] %vm63, %v62
    %s65 = scalar_lea.vmem %s0, 5
    %v66 = vld [vmem:[%s65] sm:$0x1]
    %67 = vrot.lane.b32.xlu0 %v66, 40
    %v68 = vpop.permute.xlu0 %67
    %vm69 = vcmask 392512
    %70 = vst.msk [vmem:[#allocation0] sm:$0x1] %vm69, %v68
    %s71 = scalar_lea.vmem %s0, 4
    %v72 = vld [vmem:[%s71] sm:$0x1]
    %73 = vrot.lane.b32.xlu0 %v72, 32
    %v74 = vpop.permute.xlu0 %73
    %vm75 = vcmask 326912
    %76 = vst.msk [vmem:[#allocation0] sm:$0x1] %vm75, %v74
    %s77 = scalar_lea.vmem %s0, 3
    %v78 = vld [vmem:[%s77] sm:$0x1]
    %79 = vrot.lane.b32.xlu0 %v78, 24
    %v80 = vpop.permute.xlu0 %79
    %vm81 = vcmask 261312
    %82 = vst.msk [vmem:[#allocation0] sm:$0x1] %vm81, %v80
    %s83 = scalar_lea.vmem %s0, 2
    %v84 = vld [vmem:[%s83] sm:$0x1]
    %85 = vrot.lane.b32.xlu0 %v84, 16
    %v86 = vpop.permute.xlu0 %85
    %vm87 = vcmask 195712
    %88 = vst.msk [vmem:[#allocation0] sm:$0x1] %vm87, %v86
    %s89 = scalar_lea.vmem %s0, 1
    %v90 = vld [vmem:[%s89] sm:$0x1]
    %91 = vrot.lane.b32.xlu0 %v90, 8
    %v92 = vpop.permute.xlu0 %91
    %vm93 = vcmask 130112
    %94 = vst.msk [vmem:[#allocation0] sm:$0x1] %vm93, %v92
    %s96 = sshllo.u32 0, 1
    %v98 = vld [vmem:[#allocation0] sm:%s96]
    %s99 = sshllo.u32 0, 1
    %100 = vst [vmem:[%s1] sm:%s99] %v98

// kernel: unet_decoder_forward.9
$region0: #{unet_decoder_forward.9}
  #allocation0 [shape = 'u32[]', space=smem, size = 0x4, offset = 0x4, fixed_abs, tag = 'smem constant byte address 0x4 - core index']
  #allocation1 [shape = 'u32[144,128]{1,0:T(1,128)}', space=vmem, size = 0x12000, scoped, tag = 'internal scratch']
  %s0 = inlined_call_operand.vmem [shape: f32[672,128], index: 0, kind: input, shape index: {}]
  %s1 = inlined_call_operand.vmem [shape: f32[1,128], index: 1, kind: input, shape index: {}]
  %s2 = inlined_call_operand.vmem [shape: f32[1,128], index: 2, kind: input, shape index: {}]
  %s3 = inlined_call_operand.vmem [shape: f32[672,128], index: 3, kind: output, shape index: {}]
  %s4 = sld [smem:[#allocation0]]
  $region45: #{unet_decoder_forward.9} parent=0
    _
  %s6 = ssub.s32 1, %s4
  %s7 = scalar_select 0, %s6, %s4
  loop: start=0, step=1, limit=4
  $region2: #{unet_decoder_forward.9} parent=0 // loop_pre_header
    _
  $region3: #{unet_decoder_forward.9} parent=0 // loop_header
    %s9 = sphi 0, %s13
    %p10 = scmp.ge.s32.totalorder %s9, 4
    %s19 = sphi 0, %s21
    %s22 = sphi 0, %s19
    %s23 = sphi 0, %s22
    %s39 = sphi 0, %s23
    %s43 = sphi 0, %s43
    %s45 = sphi 0, %s43
    %s46 = sphi 0, %s45
    %s60 = sphi 0, %s46
    %s64 = sphi 0, %s64
    %s66 = sphi 0, %s64
    %s67 = sphi 0, %s66
    %s81 = sphi 0, %s67
    %s87 = sphi 0, %s89
    %s90 = sphi 0, %s87
    %s91 = sphi 0, %s90
    %s107 = sphi 0, %s91
  $region4: #{unet_decoder_forward.9} parent=0 // loop_header_branch
    %12 = sbr.rel (%p10) target = $region8
  $region5: #{unet_decoder_forward.9} parent=0 // loop_body
    %s14 = ssub.s32 %s9, 1
    %s15 = ssub.s32 %s9, 2
    %s16 = sadd.s32 %s9, 1
    %s17 = ssub.s32 %s9, %s16
    %p18 = scmp.eq.s32.totalorder %s17, 0
    %s20 = sadd.s32 %s19, 1
    %s21 = scalar_select %p18, %s19, %s20
    %p24 = pneg %p18
    %p25 = scmp.eq.s32.totalorder %s9, 1
    %p26 = por %p24, %p25
    %p27 = scmp.ne.s32.totalorder %s19, %s22
    %p28 = scmp.eq.s32.totalorder %s9, 0
    %p29 = por %p27, %p28
    %p30 = scmp.ne.s32.totalorder %s19, %s22
    %p31 = scmp.eq.s32.totalorder %s14, 1
    %p32 = por %p30, %p31
    %p33 = scmp.ne.s32.totalorder %s22, %s23
    %p34 = scmp.eq.s32.totalorder %s14, 0
    %p35 = por %p33, %p34
    %p36 = scmp.ne.s32.totalorder %s22, %s23
    %p37 = scmp.eq.s32.totalorder %s15, 1
    %p38 = por %p36, %p37
    %p40 = scmp.ne.s32.totalorder %s23, %s39
    %p41 = scmp.eq.s32.totalorder %s15, 0
    %p42 = por %p40, %p41
    %s44 = sadd.s32 %s43, 1
    %p47 = scmp.eq.s32.totalorder %s9, 1
    %p48 = scmp.ne.s32.totalorder %s43, %s45
    %p49 = scmp.eq.s32.totalorder %s9, 0
    %p50 = por %p48, %p49
    %p51 = scmp.ne.s32.totalorder %s43, %s45
    %p52 = scmp.eq.s32.totalorder %s14, 1
    %p53 = por %p51, %p52
    %p54 = scmp.ne.s32.totalorder %s45, %s46
    %p55 = scmp.eq.s32.totalorder %s14, 0
    %p56 = por %p54, %p55
    %p57 = scmp.ne.s32.totalorder %s45, %s46
    %p58 = scmp.eq.s32.totalorder %s15, 1
    %p59 = por %p57, %p58
    %p61 = scmp.ne.s32.totalorder %s46, %s60
    %p62 = scmp.eq.s32.totalorder %s15, 0
    %p63 = por %p61, %p62
    %s65 = sadd.s32 %s64, 1
    %p68 = scmp.eq.s32.totalorder %s9, 1
    %p69 = scmp.ne.s32.totalorder %s64, %s66
    %p70 = scmp.eq.s32.totalorder %s9, 0
    %p71 = por %p69, %p70
    %p72 = scmp.ne.s32.totalorder %s64, %s66
    %p73 = scmp.eq.s32.totalorder %s14, 1
    %p74 = por %p72, %p73
    %p75 = scmp.ne.s32.totalorder %s66, %s67
    %p76 = scmp.eq.s32.totalorder %s14, 0
    %p77 = por %p75, %p76
    %p78 = scmp.ne.s32.totalorder %s66, %s67
    %p79 = scmp.eq.s32.totalorder %s15, 1
    %p80 = por %p78, %p79
    %p82 = scmp.ne.s32.totalorder %s67, %s81
    %p83 = scmp.eq.s32.totalorder %s15, 0
    %p84 = por %p82, %p83
    %s85 = ssub.s32 %s9, %s16
    %p86 = scmp.eq.s32.totalorder %s85, 0
    %s88 = sadd.s32 %s87, 1
    %s89 = scalar_select %p86, %s87, %s88
    %p92 = pneg %p86
    %p93 = scmp.eq.s32.totalorder %s9, 1
    %p94 = por %p92, %p93
    %p95 = scmp.ne.s32.totalorder %s87, %s90
    %p96 = scmp.eq.s32.totalorder %s9, 0
    %p97 = por %p95, %p96
    %p98 = scmp.ne.s32.totalorder %s87, %s90
    %p99 = scmp.eq.s32.totalorder %s14, 1
    %p100 = por %p98, %p99
    %p101 = scmp.ne.s32.totalorder %s90, %s91
    %p102 = scmp.eq.s32.totalorder %s14, 0
    %p103 = por %p101, %p102
    %p104 = scmp.ne.s32.totalorder %s90, %s91
    %p105 = scmp.eq.s32.totalorder %s15, 1
    %p106 = por %p104, %p105
    %p108 = scmp.ne.s32.totalorder %s91, %s107
    %p109 = scmp.eq.s32.totalorder %s15, 0
    %p110 = por %p108, %p109
    %p111 = scmp.le.s32.totalorder 1, %s9
    %p112 = scmp.lt.s32.totalorder %s9, 3
    %p113 = pnand %p111, %p112
    %p114 = pneg %p113
    // Predicated region
    $region9: #{unet_decoder_forward.9} parent=5 // pred_check
      _
    $region10: #{unet_decoder_forward.9} parent=5 // pred_check_branch
      %116 = sbr.rel (%p113) target = $region12
    $region11: #{unet_decoder_forward.9} parent=5 // pred_region
      %s117 = ssub.s32 %s9, 1
      // Predicated region
      $region13: #{unet_decoder_forward.9} parent=11 // pred_check
        %p118 = pneg %p56
      $region14: #{unet_decoder_forward.9} parent=11 // pred_check_branch
        %120 = sbr.rel (%p118) target = $region16
      $region15: #{unet_decoder_forward.9} parent=11 // pred_region
        _
      $region16: #{unet_decoder_forward.9} parent=11 // pred_fallthru
        _
      // Predicated region
      $region17: #{unet_decoder_forward.9} parent=11 // pred_check
        %p121 = pneg %p77
      $region18: #{unet_decoder_forward.9} parent=11 // pred_check_branch
        %123 = sbr.rel (%p121) target = $region20
      $region19: #{unet_decoder_forward.9} parent=11 // pred_region
        _
      $region20: #{unet_decoder_forward.9} parent=11 // pred_fallthru
        _
    $region12: #{unet_decoder_forward.9} parent=5 // pred_fallthru
      _
    %p124 = scmp.lt.s32.totalorder %s9, 2
    // Predicated region
    $region21: #{unet_decoder_forward.9} parent=5 // pred_check
      %p125 = pneg %p124
    $region22: #{unet_decoder_forward.9} parent=5 // pred_check_branch
      %127 = sbr.rel (%p125) target = $region24
    $region23: #{unet_decoder_forward.9} parent=5 // pred_region
      // Predicated region
      $region25: #{unet_decoder_forward.9} parent=23 // pred_check
        %p128 = pneg %p29
      $region26: #{unet_decoder_forward.9} parent=23 // pred_check_branch
        %130 = sbr.rel (%p128) target = $region28
      $region27: #{unet_decoder_forward.9} parent=23 // pred_region
        %s131 = smul.u32 42, %s9
        %p132 = scmp.lt.s32.totalorder %s131, 83
        %s133 = scalar_select %p132, %s131, 83
        %s134 = smul.addr %s133, 8
        %s135 = scalar_lea.vmem %s0, %s134
        %s136 = smul.u32 42, %s9
      $region28: #{unet_decoder_forward.9} parent=23 // pred_fallthru
        _
    $region24: #{unet_decoder_forward.9} parent=5 // pred_fallthru
      _
    %p137 = scmp.le.s32.totalorder 1, %s9
    %p138 = scmp.lt.s32.totalorder %s9, 3
    %p139 = pnand %p137, %p138
    %p140 = pneg %p139
    // Predicated region
    $region29: #{unet_decoder_forward.9} parent=5 // pred_check
      _
    $region30: #{unet_decoder_forward.9} parent=5 // pred_check_branch
      %142 = sbr.rel (%p139) target = $region32
    $region31: #{unet_decoder_forward.9} parent=5 // pred_region
      %s143 = ssub.s32 %s9, 1
      %s144 = smul.u32 42, %s14
      %p145 = scmp.lt.s32.totalorder %s144, 83
      %s146 = scalar_select %p145, %s144, 83
      %s147 = smul.addr %s146, 8
      %s148 = scalar_lea.vmem %s0, %s147
      %p149 = pneg %p35
      %p150 = pneg %p32
      %p151 = pneg %p56
      %p152 = pneg %p53
      %p153 = pneg %p77
      %p154 = pneg %p74
      %p155 = pneg %p103
      %p156 = pneg %p100
      %s157 = smul.u32 42, %s14
      %p158 = scmp.lt.s32.totalorder %s157, 83
      %s159 = scalar_select %p158, %s157, 83
      %s160 = smul.addr %s159, 8
      %s161 = scalar_lea.vmem %s3, %s160
      %s162 = smul.u32 42, %s14
      %p163 = scmp.lt.s32.totalorder %s162, 83
      %s164 = scalar_select %p163, %s162, 83
      %s165 = smul.addr %s164, 8
      %s166 = scalar_lea.vmem %s0, %s165
      %s167 = smul.u32 42, %s14
      %s168 = smul.u32 42, %s14
      %p169 = scmp.lt.s32.totalorder %s168, 83
      %s170 = scalar_select %p169, %s168, 83
      %s171 = smul.addr %s170, 8
      %s172 = scalar_lea.vmem %s3, %s171
      %s173 = smul.u32 42, %s14
      %v174 = vld [vmem:[%s166] sm:$0xff]
      %v175 = vld [vmem:[%s166 + $0x8] sm:$0xff]
      %v176 = vld [vmem:[%s166 + $0x10] sm:$0xff]
      %v177 = vld [vmem:[%s166 + $0x18] sm:$0xff]
      %v178 = vld [vmem:[%s166 + $0x20] sm:$0xff]
      %v179 = vld [vmem:[%s166 + $0x28] sm:$0xff]
      %v180 = vld [vmem:[%s166 + $0x30] sm:$0xff]
      %v181 = vld [vmem:[%s166 + $0x38] sm:$0xff]
      %v182 = vld [vmem:[%s166 + $0x40] sm:$0xff]
      %v183 = vld [vmem:[%s166 + $0x48] sm:$0xff]
      %v184 = vld [vmem:[%s166 + $0x50] sm:$0xff]
      %v185 = vld [vmem:[%s166 + $0x58] sm:$0xff]
      %v186 = vld [vmem:[%s166 + $0x60] sm:$0xff]
      %v187 = vld [vmem:[%s166 + $0x68] sm:$0xff]
      %v188 = vld [vmem:[%s166 + $0x70] sm:$0xff]
      %v189 = vld [vmem:[%s166 + $0x78] sm:$0xff]
      %v190 = vld [vmem:[%s166 + $0x80] sm:$0xff]
      %v191 = vld [vmem:[%s166 + $0x88] sm:$0xff]
      %v192 = vld [vmem:[%s166 + $0x90] sm:$0xff]
      %v193 = vld [vmem:[%s166 + $0x98] sm:$0xff]
      %v194 = vld [vmem:[%s166 + $0xa0] sm:$0xff]
      %v195 = vld [vmem:[%s166 + $0xa8] sm:$0xff]
      %v196 = vld [vmem:[%s166 + $0xb0] sm:$0xff]
      %v197 = vld [vmem:[%s166 + $0xb8] sm:$0xff]
      %v198 = vld [vmem:[%s166 + $0xc0] sm:$0xff]
      %v199 = vld [vmem:[%s166 + $0xc8] sm:$0xff]
      %v200 = vld [vmem:[%s166 + $0xd0] sm:$0xff]
      %v201 = vld [vmem:[%s166 + $0xd8] sm:$0xff]
      %v202 = vld [vmem:[%s166 + $0xe0] sm:$0xff]
      %v203 = vld [vmem:[%s166 + $0xe8] sm:$0xff]
      %v204 = vld [vmem:[%s166 + $0xf0] sm:$0xff]
      %v205 = vld [vmem:[%s166 + $0xf8] sm:$0xff]
      %v206 = vld [vmem:[%s166 + $0x100] sm:$0xff]
      %v207 = vld [vmem:[%s166 + $0x108] sm:$0xff]
      %v208 = vld [vmem:[%s166 + $0x110] sm:$0xff]
      %v209 = vld [vmem:[%s166 + $0x118] sm:$0xff]
      %v210 = vld [vmem:[%s166 + $0x120] sm:$0xff]
      %v211 = vld [vmem:[%s166 + $0x128] sm:$0xff]
      %v212 = vld [vmem:[%s166 + $0x130] sm:$0xff]
      %v213 = vld [vmem:[%s166 + $0x138] sm:$0xff]
      %v214 = vld [vmem:[%s166 + $0x140] sm:$0xff]
      %v215 = vld [vmem:[%s166 + $0x148] sm:$0xff]
      %v216 = vld [vmem:[%s1] sm:$0x1]
      %v218 = vlaneseq
      %v219 = vshrl.u32 %v218, 7
      %v220 = vsub.s32 0, %v219
      %v221 = vrot.slane %v216, %v220
      %v223 = vmul.f32 %v174, %v221
      %v224 = vmul.f32 %v175, %v221
      %v225 = vmul.f32 %v176, %v221
      %v226 = vmul.f32 %v177, %v221
      %v227 = vmul.f32 %v178, %v221
      %v228 = vmul.f32 %v179, %v221
      %v229 = vmul.f32 %v180, %v221
      %v230 = vmul.f32 %v181, %v221
      %v231 = vmul.f32 %v182, %v221
      %v232 = vmul.f32 %v183, %v221
      %v233 = vmul.f32 %v184, %v221
      %v234 = vmul.f32 %v185, %v221
      %v235 = vmul.f32 %v186, %v221
      %v236 = vmul.f32 %v187, %v221
      %v237 = vmul.f32 %v188, %v221
      %v238 = vmul.f32 %v189, %v221
      %v239 = vmul.f32 %v190, %v221
      %v240 = vmul.f32 %v191, %v221
      %v241 = vmul.f32 %v192, %v221
      %v242 = vmul.f32 %v193, %v221
      %v243 = vmul.f32 %v194, %v221
      %v244 = vmul.f32 %v195, %v221
      %v245 = vmul.f32 %v196, %v221
      %v246 = vmul.f32 %v197, %v221
      %v247 = vmul.f32 %v198, %v221
      %v248 = vmul.f32 %v199, %v221
      %v249 = vmul.f32 %v200, %v221
      %v250 = vmul.f32 %v201, %v221
      %v251 = vmul.f32 %v202, %v221
      %v252 = vmul.f32 %v203, %v221
      %v253 = vmul.f32 %v204, %v221
      %v254 = vmul.f32 %v205, %v221
      %v255 = vmul.f32 %v206, %v221
      %v256 = vmul.f32 %v207, %v221
      %v257 = vmul.f32 %v208, %v221
      %v258 = vmul.f32 %v209, %v221
      %v259 = vmul.f32 %v210, %v221
      %v260 = vmul.f32 %v211, %v221
      %v261 = vmul.f32 %v212, %v221
      %v262 = vmul.f32 %v213, %v221
      %v263 = vmul.f32 %v214, %v221
      %v264 = vmul.f32 %v215, %v221
      %v265 = vld [vmem:[%s2] sm:$0x1]
      %v267 = vlaneseq
      %v268 = vshrl.u32 %v267, 7
      %v269 = vsub.s32 0, %v268
      %v270 = vrot.slane %v265, %v269
      %v272 = vadd.f32 %v223, %v270
      %v273 = vadd.f32 %v224, %v270
      %v274 = vadd.f32 %v225, %v270
      %v275 = vadd.f32 %v226, %v270
      %v276 = vadd.f32 %v227, %v270
      %v277 = vadd.f32 %v228, %v270
      %v278 = vadd.f32 %v229, %v270
      %v279 = vadd.f32 %v230, %v270
      %v280 = vadd.f32 %v231, %v270
      %v281 = vadd.f32 %v232, %v270
      %v282 = vadd.f32 %v233, %v270
      %v283 = vadd.f32 %v234, %v270
      %v284 = vadd.f32 %v235, %v270
      %v285 = vadd.f32 %v236, %v270
      %v286 = vadd.f32 %v237, %v270
      %v287 = vadd.f32 %v238, %v270
      %v288 = vadd.f32 %v239, %v270
      %v289 = vadd.f32 %v240, %v270
      %v290 = vadd.f32 %v241, %v270
      %v291 = vadd.f32 %v242, %v270
      %v292 = vadd.f32 %v243, %v270
      %v293 = vadd.f32 %v244, %v270
      %v294 = vadd.f32 %v245, %v270
      %v295 = vadd.f32 %v246, %v270
      %v296 = vadd.f32 %v247, %v270
      %v297 = vadd.f32 %v248, %v270
      %v298 = vadd.f32 %v249, %v270
      %v299 = vadd.f32 %v250, %v270
      %v300 = vadd.f32 %v251, %v270
      %v301 = vadd.f32 %v252, %v270
      %v302 = vadd.f32 %v253, %v270
      %v303 = vadd.f32 %v254, %v270
      %v304 = vadd.f32 %v255, %v270
      %v305 = vadd.f32 %v256, %v270
      %v306 = vadd.f32 %v257, %v270
      %v307 = vadd.f32 %v258, %v270
      %v308 = vadd.f32 %v259, %v270
      %v309 = vadd.f32 %v260, %v270
      %v310 = vadd.f32 %v261, %v270
      %v311 = vadd.f32 %v262, %v270
      %v312 = vadd.f32 %v263, %v270
      %v313 = vadd.f32 %v264, %v270
      %v314 = vmax.f32 %v272, 0.0
      %v315 = vmax.f32 %v273, 0.0
      %v316 = vmax.f32 %v274, 0.0
      %v317 = vmax.f32 %v275, 0.0
      %v318 = vmax.f32 %v276, 0.0
      %v319 = vmax.f32 %v277, 0.0
      %v320 = vmax.f32 %v278, 0.0
      %v321 = vmax.f32 %v279, 0.0
      %v322 = vmax.f32 %v280, 0.0
      %v323 = vmax.f32 %v281, 0.0
      %v324 = vmax.f32 %v282, 0.0
      %v325 = vmax.f32 %v283, 0.0
      %v326 = vmax.f32 %v284, 0.0
      %v327 = vmax.f32 %v285, 0.0
      %v328 = vmax.f32 %v286, 0.0
      %v329 = vmax.f32 %v287, 0.0
      %v330 = vmax.f32 %v288, 0.0
      %v331 = vmax.f32 %v289, 0.0
      %v332 = vmax.f32 %v290, 0.0
      %v333 = vmax.f32 %v291, 0.0
      %v334 = vmax.f32 %v292, 0.0
      %v335 = vmax.f32 %v293, 0.0
      %v336 = vmax.f32 %v294, 0.0
      %v337 = vmax.f32 %v295, 0.0
      %v338 = vmax.f32 %v296, 0.0
      %v339 = vmax.f32 %v297, 0.0
      %v340 = vmax.f32 %v298, 0.0
      %v341 = vmax.f32 %v299, 0.0
      %v342 = vmax.f32 %v300, 0.0
      %v343 = vmax.f32 %v301, 0.0
      %v344 = vmax.f32 %v302, 0.0
      %v345 = vmax.f32 %v303, 0.0
      %v346 = vmax.f32 %v304, 0.0
      %v347 = vmax.f32 %v305, 0.0
      %v348 = vmax.f32 %v306, 0.0
      %v349 = vmax.f32 %v307, 0.0
      %v350 = vmax.f32 %v308, 0.0
      %v351 = vmax.f32 %v309, 0.0
      %v352 = vmax.f32 %v310, 0.0
      %v353 = vmax.f32 %v311, 0.0
      %v354 = vmax.f32 %v312, 0.0
      %v355 = vmax.f32 %v313, 0.0
      %356 = vst [vmem:[%s172] sm:$0xff] %v314
      %357 = vst [vmem:[%s172 + $0x8] sm:$0xff] %v315
      %358 = vst [vmem:[%s172 + $0x10] sm:$0xff] %v316
      %359 = vst [vmem:[%s172 + $0x18] sm:$0xff] %v317
      %360 = vst [vmem:[%s172 + $0x20] sm:$0xff] %v318
      %361 = vst [vmem:[%s172 + $0x28] sm:$0xff] %v319
      %362 = vst [vmem:[%s172 + $0x30] sm:$0xff] %v320
      %363 = vst [vmem:[%s172 + $0x38] sm:$0xff] %v321
      %364 = vst [vmem:[%s172 + $0x40] sm:$0xff] %v322
      %365 = vst [vmem:[%s172 + $0x48] sm:$0xff] %v323
      %366 = vst [vmem:[%s172 + $0x50] sm:$0xff] %v324
      %367 = vst [vmem:[%s172 + $0x58] sm:$0xff] %v325
      %368 = vst [vmem:[%s172 + $0x60] sm:$0xff] %v326
      %369 = vst [vmem:[%s172 + $0x68] sm:$0xff] %v327
      %370 = vst [vmem:[%s172 + $0x70] sm:$0xff] %v328
      %371 = vst [vmem:[%s172 + $0x78] sm:$0xff] %v329
      %372 = vst [vmem:[%s172 + $0x80] sm:$0xff] %v330
      %373 = vst [vmem:[%s172 + $0x88] sm:$0xff] %v331
      %374 = vst [vmem:[%s172 + $0x90] sm:$0xff] %v332
      %375 = vst [vmem:[%s172 + $0x98] sm:$0xff] %v333
      %376 = vst [vmem:[%s172 + $0xa0] sm:$0xff] %v334
      %377 = vst [vmem:[%s172 + $0xa8] sm:$0xff] %v335
      %378 = vst [vmem:[%s172 + $0xb0] sm:$0xff] %v336
      %379 = vst [vmem:[%s172 + $0xb8] sm:$0xff] %v337
      %380 = vst [vmem:[%s172 + $0xc0] sm:$0xff] %v338
      %381 = vst [vmem:[%s172 + $0xc8] sm:$0xff] %v339
      %382 = vst [vmem:[%s172 + $0xd0] sm:$0xff] %v340
      %383 = vst [vmem:[%s172 + $0xd8] sm:$0xff] %v341
      %384 = vst [vmem:[%s172 + $0xe0] sm:$0xff] %v342
      %385 = vst [vmem:[%s172 + $0xe8] sm:$0xff] %v343
      %386 = vst [vmem:[%s172 + $0xf0] sm:$0xff] %v344
      %387 = vst [vmem:[%s172 + $0xf8] sm:$0xff] %v345
      %388 = vst [vmem:[%s172 + $0x100] sm:$0xff] %v346
      %389 = vst [vmem:[%s172 + $0x108] sm:$0xff] %v347
      %390 = vst [vmem:[%s172 + $0x110] sm:$0xff] %v348
      %391 = vst [vmem:[%s172 + $0x118] sm:$0xff] %v349
      %392 = vst [vmem:[%s172 + $0x120] sm:$0xff] %v350
      %393 = vst [vmem:[%s172 + $0x128] sm:$0xff] %v351
      %394 = vst [vmem:[%s172 + $0x130] sm:$0xff] %v352
      %395 = vst [vmem:[%s172 + $0x138] sm:$0xff] %v353
      %396 = vst [vmem:[%s172 + $0x140] sm:$0xff] %v354
      %397 = vst [vmem:[%s172 + $0x148] sm:$0xff] %v355
      %s398 = smul.u32 42, %s14
      %p399 = scmp.lt.s32.totalorder %s398, 83
      %s400 = scalar_select %p399, %s398, 83
      %s401 = smul.addr %s400, 8
      %s402 = scalar_lea.vmem %s3, %s401
      // Predicated region
      $region33: #{unet_decoder_forward.9} parent=31 // pred_check
        %p403 = pneg %p100
      $region34: #{unet_decoder_forward.9} parent=31 // pred_check_branch
        %405 = sbr.rel (%p403) target = $region36
      $region35: #{unet_decoder_forward.9} parent=31 // pred_region
        %s406 = smul.u32 42, %s14
      $region36: #{unet_decoder_forward.9} parent=31 // pred_fallthru
        _
    $region32: #{unet_decoder_forward.9} parent=5 // pred_fallthru
      _
    %p407 = scmp.le.s32.totalorder 2, %s9
    // Predicated region
    $region37: #{unet_decoder_forward.9} parent=5 // pred_check
      %p408 = pneg %p407
    $region38: #{unet_decoder_forward.9} parent=5 // pred_check_branch
      %410 = sbr.rel (%p408) target = $region40
    $region39: #{unet_decoder_forward.9} parent=5 // pred_region
      %s411 = ssub.s32 %s9, 2
      // Predicated region
      $region41: #{unet_decoder_forward.9} parent=39 // pred_check
        %p412 = pneg %p106
      $region42: #{unet_decoder_forward.9} parent=39 // pred_check_branch
        %414 = sbr.rel (%p412) target = $region44
      $region43: #{unet_decoder_forward.9} parent=39 // pred_region
        %s415 = smul.u32 42, %s15
        %p416 = scmp.lt.s32.totalorder %s415, 83
        %s417 = scalar_select %p416, %s415, 83
        %s418 = smul.addr %s417, 8
        %s419 = scalar_lea.vmem %s3, %s418
      $region44: #{unet_decoder_forward.9} parent=39 // pred_fallthru
        _
    $region40: #{unet_decoder_forward.9} parent=5 // pred_fallthru
      _
  $region6: #{unet_decoder_forward.9} parent=0 // loop_footer
    %s13 = sadd.s32 1, %s9
  $region7: #{unet_decoder_forward.9} parent=0 // loop_footer_branch
    %8 = sbr.rel target = $region3
  $region8: #{unet_decoder_forward.9} parent=0 // loop_exit
    _

// kernel: unet_decoder_forward.10
$region0: #{unet_decoder_forward.10}
  #allocation0 [shape = 'u32[]', space=smem, size = 0x4, offset = 0x4, fixed_abs, tag = 'smem constant byte address 0x4 - core index']
  #allocation1 [shape = 'u32[144,128]{1,0:T(1,128)}', space=vmem, size = 0x12000, scoped, tag = 'internal scratch']
  %s0 = inlined_call_operand.vmem [shape: bf16[11360,24], index: 0, kind: input, shape index: {}]
  %s1 = inlined_call_operand.vmem [shape: f32[216,8], index: 1, kind: input, shape index: {}]
  %s2 = inlined_call_operand.vmem [shape: f32[84,1,128], index: 2, kind: input, shape index: {}]
  %s3 = inlined_call_operand.vmem [shape: f32[10752,8], index: 3, kind: output, shape index: {0}]
  %s4 = inlined_call_operand.vmem [shape: f32[6,1,8], index: 4, kind: output, shape index: {1}]
  %s5 = inlined_call_operand.vmem [shape: f32[6,1,8], index: 5, kind: output, shape index: {2}]
  %6 = xla_tuple %s3, %s4, %s5
  %s7 = sld [smem:[#allocation0]]
  $region68: #{unet_decoder_forward.10} parent=0
    _
  %s9 = ssub.s32 1, %s7
  %s10 = scalar_select 0, %s9, %s7
  loop: start=0, step=1, limit=8
  $region2: #{unet_decoder_forward.10} parent=0 // loop_pre_header
    _
  $region3: #{unet_decoder_forward.10} parent=0 // loop_header
    %s12 = sphi 0, %s16
    %p13 = scmp.ge.s32.totalorder %s12, 8
    %s20 = sphi 0, %s20
    %s22 = sphi 0, %s20
    %s23 = sphi 0, %s22
    %s37 = sphi 0, %s23
    %s41 = sphi 0, %s41
    %s43 = sphi 0, %s41
    %s44 = sphi 0, %s43
    %s58 = sphi 0, %s44
    %s64 = sphi 0, %s66
    %s67 = sphi 0, %s64
    %s68 = sphi 0, %s67
    %s84 = sphi 0, %s68
    %s90 = sphi 0, %s92
    %s93 = sphi 0, %s90
    %s94 = sphi 0, %s93
    %s110 = sphi 0, %s94
    %s116 = sphi 0, %s118
    %s119 = sphi 0, %s116
    %s120 = sphi 0, %s119
    %s136 = sphi 0, %s120
    %s142 = sphi 0, %s144
    %s145 = sphi 0, %s142
    %s146 = sphi 0, %s145
    %s162 = sphi 0, %s146
  $region4: #{unet_decoder_forward.10} parent=0 // loop_header_branch
    %15 = sbr.rel (%p13) target = $region8
  $region5: #{unet_decoder_forward.10} parent=0 // loop_body
    %s17 = ssub.s32 %s12, 1
    %s18 = ssub.s32 %s12, 2
    %s19 = sadd.s32 %s12, 1
    %s21 = sadd.s32 %s20, 1
    %p24 = scmp.eq.s32.totalorder %s12, 5
    %p25 = scmp.ne.s32.totalorder %s20, %s22
    %p26 = scmp.eq.s32.totalorder %s12, 0
    %p27 = por %p25, %p26
    %p28 = scmp.ne.s32.totalorder %s20, %s22
    %p29 = scmp.eq.s32.totalorder %s17, 5
    %p30 = por %p28, %p29
    %p31 = scmp.ne.s32.totalorder %s22, %s23
    %p32 = scmp.eq.s32.totalorder %s17, 0
    %p33 = por %p31, %p32
    %p34 = scmp.ne.s32.totalorder %s22, %s23
    %p35 = scmp.eq.s32.totalorder %s18, 5
    %p36 = por %p34, %p35
    %p38 = scmp.ne.s32.totalorder %s23, %s37
    %p39 = scmp.eq.s32.totalorder %s18, 0
    %p40 = por %p38, %p39
    %s42 = sadd.s32 %s41, 1
    %p45 = scmp.eq.s32.totalorder %s12, 5
    %p46 = scmp.ne.s32.totalorder %s41, %s43
    %p47 = scmp.eq.s32.totalorder %s12, 0
    %p48 = por %p46, %p47
    %p49 = scmp.ne.s32.totalorder %s41, %s43
    %p50 = scmp.eq.s32.totalorder %s17, 5
    %p51 = por %p49, %p50
    %p52 = scmp.ne.s32.totalorder %s43, %s44
    %p53 = scmp.eq.s32.totalorder %s17, 0
    %p54 = por %p52, %p53
    %p55 = scmp.ne.s32.totalorder %s43, %s44
    %p56 = scmp.eq.s32.totalorder %s18, 5
    %p57 = por %p55, %p56
    %p59 = scmp.ne.s32.totalorder %s44, %s58
    %p60 = scmp.eq.s32.totalorder %s18, 0
    %p61 = por %p59, %p60
    %s62 = ssub.s32 %s12, %s19
    %p63 = scmp.eq.s32.totalorder %s62, 0
    %s65 = sadd.s32 %s64, 1
    %s66 = scalar_select %p63, %s64, %s65
    %p69 = pneg %p63
    %p70 = scmp.eq.s32.totalorder %s12, 5
    %p71 = por %p69, %p70
    %p72 = scmp.ne.s32.totalorder %s64, %s67
    %p73 = scmp.eq.s32.totalorder %s12, 0
    %p74 = por %p72, %p73
    %p75 = scmp.ne.s32.totalorder %s64, %s67
    %p76 = scmp.eq.s32.totalorder %s17, 5
    %p77 = por %p75, %p76
    %p78 = scmp.ne.s32.totalorder %s67, %s68
    %p79 = scmp.eq.s32.totalorder %s17, 0
    %p80 = por %p78, %p79
    %p81 = scmp.ne.s32.totalorder %s67, %s68
    %p82 = scmp.eq.s32.totalorder %s18, 5
    %p83 = por %p81, %p82
    %p85 = scmp.ne.s32.totalorder %s68, %s84
    %p86 = scmp.eq.s32.totalorder %s18, 0
    %p87 = por %p85, %p86
    %s88 = ssub.s32 %s12, %s19
    %p89 = scmp.eq.s32.totalorder %s88, 0
    %s91 = sadd.s32 %s90, 1
    %s92 = scalar_select %p89, %s90, %s91
    %p95 = pneg %p89
    %p96 = scmp.eq.s32.totalorder %s12, 5
    %p97 = por %p95, %p96
    %p98 = scmp.ne.s32.totalorder %s90, %s93
    %p99 = scmp.eq.s32.totalorder %s12, 0
    %p100 = por %p98, %p99
    %p101 = scmp.ne.s32.totalorder %s90, %s93
    %p102 = scmp.eq.s32.totalorder %s17, 5
    %p103 = por %p101, %p102
    %p104 = scmp.ne.s32.totalorder %s93, %s94
    %p105 = scmp.eq.s32.totalorder %s17, 0
    %p106 = por %p104, %p105
    %p107 = scmp.ne.s32.totalorder %s93, %s94
    %p108 = scmp.eq.s32.totalorder %s18, 5
    %p109 = por %p107, %p108
    %p111 = scmp.ne.s32.totalorder %s94, %s110
    %p112 = scmp.eq.s32.totalorder %s18, 0
    %p113 = por %p111, %p112
    %s114 = ssub.s32 %s12, %s19
    %p115 = scmp.eq.s32.totalorder %s114, 0
    %s117 = sadd.s32 %s116, 1
    %s118 = scalar_select %p115, %s116, %s117
    %p121 = pneg %p115
    %p122 = scmp.eq.s32.totalorder %s12, 5
    %p123 = por %p121, %p122
    %p124 = scmp.ne.s32.totalorder %s116, %s119
    %p125 = scmp.eq.s32.totalorder %s12, 0
    %p126 = por %p124, %p125
    %p127 = scmp.ne.s32.totalorder %s116, %s119
    %p128 = scmp.eq.s32.totalorder %s17, 5
    %p129 = por %p127, %p128
    %p130 = scmp.ne.s32.totalorder %s119, %s120
    %p131 = scmp.eq.s32.totalorder %s17, 0
    %p132 = por %p130, %p131
    %p133 = scmp.ne.s32.totalorder %s119, %s120
    %p134 = scmp.eq.s32.totalorder %s18, 5
    %p135 = por %p133, %p134
    %p137 = scmp.ne.s32.totalorder %s120, %s136
    %p138 = scmp.eq.s32.totalorder %s18, 0
    %p139 = por %p137, %p138
    %s140 = ssub.s32 %s12, %s19
    %p141 = scmp.eq.s32.totalorder %s140, 0
    %s143 = sadd.s32 %s142, 1
    %s144 = scalar_select %p141, %s142, %s143
    %p147 = pneg %p141
    %p148 = scmp.eq.s32.totalorder %s12, 5
    %p149 = por %p147, %p148
    %p150 = scmp.ne.s32.totalorder %s142, %s145
    %p151 = scmp.eq.s32.totalorder %s12, 0
    %p152 = por %p150, %p151
    %p153 = scmp.ne.s32.totalorder %s142, %s145
    %p154 = scmp.eq.s32.totalorder %s17, 5
    %p155 = por %p153, %p154
    %p156 = scmp.ne.s32.totalorder %s145, %s146
    %p157 = scmp.eq.s32.totalorder %s17, 0
    %p158 = por %p156, %p157
    %p159 = scmp.ne.s32.totalorder %s145, %s146
    %p160 = scmp.eq.s32.totalorder %s18, 5
    %p161 = por %p159, %p160
    %p163 = scmp.ne.s32.totalorder %s146, %s162
    %p164 = scmp.eq.s32.totalorder %s18, 0
    %p165 = por %p163, %p164
    %p166 = scmp.le.s32.totalorder 1, %s12
    %p167 = scmp.lt.s32.totalorder %s12, 7
    %p168 = pnand %p166, %p167
    %p169 = pneg %p168
    // Predicated region
    $region9: #{unet_decoder_forward.10} parent=5 // pred_check
      _
    $region10: #{unet_decoder_forward.10} parent=5 // pred_check_branch
      %171 = sbr.rel (%p168) target = $region12
    $region11: #{unet_decoder_forward.10} parent=5 // pred_region
      %s172 = ssub.s32 %s12, 1
      // Predicated region
      $region13: #{unet_decoder_forward.10} parent=11 // pred_check
        %p173 = pneg %p33
      $region14: #{unet_decoder_forward.10} parent=11 // pred_check_branch
        %175 = sbr.rel (%p173) target = $region16
      $region15: #{unet_decoder_forward.10} parent=11 // pred_region
        _
      $region16: #{unet_decoder_forward.10} parent=11 // pred_fallthru
        _
      // Predicated region
      $region17: #{unet_decoder_forward.10} parent=11 // pred_check
        %p176 = pneg %p54
      $region18: #{unet_decoder_forward.10} parent=11 // pred_check_branch
        %178 = sbr.rel (%p176) target = $region20
      $region19: #{unet_decoder_forward.10} parent=11 // pred_region
        _
      $region20: #{unet_decoder_forward.10} parent=11 // pred_fallthru
        _
    $region12: #{unet_decoder_forward.10} parent=5 // pred_fallthru
      _
    %p179 = scmp.lt.s32.totalorder %s12, 6
    // Predicated region
    $region21: #{unet_decoder_forward.10} parent=5 // pred_check
      %p180 = pneg %p179
    $region22: #{unet_decoder_forward.10} parent=5 // pred_check_branch
      %182 = sbr.rel (%p180) target = $region24
    $region23: #{unet_decoder_forward.10} parent=5 // pred_region
      // Predicated region
      $region25: #{unet_decoder_forward.10} parent=23 // pred_check
        %p183 = pneg %p74
      $region26: #{unet_decoder_forward.10} parent=23 // pred_check_branch
        %185 = sbr.rel (%p183) target = $region28
      $region27: #{unet_decoder_forward.10} parent=23 // pred_region
        %s186 = smul.u32 14, %s12
        %p187 = scmp.lt.s32.totalorder %s186, 83
        %s188 = scalar_select %p187, %s186, 83
        %s189 = scalar_lea.vmem %s2, %s188
        %s190 = smul.u32 14, %s12
      $region28: #{unet_decoder_forward.10} parent=23 // pred_fallthru
        _
    $region24: #{unet_decoder_forward.10} parent=5 // pred_fallthru
      _
    %p191 = scmp.le.s32.totalorder 1, %s12
    %p192 = scmp.lt.s32.totalorder %s12, 7
    %p193 = pnand %p191, %p192
    %p194 = pneg %p193
    // Predicated region
    $region29: #{unet_decoder_forward.10} parent=5 // pred_check
      _
    $region30: #{unet_decoder_forward.10} parent=5 // pred_check_branch
      %196 = sbr.rel (%p193) target = $region32
    $region31: #{unet_decoder_forward.10} parent=5 // pred_region
      %s197 = ssub.s32 %s12, 1
      %p198 = pneg %p33
      %p199 = pneg %p30
      %p200 = pneg %p54
      %p201 = pneg %p51
      %s202 = smul.u32 14, %s17
      %p203 = scmp.lt.s32.totalorder %s202, 83
      %s204 = scalar_select %p203, %s202, 83
      %s205 = scalar_lea.vmem %s2, %s204
      %p206 = pneg %p80
      %p207 = pneg %p77
      %p208 = pneg %p106
      %p209 = pneg %p103
      %s210 = smul.u32 224, %s17
      %p211 = scmp.lt.s32.totalorder %s210, 1343
      %s212 = scalar_select %p211, %s210, 1343
      %s213 = smul.addr %s212, 8
      %s214 = scalar_lea.vmem %s3, %s213
      %p215 = pneg %p132
      %p216 = pneg %p129
      %p217 = scmp.lt.s32.totalorder %s17, 5
      %s218 = scalar_select %p217, %s17, 5
      %s219 = scalar_lea.vmem %s4, %s218
      %p220 = pneg %p158
      %p221 = pneg %p155
      %p222 = scmp.lt.s32.totalorder %s17, 5
      %s223 = scalar_select %p222, %s17, 5
      %s224 = scalar_lea.vmem %s5, %s223
      %s225 = smul.u32 14, %s17
      %p226 = scmp.lt.s32.totalorder %s225, 83
      %s227 = scalar_select %p226, %s225, 83
      %s228 = scalar_lea.vmem %s2, %s227
      %s229 = smul.u32 14, %s17
      %s230 = smul.u32 224, %s17
      %p231 = scmp.lt.s32.totalorder %s230, 1343
      %s232 = scalar_select %p231, %s230, 1343
      %s233 = smul.addr %s232, 8
      %s234 = scalar_lea.vmem %s3, %s233
      %s235 = smul.u32 224, %s17
      %p236 = scmp.lt.s32.totalorder %s17, 5
      %s237 = scalar_select %p236, %s17, 5
      %s238 = scalar_lea.vmem %s4, %s237
      %p239 = scmp.lt.s32.totalorder %s17, 5
      %s240 = scalar_select %p239, %s17, 5
      %s241 = scalar_lea.vmem %s5, %s240
      %v243 = vld [vmem:[%s1] sm:$0xff]
      %v244 = vld [vmem:[%s1 + $0x8] sm:$0xff]
      %v245 = vld [vmem:[%s1 + $0x10] sm:$0xff]
      %v246 = vpack.c.bf16 %v244, %v243
      %v247 = vpack.c.bf16 %v245, %v245
      %v248 = vld [vmem:[%s1 + $0x18] sm:$0xff]
      %v249 = vld [vmem:[%s1 + $0x20] sm:$0xff]
      %v250 = vld [vmem:[%s1 + $0x28] sm:$0xff]
      %v251 = vpack.c.bf16 %v249, %v248
      %v252 = vpack.c.bf16 %v250, %v250
      %v253 = vld [vmem:[%s1 + $0x30] sm:$0xff]
      %v254 = vld [vmem:[%s1 + $0x38] sm:$0xff]
      %v255 = vld [vmem:[%s1 + $0x40] sm:$0xff]
      %v256 = vpack.c.bf16 %v254, %v253
      %v257 = vpack.c.bf16 %v255, %v255
      %v258 = vld [vmem:[%s1 + $0x48] sm:$0xff]
      %v259 = vld [vmem:[%s1 + $0x50] sm:$0xff]
      %v260 = vld [vmem:[%s1 + $0x58] sm:$0xff]
      %v261 = vpack.c.bf16 %v259, %v258
      %v262 = vpack.c.bf16 %v260, %v260
      %v263 = vld [vmem:[%s1 + $0x60] sm:$0xff]
      %v264 = vld [vmem:[%s1 + $0x68] sm:$0xff]
      %v265 = vld [vmem:[%s1 + $0x70] sm:$0xff]
      %v266 = vpack.c.bf16 %v264, %v263
      %v267 = vpack.c.bf16 %v265, %v265
      %v268 = vld [vmem:[%s1 + $0x78] sm:$0xff]
      %v269 = vld [vmem:[%s1 + $0x80] sm:$0xff]
      %v270 = vld [vmem:[%s1 + $0x88] sm:$0xff]
      %v271 = vpack.c.bf16 %v269, %v268
      %v272 = vpack.c.bf16 %v270, %v270
      %v273 = vld [vmem:[%s1 + $0x90] sm:$0xff]
      %v274 = vld [vmem:[%s1 + $0x98] sm:$0xff]
      %v275 = vld [vmem:[%s1 + $0xa0] sm:$0xff]
      %v276 = vpack.c.bf16 %v274, %v273
      %v277 = vpack.c.bf16 %v275, %v275
      %v278 = vld [vmem:[%s1 + $0xa8] sm:$0xff]
      %v279 = vld [vmem:[%s1 + $0xb0] sm:$0xff]
      %v280 = vld [vmem:[%s1 + $0xb8] sm:$0xff]
      %v281 = vpack.c.bf16 %v279, %v278
      %v282 = vpack.c.bf16 %v280, %v280
      %v283 = vld [vmem:[%s1 + $0xc0] sm:$0xff]
      %v284 = vld [vmem:[%s1 + $0xc8] sm:$0xff]
      %v285 = vld [vmem:[%s1 + $0xd0] sm:$0xff]
      %v286 = vpack.c.bf16 %v284, %v283
      %v287 = vpack.c.bf16 %v285, %v285
      loop: start=0, step=1, limit=14
      $region33: #{unet_decoder_forward.10} parent=31 // loop_pre_header
        _
      $region34: #{unet_decoder_forward.10} parent=31 // loop_header
        %s289 = sphi 0, %s293
        %p290 = scmp.ge.s32.totalorder %s289, 14
        %v294 = vphi 0.0, %v2167
        %v295 = vphi 0.0, %v2254
      $region35: #{unet_decoder_forward.10} parent=31 // loop_header_branch
        %292 = sbr.rel (%p290) target = $region39
      $region36: #{unet_decoder_forward.10} parent=31 // loop_body
        %s296 = smul.u32 %s17, 1792
        %s297 = smul.u32 %s289, 128
        %s298 = sadd.s32 %s296, %s297
        %s299 = sshra.s32 %s298, 3
        %s300 = sand.u32 %s298, 7
        %s301 = smul.addr %s299, 4
        %s302 = scalar_lea.vmem %s0, %s301
        %v303 = vld [vmem:[%s302] sm:$0xf]
        %v304 = vld [vmem:[%s302 + $0x4] sm:$0xf]
        %v305 = vld [vmem:[%s302 + $0x8] sm:$0xf]
        %v306 = vld [vmem:[%s302 + $0xc] sm:$0xf]
        %v307 = vld [vmem:[%s302 + $0x10] sm:$0xf]
        %v308 = vld [vmem:[%s302 + $0x14] sm:$0xf]
        %v309 = vld [vmem:[%s302 + $0x18] sm:$0xf]
        %v310 = vld [vmem:[%s302 + $0x1c] sm:$0xf]
        %v311 = vld [vmem:[%s302 + $0x20] sm:$0xf]
        %v312 = vld [vmem:[%s302 + $0x24] sm:$0xf]
        %v313 = vld [vmem:[%s302 + $0x28] sm:$0xf]
        %v314 = vld [vmem:[%s302 + $0x2c] sm:$0xf]
        %v315 = vld [vmem:[%s302 + $0x30] sm:$0xf]
        %v316 = vld [vmem:[%s302 + $0x34] sm:$0xf]
        %v317 = vld [vmem:[%s302 + $0x38] sm:$0xf]
        %v318 = vld [vmem:[%s302 + $0x3c] sm:$0xf]
        %s319 = sadd.s32 %s298, 16
        %s320 = sshra.s32 %s319, 3
        %s321 = sand.u32 %s319, 7
        %s322 = smul.addr %s320, 4
        %s323 = scalar_lea.vmem %s0, %s322
        %v324 = vld [vmem:[%s323] sm:$0xf]
        %v325 = vld [vmem:[%s323 + $0x4] sm:$0xf]
        %v326 = vld [vmem:[%s323 + $0x8] sm:$0xf]
        %v327 = vld [vmem:[%s323 + $0xc] sm:$0xf]
        %v328 = vld [vmem:[%s323 + $0x10] sm:$0xf]
        %v329 = vld [vmem:[%s323 + $0x14] sm:$0xf]
        %v330 = vld [vmem:[%s323 + $0x18] sm:$0xf]
        %v331 = vld [vmem:[%s323 + $0x1c] sm:$0xf]
        %v332 = vld [vmem:[%s323 + $0x20] sm:$0xf]
        %v333 = vld [vmem:[%s323 + $0x24] sm:$0xf]
        %v334 = vld [vmem:[%s323 + $0x28] sm:$0xf]
        %v335 = vld [vmem:[%s323 + $0x2c] sm:$0xf]
        %v336 = vld [vmem:[%s323 + $0x30] sm:$0xf]
        %v337 = vld [vmem:[%s323 + $0x34] sm:$0xf]
        %v338 = vld [vmem:[%s323 + $0x38] sm:$0xf]
        %v339 = vld [vmem:[%s323 + $0x3c] sm:$0xf]
        %v356 = vunpack.c.l.b16 %v324
        %v357 = vunpack.c.l.b16 %v325
        %v358 = vunpack.c.l.b16 %v326
        %v359 = vunpack.c.l.b16 %v327
        %v360 = vunpack.c.l.b16 %v328
        %v361 = vunpack.c.l.b16 %v329
        %v362 = vunpack.c.l.b16 %v330
        %v363 = vunpack.c.l.b16 %v331
        %v364 = vunpack.c.l.b16 %v332
        %v365 = vunpack.c.l.b16 %v333
        %v366 = vunpack.c.l.b16 %v334
        %v367 = vunpack.c.l.b16 %v335
        %v368 = vunpack.c.l.b16 %v336
        %v369 = vunpack.c.l.b16 %v337
        %v370 = vunpack.c.l.b16 %v338
        %v371 = vunpack.c.l.b16 %v339
        %v372 = vpack.c.b16 %v357, %v356
        %v373 = vpack.c.b16 %v359, %v358
        %v374 = vpack.c.b16 %v361, %v360
        %v375 = vpack.c.b16 %v363, %v362
        %v376 = vpack.c.b16 %v365, %v364
        %v377 = vpack.c.b16 %v367, %v366
        %v378 = vpack.c.b16 %v369, %v368
        %v379 = vpack.c.b16 %v371, %v370
        %vm380 = vcmask 195584
        %v382 = vsel %vm380, %v372, 0
        %v385 = vsel %vm380, %v373, 0
        %v388 = vsel %vm380, %v374, 0
        %v391 = vsel %vm380, %v375, 0
        %v394 = vsel %vm380, %v376, 0
        %v397 = vsel %vm380, %v377, 0
        %v400 = vsel %vm380, %v378, 0
        %v403 = vsel %vm380, %v379, 0
        %vm405 = vcmask 1043456
        %v407 = vsel %vm405, %v252, 0
        %409 = vmatprep.subr.bf16.mxu0 0
        %410 = vmatpush1.bf16.msra.mxu0 %v251
        %411 = vmatprep.subr.bf16.mxu0 0
        %412 = vmatpush1.bf16.msra.mxu0 %v407
        %413 = vmatprep.subr.bf16.mxu0 0
        %414 = vmatpush1.bf16.msra.mxu0 0
        %415 = vmatprep.subr.bf16.mxu0 0
        %416 = vmatpush1.bf16.msra.mxu0 0
        %417 = vmatprep.subr.bf16.mxu0 0
        %418 = vmatpush1.bf16.msra.mxu0 0
        %419 = vmatprep.subr.bf16.mxu0 0
        %420 = vmatpush1.bf16.msra.mxu0 0
        %421 = vmatprep.subr.bf16.mxu0 0
        %422 = vmatpush1.bf16.msra.mxu0 0
        %423 = vmatprep.subr.bf16.mxu0 0
        %424 = vmatpush1.bf16.msra.mxu0 0
        %425 = vmatprep.subr.bf16.mxu0 0
        %426 = vmatpush1.bf16.msra.mxu0 0
        %427 = vmatprep.subr.bf16.mxu0 0
        %428 = vmatpush1.bf16.msra.mxu0 0
        %429 = vmatprep.subr.bf16.mxu0 0
        %430 = vmatpush1.bf16.msra.mxu0 0
        %431 = vmatprep.subr.bf16.mxu0 0
        %432 = vmatpush1.bf16.msra.mxu0 0
        %433 = vmatprep.subr.bf16.mxu0 0
        %434 = vmatpush1.bf16.msra.mxu0 0
        %435 = vmatprep.subr.bf16.mxu0 0
        %436 = vmatpush1.bf16.msra.mxu0 0
        %437 = vmatprep.subr.bf16.mxu0 0
        %438 = vmatpush1.bf16.msra.mxu0 0
        %439 = vmatprep.subr.bf16.mxu0 0
        %440 = vmatpush1.bf16.msra.mxu0 0
        %441 = vmatprep.mubr.bf16.mxu0 0
        %442 = vmatmul.mubr.bf16.gmra.mrb[0].mxu0 %v382
        %v443 = vpop.f32.mrb[0].mxu0
        %v444 = vadd.f32 0.0, %v443
        %v445 = vpop.f32.mrb[0].mxu0
        %v446 = vpop.f32.mrb[0].mxu0
        %v447 = vadd.f32 0.0, %v446
        %v448 = vpop.f32.mrb[0].mxu0
        %449 = vmatprep.mubr.bf16.mxu0 0
        %450 = vmatmul.mubr.bf16.gmra.mrb[0].mxu0 %v385
        %v451 = vpop.f32.mrb[0].mxu0
        %v452 = vadd.f32 0.0, %v451
        %v453 = vpop.f32.mrb[0].mxu0
        %v454 = vpop.f32.mrb[0].mxu0
        %v455 = vadd.f32 0.0, %v454
        %v456 = vpop.f32.mrb[0].mxu0
        %457 = vmatprep.mubr.bf16.mxu0 0
        %458 = vmatmul.mubr.bf16.gmra.mrb[0].mxu0 %v388
        %v459 = vpop.f32.mrb[0].mxu0
        %v460 = vadd.f32 0.0, %v459
        %v461 = vpop.f32.mrb[0].mxu0
        %v462 = vpop.f32.mrb[0].mxu0
        %v463 = vadd.f32 0.0, %v462
        %v464 = vpop.f32.mrb[0].mxu0
        %465 = vmatprep.mubr.bf16.mxu0 0
        %466 = vmatmul.mubr.bf16.gmra.mrb[0].mxu0 %v391
        %v467 = vpop.f32.mrb[0].mxu0
        %v468 = vadd.f32 0.0, %v467
        %v469 = vpop.f32.mrb[0].mxu0
        %v470 = vpop.f32.mrb[0].mxu0
        %v471 = vadd.f32 0.0, %v470
        %v472 = vpop.f32.mrb[0].mxu0
        %473 = vmatprep.mubr.bf16.mxu0 0
        %474 = vmatmul.mubr.bf16.gmra.mrb[0].mxu0 %v394
        %v475 = vpop.f32.mrb[0].mxu0
        %v476 = vadd.f32 0.0, %v475
        %v477 = vpop.f32.mrb[0].mxu0
        %v478 = vpop.f32.mrb[0].mxu0
        %v479 = vadd.f32 0.0, %v478
        %v480 = vpop.f32.mrb[0].mxu0
        %481 = vmatprep.mubr.bf16.mxu0 0
        %482 = vmatmul.mubr.bf16.gmra.mrb[0].mxu0 %v397
        %v483 = vpop.f32.mrb[0].mxu0
        %v484 = vadd.f32 0.0, %v483
        %v485 = vpop.f32.mrb[0].mxu0
        %v486 = vpop.f32.mrb[0].mxu0
        %v487 = vadd.f32 0.0, %v486
        %v488 = vpop.f32.mrb[0].mxu0
        %489 = vmatprep.mubr.bf16.mxu0 0
        %490 = vmatmul.mubr.bf16.gmra.mrb[0].mxu0 %v400
        %v491 = vpop.f32.mrb[0].mxu0
        %v492 = vadd.f32 0.0, %v491
        %v493 = vpop.f32.mrb[0].mxu0
        %v494 = vpop.f32.mrb[0].mxu0
        %v495 = vadd.f32 0.0, %v494
        %v496 = vpop.f32.mrb[0].mxu0
        %497 = vmatprep.mubr.bf16.mxu0 0
        %498 = vmatmul.mubr.bf16.gmra.mrb[0].mxu0 %v403
        %v499 = vpop.f32.mrb[0].mxu0
        %v500 = vadd.f32 0.0, %v499
        %v501 = vpop.f32.mrb[0].mxu0
        %v502 = vpop.f32.mrb[0].mxu0
        %v503 = vadd.f32 0.0, %v502
        %v504 = vpop.f32.mrb[0].mxu0
        %505 = vdwg.mxu0
        %v522 = vunpack.c.l.b16 %v303
        %v523 = vunpack.c.l.b16 %v304
        %v524 = vunpack.c.l.b16 %v305
        %v525 = vunpack.c.l.b16 %v306
        %v526 = vunpack.c.l.b16 %v307
        %v527 = vunpack.c.l.b16 %v308
        %v528 = vunpack.c.l.b16 %v309
        %v529 = vunpack.c.l.b16 %v310
        %v530 = vunpack.c.l.b16 %v311
        %v531 = vunpack.c.l.b16 %v312
        %v532 = vunpack.c.l.b16 %v313
        %v533 = vunpack.c.l.b16 %v314
        %v534 = vunpack.c.l.b16 %v315
        %v535 = vunpack.c.l.b16 %v316
        %v536 = vunpack.c.l.b16 %v317
        %v537 = vunpack.c.l.b16 %v318
        %v538 = vpack.c.b16 %v523, %v522
        %v539 = vpack.c.b16 %v525, %v524
        %v540 = vpack.c.b16 %v527, %v526
        %v541 = vpack.c.b16 %v529, %v528
        %v542 = vpack.c.b16 %v531, %v530
        %v543 = vpack.c.b16 %v533, %v532
        %v544 = vpack.c.b16 %v535, %v534
        %v545 = vpack.c.b16 %v537, %v536
        %v547 = vsel %vm380, %v538, 0
        %v550 = vsel %vm380, %v539, 0
        %v553 = vsel %vm380, %v540, 0
        %v556 = vsel %vm380, %v541, 0
        %v559 = vsel %vm380, %v542, 0
        %v562 = vsel %vm380, %v543, 0
        %v565 = vsel %vm380, %v544, 0
        %v568 = vsel %vm380, %v545, 0
        %v571 = vsel %vm405, %v247, 0
        %573 = vmatprep.subr.bf16.mxu0 0
        %574 = vmatpush1.bf16.msra.mxu0 %v246
        %575 = vmatprep.subr.bf16.mxu0 0
        %576 = vmatpush1.bf16.msra.mxu0 %v571
        %577 = vmatprep.subr.bf16.mxu0 0
        %578 = vmatpush1.bf16.msra.mxu0 0
        %579 = vmatprep.subr.bf16.mxu0 0
        %580 = vmatpush1.bf16.msra.mxu0 0
        %581 = vmatprep.subr.bf16.mxu0 0
        %582 = vmatpush1.bf16.msra.mxu0 0
        %583 = vmatprep.subr.bf16.mxu0 0
        %584 = vmatpush1.bf16.msra.mxu0 0
        %585 = vmatprep.subr.bf16.mxu0 0
        %586 = vmatpush1.bf16.msra.mxu0 0
        %587 = vmatprep.subr.bf16.mxu0 0
        %588 = vmatpush1.bf16.msra.mxu0 0
        %589 = vmatprep.subr.bf16.mxu0 0
        %590 = vmatpush1.bf16.msra.mxu0 0
        %591 = vmatprep.subr.bf16.mxu0 0
        %592 = vmatpush1.bf16.msra.mxu0 0
        %593 = vmatprep.subr.bf16.mxu0 0
        %594 = vmatpush1.bf16.msra.mxu0 0
        %595 = vmatprep.subr.bf16.mxu0 0
        %596 = vmatpush1.bf16.msra.mxu0 0
        %597 = vmatprep.subr.bf16.mxu0 0
        %598 = vmatpush1.bf16.msra.mxu0 0
        %599 = vmatprep.subr.bf16.mxu0 0
        %600 = vmatpush1.bf16.msra.mxu0 0
        %601 = vmatprep.subr.bf16.mxu0 0
        %602 = vmatpush1.bf16.msra.mxu0 0
        %603 = vmatprep.subr.bf16.mxu0 0
        %604 = vmatpush1.bf16.msra.mxu0 0
        %605 = vmatprep.mubr.bf16.mxu0 0
        %606 = vmatmul.mubr.bf16.gmra.mrb[0].mxu0 %v547
        %v607 = vpop.f32.mrb[0].mxu0
        %v608 = vadd.f32 %v444, %v607
        %v609 = vpop.f32.mrb[0].mxu0
        %v610 = vpop.f32.mrb[0].mxu0
        %v611 = vadd.f32 %v447, %v610
        %v612 = vpop.f32.mrb[0].mxu0
        %613 = vmatprep.mubr.bf16.mxu0 0
        %614 = vmatmul.mubr.bf16.gmra.mrb[0].mxu0 %v550
        %v615 = vpop.f32.mrb[0].mxu0
        %v616 = vadd.f32 %v452, %v615
        %v617 = vpop.f32.mrb[0].mxu0
        %v618 = vpop.f32.mrb[0].mxu0
        %v619 = vadd.f32 %v455, %v618
        %v620 = vpop.f32.mrb[0].mxu0
        %621 = vmatprep.mubr.bf16.mxu0 0
        %622 = vmatmul.mubr.bf16.gmra.mrb[0].mxu0 %v553
        %v623 = vpop.f32.mrb[0].mxu0
        %v624 = vadd.f32 %v460, %v623
        %v625 = vpop.f32.mrb[0].mxu0
        %v626 = vpop.f32.mrb[0].mxu0
        %v627 = vadd.f32 %v463, %v626
        %v628 = vpop.f32.mrb[0].mxu0
        %629 = vmatprep.mubr.bf16.mxu0 0
        %630 = vmatmul.mubr.bf16.gmra.mrb[0].mxu0 %v556
        %v631 = vpop.f32.mrb[0].mxu0
        %v632 = vadd.f32 %v468, %v631
        %v633 = vpop.f32.mrb[0].mxu0
        %v634 = vpop.f32.mrb[0].mxu0
        %v635 = vadd.f32 %v471, %v634
        %v636 = vpop.f32.mrb[0].mxu0
        %637 = vmatprep.mubr.bf16.mxu0 0
        %638 = vmatmul.mubr.bf16.gmra.mrb[0].mxu0 %v559
        %v639 = vpop.f32.mrb[0].mxu0
        %v640 = vadd.f32 %v476, %v639
        %v641 = vpop.f32.mrb[0].mxu0
        %v642 = vpop.f32.mrb[0].mxu0
        %v643 = vadd.f32 %v479, %v642
        %v644 = vpop.f32.mrb[0].mxu0
        %645 = vmatprep.mubr.bf16.mxu0 0
        %646 = vmatmul.mubr.bf16.gmra.mrb[0].mxu0 %v562
        %v647 = vpop.f32.mrb[0].mxu0
        %v648 = vadd.f32 %v484, %v647
        %v649 = vpop.f32.mrb[0].mxu0
        %v650 = vpop.f32.mrb[0].mxu0
        %v651 = vadd.f32 %v487, %v650
        %v652 = vpop.f32.mrb[0].mxu0
        %653 = vmatprep.mubr.bf16.mxu0 0
        %654 = vmatmul.mubr.bf16.gmra.mrb[0].mxu0 %v565
        %v655 = vpop.f32.mrb[0].mxu0
        %v656 = vadd.f32 %v492, %v655
        %v657 = vpop.f32.mrb[0].mxu0
        %v658 = vpop.f32.mrb[0].mxu0
        %v659 = vadd.f32 %v495, %v658
        %v660 = vpop.f32.mrb[0].mxu0
        %661 = vmatprep.mubr.bf16.mxu0 0
        %662 = vmatmul.mubr.bf16.gmra.mrb[0].mxu0 %v568
        %v663 = vpop.f32.mrb[0].mxu0
        %v664 = vadd.f32 %v500, %v663
        %v665 = vpop.f32.mrb[0].mxu0
        %v666 = vpop.f32.mrb[0].mxu0
        %v667 = vadd.f32 %v503, %v666
        %v668 = vpop.f32.mrb[0].mxu0
        %669 = vdwg.mxu0
        %s670 = sadd.s32 %s298, 32
        %s671 = sshra.s32 %s670, 3
        %s672 = sand.u32 %s670, 7
        %s673 = smul.addr %s671, 4
        %s674 = scalar_lea.vmem %s0, %s673
        %v675 = vld [vmem:[%s674] sm:$0xf]
        %v676 = vld [vmem:[%s674 + $0x4] sm:$0xf]
        %v677 = vld [vmem:[%s674 + $0x8] sm:$0xf]
        %v678 = vld [vmem:[%s674 + $0xc] sm:$0xf]
        %v679 = vld [vmem:[%s674 + $0x10] sm:$0xf]
        %v680 = vld [vmem:[%s674 + $0x14] sm:$0xf]
        %v681 = vld [vmem:[%s674 + $0x18] sm:$0xf]
        %v682 = vld [vmem:[%s674 + $0x1c] sm:$0xf]
        %v683 = vld [vmem:[%s674 + $0x20] sm:$0xf]
        %v684 = vld [vmem:[%s674 + $0x24] sm:$0xf]
        %v685 = vld [vmem:[%s674 + $0x28] sm:$0xf]
        %v686 = vld [vmem:[%s674 + $0x2c] sm:$0xf]
        %v687 = vld [vmem:[%s674 + $0x30] sm:$0xf]
        %v688 = vld [vmem:[%s674 + $0x34] sm:$0xf]
        %v689 = vld [vmem:[%s674 + $0x38] sm:$0xf]
        %v690 = vld [vmem:[%s674 + $0x3c] sm:$0xf]
        %v707 = vunpack.c.l.b16 %v675
        %v708 = vunpack.c.l.b16 %v676
        %v709 = vunpack.c.l.b16 %v677
        %v710 = vunpack.c.l.b16 %v678
        %v711 = vunpack.c.l.b16 %v679
        %v712 = vunpack.c.l.b16 %v680
        %v713 = vunpack.c.l.b16 %v681
        %v714 = vunpack.c.l.b16 %v682
        %v715 = vunpack.c.l.b16 %v683
        %v716 = vunpack.c.l.b16 %v684
        %v717 = vunpack.c.l.b16 %v685
        %v718 = vunpack.c.l.b16 %v686
        %v719 = vunpack.c.l.b16 %v687
        %v720 = vunpack.c.l.b16 %v688
        %v721 = vunpack.c.l.b16 %v689
        %v722 = vunpack.c.l.b16 %v690
        %v723 = vpack.c.b16 %v708, %v707
        %v724 = vpack.c.b16 %v710, %v709
        %v725 = vpack.c.b16 %v712, %v711
        %v726 = vpack.c.b16 %v714, %v713
        %v727 = vpack.c.b16 %v716, %v715
        %v728 = vpack.c.b16 %v718, %v717
        %v729 = vpack.c.b16 %v720, %v719
        %v730 = vpack.c.b16 %v722, %v721
        %v732 = vsel %vm380, %v723, 0
        %v735 = vsel %vm380, %v724, 0
        %v738 = vsel %vm380, %v725, 0
        %v741 = vsel %vm380, %v726, 0
        %v744 = vsel %vm380, %v727, 0
        %v747 = vsel %vm380, %v728, 0
        %v750 = vsel %vm380, %v729, 0
        %v753 = vsel %vm380, %v730, 0
        %v756 = vsel %vm405, %v257, 0
        %758 = vmatprep.subr.bf16.mxu0 0
        %759 = vmatpush1.bf16.msra.mxu0 %v256
        %760 = vmatprep.subr.bf16.mxu0 0
        %761 = vmatpush1.bf16.msra.mxu0 %v756
        %762 = vmatprep.subr.bf16.mxu0 0
        %763 = vmatpush1.bf16.msra.mxu0 0
        %764 = vmatprep.subr.bf16.mxu0 0
        %765 = vmatpush1.bf16.msra.mxu0 0
        %766 = vmatprep.subr.bf16.mxu0 0
        %767 = vmatpush1.bf16.msra.mxu0 0
        %768 = vmatprep.subr.bf16.mxu0 0
        %769 = vmatpush1.bf16.msra.mxu0 0
        %770 = vmatprep.subr.bf16.mxu0 0
        %771 = vmatpush1.bf16.msra.mxu0 0
        %772 = vmatprep.subr.bf16.mxu0 0
        %773 = vmatpush1.bf16.msra.mxu0 0
        %774 = vmatprep.subr.bf16.mxu0 0
        %775 = vmatpush1.bf16.msra.mxu0 0
        %776 = vmatprep.subr.bf16.mxu0 0
        %777 = vmatpush1.bf16.msra.mxu0 0
        %778 = vmatprep.subr.bf16.mxu0 0
        %779 = vmatpush1.bf16.msra.mxu0 0
        %780 = vmatprep.subr.bf16.mxu0 0
        %781 = vmatpush1.bf16.msra.mxu0 0
        %782 = vmatprep.subr.bf16.mxu0 0
        %783 = vmatpush1.bf16.msra.mxu0 0
        %784 = vmatprep.subr.bf16.mxu0 0
        %785 = vmatpush1.bf16.msra.mxu0 0
        %786 = vmatprep.subr.bf16.mxu0 0
        %787 = vmatpush1.bf16.msra.mxu0 0
        %788 = vmatprep.subr.bf16.mxu0 0
        %789 = vmatpush1.bf16.msra.mxu0 0
        %790 = vmatprep.mubr.bf16.mxu0 0
        %791 = vmatmul.mubr.bf16.gmra.mrb[0].mxu0 %v732
        %v792 = vpop.f32.mrb[0].mxu0
        %v793 = vadd.f32 0.0, %v792
        %v794 = vpop.f32.mrb[0].mxu0
        %v795 = vpop.f32.mrb[0].mxu0
        %v796 = vadd.f32 0.0, %v795
        %v797 = vpop.f32.mrb[0].mxu0
        %798 = vmatprep.mubr.bf16.mxu0 0
        %799 = vmatmul.mubr.bf16.gmra.mrb[0].mxu0 %v735
        %v800 = vpop.f32.mrb[0].mxu0
        %v801 = vadd.f32 0.0, %v800
        %v802 = vpop.f32.mrb[0].mxu0
        %v803 = vpop.f32.mrb[0].mxu0
        %v804 = vadd.f32 0.0, %v803
        %v805 = vpop.f32.mrb[0].mxu0
        %806 = vmatprep.mubr.bf16.mxu0 0
        %807 = vmatmul.mubr.bf16.gmra.mrb[0].mxu0 %v738
        %v808 = vpop.f32.mrb[0].mxu0
        %v809 = vadd.f32 0.0, %v808
        %v810 = vpop.f32.mrb[0].mxu0
        %v811 = vpop.f32.mrb[0].mxu0
        %v812 = vadd.f32 0.0, %v811
        %v813 = vpop.f32.mrb[0].mxu0
        %814 = vmatprep.mubr.bf16.mxu0 0
        %815 = vmatmul.mubr.bf16.gmra.mrb[0].mxu0 %v741
        %v816 = vpop.f32.mrb[0].mxu0
        %v817 = vadd.f32 0.0, %v816
        %v818 = vpop.f32.mrb[0].mxu0
        %v819 = vpop.f32.mrb[0].mxu0
        %v820 = vadd.f32 0.0, %v819
        %v821 = vpop.f32.mrb[0].mxu0
        %822 = vmatprep.mubr.bf16.mxu0 0
        %823 = vmatmul.mubr.bf16.gmra.mrb[0].mxu0 %v744
        %v824 = vpop.f32.mrb[0].mxu0
        %v825 = vadd.f32 0.0, %v824
        %v826 = vpop.f32.mrb[0].mxu0
        %v827 = vpop.f32.mrb[0].mxu0
        %v828 = vadd.f32 0.0, %v827
        %v829 = vpop.f32.mrb[0].mxu0
        %830 = vmatprep.mubr.bf16.mxu0 0
        %831 = vmatmul.mubr.bf16.gmra.mrb[0].mxu0 %v747
        %v832 = vpop.f32.mrb[0].mxu0
        %v833 = vadd.f32 0.0, %v832
        %v834 = vpop.f32.mrb[0].mxu0
        %v835 = vpop.f32.mrb[0].mxu0
        %v836 = vadd.f32 0.0, %v835
        %v837 = vpop.f32.mrb[0].mxu0
        %838 = vmatprep.mubr.bf16.mxu0 0
        %839 = vmatmul.mubr.bf16.gmra.mrb[0].mxu0 %v750
        %v840 = vpop.f32.mrb[0].mxu0
        %v841 = vadd.f32 0.0, %v840
        %v842 = vpop.f32.mrb[0].mxu0
        %v843 = vpop.f32.mrb[0].mxu0
        %v844 = vadd.f32 0.0, %v843
        %v845 = vpop.f32.mrb[0].mxu0
        %846 = vmatprep.mubr.bf16.mxu0 0
        %847 = vmatmul.mubr.bf16.gmra.mrb[0].mxu0 %v753
        %v848 = vpop.f32.mrb[0].mxu0
        %v849 = vadd.f32 0.0, %v848
        %v850 = vpop.f32.mrb[0].mxu0
        %v851 = vpop.f32.mrb[0].mxu0
        %v852 = vadd.f32 0.0, %v851
        %v853 = vpop.f32.mrb[0].mxu0
        %854 = vdwg.mxu0
        %v855 = vadd.f32 %v608, %v793
        %v856 = vadd.f32 %v611, %v796
        %v857 = vadd.f32 %v616, %v801
        %v858 = vadd.f32 %v619, %v804
        %v859 = vadd.f32 %v624, %v809
        %v860 = vadd.f32 %v627, %v812
        %v861 = vadd.f32 %v632, %v817
        %v862 = vadd.f32 %v635, %v820
        %v863 = vadd.f32 %v640, %v825
        %v864 = vadd.f32 %v643, %v828
        %v865 = vadd.f32 %v648, %v833
        %v866 = vadd.f32 %v651, %v836
        %v867 = vadd.f32 %v656, %v841
        %v868 = vadd.f32 %v659, %v844
        %v869 = vadd.f32 %v664, %v849
        %v870 = vadd.f32 %v667, %v852
        %s871 = sadd.s32 %s298, 288
        %s872 = sshra.s32 %s871, 3
        %s873 = sand.u32 %s871, 7
        %s874 = smul.addr %s872, 4
        %s875 = scalar_lea.vmem %s0, %s874
        %v876 = vld [vmem:[%s875] sm:$0xf]
        %v877 = vld [vmem:[%s875 + $0x4] sm:$0xf]
        %v878 = vld [vmem:[%s875 + $0x8] sm:$0xf]
        %v879 = vld [vmem:[%s875 + $0xc] sm:$0xf]
        %v880 = vld [vmem:[%s875 + $0x10] sm:$0xf]
        %v881 = vld [vmem:[%s875 + $0x14] sm:$0xf]
        %v882 = vld [vmem:[%s875 + $0x18] sm:$0xf]
        %v883 = vld [vmem:[%s875 + $0x1c] sm:$0xf]
        %v884 = vld [vmem:[%s875 + $0x20] sm:$0xf]
        %v885 = vld [vmem:[%s875 + $0x24] sm:$0xf]
        %v886 = vld [vmem:[%s875 + $0x28] sm:$0xf]
        %v887 = vld [vmem:[%s875 + $0x2c] sm:$0xf]
        %v888 = vld [vmem:[%s875 + $0x30] sm:$0xf]
        %v889 = vld [vmem:[%s875 + $0x34] sm:$0xf]
        %v890 = vld [vmem:[%s875 + $0x38] sm:$0xf]
        %v891 = vld [vmem:[%s875 + $0x3c] sm:$0xf]
        %v908 = vunpack.c.l.b16 %v876
        %v909 = vunpack.c.l.b16 %v877
        %v910 = vunpack.c.l.b16 %v878
        %v911 = vunpack.c.l.b16 %v879
        %v912 = vunpack.c.l.b16 %v880
        %v913 = vunpack.c.l.b16 %v881
        %v914 = vunpack.c.l.b16 %v882
        %v915 = vunpack.c.l.b16 %v883
        %v916 = vunpack.c.l.b16 %v884
        %v917 = vunpack.c.l.b16 %v885
        %v918 = vunpack.c.l.b16 %v886
        %v919 = vunpack.c.l.b16 %v887
        %v920 = vunpack.c.l.b16 %v888
        %v921 = vunpack.c.l.b16 %v889
        %v922 = vunpack.c.l.b16 %v890
        %v923 = vunpack.c.l.b16 %v891
        %v924 = vpack.c.b16 %v909, %v908
        %v925 = vpack.c.b16 %v911, %v910
        %v926 = vpack.c.b16 %v913, %v912
        %v927 = vpack.c.b16 %v915, %v914
        %v928 = vpack.c.b16 %v917, %v916
        %v929 = vpack.c.b16 %v919, %v918
        %v930 = vpack.c.b16 %v921, %v920
        %v931 = vpack.c.b16 %v923, %v922
        %v933 = vsel %vm380, %v924, 0
        %v936 = vsel %vm380, %v925, 0
        %v939 = vsel %vm380, %v926, 0
        %v942 = vsel %vm380, %v927, 0
        %v945 = vsel %vm380, %v928, 0
        %v948 = vsel %vm380, %v929, 0
        %v951 = vsel %vm380, %v930, 0
        %v954 = vsel %vm380, %v931, 0
        %v957 = vsel %vm405, %v262, 0
        %959 = vmatprep.subr.bf16.mxu0 0
        %960 = vmatpush1.bf16.msra.mxu0 %v261
        %961 = vmatprep.subr.bf16.mxu0 0
        %962 = vmatpush1.bf16.msra.mxu0 %v957
        %963 = vmatprep.subr.bf16.mxu0 0
        %964 = vmatpush1.bf16.msra.mxu0 0
        %965 = vmatprep.subr.bf16.mxu0 0
        %966 = vmatpush1.bf16.msra.mxu0 0
        %967 = vmatprep.subr.bf16.mxu0 0
        %968 = vmatpush1.bf16.msra.mxu0 0
        %969 = vmatprep.subr.bf16.mxu0 0
        %970 = vmatpush1.bf16.msra.mxu0 0
        %971 = vmatprep.subr.bf16.mxu0 0
        %972 = vmatpush1.bf16.msra.mxu0 0
        %973 = vmatprep.subr.bf16.mxu0 0
        %974 = vmatpush1.bf16.msra.mxu0 0
        %975 = vmatprep.subr.bf16.mxu0 0
        %976 = vmatpush1.bf16.msra.mxu0 0
        %977 = vmatprep.subr.bf16.mxu0 0
        %978 = vmatpush1.bf16.msra.mxu0 0
        %979 = vmatprep.subr.bf16.mxu0 0
        %980 = vmatpush1.bf16.msra.mxu0 0
        %981 = vmatprep.subr.bf16.mxu0 0
        %982 = vmatpush1.bf16.msra.mxu0 0
        %983 = vmatprep.subr.bf16.mxu0 0
        %984 = vmatpush1.bf16.msra.mxu0 0
        %985 = vmatprep.subr.bf16.mxu0 0
        %986 = vmatpush1.bf16.msra.mxu0 0
        %987 = vmatprep.subr.bf16.mxu0 0
        %988 = vmatpush1.bf16.msra.mxu0 0
        %989 = vmatprep.subr.bf16.mxu0 0
        %990 = vmatpush1.bf16.msra.mxu0 0
        %991 = vmatprep.mubr.bf16.mxu0 0
        %992 = vmatmul.mubr.bf16.gmra.mrb[0].mxu0 %v933
        %v993 = vpop.f32.mrb[0].mxu0
        %v994 = vadd.f32 0.0, %v993
        %v995 = vpop.f32.mrb[0].mxu0
        %v996 = vpop.f32.mrb[0].mxu0
        %v997 = vadd.f32 0.0, %v996
        %v998 = vpop.f32.mrb[0].mxu0
        %999 = vmatprep.mubr.bf16.mxu0 0
        %1000 = vmatmul.mubr.bf16.gmra.mrb[0].mxu0 %v936
        %v1001 = vpop.f32.mrb[0].mxu0
        %v1002 = vadd.f32 0.0, %v1001
        %v1003 = vpop.f32.mrb[0].mxu0
        %v1004 = vpop.f32.mrb[0].mxu0
        %v1005 = vadd.f32 0.0, %v1004
        %v1006 = vpop.f32.mrb[0].mxu0
        %1007 = vmatprep.mubr.bf16.mxu0 0
        %1008 = vmatmul.mubr.bf16.gmra.mrb[0].mxu0 %v939
        %v1009 = vpop.f32.mrb[0].mxu0
        %v1010 = vadd.f32 0.0, %v1009
        %v1011 = vpop.f32.mrb[0].mxu0
        %v1012 = vpop.f32.mrb[0].mxu0
        %v1013 = vadd.f32 0.0, %v1012
        %v1014 = vpop.f32.mrb[0].mxu0
        %1015 = vmatprep.mubr.bf16.mxu0 0
        %1016 = vmatmul.mubr.bf16.gmra.mrb[0].mxu0 %v942
        %v1017 = vpop.f32.mrb[0].mxu0
        %v1018 = vadd.f32 0.0, %v1017
        %v1019 = vpop.f32.mrb[0].mxu0
        %v1020 = vpop.f32.mrb[0].mxu0
        %v1021 = vadd.f32 0.0, %v1020
        %v1022 = vpop.f32.mrb[0].mxu0
        %1023 = vmatprep.mubr.bf16.mxu0 0
        %1024 = vmatmul.mubr.bf16.gmra.mrb[0].mxu0 %v945
        %v1025 = vpop.f32.mrb[0].mxu0
        %v1026 = vadd.f32 0.0, %v1025
        %v1027 = vpop.f32.mrb[0].mxu0
        %v1028 = vpop.f32.mrb[0].mxu0
        %v1029 = vadd.f32 0.0, %v1028
        %v1030 = vpop.f32.mrb[0].mxu0
        %1031 = vmatprep.mubr.bf16.mxu0 0
        %1032 = vmatmul.mubr.bf16.gmra.mrb[0].mxu0 %v948
        %v1033 = vpop.f32.mrb[0].mxu0
        %v1034 = vadd.f32 0.0, %v1033
        %v1035 = vpop.f32.mrb[0].mxu0
        %v1036 = vpop.f32.mrb[0].mxu0
        %v1037 = vadd.f32 0.0, %v1036
        %v1038 = vpop.f32.mrb[0].mxu0
        %1039 = vmatprep.mubr.bf16.mxu0 0
        %1040 = vmatmul.mubr.bf16.gmra.mrb[0].mxu0 %v951
        %v1041 = vpop.f32.mrb[0].mxu0
        %v1042 = vadd.f32 0.0, %v1041
        %v1043 = vpop.f32.mrb[0].mxu0
        %v1044 = vpop.f32.mrb[0].mxu0
        %v1045 = vadd.f32 0.0, %v1044
        %v1046 = vpop.f32.mrb[0].mxu0
        %1047 = vmatprep.mubr.bf16.mxu0 0
        %1048 = vmatmul.mubr.bf16.gmra.mrb[0].mxu0 %v954
        %v1049 = vpop.f32.mrb[0].mxu0
        %v1050 = vadd.f32 0.0, %v1049
        %v1051 = vpop.f32.mrb[0].mxu0
        %v1052 = vpop.f32.mrb[0].mxu0
        %v1053 = vadd.f32 0.0, %v1052
        %v1054 = vpop.f32.mrb[0].mxu0
        %1055 = vdwg.mxu0
        %v1056 = vadd.f32 %v855, %v994
        %v1057 = vadd.f32 %v856, %v997
        %v1058 = vadd.f32 %v857, %v1002
        %v1059 = vadd.f32 %v858, %v1005
        %v1060 = vadd.f32 %v859, %v1010
        %v1061 = vadd.f32 %v860, %v1013
        %v1062 = vadd.f32 %v861, %v1018
        %v1063 = vadd.f32 %v862, %v1021
        %v1064 = vadd.f32 %v863, %v1026
        %v1065 = vadd.f32 %v864, %v1029
        %v1066 = vadd.f32 %v865, %v1034
        %v1067 = vadd.f32 %v866, %v1037
        %v1068 = vadd.f32 %v867, %v1042
        %v1069 = vadd.f32 %v868, %v1045
        %v1070 = vadd.f32 %v869, %v1050
        %v1071 = vadd.f32 %v870, %v1053
        %s1072 = sadd.s32 %s298, 304
        %s1073 = sshra.s32 %s1072, 3
        %s1074 = sand.u32 %s1072, 7
        %s1075 = smul.addr %s1073, 4
        %s1076 = scalar_lea.vmem %s0, %s1075
        %v1077 = vld [vmem:[%s1076] sm:$0xf]
        %v1078 = vld [vmem:[%s1076 + $0x4] sm:$0xf]
        %v1079 = vld [vmem:[%s1076 + $0x8] sm:$0xf]
        %v1080 = vld [vmem:[%s1076 + $0xc] sm:$0xf]
        %v1081 = vld [vmem:[%s1076 + $0x10] sm:$0xf]
        %v1082 = vld [vmem:[%s1076 + $0x14] sm:$0xf]
        %v1083 = vld [vmem:[%s1076 + $0x18] sm:$0xf]
        %v1084 = vld [vmem:[%s1076 + $0x1c] sm:$0xf]
        %v1085 = vld [vmem:[%s1076 + $0x20] sm:$0xf]
        %v1086 = vld [vmem:[%s1076 + $0x24] sm:$0xf]
        %v1087 = vld [vmem:[%s1076 + $0x28] sm:$0xf]
        %v1088 = vld [vmem:[%s1076 + $0x2c] sm:$0xf]
        %v1089 = vld [vmem:[%s1076 + $0x30] sm:$0xf]
        %v1090 = vld [vmem:[%s1076 + $0x34] sm:$0xf]
        %v1091 = vld [vmem:[%s1076 + $0x38] sm:$0xf]
        %v1092 = vld [vmem:[%s1076 + $0x3c] sm:$0xf]
        %v1109 = vunpack.c.l.b16 %v1077
        %v1110 = vunpack.c.l.b16 %v1078
        %v1111 = vunpack.c.l.b16 %v1079
        %v1112 = vunpack.c.l.b16 %v1080
        %v1113 = vunpack.c.l.b16 %v1081
        %v1114 = vunpack.c.l.b16 %v1082
        %v1115 = vunpack.c.l.b16 %v1083
        %v1116 = vunpack.c.l.b16 %v1084
        %v1117 = vunpack.c.l.b16 %v1085
        %v1118 = vunpack.c.l.b16 %v1086
        %v1119 = vunpack.c.l.b16 %v1087
        %v1120 = vunpack.c.l.b16 %v1088
        %v1121 = vunpack.c.l.b16 %v1089
        %v1122 = vunpack.c.l.b16 %v1090
        %v1123 = vunpack.c.l.b16 %v1091
        %v1124 = vunpack.c.l.b16 %v1092
        %v1125 = vpack.c.b16 %v1110, %v1109
        %v1126 = vpack.c.b16 %v1112, %v1111
        %v1127 = vpack.c.b16 %v1114, %v1113
        %v1128 = vpack.c.b16 %v1116, %v1115
        %v1129 = vpack.c.b16 %v1118, %v1117
        %v1130 = vpack.c.b16 %v1120, %v1119
        %v1131 = vpack.c.b16 %v1122, %v1121
        %v1132 = vpack.c.b16 %v1124, %v1123
        %v1134 = vsel %vm380, %v1125, 0
        %v1137 = vsel %vm380, %v1126, 0
        %v1140 = vsel %vm380, %v1127, 0
        %v1143 = vsel %vm380, %v1128, 0
        %v1146 = vsel %vm380, %v1129, 0
        %v1149 = vsel %vm380, %v1130, 0
        %v1152 = vsel %vm380, %v1131, 0
        %v1155 = vsel %vm380, %v1132, 0
        %v1158 = vsel %vm405, %v267, 0
        %1160 = vmatprep.subr.bf16.mxu0 0
        %1161 = vmatpush1.bf16.msra.mxu0 %v266
        %1162 = vmatprep.subr.bf16.mxu0 0
        %1163 = vmatpush1.bf16.msra.mxu0 %v1158
        %1164 = vmatprep.subr.bf16.mxu0 0
        %1165 = vmatpush1.bf16.msra.mxu0 0
        %1166 = vmatprep.subr.bf16.mxu0 0
        %1167 = vmatpush1.bf16.msra.mxu0 0
        %1168 = vmatprep.subr.bf16.mxu0 0
        %1169 = vmatpush1.bf16.msra.mxu0 0
        %1170 = vmatprep.subr.bf16.mxu0 0
        %1171 = vmatpush1.bf16.msra.mxu0 0
        %1172 = vmatprep.subr.bf16.mxu0 0
        %1173 = vmatpush1.bf16.msra.mxu0 0
        %1174 = vmatprep.subr.bf16.mxu0 0
        %1175 = vmatpush1.bf16.msra.mxu0 0
        %1176 = vmatprep.subr.bf16.mxu0 0
        %1177 = vmatpush1.bf16.msra.mxu0 0
        %1178 = vmatprep.subr.bf16.mxu0 0
        %1179 = vmatpush1.bf16.msra.mxu0 0
        %1180 = vmatprep.subr.bf16.mxu0 0
        %1181 = vmatpush1.bf16.msra.mxu0 0
        %1182 = vmatprep.subr.bf16.mxu0 0
        %1183 = vmatpush1.bf16.msra.mxu0 0
        %1184 = vmatprep.subr.bf16.mxu0 0
        %1185 = vmatpush1.bf16.msra.mxu0 0
        %1186 = vmatprep.subr.bf16.mxu0 0
        %1187 = vmatpush1.bf16.msra.mxu0 0
        %1188 = vmatprep.subr.bf16.mxu0 0
        %1189 = vmatpush1.bf16.msra.mxu0 0
        %1190 = vmatprep.subr.bf16.mxu0 0
        %1191 = vmatpush1.bf16.msra.mxu0 0
        %1192 = vmatprep.mubr.bf16.mxu0 0
        %1193 = vmatmul.mubr.bf16.gmra.mrb[0].mxu0 %v1134
        %v1194 = vpop.f32.mrb[0].mxu0
        %v1195 = vadd.f32 0.0, %v1194
        %v1196 = vpop.f32.mrb[0].mxu0
        %v1197 = vpop.f32.mrb[0].mxu0
        %v1198 = vadd.f32 0.0, %v1197
        %v1199 = vpop.f32.mrb[0].mxu0
        %1200 = vmatprep.mubr.bf16.mxu0 0
        %1201 = vmatmul.mubr.bf16.gmra.mrb[0].mxu0 %v1137
        %v1202 = vpop.f32.mrb[0].mxu0
        %v1203 = vadd.f32 0.0, %v1202
        %v1204 = vpop.f32.mrb[0].mxu0
        %v1205 = vpop.f32.mrb[0].mxu0
        %v1206 = vadd.f32 0.0, %v1205
        %v1207 = vpop.f32.mrb[0].mxu0
        %1208 = vmatprep.mubr.bf16.mxu0 0
        %1209 = vmatmul.mubr.bf16.gmra.mrb[0].mxu0 %v1140
        %v1210 = vpop.f32.mrb[0].mxu0
        %v1211 = vadd.f32 0.0, %v1210
        %v1212 = vpop.f32.mrb[0].mxu0
        %v1213 = vpop.f32.mrb[0].mxu0
        %v1214 = vadd.f32 0.0, %v1213
        %v1215 = vpop.f32.mrb[0].mxu0
        %1216 = vmatprep.mubr.bf16.mxu0 0
        %1217 = vmatmul.mubr.bf16.gmra.mrb[0].mxu0 %v1143
        %v1218 = vpop.f32.mrb[0].mxu0
        %v1219 = vadd.f32 0.0, %v1218
        %v1220 = vpop.f32.mrb[0].mxu0
        %v1221 = vpop.f32.mrb[0].mxu0
        %v1222 = vadd.f32 0.0, %v1221
        %v1223 = vpop.f32.mrb[0].mxu0
        %1224 = vmatprep.mubr.bf16.mxu0 0
        %1225 = vmatmul.mubr.bf16.gmra.mrb[0].mxu0 %v1146
        %v1226 = vpop.f32.mrb[0].mxu0
        %v1227 = vadd.f32 0.0, %v1226
        %v1228 = vpop.f32.mrb[0].mxu0
        %v1229 = vpop.f32.mrb[0].mxu0
        %v1230 = vadd.f32 0.0, %v1229
        %v1231 = vpop.f32.mrb[0].mxu0
        %1232 = vmatprep.mubr.bf16.mxu0 0
        %1233 = vmatmul.mubr.bf16.gmra.mrb[0].mxu0 %v1149
        %v1234 = vpop.f32.mrb[0].mxu0
        %v1235 = vadd.f32 0.0, %v1234
        %v1236 = vpop.f32.mrb[0].mxu0
        %v1237 = vpop.f32.mrb[0].mxu0
        %v1238 = vadd.f32 0.0, %v1237
        %v1239 = vpop.f32.mrb[0].mxu0
        %1240 = vmatprep.mubr.bf16.mxu0 0
        %1241 = vmatmul.mubr.bf16.gmra.mrb[0].mxu0 %v1152
        %v1242 = vpop.f32.mrb[0].mxu0
        %v1243 = vadd.f32 0.0, %v1242
        %v1244 = vpop.f32.mrb[0].mxu0
        %v1245 = vpop.f32.mrb[0].mxu0
        %v1246 = vadd.f32 0.0, %v1245
        %v1247 = vpop.f32.mrb[0].mxu0
        %1248 = vmatprep.mubr.bf16.mxu0 0
        %1249 = vmatmul.mubr.bf16.gmra.mrb[0].mxu0 %v1155
        %v1250 = vpop.f32.mrb[0].mxu0
        %v1251 = vadd.f32 0.0, %v1250
        %v1252 = vpop.f32.mrb[0].mxu0
        %v1253 = vpop.f32.mrb[0].mxu0
        %v1254 = vadd.f32 0.0, %v1253
        %v1255 = vpop.f32.mrb[0].mxu0
        %1256 = vdwg.mxu0
        %v1257 = vadd.f32 %v1056, %v1195
        %v1258 = vadd.f32 %v1057, %v1198
        %v1259 = vadd.f32 %v1058, %v1203
        %v1260 = vadd.f32 %v1059, %v1206
        %v1261 = vadd.f32 %v1060, %v1211
        %v1262 = vadd.f32 %v1061, %v1214
        %v1263 = vadd.f32 %v1062, %v1219
        %v1264 = vadd.f32 %v1063, %v1222
        %v1265 = vadd.f32 %v1064, %v1227
        %v1266 = vadd.f32 %v1065, %v1230
        %v1267 = vadd.f32 %v1066, %v1235
        %v1268 = vadd.f32 %v1067, %v1238
        %v1269 = vadd.f32 %v1068, %v1243
        %v1270 = vadd.f32 %v1069, %v1246
        %v1271 = vadd.f32 %v1070, %v1251
        %v1272 = vadd.f32 %v1071, %v1254
        %s1273 = sadd.s32 %s298, 320
        %s1274 = sshra.s32 %s1273, 3
        %s1275 = sand.u32 %s1273, 7
        %s1276 = smul.addr %s1274, 4
        %s1277 = scalar_lea.vmem %s0, %s1276
        %v1278 = vld [vmem:[%s1277] sm:$0xf]
        %v1279 = vld [vmem:[%s1277 + $0x4] sm:$0xf]
        %v1280 = vld [vmem:[%s1277 + $0x8] sm:$0xf]
        %v1281 = vld [vmem:[%s1277 + $0xc] sm:$0xf]
        %v1282 = vld [vmem:[%s1277 + $0x10] sm:$0xf]
        %v1283 = vld [vmem:[%s1277 + $0x14] sm:$0xf]
        %v1284 = vld [vmem:[%s1277 + $0x18] sm:$0xf]
        %v1285 = vld [vmem:[%s1277 + $0x1c] sm:$0xf]
        %v1286 = vld [vmem:[%s1277 + $0x20] sm:$0xf]
        %v1287 = vld [vmem:[%s1277 + $0x24] sm:$0xf]
        %v1288 = vld [vmem:[%s1277 + $0x28] sm:$0xf]
        %v1289 = vld [vmem:[%s1277 + $0x2c] sm:$0xf]
        %v1290 = vld [vmem:[%s1277 + $0x30] sm:$0xf]
        %v1291 = vld [vmem:[%s1277 + $0x34] sm:$0xf]
        %v1292 = vld [vmem:[%s1277 + $0x38] sm:$0xf]
        %v1293 = vld [vmem:[%s1277 + $0x3c] sm:$0xf]
        %v1310 = vunpack.c.l.b16 %v1278
        %v1311 = vunpack.c.l.b16 %v1279
        %v1312 = vunpack.c.l.b16 %v1280
        %v1313 = vunpack.c.l.b16 %v1281
        %v1314 = vunpack.c.l.b16 %v1282
        %v1315 = vunpack.c.l.b16 %v1283
        %v1316 = vunpack.c.l.b16 %v1284
        %v1317 = vunpack.c.l.b16 %v1285
        %v1318 = vunpack.c.l.b16 %v1286
        %v1319 = vunpack.c.l.b16 %v1287
        %v1320 = vunpack.c.l.b16 %v1288
        %v1321 = vunpack.c.l.b16 %v1289
        %v1322 = vunpack.c.l.b16 %v1290
        %v1323 = vunpack.c.l.b16 %v1291
        %v1324 = vunpack.c.l.b16 %v1292
        %v1325 = vunpack.c.l.b16 %v1293
        %v1326 = vpack.c.b16 %v1311, %v1310
        %v1327 = vpack.c.b16 %v1313, %v1312
        %v1328 = vpack.c.b16 %v1315, %v1314
        %v1329 = vpack.c.b16 %v1317, %v1316
        %v1330 = vpack.c.b16 %v1319, %v1318
        %v1331 = vpack.c.b16 %v1321, %v1320
        %v1332 = vpack.c.b16 %v1323, %v1322
        %v1333 = vpack.c.b16 %v1325, %v1324
        %v1335 = vsel %vm380, %v1326, 0
        %v1338 = vsel %vm380, %v1327, 0
        %v1341 = vsel %vm380, %v1328, 0
        %v1344 = vsel %vm380, %v1329, 0
        %v1347 = vsel %vm380, %v1330, 0
        %v1350 = vsel %vm380, %v1331, 0
        %v1353 = vsel %vm380, %v1332, 0
        %v1356 = vsel %vm380, %v1333, 0
        %v1359 = vsel %vm405, %v272, 0
        %1361 = vmatprep.subr.bf16.mxu0 0
        %1362 = vmatpush1.bf16.msra.mxu0 %v271
        %1363 = vmatprep.subr.bf16.mxu0 0
        %1364 = vmatpush1.bf16.msra.mxu0 %v1359
        %1365 = vmatprep.subr.bf16.mxu0 0
        %1366 = vmatpush1.bf16.msra.mxu0 0
        %1367 = vmatprep.subr.bf16.mxu0 0
        %1368 = vmatpush1.bf16.msra.mxu0 0
        %1369 = vmatprep.subr.bf16.mxu0 0
        %1370 = vmatpush1.bf16.msra.mxu0 0
        %1371 = vmatprep.subr.bf16.mxu0 0
        %1372 = vmatpush1.bf16.msra.mxu0 0
        %1373 = vmatprep.subr.bf16.mxu0 0
        %1374 = vmatpush1.bf16.msra.mxu0 0
        %1375 = vmatprep.subr.bf16.mxu0 0
        %1376 = vmatpush1.bf16.msra.mxu0 0
        %1377 = vmatprep.subr.bf16.mxu0 0
        %1378 = vmatpush1.bf16.msra.mxu0 0
        %1379 = vmatprep.subr.bf16.mxu0 0
        %1380 = vmatpush1.bf16.msra.mxu0 0
        %1381 = vmatprep.subr.bf16.mxu0 0
        %1382 = vmatpush1.bf16.msra.mxu0 0
        %1383 = vmatprep.subr.bf16.mxu0 0
        %1384 = vmatpush1.bf16.msra.mxu0 0
        %1385 = vmatprep.subr.bf16.mxu0 0
        %1386 = vmatpush1.bf16.msra.mxu0 0
        %1387 = vmatprep.subr.bf16.mxu0 0
        %1388 = vmatpush1.bf16.msra.mxu0 0
        %1389 = vmatprep.subr.bf16.mxu0 0
        %1390 = vmatpush1.bf16.msra.mxu0 0
        %1391 = vmatprep.subr.bf16.mxu0 0
        %1392 = vmatpush1.bf16.msra.mxu0 0
        %1393 = vmatprep.mubr.bf16.mxu0 0
        %1394 = vmatmul.mubr.bf16.gmra.mrb[0].mxu0 %v1335
        %v1395 = vpop.f32.mrb[0].mxu0
        %v1396 = vadd.f32 0.0, %v1395
        %v1397 = vpop.f32.mrb[0].mxu0
        %v1398 = vpop.f32.mrb[0].mxu0
        %v1399 = vadd.f32 0.0, %v1398
        %v1400 = vpop.f32.mrb[0].mxu0
        %1401 = vmatprep.mubr.bf16.mxu0 0
        %1402 = vmatmul.mubr.bf16.gmra.mrb[0].mxu0 %v1338
        %v1403 = vpop.f32.mrb[0].mxu0
        %v1404 = vadd.f32 0.0, %v1403
        %v1405 = vpop.f32.mrb[0].mxu0
        %v1406 = vpop.f32.mrb[0].mxu0
        %v1407 = vadd.f32 0.0, %v1406
        %v1408 = vpop.f32.mrb[0].mxu0
        %1409 = vmatprep.mubr.bf16.mxu0 0
        %1410 = vmatmul.mubr.bf16.gmra.mrb[0].mxu0 %v1341
        %v1411 = vpop.f32.mrb[0].mxu0
        %v1412 = vadd.f32 0.0, %v1411
        %v1413 = vpop.f32.mrb[0].mxu0
        %v1414 = vpop.f32.mrb[0].mxu0
        %v1415 = vadd.f32 0.0, %v1414
        %v1416 = vpop.f32.mrb[0].mxu0
        %1417 = vmatprep.mubr.bf16.mxu0 0
        %1418 = vmatmul.mubr.bf16.gmra.mrb[0].mxu0 %v1344
        %v1419 = vpop.f32.mrb[0].mxu0
        %v1420 = vadd.f32 0.0, %v1419
        %v1421 = vpop.f32.mrb[0].mxu0
        %v1422 = vpop.f32.mrb[0].mxu0
        %v1423 = vadd.f32 0.0, %v1422
        %v1424 = vpop.f32.mrb[0].mxu0
        %1425 = vmatprep.mubr.bf16.mxu0 0
        %1426 = vmatmul.mubr.bf16.gmra.mrb[0].mxu0 %v1347
        %v1427 = vpop.f32.mrb[0].mxu0
        %v1428 = vadd.f32 0.0, %v1427
        %v1429 = vpop.f32.mrb[0].mxu0
        %v1430 = vpop.f32.mrb[0].mxu0
        %v1431 = vadd.f32 0.0, %v1430
        %v1432 = vpop.f32.mrb[0].mxu0
        %1433 = vmatprep.mubr.bf16.mxu0 0
        %1434 = vmatmul.mubr.bf16.gmra.mrb[0].mxu0 %v1350
        %v1435 = vpop.f32.mrb[0].mxu0
        %v1436 = vadd.f32 0.0, %v1435
        %v1437 = vpop.f32.mrb[0].mxu0
        %v1438 = vpop.f32.mrb[0].mxu0
        %v1439 = vadd.f32 0.0, %v1438
        %v1440 = vpop.f32.mrb[0].mxu0
        %1441 = vmatprep.mubr.bf16.mxu0 0
        %1442 = vmatmul.mubr.bf16.gmra.mrb[0].mxu0 %v1353
        %v1443 = vpop.f32.mrb[0].mxu0
        %v1444 = vadd.f32 0.0, %v1443
        %v1445 = vpop.f32.mrb[0].mxu0
        %v1446 = vpop.f32.mrb[0].mxu0
        %v1447 = vadd.f32 0.0, %v1446
        %v1448 = vpop.f32.mrb[0].mxu0
        %1449 = vmatprep.mubr.bf16.mxu0 0
        %1450 = vmatmul.mubr.bf16.gmra.mrb[0].mxu0 %v1356
        %v1451 = vpop.f32.mrb[0].mxu0
        %v1452 = vadd.f32 0.0, %v1451
        %v1453 = vpop.f32.mrb[0].mxu0
        %v1454 = vpop.f32.mrb[0].mxu0
        %v1455 = vadd.f32 0.0, %v1454
        %v1456 = vpop.f32.mrb[0].mxu0
        %1457 = vdwg.mxu0
        %v1458 = vadd.f32 %v1257, %v1396
        %v1459 = vadd.f32 %v1258, %v1399
        %v1460 = vadd.f32 %v1259, %v1404
        %v1461 = vadd.f32 %v1260, %v1407
        %v1462 = vadd.f32 %v1261, %v1412
        %v1463 = vadd.f32 %v1262, %v1415
        %v1464 = vadd.f32 %v1263, %v1420
        %v1465 = vadd.f32 %v1264, %v1423
        %v1466 = vadd.f32 %v1265, %v1428
        %v1467 = vadd.f32 %v1266, %v1431
        %v1468 = vadd.f32 %v1267, %v1436
        %v1469 = vadd.f32 %v1268, %v1439
        %v1470 = vadd.f32 %v1269, %v1444
        %v1471 = vadd.f32 %v1270, %v1447
        %v1472 = vadd.f32 %v1271, %v1452
        %v1473 = vadd.f32 %v1272, %v1455
        %s1474 = sadd.s32 %s298, 576
        %s1475 = sshra.s32 %s1474, 3
        %s1476 = sand.u32 %s1474, 7
        %s1477 = smul.addr %s1475, 4
        %s1478 = scalar_lea.vmem %s0, %s1477
        %v1479 = vld [vmem:[%s1478] sm:$0xf]
        %v1480 = vld [vmem:[%s1478 + $0x4] sm:$0xf]
        %v1481 = vld [vmem:[%s1478 + $0x8] sm:$0xf]
        %v1482 = vld [vmem:[%s1478 + $0xc] sm:$0xf]
        %v1483 = vld [vmem:[%s1478 + $0x10] sm:$0xf]
        %v1484 = vld [vmem:[%s1478 + $0x14] sm:$0xf]
        %v1485 = vld [vmem:[%s1478 + $0x18] sm:$0xf]
        %v1486 = vld [vmem:[%s1478 + $0x1c] sm:$0xf]
        %v1487 = vld [vmem:[%s1478 + $0x20] sm:$0xf]
        %v1488 = vld [vmem:[%s1478 + $0x24] sm:$0xf]
        %v1489 = vld [vmem:[%s1478 + $0x28] sm:$0xf]
        %v1490 = vld [vmem:[%s1478 + $0x2c] sm:$0xf]
        %v1491 = vld [vmem:[%s1478 + $0x30] sm:$0xf]
        %v1492 = vld [vmem:[%s1478 + $0x34] sm:$0xf]
        %v1493 = vld [vmem:[%s1478 + $0x38] sm:$0xf]
        %v1494 = vld [vmem:[%s1478 + $0x3c] sm:$0xf]
        %v1511 = vunpack.c.l.b16 %v1479
        %v1512 = vunpack.c.l.b16 %v1480
        %v1513 = vunpack.c.l.b16 %v1481
        %v1514 = vunpack.c.l.b16 %v1482
        %v1515 = vunpack.c.l.b16 %v1483
        %v1516 = vunpack.c.l.b16 %v1484
        %v1517 = vunpack.c.l.b16 %v1485
        %v1518 = vunpack.c.l.b16 %v1486
        %v1519 = vunpack.c.l.b16 %v1487
        %v1520 = vunpack.c.l.b16 %v1488
        %v1521 = vunpack.c.l.b16 %v1489
        %v1522 = vunpack.c.l.b16 %v1490
        %v1523 = vunpack.c.l.b16 %v1491
        %v1524 = vunpack.c.l.b16 %v1492
        %v1525 = vunpack.c.l.b16 %v1493
        %v1526 = vunpack.c.l.b16 %v1494
        %v1527 = vpack.c.b16 %v1512, %v1511
        %v1528 = vpack.c.b16 %v1514, %v1513
        %v1529 = vpack.c.b16 %v1516, %v1515
        %v1530 = vpack.c.b16 %v1518, %v1517
        %v1531 = vpack.c.b16 %v1520, %v1519
        %v1532 = vpack.c.b16 %v1522, %v1521
        %v1533 = vpack.c.b16 %v1524, %v1523
        %v1534 = vpack.c.b16 %v1526, %v1525
        %v1536 = vsel %vm380, %v1527, 0
        %v1539 = vsel %vm380, %v1528, 0
        %v1542 = vsel %vm380, %v1529, 0
        %v1545 = vsel %vm380, %v1530, 0
        %v1548 = vsel %vm380, %v1531, 0
        %v1551 = vsel %vm380, %v1532, 0
        %v1554 = vsel %vm380, %v1533, 0
        %v1557 = vsel %vm380, %v1534, 0
        %v1560 = vsel %vm405, %v277, 0
        %1562 = vmatprep.subr.bf16.mxu0 0
        %1563 = vmatpush1.bf16.msra.mxu0 %v276
        %1564 = vmatprep.subr.bf16.mxu0 0
        %1565 = vmatpush1.bf16.msra.mxu0 %v1560
        %1566 = vmatprep.subr.bf16.mxu0 0
        %1567 = vmatpush1.bf16.msra.mxu0 0
        %1568 = vmatprep.subr.bf16.mxu0 0
        %1569 = vmatpush1.bf16.msra.mxu0 0
        %1570 = vmatprep.subr.bf16.mxu0 0
        %1571 = vmatpush1.bf16.msra.mxu0 0
        %1572 = vmatprep.subr.bf16.mxu0 0
        %1573 = vmatpush1.bf16.msra.mxu0 0
        %1574 = vmatprep.subr.bf16.mxu0 0
        %1575 = vmatpush1.bf16.msra.mxu0 0
        %1576 = vmatprep.subr.bf16.mxu0 0
        %1577 = vmatpush1.bf16.msra.mxu0 0
        %1578 = vmatprep.subr.bf16.mxu0 0
        %1579 = vmatpush1.bf16.msra.mxu0 0
        %1580 = vmatprep.subr.bf16.mxu0 0
        %1581 = vmatpush1.bf16.msra.mxu0 0
        %1582 = vmatprep.subr.bf16.mxu0 0
        %1583 = vmatpush1.bf16.msra.mxu0 0
        %1584 = vmatprep.subr.bf16.mxu0 0
        %1585 = vmatpush1.bf16.msra.mxu0 0
        %1586 = vmatprep.subr.bf16.mxu0 0
        %1587 = vmatpush1.bf16.msra.mxu0 0
        %1588 = vmatprep.subr.bf16.mxu0 0
        %1589 = vmatpush1.bf16.msra.mxu0 0
        %1590 = vmatprep.subr.bf16.mxu0 0
        %1591 = vmatpush1.bf16.msra.mxu0 0
        %1592 = vmatprep.subr.bf16.mxu0 0
        %1593 = vmatpush1.bf16.msra.mxu0 0
        %1594 = vmatprep.mubr.bf16.mxu0 0
        %1595 = vmatmul.mubr.bf16.gmra.mrb[0].mxu0 %v1536
        %v1596 = vpop.f32.mrb[0].mxu0
        %v1597 = vadd.f32 0.0, %v1596
        %v1598 = vpop.f32.mrb[0].mxu0
        %v1599 = vpop.f32.mrb[0].mxu0
        %v1600 = vadd.f32 0.0, %v1599
        %v1601 = vpop.f32.mrb[0].mxu0
        %1602 = vmatprep.mubr.bf16.mxu0 0
        %1603 = vmatmul.mubr.bf16.gmra.mrb[0].mxu0 %v1539
        %v1604 = vpop.f32.mrb[0].mxu0
        %v1605 = vadd.f32 0.0, %v1604
        %v1606 = vpop.f32.mrb[0].mxu0
        %v1607 = vpop.f32.mrb[0].mxu0
        %v1608 = vadd.f32 0.0, %v1607
        %v1609 = vpop.f32.mrb[0].mxu0
        %1610 = vmatprep.mubr.bf16.mxu0 0
        %1611 = vmatmul.mubr.bf16.gmra.mrb[0].mxu0 %v1542
        %v1612 = vpop.f32.mrb[0].mxu0
        %v1613 = vadd.f32 0.0, %v1612
        %v1614 = vpop.f32.mrb[0].mxu0
        %v1615 = vpop.f32.mrb[0].mxu0
        %v1616 = vadd.f32 0.0, %v1615
        %v1617 = vpop.f32.mrb[0].mxu0
        %1618 = vmatprep.mubr.bf16.mxu0 0
        %1619 = vmatmul.mubr.bf16.gmra.mrb[0].mxu0 %v1545
        %v1620 = vpop.f32.mrb[0].mxu0
        %v1621 = vadd.f32 0.0, %v1620
        %v1622 = vpop.f32.mrb[0].mxu0
        %v1623 = vpop.f32.mrb[0].mxu0
        %v1624 = vadd.f32 0.0, %v1623
        %v1625 = vpop.f32.mrb[0].mxu0
        %1626 = vmatprep.mubr.bf16.mxu0 0
        %1627 = vmatmul.mubr.bf16.gmra.mrb[0].mxu0 %v1548
        %v1628 = vpop.f32.mrb[0].mxu0
        %v1629 = vadd.f32 0.0, %v1628
        %v1630 = vpop.f32.mrb[0].mxu0
        %v1631 = vpop.f32.mrb[0].mxu0
        %v1632 = vadd.f32 0.0, %v1631
        %v1633 = vpop.f32.mrb[0].mxu0
        %1634 = vmatprep.mubr.bf16.mxu0 0
        %1635 = vmatmul.mubr.bf16.gmra.mrb[0].mxu0 %v1551
        %v1636 = vpop.f32.mrb[0].mxu0
        %v1637 = vadd.f32 0.0, %v1636
        %v1638 = vpop.f32.mrb[0].mxu0
        %v1639 = vpop.f32.mrb[0].mxu0
        %v1640 = vadd.f32 0.0, %v1639
        %v1641 = vpop.f32.mrb[0].mxu0
        %1642 = vmatprep.mubr.bf16.mxu0 0
        %1643 = vmatmul.mubr.bf16.gmra.mrb[0].mxu0 %v1554
        %v1644 = vpop.f32.mrb[0].mxu0
        %v1645 = vadd.f32 0.0, %v1644
        %v1646 = vpop.f32.mrb[0].mxu0
        %v1647 = vpop.f32.mrb[0].mxu0
        %v1648 = vadd.f32 0.0, %v1647
        %v1649 = vpop.f32.mrb[0].mxu0
        %1650 = vmatprep.mubr.bf16.mxu0 0
        %1651 = vmatmul.mubr.bf16.gmra.mrb[0].mxu0 %v1557
        %v1652 = vpop.f32.mrb[0].mxu0
        %v1653 = vadd.f32 0.0, %v1652
        %v1654 = vpop.f32.mrb[0].mxu0
        %v1655 = vpop.f32.mrb[0].mxu0
        %v1656 = vadd.f32 0.0, %v1655
        %v1657 = vpop.f32.mrb[0].mxu0
        %1658 = vdwg.mxu0
        %v1659 = vadd.f32 %v1458, %v1597
        %v1660 = vadd.f32 %v1459, %v1600
        %v1661 = vadd.f32 %v1460, %v1605
        %v1662 = vadd.f32 %v1461, %v1608
        %v1663 = vadd.f32 %v1462, %v1613
        %v1664 = vadd.f32 %v1463, %v1616
        %v1665 = vadd.f32 %v1464, %v1621
        %v1666 = vadd.f32 %v1465, %v1624
        %v1667 = vadd.f32 %v1466, %v1629
        %v1668 = vadd.f32 %v1467, %v1632
        %v1669 = vadd.f32 %v1468, %v1637
        %v1670 = vadd.f32 %v1469, %v1640
        %v1671 = vadd.f32 %v1470, %v1645
        %v1672 = vadd.f32 %v1471, %v1648
        %v1673 = vadd.f32 %v1472, %v1653
        %v1674 = vadd.f32 %v1473, %v1656
        %s1675 = sadd.s32 %s298, 592
        %s1676 = sshra.s32 %s1675, 3
        %s1677 = sand.u32 %s1675, 7
        %s1678 = smul.addr %s1676, 4
        %s1679 = scalar_lea.vmem %s0, %s1678
        %v1680 = vld [vmem:[%s1679] sm:$0xf]
        %v1681 = vld [vmem:[%s1679 + $0x4] sm:$0xf]
        %v1682 = vld [vmem:[%s1679 + $0x8] sm:$0xf]
        %v1683 = vld [vmem:[%s1679 + $0xc] sm:$0xf]
        %v1684 = vld [vmem:[%s1679 + $0x10] sm:$0xf]
        %v1685 = vld [vmem:[%s1679 + $0x14] sm:$0xf]
        %v1686 = vld [vmem:[%s1679 + $0x18] sm:$0xf]
        %v1687 = vld [vmem:[%s1679 + $0x1c] sm:$0xf]
        %v1688 = vld [vmem:[%s1679 + $0x20] sm:$0xf]
        %v1689 = vld [vmem:[%s1679 + $0x24] sm:$0xf]
        %v1690 = vld [vmem:[%s1679 + $0x28] sm:$0xf]
        %v1691 = vld [vmem:[%s1679 + $0x2c] sm:$0xf]
        %v1692 = vld [vmem:[%s1679 + $0x30] sm:$0xf]
        %v1693 = vld [vmem:[%s1679 + $0x34] sm:$0xf]
        %v1694 = vld [vmem:[%s1679 + $0x38] sm:$0xf]
        %v1695 = vld [vmem:[%s1679 + $0x3c] sm:$0xf]
        %v1712 = vunpack.c.l.b16 %v1680
        %v1713 = vunpack.c.l.b16 %v1681
        %v1714 = vunpack.c.l.b16 %v1682
        %v1715 = vunpack.c.l.b16 %v1683
        %v1716 = vunpack.c.l.b16 %v1684
        %v1717 = vunpack.c.l.b16 %v1685
        %v1718 = vunpack.c.l.b16 %v1686
        %v1719 = vunpack.c.l.b16 %v1687
        %v1720 = vunpack.c.l.b16 %v1688
        %v1721 = vunpack.c.l.b16 %v1689
        %v1722 = vunpack.c.l.b16 %v1690
        %v1723 = vunpack.c.l.b16 %v1691
        %v1724 = vunpack.c.l.b16 %v1692
        %v1725 = vunpack.c.l.b16 %v1693
        %v1726 = vunpack.c.l.b16 %v1694
        %v1727 = vunpack.c.l.b16 %v1695
        %v1728 = vpack.c.b16 %v1713, %v1712
        %v1729 = vpack.c.b16 %v1715, %v1714
        %v1730 = vpack.c.b16 %v1717, %v1716
        %v1731 = vpack.c.b16 %v1719, %v1718
        %v1732 = vpack.c.b16 %v1721, %v1720
        %v1733 = vpack.c.b16 %v1723, %v1722
        %v1734 = vpack.c.b16 %v1725, %v1724
        %v1735 = vpack.c.b16 %v1727, %v1726
        %v1737 = vsel %vm380, %v1728, 0
        %v1740 = vsel %vm380, %v1729, 0
        %v1743 = vsel %vm380, %v1730, 0
        %v1746 = vsel %vm380, %v1731, 0
        %v1749 = vsel %vm380, %v1732, 0
        %v1752 = vsel %vm380, %v1733, 0
        %v1755 = vsel %vm380, %v1734, 0
        %v1758 = vsel %vm380, %v1735, 0
        %v1761 = vsel %vm405, %v282, 0
        %1763 = vmatprep.subr.bf16.mxu0 0
        %1764 = vmatpush1.bf16.msra.mxu0 %v281
        %1765 = vmatprep.subr.bf16.mxu0 0
        %1766 = vmatpush1.bf16.msra.mxu0 %v1761
        %1767 = vmatprep.subr.bf16.mxu0 0
        %1768 = vmatpush1.bf16.msra.mxu0 0
        %1769 = vmatprep.subr.bf16.mxu0 0
        %1770 = vmatpush1.bf16.msra.mxu0 0
        %1771 = vmatprep.subr.bf16.mxu0 0
        %1772 = vmatpush1.bf16.msra.mxu0 0
        %1773 = vmatprep.subr.bf16.mxu0 0
        %1774 = vmatpush1.bf16.msra.mxu0 0
        %1775 = vmatprep.subr.bf16.mxu0 0
        %1776 = vmatpush1.bf16.msra.mxu0 0
        %1777 = vmatprep.subr.bf16.mxu0 0
        %1778 = vmatpush1.bf16.msra.mxu0 0
        %1779 = vmatprep.subr.bf16.mxu0 0
        %1780 = vmatpush1.bf16.msra.mxu0 0
        %1781 = vmatprep.subr.bf16.mxu0 0
        %1782 = vmatpush1.bf16.msra.mxu0 0
        %1783 = vmatprep.subr.bf16.mxu0 0
        %1784 = vmatpush1.bf16.msra.mxu0 0
        %1785 = vmatprep.subr.bf16.mxu0 0
        %1786 = vmatpush1.bf16.msra.mxu0 0
        %1787 = vmatprep.subr.bf16.mxu0 0
        %1788 = vmatpush1.bf16.msra.mxu0 0
        %1789 = vmatprep.subr.bf16.mxu0 0
        %1790 = vmatpush1.bf16.msra.mxu0 0
        %1791 = vmatprep.subr.bf16.mxu0 0
        %1792 = vmatpush1.bf16.msra.mxu0 0
        %1793 = vmatprep.subr.bf16.mxu0 0
        %1794 = vmatpush1.bf16.msra.mxu0 0
        %1795 = vmatprep.mubr.bf16.mxu0 0
        %1796 = vmatmul.mubr.bf16.gmra.mrb[0].mxu0 %v1737
        %v1797 = vpop.f32.mrb[0].mxu0
        %v1798 = vadd.f32 0.0, %v1797
        %v1799 = vpop.f32.mrb[0].mxu0
        %v1800 = vpop.f32.mrb[0].mxu0
        %v1801 = vadd.f32 0.0, %v1800
        %v1802 = vpop.f32.mrb[0].mxu0
        %1803 = vmatprep.mubr.bf16.mxu0 0
        %1804 = vmatmul.mubr.bf16.gmra.mrb[0].mxu0 %v1740
        %v1805 = vpop.f32.mrb[0].mxu0
        %v1806 = vadd.f32 0.0, %v1805
        %v1807 = vpop.f32.mrb[0].mxu0
        %v1808 = vpop.f32.mrb[0].mxu0
        %v1809 = vadd.f32 0.0, %v1808
        %v1810 = vpop.f32.mrb[0].mxu0
        %1811 = vmatprep.mubr.bf16.mxu0 0
        %1812 = vmatmul.mubr.bf16.gmra.mrb[0].mxu0 %v1743
        %v1813 = vpop.f32.mrb[0].mxu0
        %v1814 = vadd.f32 0.0, %v1813
        %v1815 = vpop.f32.mrb[0].mxu0
        %v1816 = vpop.f32.mrb[0].mxu0
        %v1817 = vadd.f32 0.0, %v1816
        %v1818 = vpop.f32.mrb[0].mxu0
        %1819 = vmatprep.mubr.bf16.mxu0 0
        %1820 = vmatmul.mubr.bf16.gmra.mrb[0].mxu0 %v1746
        %v1821 = vpop.f32.mrb[0].mxu0
        %v1822 = vadd.f32 0.0, %v1821
        %v1823 = vpop.f32.mrb[0].mxu0
        %v1824 = vpop.f32.mrb[0].mxu0
        %v1825 = vadd.f32 0.0, %v1824
        %v1826 = vpop.f32.mrb[0].mxu0
        %1827 = vmatprep.mubr.bf16.mxu0 0
        %1828 = vmatmul.mubr.bf16.gmra.mrb[0].mxu0 %v1749
        %v1829 = vpop.f32.mrb[0].mxu0
        %v1830 = vadd.f32 0.0, %v1829
        %v1831 = vpop.f32.mrb[0].mxu0
        %v1832 = vpop.f32.mrb[0].mxu0
        %v1833 = vadd.f32 0.0, %v1832
        %v1834 = vpop.f32.mrb[0].mxu0
        %1835 = vmatprep.mubr.bf16.mxu0 0
        %1836 = vmatmul.mubr.bf16.gmra.mrb[0].mxu0 %v1752
        %v1837 = vpop.f32.mrb[0].mxu0
        %v1838 = vadd.f32 0.0, %v1837
        %v1839 = vpop.f32.mrb[0].mxu0
        %v1840 = vpop.f32.mrb[0].mxu0
        %v1841 = vadd.f32 0.0, %v1840
        %v1842 = vpop.f32.mrb[0].mxu0
        %1843 = vmatprep.mubr.bf16.mxu0 0
        %1844 = vmatmul.mubr.bf16.gmra.mrb[0].mxu0 %v1755
        %v1845 = vpop.f32.mrb[0].mxu0
        %v1846 = vadd.f32 0.0, %v1845
        %v1847 = vpop.f32.mrb[0].mxu0
        %v1848 = vpop.f32.mrb[0].mxu0
        %v1849 = vadd.f32 0.0, %v1848
        %v1850 = vpop.f32.mrb[0].mxu0
        %1851 = vmatprep.mubr.bf16.mxu0 0
        %1852 = vmatmul.mubr.bf16.gmra.mrb[0].mxu0 %v1758
        %v1853 = vpop.f32.mrb[0].mxu0
        %v1854 = vadd.f32 0.0, %v1853
        %v1855 = vpop.f32.mrb[0].mxu0
        %v1856 = vpop.f32.mrb[0].mxu0
        %v1857 = vadd.f32 0.0, %v1856
        %v1858 = vpop.f32.mrb[0].mxu0
        %1859 = vdwg.mxu0
        %v1860 = vadd.f32 %v1659, %v1798
        %v1861 = vadd.f32 %v1660, %v1801
        %v1862 = vadd.f32 %v1661, %v1806
        %v1863 = vadd.f32 %v1662, %v1809
        %v1864 = vadd.f32 %v1663, %v1814
        %v1865 = vadd.f32 %v1664, %v1817
        %v1866 = vadd.f32 %v1665, %v1822
        %v1867 = vadd.f32 %v1666, %v1825
        %v1868 = vadd.f32 %v1667, %v1830
        %v1869 = vadd.f32 %v1668, %v1833
        %v1870 = vadd.f32 %v1669, %v1838
        %v1871 = vadd.f32 %v1670, %v1841
        %v1872 = vadd.f32 %v1671, %v1846
        %v1873 = vadd.f32 %v1672, %v1849
        %v1874 = vadd.f32 %v1673, %v1854
        %v1875 = vadd.f32 %v1674, %v1857
        %s1876 = sadd.s32 %s298, 608
        %s1877 = sshra.s32 %s1876, 3
        %s1878 = sand.u32 %s1876, 7
        %s1879 = smul.addr %s1877, 4
        %s1880 = scalar_lea.vmem %s0, %s1879
        %v1881 = vld [vmem:[%s1880] sm:$0xf]
        %v1882 = vld [vmem:[%s1880 + $0x4] sm:$0xf]
        %v1883 = vld [vmem:[%s1880 + $0x8] sm:$0xf]
        %v1884 = vld [vmem:[%s1880 + $0xc] sm:$0xf]
        %v1885 = vld [vmem:[%s1880 + $0x10] sm:$0xf]
        %v1886 = vld [vmem:[%s1880 + $0x14] sm:$0xf]
        %v1887 = vld [vmem:[%s1880 + $0x18] sm:$0xf]
        %v1888 = vld [vmem:[%s1880 + $0x1c] sm:$0xf]
        %v1889 = vld [vmem:[%s1880 + $0x20] sm:$0xf]
        %v1890 = vld [vmem:[%s1880 + $0x24] sm:$0xf]
        %v1891 = vld [vmem:[%s1880 + $0x28] sm:$0xf]
        %v1892 = vld [vmem:[%s1880 + $0x2c] sm:$0xf]
        %v1893 = vld [vmem:[%s1880 + $0x30] sm:$0xf]
        %v1894 = vld [vmem:[%s1880 + $0x34] sm:$0xf]
        %v1895 = vld [vmem:[%s1880 + $0x38] sm:$0xf]
        %v1896 = vld [vmem:[%s1880 + $0x3c] sm:$0xf]
        %v1913 = vunpack.c.l.b16 %v1881
        %v1914 = vunpack.c.l.b16 %v1882
        %v1915 = vunpack.c.l.b16 %v1883
        %v1916 = vunpack.c.l.b16 %v1884
        %v1917 = vunpack.c.l.b16 %v1885
        %v1918 = vunpack.c.l.b16 %v1886
        %v1919 = vunpack.c.l.b16 %v1887
        %v1920 = vunpack.c.l.b16 %v1888
        %v1921 = vunpack.c.l.b16 %v1889
        %v1922 = vunpack.c.l.b16 %v1890
        %v1923 = vunpack.c.l.b16 %v1891
        %v1924 = vunpack.c.l.b16 %v1892
        %v1925 = vunpack.c.l.b16 %v1893
        %v1926 = vunpack.c.l.b16 %v1894
        %v1927 = vunpack.c.l.b16 %v1895
        %v1928 = vunpack.c.l.b16 %v1896
        %v1929 = vpack.c.b16 %v1914, %v1913
        %v1930 = vpack.c.b16 %v1916, %v1915
        %v1931 = vpack.c.b16 %v1918, %v1917
        %v1932 = vpack.c.b16 %v1920, %v1919
        %v1933 = vpack.c.b16 %v1922, %v1921
        %v1934 = vpack.c.b16 %v1924, %v1923
        %v1935 = vpack.c.b16 %v1926, %v1925
        %v1936 = vpack.c.b16 %v1928, %v1927
        %v1938 = vsel %vm380, %v1929, 0
        %v1941 = vsel %vm380, %v1930, 0
        %v1944 = vsel %vm380, %v1931, 0
        %v1947 = vsel %vm380, %v1932, 0
        %v1950 = vsel %vm380, %v1933, 0
        %v1953 = vsel %vm380, %v1934, 0
        %v1956 = vsel %vm380, %v1935, 0
        %v1959 = vsel %vm380, %v1936, 0
        %v1962 = vsel %vm405, %v287, 0
        %1964 = vmatprep.subr.bf16.mxu0 0
        %1965 = vmatpush1.bf16.msra.mxu0 %v286
        %1966 = vmatprep.subr.bf16.mxu0 0
        %1967 = vmatpush1.bf16.msra.mxu0 %v1962
        %1968 = vmatprep.subr.bf16.mxu0 0
        %1969 = vmatpush1.bf16.msra.mxu0 0
        %1970 = vmatprep.subr.bf16.mxu0 0
        %1971 = vmatpush1.bf16.msra.mxu0 0
        %1972 = vmatprep.subr.bf16.mxu0 0
        %1973 = vmatpush1.bf16.msra.mxu0 0
        %1974 = vmatprep.subr.bf16.mxu0 0
        %1975 = vmatpush1.bf16.msra.mxu0 0
        %1976 = vmatprep.subr.bf16.mxu0 0
        %1977 = vmatpush1.bf16.msra.mxu0 0
        %1978 = vmatprep.subr.bf16.mxu0 0
        %1979 = vmatpush1.bf16.msra.mxu0 0
        %1980 = vmatprep.subr.bf16.mxu0 0
        %1981 = vmatpush1.bf16.msra.mxu0 0
        %1982 = vmatprep.subr.bf16.mxu0 0
        %1983 = vmatpush1.bf16.msra.mxu0 0
        %1984 = vmatprep.subr.bf16.mxu0 0
        %1985 = vmatpush1.bf16.msra.mxu0 0
        %1986 = vmatprep.subr.bf16.mxu0 0
        %1987 = vmatpush1.bf16.msra.mxu0 0
        %1988 = vmatprep.subr.bf16.mxu0 0
        %1989 = vmatpush1.bf16.msra.mxu0 0
        %1990 = vmatprep.subr.bf16.mxu0 0
        %1991 = vmatpush1.bf16.msra.mxu0 0
        %1992 = vmatprep.subr.bf16.mxu0 0
        %1993 = vmatpush1.bf16.msra.mxu0 0
        %1994 = vmatprep.subr.bf16.mxu0 0
        %1995 = vmatpush1.bf16.msra.mxu0 0
        %1996 = vmatprep.mubr.bf16.mxu0 0
        %1997 = vmatmul.mubr.bf16.gmra.mrb[0].mxu0 %v1938
        %v1998 = vpop.f32.mrb[0].mxu0
        %v1999 = vadd.f32 0.0, %v1998
        %v2000 = vpop.f32.mrb[0].mxu0
        %v2001 = vpop.f32.mrb[0].mxu0
        %v2002 = vadd.f32 0.0, %v2001
        %v2003 = vpop.f32.mrb[0].mxu0
        %2004 = vmatprep.mubr.bf16.mxu0 0
        %2005 = vmatmul.mubr.bf16.gmra.mrb[0].mxu0 %v1941
        %v2006 = vpop.f32.mrb[0].mxu0
        %v2007 = vadd.f32 0.0, %v2006
        %v2008 = vpop.f32.mrb[0].mxu0
        %v2009 = vpop.f32.mrb[0].mxu0
        %v2010 = vadd.f32 0.0, %v2009
        %v2011 = vpop.f32.mrb[0].mxu0
        %2012 = vmatprep.mubr.bf16.mxu0 0
        %2013 = vmatmul.mubr.bf16.gmra.mrb[0].mxu0 %v1944
        %v2014 = vpop.f32.mrb[0].mxu0
        %v2015 = vadd.f32 0.0, %v2014
        %v2016 = vpop.f32.mrb[0].mxu0
        %v2017 = vpop.f32.mrb[0].mxu0
        %v2018 = vadd.f32 0.0, %v2017
        %v2019 = vpop.f32.mrb[0].mxu0
        %2020 = vmatprep.mubr.bf16.mxu0 0
        %2021 = vmatmul.mubr.bf16.gmra.mrb[0].mxu0 %v1947
        %v2022 = vpop.f32.mrb[0].mxu0
        %v2023 = vadd.f32 0.0, %v2022
        %v2024 = vpop.f32.mrb[0].mxu0
        %v2025 = vpop.f32.mrb[0].mxu0
        %v2026 = vadd.f32 0.0, %v2025
        %v2027 = vpop.f32.mrb[0].mxu0
        %2028 = vmatprep.mubr.bf16.mxu0 0
        %2029 = vmatmul.mubr.bf16.gmra.mrb[0].mxu0 %v1950
        %v2030 = vpop.f32.mrb[0].mxu0
        %v2031 = vadd.f32 0.0, %v2030
        %v2032 = vpop.f32.mrb[0].mxu0
        %v2033 = vpop.f32.mrb[0].mxu0
        %v2034 = vadd.f32 0.0, %v2033
        %v2035 = vpop.f32.mrb[0].mxu0
        %2036 = vmatprep.mubr.bf16.mxu0 0
        %2037 = vmatmul.mubr.bf16.gmra.mrb[0].mxu0 %v1953
        %v2038 = vpop.f32.mrb[0].mxu0
        %v2039 = vadd.f32 0.0, %v2038
        %v2040 = vpop.f32.mrb[0].mxu0
        %v2041 = vpop.f32.mrb[0].mxu0
        %v2042 = vadd.f32 0.0, %v2041
        %v2043 = vpop.f32.mrb[0].mxu0
        %2044 = vmatprep.mubr.bf16.mxu0 0
        %2045 = vmatmul.mubr.bf16.gmra.mrb[0].mxu0 %v1956
        %v2046 = vpop.f32.mrb[0].mxu0
        %v2047 = vadd.f32 0.0, %v2046
        %v2048 = vpop.f32.mrb[0].mxu0
        %v2049 = vpop.f32.mrb[0].mxu0
        %v2050 = vadd.f32 0.0, %v2049
        %v2051 = vpop.f32.mrb[0].mxu0
        %2052 = vmatprep.mubr.bf16.mxu0 0
        %2053 = vmatmul.mubr.bf16.gmra.mrb[0].mxu0 %v1959
        %v2054 = vpop.f32.mrb[0].mxu0
        %v2055 = vadd.f32 0.0, %v2054
        %v2056 = vpop.f32.mrb[0].mxu0
        %v2057 = vpop.f32.mrb[0].mxu0
        %v2058 = vadd.f32 0.0, %v2057
        %v2059 = vpop.f32.mrb[0].mxu0
        %2060 = vdwg.mxu0
        %v2061 = vadd.f32 %v1860, %v1999
        %v2062 = vadd.f32 %v1861, %v2002
        %v2063 = vadd.f32 %v1862, %v2007
        %v2064 = vadd.f32 %v1863, %v2010
        %v2065 = vadd.f32 %v1864, %v2015
        %v2066 = vadd.f32 %v1865, %v2018
        %v2067 = vadd.f32 %v1866, %v2023
        %v2068 = vadd.f32 %v1867, %v2026
        %v2069 = vadd.f32 %v1868, %v2031
        %v2070 = vadd.f32 %v1869, %v2034
        %v2071 = vadd.f32 %v1870, %v2039
        %v2072 = vadd.f32 %v1871, %v2042
        %v2073 = vadd.f32 %v1872, %v2047
        %v2074 = vadd.f32 %v1873, %v2050
        %v2075 = vadd.f32 %v1874, %v2055
        %v2076 = vadd.f32 %v1875, %v2058
        %s2077 = scalar_lea.vmem %s234, %s297
        %vm2078 = vcmask 64512
        %2079 = vst.msk [vmem:[%s2077] sm:$0xff] %vm2078, %v2061
        %2080 = vst.msk [vmem:[%s2077 + $0x8] sm:$0xff] %vm2078, %v2062
        %2081 = vst.msk [vmem:[%s2077 + $0x10] sm:$0xff] %vm2078, %v2063
        %2082 = vst.msk [vmem:[%s2077 + $0x18] sm:$0xff] %vm2078, %v2064
        %2083 = vst.msk [vmem:[%s2077 + $0x20] sm:$0xff] %vm2078, %v2065
        %2084 = vst.msk [vmem:[%s2077 + $0x28] sm:$0xff] %vm2078, %v2066
        %2085 = vst.msk [vmem:[%s2077 + $0x30] sm:$0xff] %vm2078, %v2067
        %2086 = vst.msk [vmem:[%s2077 + $0x38] sm:$0xff] %vm2078, %v2068
        %2087 = vst.msk [vmem:[%s2077 + $0x40] sm:$0xff] %vm2078, %v2069
        %2088 = vst.msk [vmem:[%s2077 + $0x48] sm:$0xff] %vm2078, %v2070
        %2089 = vst.msk [vmem:[%s2077 + $0x50] sm:$0xff] %vm2078, %v2071
        %2090 = vst.msk [vmem:[%s2077 + $0x58] sm:$0xff] %vm2078, %v2072
        %2091 = vst.msk [vmem:[%s2077 + $0x60] sm:$0xff] %vm2078, %v2073
        %2092 = vst.msk [vmem:[%s2077 + $0x68] sm:$0xff] %vm2078, %v2074
        %2093 = vst.msk [vmem:[%s2077 + $0x70] sm:$0xff] %vm2078, %v2075
        %2094 = vst.msk [vmem:[%s2077 + $0x78] sm:$0xff] %vm2078, %v2076
        %s2095 = scalar_lea.vmem %s228, %s289
        %v2096 = vld [vmem:[%s2095] sm:$0x1]
        %2097 = vmatprep.subr.mxu0 0.0
        %2098 = vmatpush1.msra.mxu0 %v2061
        %2099 = vmatprep.subr.mxu0 0.0
        %2100 = vmatpush1.msra.mxu0 %v2062
        %2101 = vmatprep.subr.mxu0 0.0
        %2102 = vmatpush1.msra.mxu0 %v2063
        %2103 = vmatprep.subr.mxu0 0.0
        %2104 = vmatpush1.msra.mxu0 %v2064
        %2105 = vmatprep.subr.mxu0 0.0
        %2106 = vmatpush1.msra.mxu0 %v2065
        %2107 = vmatprep.subr.mxu0 0.0
        %2108 = vmatpush1.msra.mxu0 %v2066
        %2109 = vmatprep.subr.mxu0 0.0
        %2110 = vmatpush1.msra.mxu0 %v2067
        %2111 = vmatprep.subr.mxu0 0.0
        %2112 = vmatpush1.msra.mxu0 %v2068
        %2113 = vmatprep.subr.mxu0 0.0
        %2114 = vmatpush1.msra.mxu0 %v2069
        %2115 = vmatprep.subr.mxu0 0.0
        %2116 = vmatpush1.msra.mxu0 %v2070
        %2117 = vmatprep.subr.mxu0 0.0
        %2118 = vmatpush1.msra.mxu0 %v2071
        %2119 = vmatprep.subr.mxu0 0.0
        %2120 = vmatpush1.msra.mxu0 %v2072
        %2121 = vmatprep.subr.mxu0 0.0
        %2122 = vmatpush1.msra.mxu0 %v2073
        %2123 = vmatprep.subr.mxu0 0.0
        %2124 = vmatpush1.msra.mxu0 %v2074
        %2125 = vmatprep.subr.mxu0 0.0
        %2126 = vmatpush1.msra.mxu0 %v2075
        %2127 = vmatprep.subr.mxu0 0.0
        %2128 = vmatpush1.msra.mxu0 %v2076
        %2129 = vmatprep.subr.mxu0 0.0
        %2130 = vmatpush1.msra.mxu0 0.0
        %2131 = vmatprep.subr.mxu0 0.0
        %2132 = vmatpush1.msra.mxu0 0.0
        %2133 = vmatprep.subr.mxu0 0.0
        %2134 = vmatpush1.msra.mxu0 0.0
        %2135 = vmatprep.subr.mxu0 0.0
        %2136 = vmatpush1.msra.mxu0 0.0
        %2137 = vmatprep.subr.mxu0 0.0
        %2138 = vmatpush1.msra.mxu0 0.0
        %2139 = vmatprep.subr.mxu0 0.0
        %2140 = vmatpush1.msra.mxu0 0.0
        %2141 = vmatprep.subr.mxu0 0.0
        %2142 = vmatpush1.msra.mxu0 0.0
        %2143 = vmatprep.subr.mxu0 0.0
        %2144 = vmatpush1.msra.mxu0 0.0
        %2145 = vmatprep.subr.mxu0 0.0
        %2146 = vmatpush1.msra.mxu0 0.0
        %2147 = vmatprep.subr.mxu0 0.0
        %2148 = vmatpush1.msra.mxu0 0.0
        %2149 = vmatprep.subr.mxu0 0.0
        %2150 = vmatpush1.msra.mxu0 0.0
        %2151 = vmatprep.subr.mxu0 0.0
        %2152 = vmatpush1.msra.mxu0 0.0
        %2153 = vmatprep.subr.mxu0 0.0
        %2154 = vmatpush1.msra.mxu0 0.0
        %2155 = vmatprep.subr.mxu0 0.0
        %2156 = vmatpush1.msra.mxu0 0.0
        %2157 = vmatprep.subr.mxu0 0.0
        %2158 = vmatpush1.msra.mxu0 0.0
        %2159 = vmatprep.subr.mxu0 0.0
        %2160 = vmatpush1.msra.mxu0 0.0
        %2161 = vmatprep.mubr.f32.mxu0 0.0
        %2162 = vmatmul.mubr.f32.gmra.mrb[0].mxu0 %v2096
        %v2163 = vpop.f32.mrb[0].mxu0
        %v2164 = vadd.f32 0.0, %v2163
        %v2165 = vpop.f32.mrb[0].mxu0
        %2166 = vdwg.mxu0
        %v2167 = vadd.f32 %v294, %v2164
        %v2168 = vmul.f32 %v2061, %v2061
        %v2169 = vmul.f32 %v2062, %v2062
        %v2170 = vmul.f32 %v2063, %v2063
        %v2171 = vmul.f32 %v2064, %v2064
        %v2172 = vmul.f32 %v2065, %v2065
        %v2173 = vmul.f32 %v2066, %v2066
        %v2174 = vmul.f32 %v2067, %v2067
        %v2175 = vmul.f32 %v2068, %v2068
        %v2176 = vmul.f32 %v2069, %v2069
        %v2177 = vmul.f32 %v2070, %v2070
        %v2178 = vmul.f32 %v2071, %v2071
        %v2179 = vmul.f32 %v2072, %v2072
        %v2180 = vmul.f32 %v2073, %v2073
        %v2181 = vmul.f32 %v2074, %v2074
        %v2182 = vmul.f32 %v2075, %v2075
        %v2183 = vmul.f32 %v2076, %v2076
        %2184 = vmatprep.subr.mxu0 0.0
        %2185 = vmatpush1.msra.mxu0 %v2168
        %2186 = vmatprep.subr.mxu0 0.0
        %2187 = vmatpush1.msra.mxu0 %v2169
        %2188 = vmatprep.subr.mxu0 0.0
        %2189 = vmatpush1.msra.mxu0 %v2170
        %2190 = vmatprep.subr.mxu0 0.0
        %2191 = vmatpush1.msra.mxu0 %v2171
        %2192 = vmatprep.subr.mxu0 0.0
        %2193 = vmatpush1.msra.mxu0 %v2172
        %2194 = vmatprep.subr.mxu0 0.0
        %2195 = vmatpush1.msra.mxu0 %v2173
        %2196 = vmatprep.subr.mxu0 0.0
        %2197 = vmatpush1.msra.mxu0 %v2174
        %2198 = vmatprep.subr.mxu0 0.0
        %2199 = vmatpush1.msra.mxu0 %v2175
        %2200 = vmatprep.subr.mxu0 0.0
        %2201 = vmatpush1.msra.mxu0 %v2176
        %2202 = vmatprep.subr.mxu0 0.0
        %2203 = vmatpush1.msra.mxu0 %v2177
        %2204 = vmatprep.subr.mxu0 0.0
        %2205 = vmatpush1.msra.mxu0 %v2178
        %2206 = vmatprep.subr.mxu0 0.0
        %2207 = vmatpush1.msra.mxu0 %v2179
        %2208 = vmatprep.subr.mxu0 0.0
        %2209 = vmatpush1.msra.mxu0 %v2180
        %2210 = vmatprep.subr.mxu0 0.0
        %2211 = vmatpush1.msra.mxu0 %v2181
        %2212 = vmatprep.subr.mxu0 0.0
        %2213 = vmatpush1.msra.mxu0 %v2182
        %2214 = vmatprep.subr.mxu0 0.0
        %2215 = vmatpush1.msra.mxu0 %v2183
        %2216 = vmatprep.subr.mxu0 0.0
        %2217 = vmatpush1.msra.mxu0 0.0
        %2218 = vmatprep.subr.mxu0 0.0
        %2219 = vmatpush1.msra.mxu0 0.0
        %2220 = vmatprep.subr.mxu0 0.0
        %2221 = vmatpush1.msra.mxu0 0.0
        %2222 = vmatprep.subr.mxu0 0.0
        %2223 = vmatpush1.msra.mxu0 0.0
        %2224 = vmatprep.subr.mxu0 0.0
        %2225 = vmatpush1.msra.mxu0 0.0
        %2226 = vmatprep.subr.mxu0 0.0
        %2227 = vmatpush1.msra.mxu0 0.0
        %2228 = vmatprep.subr.mxu0 0.0
        %2229 = vmatpush1.msra.mxu0 0.0
        %2230 = vmatprep.subr.mxu0 0.0
        %2231 = vmatpush1.msra.mxu0 0.0
        %2232 = vmatprep.subr.mxu0 0.0
        %2233 = vmatpush1.msra.mxu0 0.0
        %2234 = vmatprep.subr.mxu0 0.0
        %2235 = vmatpush1.msra.mxu0 0.0
        %2236 = vmatprep.subr.mxu0 0.0
        %2237 = vmatpush1.msra.mxu0 0.0
        %2238 = vmatprep.subr.mxu0 0.0
        %2239 = vmatpush1.msra.mxu0 0.0
        %2240 = vmatprep.subr.mxu0 0.0
        %2241 = vmatpush1.msra.mxu0 0.0
        %2242 = vmatprep.subr.mxu0 0.0
        %2243 = vmatpush1.msra.mxu0 0.0
        %2244 = vmatprep.subr.mxu0 0.0
        %2245 = vmatpush1.msra.mxu0 0.0
        %2246 = vmatprep.subr.mxu0 0.0
        %2247 = vmatpush1.msra.mxu0 0.0
        %2248 = vmatprep.mubr.f32.mxu0 0.0
        %2249 = vmatmul.mubr.f32.gmra.mrb[0].mxu0 %v2096
        %v2250 = vpop.f32.mrb[0].mxu0
        %v2251 = vadd.f32 0.0, %v2250
        %v2252 = vpop.f32.mrb[0].mxu0
        %2253 = vdwg.mxu0
        %v2254 = vadd.f32 %v295, %v2251
      $region37: #{unet_decoder_forward.10} parent=31 // loop_footer
        %s293 = sadd.s32 1, %s289
      $region38: #{unet_decoder_forward.10} parent=31 // loop_footer_branch
        %288 = sbr.rel target = $region34
      $region39: #{unet_decoder_forward.10} parent=31 // loop_exit
        _
      %vm2255 = vcmask 57344
      %2256 = vst.msk [vmem:[%s238] sm:$0x1] %vm2255, %v294
      %2257 = vst.msk [vmem:[%s241] sm:$0x1] %vm2255, %v295
      %s2258 = smul.u32 224, %s17
      %p2259 = scmp.lt.s32.totalorder %s2258, 1343
      %s2260 = scalar_select %p2259, %s2258, 1343
      %s2261 = smul.addr %s2260, 8
      %s2262 = scalar_lea.vmem %s3, %s2261
      %p2263 = scmp.lt.s32.totalorder %s17, 5
      %s2264 = scalar_select %p2263, %s17, 5
      %s2265 = scalar_lea.vmem %s4, %s2264
      %p2266 = scmp.lt.s32.totalorder %s17, 5
      %s2267 = scalar_select %p2266, %s17, 5
      %s2268 = scalar_lea.vmem %s5, %s2267
      // Predicated region
      $region40: #{unet_decoder_forward.10} parent=31 // pred_check
        %p2269 = pneg %p103
      $region41: #{unet_decoder_forward.10} parent=31 // pred_check_branch
        %2271 = sbr.rel (%p2269) target = $region43
      $region42: #{unet_decoder_forward.10} parent=31 // pred_region
        %s2272 = smul.u32 224, %s17
      $region43: #{unet_decoder_forward.10} parent=31 // pred_fallthru
        _
      // Predicated region
      $region44: #{unet_decoder_forward.10} parent=31 // pred_check
        %p2273 = pneg %p129
      $region45: #{unet_decoder_forward.10} parent=31 // pred_check_branch
        %2275 = sbr.rel (%p2273) target = $region47
      $region46: #{unet_decoder_forward.10} parent=31 // pred_region
        _
      $region47: #{unet_decoder_forward.10} parent=31 // pred_fallthru
        _
      // Predicated region
      $region48: #{unet_decoder_forward.10} parent=31 // pred_check
        %p2276 = pneg %p155
      $region49: #{unet_decoder_forward.10} parent=31 // pred_check_branch
        %2278 = sbr.rel (%p2276) target = $region51
      $region50: #{unet_decoder_forward.10} parent=31 // pred_region
        _
      $region51: #{unet_decoder_forward.10} parent=31 // pred_fallthru
        _
    $region32: #{unet_decoder_forward.10} parent=5 // pred_fallthru
      _
    %p2279 = scmp.le.s32.totalorder 2, %s12
    // Predicated region
    $region52: #{unet_decoder_forward.10} parent=5 // pred_check
      %p2280 = pneg %p2279
    $region53: #{unet_decoder_forward.10} parent=5 // pred_check_branch
      %2282 = sbr.rel (%p2280) target = $region55
    $region54: #{unet_decoder_forward.10} parent=5 // pred_region
      %s2283 = ssub.s32 %s12, 2
      // Predicated region
      $region56: #{unet_decoder_forward.10} parent=54 // pred_check
        %p2284 = pneg %p109
      $region57: #{unet_decoder_forward.10} parent=54 // pred_check_branch
        %2286 = sbr.rel (%p2284) target = $region59
      $region58: #{unet_decoder_forward.10} parent=54 // pred_region
        %s2287 = smul.u32 224, %s18
        %p2288 = scmp.lt.s32.totalorder %s2287, 1343
        %s2289 = scalar_select %p2288, %s2287, 1343
        %s2290 = smul.addr %s2289, 8
        %s2291 = scalar_lea.vmem %s3, %s2290
      $region59: #{unet_decoder_forward.10} parent=54 // pred_fallthru
        _
      // Predicated region
      $region60: #{unet_decoder_forward.10} parent=54 // pred_check
        %p2292 = pneg %p135
      $region61: #{unet_decoder_forward.10} parent=54 // pred_check_branch
        %2294 = sbr.rel (%p2292) target = $region63
      $region62: #{unet_decoder_forward.10} parent=54 // pred_region
        %p2295 = scmp.lt.s32.totalorder %s18, 5
        %s2296 = scalar_select %p2295, %s18, 5
        %s2297 = scalar_lea.vmem %s4, %s2296
      $region63: #{unet_decoder_forward.10} parent=54 // pred_fallthru
        _
      // Predicated region
      $region64: #{unet_decoder_forward.10} parent=54 // pred_check
        %p2298 = pneg %p161
      $region65: #{unet_decoder_forward.10} parent=54 // pred_check_branch
        %2300 = sbr.rel (%p2298) target = $region67
      $region66: #{unet_decoder_forward.10} parent=54 // pred_region
        %p2301 = scmp.lt.s32.totalorder %s18, 5
        %s2302 = scalar_select %p2301, %s18, 5
        %s2303 = scalar_lea.vmem %s5, %s2302
      $region67: #{unet_decoder_forward.10} parent=54 // pred_fallthru
        _
    $region55: #{unet_decoder_forward.10} parent=5 // pred_fallthru
      _
  $region6: #{unet_decoder_forward.10} parent=0 // loop_footer
    %s16 = sadd.s32 1, %s12
  $region7: #{unet_decoder_forward.10} parent=0 // loop_footer_branch
    %11 = sbr.rel target = $region3
  $region8: #{unet_decoder_forward.10} parent=0 // loop_exit
    _

</llo_original>
